<compile_context>
chip_gen: v7x
topology: tpu7x:2x2x1
jax: 0.10.0
libtpu: 0.0.40
codegen_flags: <defaults>
</compile_context>

<pallas_src>
import functools

import jax
import jax.numpy as jnp
from jax.experimental import pallas as pl
from jax.experimental.pallas import tpu as pltpu

NEG_SLOPE = 0.2


def _leaky(x):
    return jnp.where(x > 0, x, NEG_SLOPE * x)


# ----------------------------------------------------------------------------
# Kernel 1: EdgeConv (1x1 conv + folded BN + LeakyReLU + max over k neighbors)
# ----------------------------------------------------------------------------

def edgeconv_kernel(nbr_ref, ctr_ref, wn_ref, wc_ref, shift_ref, o_ref):
    # nbr_ref: (1, K, TN, C) bf16    ctr_ref: (1, TN, C) bf16
    # wn_ref : (C, Cout) bf16 = W[:C] * bn_scale           (neighbor term)
    # wc_ref : (C, Cout) bf16 = (W[C:] - W[:C]) * bn_scale (center, hoisted)
    # shift  : (1, Cout) f32 BN shift
    # out    : max_k LeakyReLU(conv([nbr-ctr, ctr])*s + t)
    #        = LeakyReLU(max_k(nbr_k @ Wn) + ctr @ Wc + t)   (leaky/+ hoisted)
    K, TN, C = nbr_ref.shape[1], nbr_ref.shape[2], nbr_ref.shape[3]
    base = jnp.dot(ctr_ref[0], wc_ref[...],
                   preferred_element_type=jnp.float32) + shift_ref[...]
    # Single large-M MXU call over all K*TN gathered rows (leading-dim collapse
    # reshape is layout-free since TN % 8 == 0).
    nbr = nbr_ref[0].reshape(K * TN, C)
    y = jnp.dot(nbr, wn_ref[...], preferred_element_type=jnp.float32)
    acc = y[0:TN]
    for kk in range(1, K):                     # static K: pure running max
        acc = jnp.maximum(acc, y[kk * TN:(kk + 1) * TN])
    o_ref[0] = _leaky(acc + base).astype(o_ref.dtype)


def edgeconv_fused(pts, idx, cp, tn=512):
    # pts: (B, N, C) bf16, idx: (B, N, K) int32 -> (B, N, Cout) bf16
    B, N, C = pts.shape
    K = idx.shape[-1]
    Cout = cp['w_nbr'].shape[1]
    # Gather directly into (B, K, N, C): transpose only the tiny idx tensor,
    # never the big gathered neighbor tensor.
    # TODO(synk): do this gather inside the kernel (SMEM indices) to cut HBM
    # traffic from K*N*C to N*C per batch.
    idx_t = jnp.transpose(idx, (0, 2, 1))                    # (B, K, N)
    nbr = pts[jnp.arange(B)[:, None, None], idx_t]           # (B, K, N, C)
    TN = N if N <= tn else tn
    assert N % TN == 0, "N must be a multiple of the point tile"
    return pl.pallas_call(
        edgeconv_kernel,
        out_shape=jax.ShapeDtypeStruct((B, N, Cout), jnp.bfloat16),
        grid=(B, N // TN),
        in_specs=[pl.BlockSpec((1, K, TN, C), lambda b, n: (b, 0, n, 0)),
                  pl.BlockSpec((1, TN, C), lambda b, n: (b, n, 0)),
                  pl.BlockSpec((C, Cout), lambda b, n: (0, 0)),
                  pl.BlockSpec((C, Cout), lambda b, n: (0, 0)),
                  pl.BlockSpec((1, Cout), lambda b, n: (0, 0))],
        out_specs=pl.BlockSpec((1, TN, Cout), lambda b, n: (b, n, 0)),
        compiler_params=pltpu.CompilerParams(
            dimension_semantics=("parallel", "parallel")),
    )(nbr, pts, cp['w_nbr'], cp['w_ctr'], cp['shift'])


# ----------------------------------------------------------------------------
# Kernel 2: Multi-head attention over the batch axis (per point) + residual
# ----------------------------------------------------------------------------

def mha_kernel(x_ref, wqkv_ref, bqkv_ref, wo_ref, bo_ref, hm_ref, hmt_ref,
               o_ref, q_sc, k_sc, v_sc, att_sc, s_sc):
    # x_ref: (B, TN, E) bf16 — TN points, attention sequence length is B.
    # wqkv : (E, 3E) bf16 fused in-projection (softmax scaling folded into the
    #        q columns at param time); bqkv: (1, 3E) f32 (scaled likewise).
    # hm   : (E, H) bf16 head-indicator; hmt: (H, E) bf16 (its transpose).
    B, TN, E = x_ref.shape
    # --- fused QKV projection: one (B*TN, E) @ (E, 3E) MXU call -------------
    x2d = x_ref[...].reshape(B * TN, E)
    qkv = jnp.dot(x2d, wqkv_ref[...],
                  preferred_element_type=jnp.float32) + bqkv_ref[...]
    q_sc[...] = qkv[:, :E].reshape(B, TN, E).astype(q_sc.dtype)
    k_sc[...] = qkv[:, E:2 * E].reshape(B, TN, E).astype(k_sc.dtype)
    v_sc[...] = qkv[:, 2 * E:].reshape(B, TN, E).astype(v_sc.dtype)

    hm = hm_ref[...]                                   # (E, H) bf16
    hmt = hmt_ref[...]                                 # (H, E) bf16
    hmt_f = hmt.astype(jnp.float32)                    # hoisted (used per i)

    for i in range(B):                                 # query index (seq pos)
        q_i = q_sc[i]                                  # (TN, E) bf16
        m = None
        for j in range(B):                             # key index
            sj = jnp.dot(q_i * k_sc[j], hm,
                         preferred_element_type=jnp.float32)     # (TN, H)
            s_sc[j] = sj                               # stage in VMEM scratch
            m = sj if m is None else jnp.maximum(m, sj)
        den = None
        o = None
        for j in range(B):
            e_j = jnp.exp(s_sc[j] - m)                 # (TN, H) f32
            den = e_j if den is None else den + e_j
            # expand per-head weights back to E lanes: e_j @ hm^T -> (TN, E)
            pe = jnp.dot(e_j.astype(hmt.dtype), hmt,
                         preferred_element_type=jnp.float32)
            c = pe * v_sc[j].astype(jnp.float32)
            o = c if o is None else o + c
        # deferred softmax normalization: one reciprocal + one tiny matmul
        inv = pl.reciprocal(den, approx=True)          # (TN, H)
        att_sc[i] = o * jnp.dot(inv, hmt_f, preferred_element_type=jnp.float32)

    # --- fused output projection + residual: one (B*TN, E) @ (E, E) call ----
    att2d = att_sc[...].reshape(B * TN, E).astype(wo_ref.dtype)
    out = jnp.dot(att2d, wo_ref[...],
                  preferred_element_type=jnp.float32) + bo_ref[...]
    res = x_ref[...].reshape(B * TN, E).astype(jnp.float32)
    o_ref[...] = (out + res).reshape(B, TN, E).astype(o_ref.dtype)


def mha_fused(x, ap, tn=256):
    # x: (B, N, E) bf16 -> attn(x) + x, same layout/dtype.
    B, N, E = x.shape
    H = ap['hm'].shape[1]
    TN = N if N <= tn else tn
    assert N % TN == 0, "N must be a multiple of the point tile"
    return pl.pallas_call(
        mha_kernel,
        out_shape=jax.ShapeDtypeStruct((B, N, E), x.dtype),
        grid=(N // TN,),
        in_specs=[pl.BlockSpec((B, TN, E), lambda n: (0, n, 0)),
                  pl.BlockSpec((E, 3 * E), lambda n: (0, 0)),
                  pl.BlockSpec((1, 3 * E), lambda n: (0, 0)),
                  pl.BlockSpec((E, E), lambda n: (0, 0)),
                  pl.BlockSpec((1, E), lambda n: (0, 0)),
                  pl.BlockSpec((E, H), lambda n: (0, 0)),
                  pl.BlockSpec((H, E), lambda n: (0, 0))],
        out_specs=pl.BlockSpec((B, TN, E), lambda n: (0, n, 0)),
        scratch_shapes=[pltpu.VMEM((B, TN, E), jnp.bfloat16),   # q
                        pltpu.VMEM((B, TN, E), jnp.bfloat16),   # k
                        pltpu.VMEM((B, TN, E), jnp.bfloat16),   # v
                        pltpu.VMEM((B, TN, E), jnp.float32),    # attn out
                        pltpu.VMEM((B, TN, H), jnp.float32)],   # scores
        compiler_params=pltpu.CompilerParams(dimension_semantics=("parallel",)),
    )(x, ap['wqkv'], ap['bqkv'], ap['wo'], ap['bo'], ap['hm'], ap['hmt'])


# ----------------------------------------------------------------------------
# Kernel 3a: conv5 (+folded BN5) + LReLU + global max/mean pooling (gridded)
# ----------------------------------------------------------------------------

def pool_kernel(f1_ref, f2_ref, f3_ref, f4_ref,
                wa_ref, wb_ref, wc_ref, wd_ref, shift_ref,
                omax_ref, osum_ref, *, inv_n):
    nt = pl.program_id(1)
    # conv5 on the channel-concat of the four trunk features, expressed as a
    # sum of four matmuls (no in-kernel concatenation; BN5 scale folded in).
    y = (jnp.dot(f1_ref[0], wa_ref[...], preferred_element_type=jnp.float32)
         + jnp.dot(f2_ref[0], wb_ref[...], preferred_element_type=jnp.float32)
         + jnp.dot(f3_ref[0], wc_ref[...], preferred_element_type=jnp.float32)
         + jnp.dot(f4_ref[0], wd_ref[...], preferred_element_type=jnp.float32))
    y = _leaky(y + shift_ref[...])                       # (TNP, EMB)
    tmax = jnp.max(y, axis=0, keepdims=True)             # (1, EMB)
    tsum = jnp.sum(y, axis=0, keepdims=True)

    @pl.when(nt == 0)
    def _():
        omax_ref[0] = tmax
        osum_ref[0] = tsum

    @pl.when(nt > 0)
    def _():
        omax_ref[0] = jnp.maximum(omax_ref[0], tmax)
        osum_ref[0] = osum_ref[0] + tsum

    @pl.when(nt == pl.num_programs(1) - 1)
    def _():
        osum_ref[0] = osum_ref[0] * inv_n                # sum -> mean


def pool_fused(feats, c5, tn=512):
    B, N, _ = feats[0].shape
    EMB = c5['wa'].shape[1]
    c1, c2, c3, c4 = (f.shape[2] for f in feats)
    TNP = N if N <= tn else tn
    assert N % TNP == 0, "N must be a multiple of the point tile"
    kern = functools.partial(pool_kernel, inv_n=1.0 / N)
    xmax, xavg = pl.pallas_call(
        kern,
        out_shape=(jax.ShapeDtypeStruct((B, 1, EMB), jnp.float32),
                   jax.ShapeDtypeStruct((B, 1, EMB), jnp.float32)),
        grid=(B, N // TNP),
        in_specs=[pl.BlockSpec((1, TNP, c1), lambda b, n: (b, n, 0)),
                  pl.BlockSpec((1, TNP, c2), lambda b, n: (b, n, 0)),
                  pl.BlockSpec((1, TNP, c3), lambda b, n: (b, n, 0)),
                  pl.BlockSpec((1, TNP, c4), lambda b, n: (b, n, 0)),
                  pl.BlockSpec((c1, EMB), lambda b, n: (0, 0)),
                  pl.BlockSpec((c2, EMB), lambda b, n: (0, 0)),
                  pl.BlockSpec((c3, EMB), lambda b, n: (0, 0)),
                  pl.BlockSpec((c4, EMB), lambda b, n: (0, 0)),
                  pl.BlockSpec((1, EMB), lambda b, n: (0, 0))],
        out_specs=(pl.BlockSpec((1, 1, EMB), lambda b, n: (b, 0, 0)),
                   pl.BlockSpec((1, 1, EMB), lambda b, n: (b, 0, 0))),
        compiler_params=pltpu.CompilerParams(
            dimension_semantics=("parallel", "arbitrary")),
    )(feats[0], feats[1], feats[2], feats[3],
      c5['wa'], c5['wb'], c5['wc'], c5['wd'], c5['shift'])
    return xmax.reshape(B, EMB), xavg.reshape(B, EMB)


# ----------------------------------------------------------------------------
# Kernel 3b: MLP head (linear1+BN6+LReLU -> linear2+BN7+LReLU -> linear3)
# ----------------------------------------------------------------------------

def head_kernel(xmax_ref, xavg_ref, w1m_ref, w1a_ref, t6_ref,
                w2_ref, t7_ref, w3_ref, b3_ref, o_ref):
    # linear1 on cat([max, avg]) as two split matmuls; BN6/BN7 scales are
    # folded into w1/w2, linear2 bias folded into t7.
    h = (jnp.dot(xmax_ref[...], w1m_ref[...], preferred_element_type=jnp.float32)
         + jnp.dot(xavg_ref[...], w1a_ref[...], preferred_element_type=jnp.float32))
    h = _leaky(h + t6_ref[...])
    # TODO(synk): dropout dp1/dp2 are identity (eval-mode forward).
    h = _leaky(jnp.dot(h, w2_ref[...], preferred_element_type=jnp.float32)
               + t7_ref[...])
    o_ref[...] = jnp.dot(h, w3_ref[...],
                         preferred_element_type=jnp.float32) + b3_ref[...]


def head_fused(xmax, xavg, head):
    B = xmax.shape[0]
    ncls = head['w3'].shape[1]
    return pl.pallas_call(
        head_kernel,
        out_shape=jax.ShapeDtypeStruct((B, ncls), jnp.float32),
    )(xmax, xavg, head['w1m'], head['w1a'], head['t6'],
      head['w2'], head['t7'], head['w3'], head['b3'])


# ----------------------------------------------------------------------------
# Plain-JAX glue: kNN indices (data-dependent top_k / gather stays in XLA)
# ----------------------------------------------------------------------------

def knn_idx(pts, k):
    # pts: (B, N, C) bf16 -> (B, N, k) neighbor indices (self included).
    inner = jnp.einsum('bnc,bmc->bnm', pts, pts,
                       preferred_element_type=jnp.float32)
    sq = jnp.sum(jnp.square(pts.astype(jnp.float32)), axis=-1)
    neg_d2 = 2.0 * inner - sq[:, :, None] - sq[:, None, :]   # -||xi - xj||^2
    return jax.lax.top_k(neg_d2, k)[1]


# ----------------------------------------------------------------------------
# Full forward
# ----------------------------------------------------------------------------

def attention_dgcnn_forward(x, params, k):
    # x: (B, 3, N) f32
    cur = jnp.transpose(x, (0, 2, 1)).astype(jnp.bfloat16)   # (B, N, 3)
    feats = []
    for i in range(1, 5):
        idx = knn_idx(cur, k)
        y = edgeconv_fused(cur, idx, params[f'conv{i}'])      # (B, N, Cout)
        cur = mha_fused(y, params[f'attn{i}'])                # attn(y) + y
        feats.append(cur)
    xmax, xavg = pool_fused(feats, params['conv5'])           # (B, EMB) x2
    return head_fused(xmax, xavg, params['head'])             # (B, num_classes)


# ----------------------------------------------------------------------------
# Deterministic parameter construction (folded BN, kernel-friendly layouts)
# ----------------------------------------------------------------------------

def make_bn(key, c, eps=1e-5):
    k1, k2, k3, k4 = jax.random.split(key, 4)
    gamma = 1.0 + 0.1 * jax.random.normal(k1, (c,), jnp.float32)
    beta = 0.1 * jax.random.normal(k2, (c,), jnp.float32)
    mean = 0.1 * jax.random.normal(k3, (c,), jnp.float32)
    var = 1.0 + 0.2 * jax.random.uniform(k4, (c,), jnp.float32)
    scale = gamma * jax.lax.rsqrt(var + eps)
    shift = beta - mean * scale
    return scale.reshape(1, c), shift.reshape(1, c)


def make_edgeconv(key, cin2, cout):
    # conv weight rows laid out for edge features cat([nbr - ctr, ctr]).
    c = cin2 // 2
    kw, kb = jax.random.split(key)
    w = 0.1 * jax.random.normal(kw, (cin2, cout), jnp.float32)   # conv weight.T
    scale, shift = make_bn(kb, cout)
    wn = w[:c] * scale                       # BN scale folded into weights
    wc = (w[c:] - w[:c]) * scale             # hoisted center term
    return dict(w_nbr=wn.astype(jnp.bfloat16),
                w_ctr=wc.astype(jnp.bfloat16),
                shift=shift)


def make_attn(key, e, h):
    dh = e // h
    scaling = dh ** -0.5
    k1, k2, k3, k4 = jax.random.split(key, 4)
    w_in = 0.1 * jax.random.normal(k1, (3 * e, e), jnp.float32)   # in_proj_weight
    b_in = 0.1 * jax.random.normal(k2, (3 * e,), jnp.float32)
    w_out = 0.1 * jax.random.normal(k3, (e, e), jnp.float32)      # out_proj.weight
    b_out = 0.1 * jax.random.normal(k4, (e,), jnp.float32)
    # fold the softmax scaling into the q columns of the fused in-projection
    qscale = jnp.concatenate([jnp.full((e,), scaling, jnp.float32),
                              jnp.ones((2 * e,), jnp.float32)])
    wqkv = w_in.T * qscale[None, :]                               # (E, 3E)
    bqkv = (b_in * qscale).reshape(1, 3 * e)
    hm = (jnp.arange(e)[:, None] // dh == jnp.arange(h)[None, :]).astype(jnp.float32)
    return dict(wqkv=wqkv.astype(jnp.bfloat16),
                bqkv=bqkv,
                wo=w_out.T.astype(jnp.bfloat16),
                bo=b_out.reshape(1, e),
                hm=hm.astype(jnp.bfloat16),        # (E, H) head indicator
                hmt=hm.T.astype(jnp.bfloat16))     # (H, E)


if __name__ == "__main__":
    B, N, K = 2, 16, 4            # batch, points, k-nearest-neighbors
    EMB, HEADS, NCLS = 64, 4, 8   # args.emb_dims, args.att_heads, args.number_classes

    key = jax.random.PRNGKey(0)
    keys = jax.random.split(key, 24)
    x = jax.random.normal(keys[0], (B, 3, N), jnp.float32)

    params = {}
    ki = 1
    conv_dims = [(6, 64), (128, 64), (128, 128), (256, 256)]      # (Cin=2*prev, Cout)
    for i, (cin2, cout) in enumerate(conv_dims, start=1):
        params[f'conv{i}'] = make_edgeconv(keys[ki], cin2, cout); ki += 1
    for i, e in enumerate([64, 64, 128, 256], start=1):
        params[f'attn{i}'] = make_attn(keys[ki], e, HEADS); ki += 1

    # conv5 + BN5 (scale folded into the split weights)
    w5 = 0.1 * jax.random.normal(keys[ki], (512, EMB), jnp.float32); ki += 1
    s5, t5 = make_bn(keys[ki], EMB); ki += 1
    w5 = w5 * s5
    params['conv5'] = dict(wa=w5[0:64].astype(jnp.bfloat16),
                           wb=w5[64:128].astype(jnp.bfloat16),
                           wc=w5[128:256].astype(jnp.bfloat16),
                           wd=w5[256:512].astype(jnp.bfloat16),
                           shift=t5)

    # MLP head: fold BN6 scale into linear1, BN7 scale + linear2 bias into w2/t7
    w1 = 0.1 * jax.random.normal(keys[ki], (2 * EMB, 512), jnp.float32); ki += 1
    s6, t6 = make_bn(keys[ki], 512); ki += 1
    w1 = w1 * s6
    w2 = 0.1 * jax.random.normal(keys[ki], (512, 256), jnp.float32); ki += 1
    b2 = 0.1 * jax.random.normal(keys[ki], (256,), jnp.float32); ki += 1
    s7, t7 = make_bn(keys[ki], 256); ki += 1
    w2 = w2 * s7
    t7 = t7 + b2.reshape(1, 256) * s7
    w3 = 0.1 * jax.random.normal(keys[ki], (256, NCLS), jnp.float32); ki += 1
    b3 = 0.1 * jax.random.normal(keys[ki], (NCLS,), jnp.float32).reshape(1, NCLS); ki += 1
    params['head'] = dict(w1m=w1[:EMB], w1a=w1[EMB:], t6=t6,
                          w2=w2, t7=t7, w3=w3, b3=b3)

    fwd = jax.jit(functools.partial(attention_dgcnn_forward, k=K))
    out = fwd(x, params)
    jax.block_until_ready(out)
    assert out.shape == (B, NCLS) and out.dtype == jnp.float32
    print("KERNEL_OK")
</pallas_src>

<mosaic_0001>
module attributes {stable_mosaic.version = 11 : i64} {
  func.func @edgeconv_kernel(%arg0: i32, %arg1: i32, %arg2: memref<1x4x16x3xbf16, #tpu.memory_space<vmem>>, %arg3: memref<1x16x3xbf16, #tpu.memory_space<vmem>>, %arg4: memref<3x64xbf16, #tpu.memory_space<vmem>>, %arg5: memref<3x64xbf16, #tpu.memory_space<vmem>>, %arg6: memref<1x64xf32, #tpu.memory_space<vmem>>, %arg7: memref<1x16x64xbf16, #tpu.memory_space<vmem>>) attributes {dimension_semantics = [#tpu.dimension_semantics<parallel>, #tpu.dimension_semantics<parallel>], iteration_bounds = array<i64: 2, 1>, scalar_prefetch = 0 : i64, scratch_operands = 0 : i64, tpu.core_type = #tpu.core_type<tc>, window_params = [{transform_indices = @transform_0, window_bounds = array<i64: 1, 4, 16, 3>}, {transform_indices = @transform_1, window_bounds = array<i64: 1, 16, 3>}, {pipeline_mode = #tpu.pipeline_mode<synchronous>, transform_indices = @transform_2, window_bounds = array<i64: 3, 64>}, {pipeline_mode = #tpu.pipeline_mode<synchronous>, transform_indices = @transform_3, window_bounds = array<i64: 3, 64>}, {pipeline_mode = #tpu.pipeline_mode<synchronous>, transform_indices = @transform_4, window_bounds = array<i64: 1, 64>}, {transform_indices = @transform_5, window_bounds = array<i64: 1, 16, 64>}]} {
    %c0 = arith.constant 0 : index
    %c0_0 = arith.constant 0 : index
    %c0_1 = arith.constant 0 : index
    %0 = vector.load %arg3[%c0, %c0_0, %c0_1] : memref<1x16x3xbf16, #tpu.memory_space<vmem>>, vector<1x16x3xbf16>
    %1 = vector.shape_cast %0 : vector<1x16x3xbf16> to vector<16x3xbf16>
    %c0_2 = arith.constant 0 : index
    %c0_3 = arith.constant 0 : index
    %2 = vector.load %arg5[%c0_2, %c0_3] : memref<3x64xbf16, #tpu.memory_space<vmem>>, vector<3x64xbf16>
    %cst = arith.constant dense<0.000000e+00> : vector<16x64xf32>
    %3 = tpu.matmul %1, %2, %cst {dimension_numbers = #tpu.dot_dimension_numbers<[1], [0], [0], [1], [0, 0, 1, 1], [], []>} : vector<16x3xbf16>, vector<3x64xbf16>, vector<16x64xf32> -> vector<16x64xf32>
    %c0_4 = arith.constant 0 : index
    %c0_5 = arith.constant 0 : index
    %4 = vector.load %arg6[%c0_4, %c0_5] : memref<1x64xf32, #tpu.memory_space<vmem>>, vector<1x64xf32>
    %5 = vector.broadcast %4 : vector<1x64xf32> to vector<16x64xf32>
    %6 = arith.addf %3, %5 : vector<16x64xf32>
    %c0_6 = arith.constant 0 : index
    %c0_7 = arith.constant 0 : index
    %c0_8 = arith.constant 0 : index
    %c0_9 = arith.constant 0 : index
    %7 = vector.load %arg2[%c0_6, %c0_7, %c0_8, %c0_9] : memref<1x4x16x3xbf16, #tpu.memory_space<vmem>>, vector<1x4x16x3xbf16>
    %8 = vector.shape_cast %7 : vector<1x4x16x3xbf16> to vector<4x16x3xbf16>
    %9 = vector.shape_cast %8 : vector<4x16x3xbf16> to vector<64x3xbf16>
    %c0_10 = arith.constant 0 : index
    %c0_11 = arith.constant 0 : index
    %10 = vector.load %arg4[%c0_10, %c0_11] : memref<3x64xbf16, #tpu.memory_space<vmem>>, vector<3x64xbf16>
    %cst_12 = arith.constant dense<0.000000e+00> : vector<64x64xf32>
    %11 = tpu.matmul %9, %10, %cst_12 {dimension_numbers = #tpu.dot_dimension_numbers<[1], [0], [0], [1], [0, 0, 1, 1], [], []>} : vector<64x3xbf16>, vector<3x64xbf16>, vector<64x64xf32> -> vector<64x64xf32>
    %12 = vector.extract_strided_slice %11 {offsets = [0, 0], sizes = [16, 64], strides = [1, 1]} : vector<64x64xf32> to vector<16x64xf32>
    %13 = vector.extract_strided_slice %11 {offsets = [16, 0], sizes = [16, 64], strides = [1, 1]} : vector<64x64xf32> to vector<16x64xf32>
    %14 = arith.maximumf %12, %13 : vector<16x64xf32>
    %15 = vector.extract_strided_slice %11 {offsets = [32, 0], sizes = [16, 64], strides = [1, 1]} : vector<64x64xf32> to vector<16x64xf32>
    %16 = arith.maximumf %14, %15 : vector<16x64xf32>
    %17 = vector.extract_strided_slice %11 {offsets = [48, 0], sizes = [16, 64], strides = [1, 1]} : vector<64x64xf32> to vector<16x64xf32>
    %18 = arith.maximumf %16, %17 : vector<16x64xf32>
    %19 = arith.addf %18, %6 : vector<16x64xf32>
    %cst_13 = arith.constant 0.000000e+00 : f32
    %20 = vector.broadcast %cst_13 : f32 to vector<16x64xf32>
    %21 = arith.cmpf ogt, %19, %20 : vector<16x64xf32>
    %cst_14 = arith.constant 2.000000e-01 : f32
    %22 = vector.broadcast %cst_14 : f32 to vector<16x64xf32>
    %23 = arith.mulf %22, %19 : vector<16x64xf32>
    %24 = arith.select %21, %19, %23 : vector<16x64xi1>, vector<16x64xf32>
    %25 = arith.truncf %24 : vector<16x64xf32> to vector<16x64xbf16>
    %c0_15 = arith.constant 0 : index
    %c0_16 = arith.constant 0 : index
    %c0_17 = arith.constant 0 : index
    %26 = vector.load %arg7[%c0_15, %c0_16, %c0_17] : memref<1x16x64xbf16, #tpu.memory_space<vmem>>, vector<1x16x64xbf16>
    %27 = vector.shape_cast %26 : vector<1x16x64xbf16> to vector<16x64xbf16>
    %28 = vector.shape_cast %25 : vector<16x64xbf16> to vector<1x16x64xbf16>
    tpu.vector_store %arg7[%c0_15, %c0_16, %c0_17], %28 {strides = array<i32>} : memref<1x16x64xbf16, #tpu.memory_space<vmem>>, vector<1x16x64xbf16>,
    return
  }
  func.func @transform_0(%arg0: i32, %arg1: i32) -> (i32, i32, i32, i32) {
    %c0_i32 = arith.constant 0 : i32
    %c0_i32_0 = arith.constant 0 : i32
    %c0_i32_1 = arith.constant 0 : i32
    return %arg0, %c0_i32, %arg1, %c0_i32_0 : i32, i32, i32, i32
  }
  func.func @transform_1(%arg0: i32, %arg1: i32) -> (i32, i32, i32) {
    %c0_i32 = arith.constant 0 : i32
    %c0_i32_0 = arith.constant 0 : i32
    return %arg0, %arg1, %c0_i32 : i32, i32, i32
  }
  func.func @transform_2(%arg0: i32, %arg1: i32) -> (i32, i32) {
    %c0_i32 = arith.constant 0 : i32
    %c0_i32_0 = arith.constant 0 : i32
    %c0_i32_1 = arith.constant 0 : i32
    return %c0_i32, %c0_i32_0 : i32, i32
  }
  func.func @transform_3(%arg0: i32, %arg1: i32) -> (i32, i32) {
    %c0_i32 = arith.constant 0 : i32
    %c0_i32_0 = arith.constant 0 : i32
    %c0_i32_1 = arith.constant 0 : i32
    return %c0_i32, %c0_i32_0 : i32, i32
  }
  func.func @transform_4(%arg0: i32, %arg1: i32) -> (i32, i32) {
    %c0_i32 = arith.constant 0 : i32
    %c0_i32_0 = arith.constant 0 : i32
    %c0_i32_1 = arith.constant 0 : i32
    return %c0_i32, %c0_i32_0 : i32, i32
  }
  func.func @transform_5(%arg0: i32, %arg1: i32) -> (i32, i32, i32) {
    %c0_i32 = arith.constant 0 : i32
    %c0_i32_0 = arith.constant 0 : i32
    return %arg0, %arg1, %c0_i32 : i32, i32, i32
  }
}

module attributes {stable_mosaic.version = 11 : i64} {
  func.func @mha_kernel(%arg0: i32, %arg1: memref<2x16x64xbf16, #tpu.memory_space<vmem>>, %arg2: memref<64x192xbf16, #tpu.memory_space<vmem>>, %arg3: memref<1x192xf32, #tpu.memory_space<vmem>>, %arg4: memref<64x64xbf16, #tpu.memory_space<vmem>>, %arg5: memref<1x64xf32, #tpu.memory_space<vmem>>, %arg6: memref<64x4xbf16, #tpu.memory_space<vmem>>, %arg7: memref<4x64xbf16, #tpu.memory_space<vmem>>, %arg8: memref<2x16x64xbf16, #tpu.memory_space<vmem>>, %arg9: memref<2x16x64xbf16, #tpu.memory_space<vmem>>, %arg10: memref<2x16x64xbf16, #tpu.memory_space<vmem>>, %arg11: memref<2x16x64xbf16, #tpu.memory_space<vmem>>, %arg12: memref<2x16x64xf32, #tpu.memory_space<vmem>>, %arg13: memref<2x16x4xf32, #tpu.memory_space<vmem>>) attributes {dimension_semantics = [#tpu.dimension_semantics<parallel>], iteration_bounds = array<i64: 1>, scalar_prefetch = 0 : i64, scratch_operands = 5 : i64, tpu.core_type = #tpu.core_type<tc>, window_params = [{transform_indices = @transform_0, window_bounds = array<i64: 2, 16, 64>}, {pipeline_mode = #tpu.pipeline_mode<synchronous>, transform_indices = @transform_1, window_bounds = array<i64: 64, 192>}, {pipeline_mode = #tpu.pipeline_mode<synchronous>, transform_indices = @transform_2, window_bounds = array<i64: 1, 192>}, {pipeline_mode = #tpu.pipeline_mode<synchronous>, transform_indices = @transform_3, window_bounds = array<i64: 64, 64>}, {pipeline_mode = #tpu.pipeline_mode<synchronous>, transform_indices = @transform_4, window_bounds = array<i64: 1, 64>}, {pipeline_mode = #tpu.pipeline_mode<synchronous>, transform_indices = @transform_5, window_bounds = array<i64: 64, 4>}, {pipeline_mode = #tpu.pipeline_mode<synchronous>, transform_indices = @transform_6, window_bounds = array<i64: 4, 64>}, {transform_indices = @transform_7, window_bounds = array<i64: 2, 16, 64>}]} {
    %c0 = arith.constant 0 : index
    %c0_0 = arith.constant 0 : index
    %c0_1 = arith.constant 0 : index
    %0 = vector.load %arg1[%c0, %c0_0, %c0_1] : memref<2x16x64xbf16, #tpu.memory_space<vmem>>, vector<2x16x64xbf16>
    %1 = vector.shape_cast %0 : vector<2x16x64xbf16> to vector<32x64xbf16>
    %c0_2 = arith.constant 0 : index
    %c0_3 = arith.constant 0 : index
    %2 = vector.load %arg2[%c0_2, %c0_3] : memref<64x192xbf16, #tpu.memory_space<vmem>>, vector<64x192xbf16>
    %cst = arith.constant dense<0.000000e+00> : vector<32x192xf32>
    %3 = tpu.matmul %1, %2, %cst {dimension_numbers = #tpu.dot_dimension_numbers<[1], [0], [0], [1], [0, 0, 1, 1], [], []>} : vector<32x64xbf16>, vector<64x192xbf16>, vector<32x192xf32> -> vector<32x192xf32>
    %c0_4 = arith.constant 0 : index
    %c0_5 = arith.constant 0 : index
    %4 = vector.load %arg3[%c0_4, %c0_5] : memref<1x192xf32, #tpu.memory_space<vmem>>, vector<1x192xf32>
    %5 = vector.broadcast %4 : vector<1x192xf32> to vector<32x192xf32>
    %6 = arith.addf %3, %5 : vector<32x192xf32>
    %7 = vector.extract_strided_slice %6 {offsets = [0, 0], sizes = [32, 64], strides = [1, 1]} : vector<32x192xf32> to vector<32x64xf32>
    %8 = vector.shape_cast %7 : vector<32x64xf32> to vector<2x16x64xf32>
    %9 = arith.truncf %8 : vector<2x16x64xf32> to vector<2x16x64xbf16>
    %c0_6 = arith.constant 0 : index
    %c0_7 = arith.constant 0 : index
    %c0_8 = arith.constant 0 : index
    %10 = vector.load %arg9[%c0_6, %c0_7, %c0_8] : memref<2x16x64xbf16, #tpu.memory_space<vmem>>, vector<2x16x64xbf16>
    tpu.vector_store %arg9[%c0_6, %c0_7, %c0_8], %9 {strides = array<i32>} : memref<2x16x64xbf16, #tpu.memory_space<vmem>>, vector<2x16x64xbf16>,
    %11 = vector.extract_strided_slice %6 {offsets = [0, 64], sizes = [32, 64], strides = [1, 1]} : vector<32x192xf32> to vector<32x64xf32>
    %12 = vector.shape_cast %11 : vector<32x64xf32> to vector<2x16x64xf32>
    %13 = arith.truncf %12 : vector<2x16x64xf32> to vector<2x16x64xbf16>
    %c0_9 = arith.constant 0 : index
    %c0_10 = arith.constant 0 : index
    %c0_11 = arith.constant 0 : index
    %14 = vector.load %arg10[%c0_9, %c0_10, %c0_11] : memref<2x16x64xbf16, #tpu.memory_space<vmem>>, vector<2x16x64xbf16>
    tpu.vector_store %arg10[%c0_9, %c0_10, %c0_11], %13 {strides = array<i32>} : memref<2x16x64xbf16, #tpu.memory_space<vmem>>, vector<2x16x64xbf16>,
    %15 = vector.extract_strided_slice %6 {offsets = [0, 128], sizes = [32, 64], strides = [1, 1]} : vector<32x192xf32> to vector<32x64xf32>
    %16 = vector.shape_cast %15 : vector<32x64xf32> to vector<2x16x64xf32>
    %17 = arith.truncf %16 : vector<2x16x64xf32> to vector<2x16x64xbf16>
    %c0_12 = arith.constant 0 : index
    %c0_13 = arith.constant 0 : index
    %c0_14 = arith.constant 0 : index
    %18 = vector.load %arg11[%c0_12, %c0_13, %c0_14] : memref<2x16x64xbf16, #tpu.memory_space<vmem>>, vector<2x16x64xbf16>
    tpu.vector_store %arg11[%c0_12, %c0_13, %c0_14], %17 {strides = array<i32>} : memref<2x16x64xbf16, #tpu.memory_space<vmem>>, vector<2x16x64xbf16>,
    %c0_15 = arith.constant 0 : index
    %c0_16 = arith.constant 0 : index
    %19 = vector.load %arg6[%c0_15, %c0_16] : memref<64x4xbf16, #tpu.memory_space<vmem>>, vector<64x4xbf16>
    %c0_17 = arith.constant 0 : index
    %c0_18 = arith.constant 0 : index
    %20 = vector.load %arg7[%c0_17, %c0_18] : memref<4x64xbf16, #tpu.memory_space<vmem>>, vector<4x64xbf16>
    %21 = arith.extf %20 : vector<4x64xbf16> to vector<4x64xf32>
    %c0_19 = arith.constant 0 : index
    %c0_20 = arith.constant 0 : index
    %c0_21 = arith.constant 0 : index
    %22 = vector.load %arg9[%c0_19, %c0_20, %c0_21] : memref<2x16x64xbf16, #tpu.memory_space<vmem>>, vector<1x16x64xbf16>
    %23 = vector.shape_cast %22 : vector<1x16x64xbf16> to vector<16x64xbf16>
    %c0_22 = arith.constant 0 : index
    %c0_23 = arith.constant 0 : index
    %c0_24 = arith.constant 0 : index
    %24 = vector.load %arg10[%c0_22, %c0_23, %c0_24] : memref<2x16x64xbf16, #tpu.memory_space<vmem>>, vector<1x16x64xbf16>
    %25 = vector.shape_cast %24 : vector<1x16x64xbf16> to vector<16x64xbf16>
    %26 = arith.mulf %23, %25 : vector<16x64xbf16>
    %cst_25 = arith.constant dense<0.000000e+00> : vector<16x4xf32>
    %27 = tpu.matmul %26, %19, %cst_25 {dimension_numbers = #tpu.dot_dimension_numbers<[1], [0], [0], [1], [0, 0, 1, 1], [], []>} : vector<16x64xbf16>, vector<64x4xbf16>, vector<16x4xf32> -> vector<16x4xf32>
    %c0_26 = arith.constant 0 : index
    %c0_27 = arith.constant 0 : index
    %c0_28 = arith.constant 0 : index
    %28 = vector.load %arg13[%c0_26, %c0_27, %c0_28] : memref<2x16x4xf32, #tpu.memory_space<vmem>>, vector<1x16x4xf32>
    %29 = vector.shape_cast %28 : vector<1x16x4xf32> to vector<16x4xf32>
    %30 = vector.shape_cast %27 : vector<16x4xf32> to vector<1x16x4xf32>
    tpu.vector_store %arg13[%c0_26, %c0_27, %c0_28], %30 {strides = array<i32>} : memref<2x16x4xf32, #tpu.memory_space<vmem>>, vector<1x16x4xf32>,
    %c1 = arith.constant 1 : index
    %c0_29 = arith.constant 0 : index
    %c0_30 = arith.constant 0 : index
    %31 = vector.load %arg10[%c1, %c0_29, %c0_30] : memref<2x16x64xbf16, #tpu.memory_space<vmem>>, vector<1x16x64xbf16>
    %32 = vector.shape_cast %31 : vector<1x16x64xbf16> to vector<16x64xbf16>
    %33 = arith.mulf %23, %32 : vector<16x64xbf16>
    %cst_31 = arith.constant dense<0.000000e+00> : vector<16x4xf32>
    %34 = tpu.matmul %33, %19, %cst_31 {dimension_numbers = #tpu.dot_dimension_numbers<[1], [0], [0], [1], [0, 0, 1, 1], [], []>} : vector<16x64xbf16>, vector<64x4xbf16>, vector<16x4xf32> -> vector<16x4xf32>
    %c1_32 = arith.constant 1 : index
    %c0_33 = arith.constant 0 : index
    %c0_34 = arith.constant 0 : index
    %35 = vector.load %arg13[%c1_32, %c0_33, %c0_34] : memref<2x16x4xf32, #tpu.memory_space<vmem>>, vector<1x16x4xf32>
    %36 = vector.shape_cast %35 : vector<1x16x4xf32> to vector<16x4xf32>
    %37 = vector.shape_cast %34 : vector<16x4xf32> to vector<1x16x4xf32>
    tpu.vector_store %arg13[%c1_32, %c0_33, %c0_34], %37 {strides = array<i32>} : memref<2x16x4xf32, #tpu.memory_space<vmem>>, vector<1x16x4xf32>,
    %38 = arith.maximumf %27, %34 : vector<16x4xf32>
    %c0_35 = arith.constant 0 : index
    %c0_36 = arith.constant 0 : index
    %c0_37 = arith.constant 0 : index
    %39 = vector.load %arg13[%c0_35, %c0_36, %c0_37] : memref<2x16x4xf32, #tpu.memory_space<vmem>>, vector<1x16x4xf32>
    %40 = vector.shape_cast %39 : vector<1x16x4xf32> to vector<16x4xf32>
    %41 = arith.subf %40, %38 : vector<16x4xf32>
    %42 = math.exp %41 : vector<16x4xf32>
    %43 = arith.truncf %42 : vector<16x4xf32> to vector<16x4xbf16>
    %cst_38 = arith.constant dense<0.000000e+00> : vector<16x64xf32>
    %44 = tpu.matmul %43, %20, %cst_38 {dimension_numbers = #tpu.dot_dimension_numbers<[1], [0], [0], [1], [0, 0, 1, 1], [], []>} : vector<16x4xbf16>, vector<4x64xbf16>, vector<16x64xf32> -> vector<16x64xf32>
    %c0_39 = arith.constant 0 : index
    %c0_40 = arith.constant 0 : index
    %c0_41 = arith.constant 0 : index
    %45 = vector.load %arg11[%c0_39, %c0_40, %c0_41] : memref<2x16x64xbf16, #tpu.memory_space<vmem>>, vector<1x16x64xbf16>
    %46 = vector.shape_cast %45 : vector<1x16x64xbf16> to vector<16x64xbf16>
    %47 = arith.extf %46 : vector<16x64xbf16> to vector<16x64xf32>
    %48 = arith.mulf %44, %47 : vector<16x64xf32>
    %c1_42 = arith.constant 1 : index
    %c0_43 = arith.constant 0 : index
    %c0_44 = arith.constant 0 : index
    %49 = vector.load %arg13[%c1_42, %c0_43, %c0_44] : memref<2x16x4xf32, #tpu.memory_space<vmem>>, vector<1x16x4xf32>
    %50 = vector.shape_cast %49 : vector<1x16x4xf32> to vector<16x4xf32>
    %51 = arith.subf %50, %38 : vector<16x4xf32>
    %52 = math.exp %51 : vector<16x4xf32>
    %53 = arith.addf %42, %52 : vector<16x4xf32>
    %54 = arith.truncf %52 : vector<16x4xf32> to vector<16x4xbf16>
    %cst_45 = arith.constant dense<0.000000e+00> : vector<16x64xf32>
    %55 = tpu.matmul %54, %20, %cst_45 {dimension_numbers = #tpu.dot_dimension_numbers<[1], [0], [0], [1], [0, 0, 1, 1], [], []>} : vector<16x4xbf16>, vector<4x64xbf16>, vector<16x64xf32> -> vector<16x64xf32>
    %c1_46 = arith.constant 1 : index
    %c0_47 = arith.constant 0 : index
    %c0_48 = arith.constant 0 : index
    %56 = vector.load %arg11[%c1_46, %c0_47, %c0_48] : memref<2x16x64xbf16, #tpu.memory_space<vmem>>, vector<1x16x64xbf16>
    %57 = vector.shape_cast %56 : vector<1x16x64xbf16> to vector<16x64xbf16>
    %58 = arith.extf %57 : vector<16x64xbf16> to vector<16x64xf32>
    %59 = arith.mulf %55, %58 : vector<16x64xf32>
    %60 = arith.addf %48, %59 : vector<16x64xf32>
    %61 = tpu.reciprocal %53 {approx = true} : vector<16x4xf32> -> vector<16x4xf32>
    %cst_49 = arith.constant dense<0.000000e+00> : vector<16x64xf32>
    %62 = tpu.matmul %61, %21, %cst_49 {dimension_numbers = #tpu.dot_dimension_numbers<[1], [0], [0], [1], [0, 0, 1, 1], [], []>} : vector<16x4xf32>, vector<4x64xf32>, vector<16x64xf32> -> vector<16x64xf32>
    %63 = arith.mulf %60, %62 : vector<16x64xf32>
    %c0_50 = arith.constant 0 : index
    %c0_51 = arith.constant 0 : index
    %c0_52 = arith.constant 0 : index
    %64 = vector.load %arg12[%c0_50, %c0_51, %c0_52] : memref<2x16x64xf32, #tpu.memory_space<vmem>>, vector<1x16x64xf32>
    %65 = vector.shape_cast %64 : vector<1x16x64xf32> to vector<16x64xf32>
    %66 = vector.shape_cast %63 : vector<16x64xf32> to vector<1x16x64xf32>
    tpu.vector_store %arg12[%c0_50, %c0_51, %c0_52], %66 {strides = array<i32>} : memref<2x16x64xf32, #tpu.memory_space<vmem>>, vector<1x16x64xf32>,
    %c1_53 = arith.constant 1 : index
    %c0_54 = arith.constant 0 : index
    %c0_55 = arith.constant 0 : index
    %67 = vector.load %arg9[%c1_53, %c0_54, %c0_55] : memref<2x16x64xbf16, #tpu.memory_space<vmem>>, vector<1x16x64xbf16>
    %68 = vector.shape_cast %67 : vector<1x16x64xbf16> to vector<16x64xbf16>
    %c0_56 = arith.constant 0 : index
    %c0_57 = arith.constant 0 : index
    %c0_58 = arith.constant 0 : index
    %69 = vector.load %arg10[%c0_56, %c0_57, %c0_58] : memref<2x16x64xbf16, #tpu.memory_space<vmem>>, vector<1x16x64xbf16>
    %70 = vector.shape_cast %69 : vector<1x16x64xbf16> to vector<16x64xbf16>
    %71 = arith.mulf %68, %70 : vector<16x64xbf16>
    %cst_59 = arith.constant dense<0.000000e+00> : vector<16x4xf32>
    %72 = tpu.matmul %71, %19, %cst_59 {dimension_numbers = #tpu.dot_dimension_numbers<[1], [0], [0], [1], [0, 0, 1, 1], [], []>} : vector<16x64xbf16>, vector<64x4xbf16>, vector<16x4xf32> -> vector<16x4xf32>
    %c0_60 = arith.constant 0 : index
    %c0_61 = arith.constant 0 : index
    %c0_62 = arith.constant 0 : index
    %73 = vector.load %arg13[%c0_60, %c0_61, %c0_62] : memref<2x16x4xf32, #tpu.memory_space<vmem>>, vector<1x16x4xf32>
    %74 = vector.shape_cast %73 : vector<1x16x4xf32> to vector<16x4xf32>
    %75 = vector.shape_cast %72 : vector<16x4xf32> to vector<1x16x4xf32>
    tpu.vector_store %arg13[%c0_60, %c0_61, %c0_62], %75 {strides = array<i32>} : memref<2x16x4xf32, #tpu.memory_space<vmem>>, vector<1x16x4xf32>,
    %c1_63 = arith.constant 1 : index
    %c0_64 = arith.constant 0 : index
    %c0_65 = arith.constant 0 : index
    %76 = vector.load %arg10[%c1_63, %c0_64, %c0_65] : memref<2x16x64xbf16, #tpu.memory_space<vmem>>, vector<1x16x64xbf16>
    %77 = vector.shape_cast %76 : vector<1x16x64xbf16> to vector<16x64xbf16>
    %78 = arith.mulf %68, %77 : vector<16x64xbf16>
    %cst_66 = arith.constant dense<0.000000e+00> : vector<16x4xf32>
    %79 = tpu.matmul %78, %19, %cst_66 {dimension_numbers = #tpu.dot_dimension_numbers<[1], [0], [0], [1], [0, 0, 1, 1], [], []>} : vector<16x64xbf16>, vector<64x4xbf16>, vector<16x4xf32> -> vector<16x4xf32>
    %c1_67 = arith.constant 1 : index
    %c0_68 = arith.constant 0 : index
    %c0_69 = arith.constant 0 : index
    %80 = vector.load %arg13[%c1_67, %c0_68, %c0_69] : memref<2x16x4xf32, #tpu.memory_space<vmem>>, vector<1x16x4xf32>
    %81 = vector.shape_cast %80 : vector<1x16x4xf32> to vector<16x4xf32>
    %82 = vector.shape_cast %79 : vector<16x4xf32> to vector<1x16x4xf32>
    tpu.vector_store %arg13[%c1_67, %c0_68, %c0_69], %82 {strides = array<i32>} : memref<2x16x4xf32, #tpu.memory_space<vmem>>, vector<1x16x4xf32>,
    %83 = arith.maximumf %72, %79 : vector<16x4xf32>
    %c0_70 = arith.constant 0 : index
    %c0_71 = arith.constant 0 : index
    %c0_72 = arith.constant 0 : index
    %84 = vector.load %arg13[%c0_70, %c0_71, %c0_72] : memref<2x16x4xf32, #tpu.memory_space<vmem>>, vector<1x16x4xf32>
    %85 = vector.shape_cast %84 : vector<1x16x4xf32> to vector<16x4xf32>
    %86 = arith.subf %85, %83 : vector<16x4xf32>
    %87 = math.exp %86 : vector<16x4xf32>
    %88 = arith.truncf %87 : vector<16x4xf32> to vector<16x4xbf16>
    %cst_73 = arith.constant dense<0.000000e+00> : vector<16x64xf32>
    %89 = tpu.matmul %88, %20, %cst_73 {dimension_numbers = #tpu.dot_dimension_numbers<[1], [0], [0], [1], [0, 0, 1, 1], [], []>} : vector<16x4xbf16>, vector<4x64xbf16>, vector<16x64xf32> -> vector<16x64xf32>
    %c0_74 = arith.constant 0 : index
    %c0_75 = arith.constant 0 : index
    %c0_76 = arith.constant 0 : index
    %90 = vector.load %arg11[%c0_74, %c0_75, %c0_76] : memref<2x16x64xbf16, #tpu.memory_space<vmem>>, vector<1x16x64xbf16>
    %91 = vector.shape_cast %90 : vector<1x16x64xbf16> to vector<16x64xbf16>
    %92 = arith.extf %91 : vector<16x64xbf16> to vector<16x64xf32>
    %93 = arith.mulf %89, %92 : vector<16x64xf32>
    %c1_77 = arith.constant 1 : index
    %c0_78 = arith.constant 0 : index
    %c0_79 = arith.constant 0 : index
    %94 = vector.load %arg13[%c1_77, %c0_78, %c0_79] : memref<2x16x4xf32, #tpu.memory_space<vmem>>, vector<1x16x4xf32>
    %95 = vector.shape_cast %94 : vector<1x16x4xf32> to vector<16x4xf32>
    %96 = arith.subf %95, %83 : vector<16x4xf32>
    %97 = math.exp %96 : vector<16x4xf32>
    %98 = arith.addf %87, %97 : vector<16x4xf32>
    %99 = arith.truncf %97 : vector<16x4xf32> to vector<16x4xbf16>
    %cst_80 = arith.constant dense<0.000000e+00> : vector<16x64xf32>
    %100 = tpu.matmul %99, %20, %cst_80 {dimension_numbers = #tpu.dot_dimension_numbers<[1], [0], [0], [1], [0, 0, 1, 1], [], []>} : vector<16x4xbf16>, vector<4x64xbf16>, vector<16x64xf32> -> vector<16x64xf32>
    %c1_81 = arith.constant 1 : index
    %c0_82 = arith.constant 0 : index
    %c0_83 = arith.constant 0 : index
    %101 = vector.load %arg11[%c1_81, %c0_82, %c0_83] : memref<2x16x64xbf16, #tpu.memory_space<vmem>>, vector<1x16x64xbf16>
    %102 = vector.shape_cast %101 : vector<1x16x64xbf16> to vector<16x64xbf16>
    %103 = arith.extf %102 : vector<16x64xbf16> to vector<16x64xf32>
    %104 = arith.mulf %100, %103 : vector<16x64xf32>
    %105 = arith.addf %93, %104 : vector<16x64xf32>
    %106 = tpu.reciprocal %98 {approx = true} : vector<16x4xf32> -> vector<16x4xf32>
    %cst_84 = arith.constant dense<0.000000e+00> : vector<16x64xf32>
    %107 = tpu.matmul %106, %21, %cst_84 {dimension_numbers = #tpu.dot_dimension_numbers<[1], [0], [0], [1], [0, 0, 1, 1], [], []>} : vector<16x4xf32>, vector<4x64xf32>, vector<16x64xf32> -> vector<16x64xf32>
    %108 = arith.mulf %105, %107 : vector<16x64xf32>
    %c1_85 = arith.constant 1 : index
    %c0_86 = arith.constant 0 : index
    %c0_87 = arith.constant 0 : index
    %109 = vector.load %arg12[%c1_85, %c0_86, %c0_87] : memref<2x16x64xf32, #tpu.memory_space<vmem>>, vector<1x16x64xf32>
    %110 = vector.shape_cast %109 : vector<1x16x64xf32> to vector<16x64xf32>
    %111 = vector.shape_cast %108 : vector<16x64xf32> to vector<1x16x64xf32>
    tpu.vector_store %arg12[%c1_85, %c0_86, %c0_87], %111 {strides = array<i32>} : memref<2x16x64xf32, #tpu.memory_space<vmem>>, vector<1x16x64xf32>,
    %c0_88 = arith.constant 0 : index
    %c0_89 = arith.constant 0 : index
    %c0_90 = arith.constant 0 : index
    %112 = vector.load %arg12[%c0_88, %c0_89, %c0_90] : memref<2x16x64xf32, #tpu.memory_space<vmem>>, vector<2x16x64xf32>
    %113 = vector.shape_cast %112 : vector<2x16x64xf32> to vector<32x64xf32>
    %114 = arith.truncf %113 : vector<32x64xf32> to vector<32x64xbf16>
    %c0_91 = arith.constant 0 : index
    %c0_92 = arith.constant 0 : index
    %115 = vector.load %arg4[%c0_91, %c0_92] : memref<64x64xbf16, #tpu.memory_space<vmem>>, vector<64x64xbf16>
    %cst_93 = arith.constant dense<0.000000e+00> : vector<32x64xf32>
    %116 = tpu.matmul %114, %115, %cst_93 {dimension_numbers = #tpu.dot_dimension_numbers<[1], [0], [0], [1], [0, 0, 1, 1], [], []>} : vector<32x64xbf16>, vector<64x64xbf16>, vector<32x64xf32> -> vector<32x64xf32>
    %c0_94 = arith.constant 0 : index
    %c0_95 = arith.constant 0 : index
    %117 = vector.load %arg5[%c0_94, %c0_95] : memref<1x64xf32, #tpu.memory_space<vmem>>, vector<1x64xf32>
    %118 = vector.broadcast %117 : vector<1x64xf32> to vector<32x64xf32>
    %119 = arith.addf %116, %118 : vector<32x64xf32>
    %c0_96 = arith.constant 0 : index
    %c0_97 = arith.constant 0 : index
    %c0_98 = arith.constant 0 : index
    %120 = vector.load %arg1[%c0_96, %c0_97, %c0_98] : memref<2x16x64xbf16, #tpu.memory_space<vmem>>, vector<2x16x64xbf16>
    %121 = vector.shape_cast %120 : vector<2x16x64xbf16> to vector<32x64xbf16>
    %122 = arith.extf %121 : vector<32x64xbf16> to vector<32x64xf32>
    %123 = arith.addf %119, %122 : vector<32x64xf32>
    %124 = vector.shape_cast %123 : vector<32x64xf32> to vector<2x16x64xf32>
    %125 = arith.truncf %124 : vector<2x16x64xf32> to vector<2x16x64xbf16>
    %c0_99 = arith.constant 0 : index
    %c0_100 = arith.constant 0 : index
    %c0_101 = arith.constant 0 : index
    %126 = vector.load %arg8[%c0_99, %c0_100, %c0_101] : memref<2x16x64xbf16, #tpu.memory_space<vmem>>, vector<2x16x64xbf16>
    tpu.vector_store %arg8[%c0_99, %c0_100, %c0_101], %125 {strides = array<i32>} : memref<2x16x64xbf16, #tpu.memory_space<vmem>>, vector<2x16x64xbf16>,
    return
  }
  func.func @transform_0(%arg0: i32) -> (i32, i32, i32) {
    %c0_i32 = arith.constant 0 : i32
    %c0_i32_0 = arith.constant 0 : i32
    %c0_i32_1 = arith.constant 0 : i32
    return %c0_i32, %arg0, %c0_i32_0 : i32, i32, i32
  }
  func.func @transform_1(%arg0: i32) -> (i32, i32) {
    %c0_i32 = arith.constant 0 : i32
    %c0_i32_0 = arith.constant 0 : i32
    %c0_i32_1 = arith.constant 0 : i32
    return %c0_i32, %c0_i32_0 : i32, i32
  }
  func.func @transform_2(%arg0: i32) -> (i32, i32) {
    %c0_i32 = arith.constant 0 : i32
    %c0_i32_0 = arith.constant 0 : i32
    %c0_i32_1 = arith.constant 0 : i32
    return %c0_i32, %c0_i32_0 : i32, i32
  }
  func.func @transform_3(%arg0: i32) -> (i32, i32) {
    %c0_i32 = arith.constant 0 : i32
    %c0_i32_0 = arith.constant 0 : i32
    %c0_i32_1 = arith.constant 0 : i32
    return %c0_i32, %c0_i32_0 : i32, i32
  }
  func.func @transform_4(%arg0: i32) -> (i32, i32) {
    %c0_i32 = arith.constant 0 : i32
    %c0_i32_0 = arith.constant 0 : i32
    %c0_i32_1 = arith.constant 0 : i32
    return %c0_i32, %c0_i32_0 : i32, i32
  }
  func.func @transform_5(%arg0: i32) -> (i32, i32) {
    %c0_i32 = arith.constant 0 : i32
    %c0_i32_0 = arith.constant 0 : i32
    %c0_i32_1 = arith.constant 0 : i32
    return %c0_i32, %c0_i32_0 : i32, i32
  }
  func.func @transform_6(%arg0: i32) -> (i32, i32) {
    %c0_i32 = arith.constant 0 : i32
    %c0_i32_0 = arith.constant 0 : i32
    %c0_i32_1 = arith.constant 0 : i32
    return %c0_i32, %c0_i32_0 : i32, i32
  }
  func.func @transform_7(%arg0: i32) -> (i32, i32, i32) {
    %c0_i32 = arith.constant 0 : i32
    %c0_i32_0 = arith.constant 0 : i32
    %c0_i32_1 = arith.constant 0 : i32
    return %c0_i32, %arg0, %c0_i32_0 : i32, i32, i32
  }
}

module attributes {stable_mosaic.version = 11 : i64} {
  func.func @edgeconv_kernel(%arg0: i32, %arg1: i32, %arg2: memref<1x4x16x64xbf16, #tpu.memory_space<vmem>>, %arg3: memref<1x16x64xbf16, #tpu.memory_space<vmem>>, %arg4: memref<64x64xbf16, #tpu.memory_space<vmem>>, %arg5: memref<64x64xbf16, #tpu.memory_space<vmem>>, %arg6: memref<1x64xf32, #tpu.memory_space<vmem>>, %arg7: memref<1x16x64xbf16, #tpu.memory_space<vmem>>) attributes {dimension_semantics = [#tpu.dimension_semantics<parallel>, #tpu.dimension_semantics<parallel>], iteration_bounds = array<i64: 2, 1>, scalar_prefetch = 0 : i64, scratch_operands = 0 : i64, tpu.core_type = #tpu.core_type<tc>, window_params = [{transform_indices = @transform_0, window_bounds = array<i64: 1, 4, 16, 64>}, {transform_indices = @transform_1, window_bounds = array<i64: 1, 16, 64>}, {pipeline_mode = #tpu.pipeline_mode<synchronous>, transform_indices = @transform_2, window_bounds = array<i64: 64, 64>}, {pipeline_mode = #tpu.pipeline_mode<synchronous>, transform_indices = @transform_3, window_bounds = array<i64: 64, 64>}, {pipeline_mode = #tpu.pipeline_mode<synchronous>, transform_indices = @transform_4, window_bounds = array<i64: 1, 64>}, {transform_indices = @transform_5, window_bounds = array<i64: 1, 16, 64>}]} {
    %c0 = arith.constant 0 : index
    %c0_0 = arith.constant 0 : index
    %c0_1 = arith.constant 0 : index
    %0 = vector.load %arg3[%c0, %c0_0, %c0_1] : memref<1x16x64xbf16, #tpu.memory_space<vmem>>, vector<1x16x64xbf16>
    %1 = vector.shape_cast %0 : vector<1x16x64xbf16> to vector<16x64xbf16>
    %c0_2 = arith.constant 0 : index
    %c0_3 = arith.constant 0 : index
    %2 = vector.load %arg5[%c0_2, %c0_3] : memref<64x64xbf16, #tpu.memory_space<vmem>>, vector<64x64xbf16>
    %cst = arith.constant dense<0.000000e+00> : vector<16x64xf32>
    %3 = tpu.matmul %1, %2, %cst {dimension_numbers = #tpu.dot_dimension_numbers<[1], [0], [0], [1], [0, 0, 1, 1], [], []>} : vector<16x64xbf16>, vector<64x64xbf16>, vector<16x64xf32> -> vector<16x64xf32>
    %c0_4 = arith.constant 0 : index
    %c0_5 = arith.constant 0 : index
    %4 = vector.load %arg6[%c0_4, %c0_5] : memref<1x64xf32, #tpu.memory_space<vmem>>, vector<1x64xf32>
    %5 = vector.broadcast %4 : vector<1x64xf32> to vector<16x64xf32>
    %6 = arith.addf %3, %5 : vector<16x64xf32>
    %c0_6 = arith.constant 0 : index
    %c0_7 = arith.constant 0 : index
    %c0_8 = arith.constant 0 : index
    %c0_9 = arith.constant 0 : index
    %7 = vector.load %arg2[%c0_6, %c0_7, %c0_8, %c0_9] : memref<1x4x16x64xbf16, #tpu.memory_space<vmem>>, vector<1x4x16x64xbf16>
    %8 = vector.shape_cast %7 : vector<1x4x16x64xbf16> to vector<4x16x64xbf16>
    %9 = vector.shape_cast %8 : vector<4x16x64xbf16> to vector<64x64xbf16>
    %c0_10 = arith.constant 0 : index
    %c0_11 = arith.constant 0 : index
    %10 = vector.load %arg4[%c0_10, %c0_11] : memref<64x64xbf16, #tpu.memory_space<vmem>>, vector<64x64xbf16>
    %cst_12 = arith.constant dense<0.000000e+00> : vector<64x64xf32>
    %11 = tpu.matmul %9, %10, %cst_12 {dimension_numbers = #tpu.dot_dimension_numbers<[1], [0], [0], [1], [0, 0, 1, 1], [], []>} : vector<64x64xbf16>, vector<64x64xbf16>, vector<64x64xf32> -> vector<64x64xf32>
    %12 = vector.extract_strided_slice %11 {offsets = [0, 0], sizes = [16, 64], strides = [1, 1]} : vector<64x64xf32> to vector<16x64xf32>
    %13 = vector.extract_strided_slice %11 {offsets = [16, 0], sizes = [16, 64], strides = [1, 1]} : vector<64x64xf32> to vector<16x64xf32>
    %14 = arith.maximumf %12, %13 : vector<16x64xf32>
    %15 = vector.extract_strided_slice %11 {offsets = [32, 0], sizes = [16, 64], strides = [1, 1]} : vector<64x64xf32> to vector<16x64xf32>
    %16 = arith.maximumf %14, %15 : vector<16x64xf32>
    %17 = vector.extract_strided_slice %11 {offsets = [48, 0], sizes = [16, 64], strides = [1, 1]} : vector<64x64xf32> to vector<16x64xf32>
    %18 = arith.maximumf %16, %17 : vector<16x64xf32>
    %19 = arith.addf %18, %6 : vector<16x64xf32>
    %cst_13 = arith.constant 0.000000e+00 : f32
    %20 = vector.broadcast %cst_13 : f32 to vector<16x64xf32>
    %21 = arith.cmpf ogt, %19, %20 : vector<16x64xf32>
    %cst_14 = arith.constant 2.000000e-01 : f32
    %22 = vector.broadcast %cst_14 : f32 to vector<16x64xf32>
    %23 = arith.mulf %22, %19 : vector<16x64xf32>
    %24 = arith.select %21, %19, %23 : vector<16x64xi1>, vector<16x64xf32>
    %25 = arith.truncf %24 : vector<16x64xf32> to vector<16x64xbf16>
    %c0_15 = arith.constant 0 : index
    %c0_16 = arith.constant 0 : index
    %c0_17 = arith.constant 0 : index
    %26 = vector.load %arg7[%c0_15, %c0_16, %c0_17] : memref<1x16x64xbf16, #tpu.memory_space<vmem>>, vector<1x16x64xbf16>
    %27 = vector.shape_cast %26 : vector<1x16x64xbf16> to vector<16x64xbf16>
    %28 = vector.shape_cast %25 : vector<16x64xbf16> to vector<1x16x64xbf16>
    tpu.vector_store %arg7[%c0_15, %c0_16, %c0_17], %28 {strides = array<i32>} : memref<1x16x64xbf16, #tpu.memory_space<vmem>>, vector<1x16x64xbf16>,
    return
  }
  func.func @transform_0(%arg0: i32, %arg1: i32) -> (i32, i32, i32, i32) {
    %c0_i32 = arith.constant 0 : i32
    %c0_i32_0 = arith.constant 0 : i32
    %c0_i32_1 = arith.constant 0 : i32
    return %arg0, %c0_i32, %arg1, %c0_i32_0 : i32, i32, i32, i32
  }
  func.func @transform_1(%arg0: i32, %arg1: i32) -> (i32, i32, i32) {
    %c0_i32 = arith.constant 0 : i32
    %c0_i32_0 = arith.constant 0 : i32
    return %arg0, %arg1, %c0_i32 : i32, i32, i32
  }
  func.func @transform_2(%arg0: i32, %arg1: i32) -> (i32, i32) {
    %c0_i32 = arith.constant 0 : i32
    %c0_i32_0 = arith.constant 0 : i32
    %c0_i32_1 = arith.constant 0 : i32
    return %c0_i32, %c0_i32_0 : i32, i32
  }
  func.func @transform_3(%arg0: i32, %arg1: i32) -> (i32, i32) {
    %c0_i32 = arith.constant 0 : i32
    %c0_i32_0 = arith.constant 0 : i32
    %c0_i32_1 = arith.constant 0 : i32
    return %c0_i32, %c0_i32_0 : i32, i32
  }
  func.func @transform_4(%arg0: i32, %arg1: i32) -> (i32, i32) {
    %c0_i32 = arith.constant 0 : i32
    %c0_i32_0 = arith.constant 0 : i32
    %c0_i32_1 = arith.constant 0 : i32
    return %c0_i32, %c0_i32_0 : i32, i32
  }
  func.func @transform_5(%arg0: i32, %arg1: i32) -> (i32, i32, i32) {
    %c0_i32 = arith.constant 0 : i32
    %c0_i32_0 = arith.constant 0 : i32
    return %arg0, %arg1, %c0_i32 : i32, i32, i32
  }
}

module attributes {stable_mosaic.version = 11 : i64} {
  func.func @edgeconv_kernel(%arg0: i32, %arg1: i32, %arg2: memref<1x4x16x64xbf16, #tpu.memory_space<vmem>>, %arg3: memref<1x16x64xbf16, #tpu.memory_space<vmem>>, %arg4: memref<64x128xbf16, #tpu.memory_space<vmem>>, %arg5: memref<64x128xbf16, #tpu.memory_space<vmem>>, %arg6: memref<1x128xf32, #tpu.memory_space<vmem>>, %arg7: memref<1x16x128xbf16, #tpu.memory_space<vmem>>) attributes {dimension_semantics = [#tpu.dimension_semantics<parallel>, #tpu.dimension_semantics<parallel>], iteration_bounds = array<i64: 2, 1>, scalar_prefetch = 0 : i64, scratch_operands = 0 : i64, tpu.core_type = #tpu.core_type<tc>, window_params = [{transform_indices = @transform_0, window_bounds = array<i64: 1, 4, 16, 64>}, {transform_indices = @transform_1, window_bounds = array<i64: 1, 16, 64>}, {pipeline_mode = #tpu.pipeline_mode<synchronous>, transform_indices = @transform_2, window_bounds = array<i64: 64, 128>}, {pipeline_mode = #tpu.pipeline_mode<synchronous>, transform_indices = @transform_3, window_bounds = array<i64: 64, 128>}, {pipeline_mode = #tpu.pipeline_mode<synchronous>, transform_indices = @transform_4, window_bounds = array<i64: 1, 128>}, {transform_indices = @transform_5, window_bounds = array<i64: 1, 16, 128>}]} {
    %c0 = arith.constant 0 : index
    %c0_0 = arith.constant 0 : index
    %c0_1 = arith.constant 0 : index
    %0 = vector.load %arg3[%c0, %c0_0, %c0_1] : memref<1x16x64xbf16, #tpu.memory_space<vmem>>, vector<1x16x64xbf16>
    %1 = vector.shape_cast %0 : vector<1x16x64xbf16> to vector<16x64xbf16>
    %c0_2 = arith.constant 0 : index
    %c0_3 = arith.constant 0 : index
    %2 = vector.load %arg5[%c0_2, %c0_3] : memref<64x128xbf16, #tpu.memory_space<vmem>>, vector<64x128xbf16>
    %cst = arith.constant dense<0.000000e+00> : vector<16x128xf32>
    %3 = tpu.matmul %1, %2, %cst {dimension_numbers = #tpu.dot_dimension_numbers<[1], [0], [0], [1], [0, 0, 1, 1], [], []>} : vector<16x64xbf16>, vector<64x128xbf16>, vector<16x128xf32> -> vector<16x128xf32>
    %c0_4 = arith.constant 0 : index
    %c0_5 = arith.constant 0 : index
    %4 = vector.load %arg6[%c0_4, %c0_5] : memref<1x128xf32, #tpu.memory_space<vmem>>, vector<1x128xf32>
    %5 = vector.broadcast %4 : vector<1x128xf32> to vector<16x128xf32>
    %6 = arith.addf %3, %5 : vector<16x128xf32>
    %c0_6 = arith.constant 0 : index
    %c0_7 = arith.constant 0 : index
    %c0_8 = arith.constant 0 : index
    %c0_9 = arith.constant 0 : index
    %7 = vector.load %arg2[%c0_6, %c0_7, %c0_8, %c0_9] : memref<1x4x16x64xbf16, #tpu.memory_space<vmem>>, vector<1x4x16x64xbf16>
    %8 = vector.shape_cast %7 : vector<1x4x16x64xbf16> to vector<4x16x64xbf16>
    %9 = vector.shape_cast %8 : vector<4x16x64xbf16> to vector<64x64xbf16>
    %c0_10 = arith.constant 0 : index
    %c0_11 = arith.constant 0 : index
    %10 = vector.load %arg4[%c0_10, %c0_11] : memref<64x128xbf16, #tpu.memory_space<vmem>>, vector<64x128xbf16>
    %cst_12 = arith.constant dense<0.000000e+00> : vector<64x128xf32>
    %11 = tpu.matmul %9, %10, %cst_12 {dimension_numbers = #tpu.dot_dimension_numbers<[1], [0], [0], [1], [0, 0, 1, 1], [], []>} : vector<64x64xbf16>, vector<64x128xbf16>, vector<64x128xf32> -> vector<64x128xf32>
    %12 = vector.extract_strided_slice %11 {offsets = [0, 0], sizes = [16, 128], strides = [1, 1]} : vector<64x128xf32> to vector<16x128xf32>
    %13 = vector.extract_strided_slice %11 {offsets = [16, 0], sizes = [16, 128], strides = [1, 1]} : vector<64x128xf32> to vector<16x128xf32>
    %14 = arith.maximumf %12, %13 : vector<16x128xf32>
    %15 = vector.extract_strided_slice %11 {offsets = [32, 0], sizes = [16, 128], strides = [1, 1]} : vector<64x128xf32> to vector<16x128xf32>
    %16 = arith.maximumf %14, %15 : vector<16x128xf32>
    %17 = vector.extract_strided_slice %11 {offsets = [48, 0], sizes = [16, 128], strides = [1, 1]} : vector<64x128xf32> to vector<16x128xf32>
    %18 = arith.maximumf %16, %17 : vector<16x128xf32>
    %19 = arith.addf %18, %6 : vector<16x128xf32>
    %cst_13 = arith.constant 0.000000e+00 : f32
    %20 = vector.broadcast %cst_13 : f32 to vector<16x128xf32>
    %21 = arith.cmpf ogt, %19, %20 : vector<16x128xf32>
    %cst_14 = arith.constant 2.000000e-01 : f32
    %22 = vector.broadcast %cst_14 : f32 to vector<16x128xf32>
    %23 = arith.mulf %22, %19 : vector<16x128xf32>
    %24 = arith.select %21, %19, %23 : vector<16x128xi1>, vector<16x128xf32>
    %25 = arith.truncf %24 : vector<16x128xf32> to vector<16x128xbf16>
    %c0_15 = arith.constant 0 : index
    %c0_16 = arith.constant 0 : index
    %c0_17 = arith.constant 0 : index
    %26 = vector.load %arg7[%c0_15, %c0_16, %c0_17] : memref<1x16x128xbf16, #tpu.memory_space<vmem>>, vector<1x16x128xbf16>
    %27 = vector.shape_cast %26 : vector<1x16x128xbf16> to vector<16x128xbf16>
    %28 = vector.shape_cast %25 : vector<16x128xbf16> to vector<1x16x128xbf16>
    tpu.vector_store %arg7[%c0_15, %c0_16, %c0_17], %28 {strides = array<i32>} : memref<1x16x128xbf16, #tpu.memory_space<vmem>>, vector<1x16x128xbf16>,
    return
  }
  func.func @transform_0(%arg0: i32, %arg1: i32) -> (i32, i32, i32, i32) {
    %c0_i32 = arith.constant 0 : i32
    %c0_i32_0 = arith.constant 0 : i32
    %c0_i32_1 = arith.constant 0 : i32
    return %arg0, %c0_i32, %arg1, %c0_i32_0 : i32, i32, i32, i32
  }
  func.func @transform_1(%arg0: i32, %arg1: i32) -> (i32, i32, i32) {
    %c0_i32 = arith.constant 0 : i32
    %c0_i32_0 = arith.constant 0 : i32
    return %arg0, %arg1, %c0_i32 : i32, i32, i32
  }
  func.func @transform_2(%arg0: i32, %arg1: i32) -> (i32, i32) {
    %c0_i32 = arith.constant 0 : i32
    %c0_i32_0 = arith.constant 0 : i32
    %c0_i32_1 = arith.constant 0 : i32
    return %c0_i32, %c0_i32_0 : i32, i32
  }
  func.func @transform_3(%arg0: i32, %arg1: i32) -> (i32, i32) {
    %c0_i32 = arith.constant 0 : i32
    %c0_i32_0 = arith.constant 0 : i32
    %c0_i32_1 = arith.constant 0 : i32
    return %c0_i32, %c0_i32_0 : i32, i32
  }
  func.func @transform_4(%arg0: i32, %arg1: i32) -> (i32, i32) {
    %c0_i32 = arith.constant 0 : i32
    %c0_i32_0 = arith.constant 0 : i32
    %c0_i32_1 = arith.constant 0 : i32
    return %c0_i32, %c0_i32_0 : i32, i32
  }
  func.func @transform_5(%arg0: i32, %arg1: i32) -> (i32, i32, i32) {
    %c0_i32 = arith.constant 0 : i32
    %c0_i32_0 = arith.constant 0 : i32
    return %arg0, %arg1, %c0_i32 : i32, i32, i32
  }
}

module attributes {stable_mosaic.version = 11 : i64} {
  func.func @mha_kernel(%arg0: i32, %arg1: memref<2x16x128xbf16, #tpu.memory_space<vmem>>, %arg2: memref<128x384xbf16, #tpu.memory_space<vmem>>, %arg3: memref<1x384xf32, #tpu.memory_space<vmem>>, %arg4: memref<128x128xbf16, #tpu.memory_space<vmem>>, %arg5: memref<1x128xf32, #tpu.memory_space<vmem>>, %arg6: memref<128x4xbf16, #tpu.memory_space<vmem>>, %arg7: memref<4x128xbf16, #tpu.memory_space<vmem>>, %arg8: memref<2x16x128xbf16, #tpu.memory_space<vmem>>, %arg9: memref<2x16x128xbf16, #tpu.memory_space<vmem>>, %arg10: memref<2x16x128xbf16, #tpu.memory_space<vmem>>, %arg11: memref<2x16x128xbf16, #tpu.memory_space<vmem>>, %arg12: memref<2x16x128xf32, #tpu.memory_space<vmem>>, %arg13: memref<2x16x4xf32, #tpu.memory_space<vmem>>) attributes {dimension_semantics = [#tpu.dimension_semantics<parallel>], iteration_bounds = array<i64: 1>, scalar_prefetch = 0 : i64, scratch_operands = 5 : i64, tpu.core_type = #tpu.core_type<tc>, window_params = [{transform_indices = @transform_0, window_bounds = array<i64: 2, 16, 128>}, {pipeline_mode = #tpu.pipeline_mode<synchronous>, transform_indices = @transform_1, window_bounds = array<i64: 128, 384>}, {pipeline_mode = #tpu.pipeline_mode<synchronous>, transform_indices = @transform_2, window_bounds = array<i64: 1, 384>}, {pipeline_mode = #tpu.pipeline_mode<synchronous>, transform_indices = @transform_3, window_bounds = array<i64: 128, 128>}, {pipeline_mode = #tpu.pipeline_mode<synchronous>, transform_indices = @transform_4, window_bounds = array<i64: 1, 128>}, {pipeline_mode = #tpu.pipeline_mode<synchronous>, transform_indices = @transform_5, window_bounds = array<i64: 128, 4>}, {pipeline_mode = #tpu.pipeline_mode<synchronous>, transform_indices = @transform_6, window_bounds = array<i64: 4, 128>}, {transform_indices = @transform_7, window_bounds = array<i64: 2, 16, 128>}]} {
    %c0 = arith.constant 0 : index
    %c0_0 = arith.constant 0 : index
    %c0_1 = arith.constant 0 : index
    %0 = vector.load %arg1[%c0, %c0_0, %c0_1] : memref<2x16x128xbf16, #tpu.memory_space<vmem>>, vector<2x16x128xbf16>
    %1 = vector.shape_cast %0 : vector<2x16x128xbf16> to vector<32x128xbf16>
    %c0_2 = arith.constant 0 : index
    %c0_3 = arith.constant 0 : index
    %2 = vector.load %arg2[%c0_2, %c0_3] : memref<128x384xbf16, #tpu.memory_space<vmem>>, vector<128x384xbf16>
    %cst = arith.constant dense<0.000000e+00> : vector<32x384xf32>
    %3 = tpu.matmul %1, %2, %cst {dimension_numbers = #tpu.dot_dimension_numbers<[1], [0], [0], [1], [0, 0, 1, 1], [], []>} : vector<32x128xbf16>, vector<128x384xbf16>, vector<32x384xf32> -> vector<32x384xf32>
    %c0_4 = arith.constant 0 : index
    %c0_5 = arith.constant 0 : index
    %4 = vector.load %arg3[%c0_4, %c0_5] : memref<1x384xf32, #tpu.memory_space<vmem>>, vector<1x384xf32>
    %5 = vector.broadcast %4 : vector<1x384xf32> to vector<32x384xf32>
    %6 = arith.addf %3, %5 : vector<32x384xf32>
    %7 = vector.extract_strided_slice %6 {offsets = [0, 0], sizes = [32, 128], strides = [1, 1]} : vector<32x384xf32> to vector<32x128xf32>
    %8 = vector.shape_cast %7 : vector<32x128xf32> to vector<2x16x128xf32>
    %9 = arith.truncf %8 : vector<2x16x128xf32> to vector<2x16x128xbf16>
    %c0_6 = arith.constant 0 : index
    %c0_7 = arith.constant 0 : index
    %c0_8 = arith.constant 0 : index
    %10 = vector.load %arg9[%c0_6, %c0_7, %c0_8] : memref<2x16x128xbf16, #tpu.memory_space<vmem>>, vector<2x16x128xbf16>
    tpu.vector_store %arg9[%c0_6, %c0_7, %c0_8], %9 {strides = array<i32>} : memref<2x16x128xbf16, #tpu.memory_space<vmem>>, vector<2x16x128xbf16>,
    %11 = vector.extract_strided_slice %6 {offsets = [0, 128], sizes = [32, 128], strides = [1, 1]} : vector<32x384xf32> to vector<32x128xf32>
    %12 = vector.shape_cast %11 : vector<32x128xf32> to vector<2x16x128xf32>
    %13 = arith.truncf %12 : vector<2x16x128xf32> to vector<2x16x128xbf16>
    %c0_9 = arith.constant 0 : index
    %c0_10 = arith.constant 0 : index
    %c0_11 = arith.constant 0 : index
    %14 = vector.load %arg10[%c0_9, %c0_10, %c0_11] : memref<2x16x128xbf16, #tpu.memory_space<vmem>>, vector<2x16x128xbf16>
    tpu.vector_store %arg10[%c0_9, %c0_10, %c0_11], %13 {strides = array<i32>} : memref<2x16x128xbf16, #tpu.memory_space<vmem>>, vector<2x16x128xbf16>,
    %15 = vector.extract_strided_slice %6 {offsets = [0, 256], sizes = [32, 128], strides = [1, 1]} : vector<32x384xf32> to vector<32x128xf32>
    %16 = vector.shape_cast %15 : vector<32x128xf32> to vector<2x16x128xf32>
    %17 = arith.truncf %16 : vector<2x16x128xf32> to vector<2x16x128xbf16>
    %c0_12 = arith.constant 0 : index
    %c0_13 = arith.constant 0 : index
    %c0_14 = arith.constant 0 : index
    %18 = vector.load %arg11[%c0_12, %c0_13, %c0_14] : memref<2x16x128xbf16, #tpu.memory_space<vmem>>, vector<2x16x128xbf16>
    tpu.vector_store %arg11[%c0_12, %c0_13, %c0_14], %17 {strides = array<i32>} : memref<2x16x128xbf16, #tpu.memory_space<vmem>>, vector<2x16x128xbf16>,
    %c0_15 = arith.constant 0 : index
    %c0_16 = arith.constant 0 : index
    %19 = vector.load %arg6[%c0_15, %c0_16] : memref<128x4xbf16, #tpu.memory_space<vmem>>, vector<128x4xbf16>
    %c0_17 = arith.constant 0 : index
    %c0_18 = arith.constant 0 : index
    %20 = vector.load %arg7[%c0_17, %c0_18] : memref<4x128xbf16, #tpu.memory_space<vmem>>, vector<4x128xbf16>
    %21 = arith.extf %20 : vector<4x128xbf16> to vector<4x128xf32>
    %c0_19 = arith.constant 0 : index
    %c0_20 = arith.constant 0 : index
    %c0_21 = arith.constant 0 : index
    %22 = vector.load %arg9[%c0_19, %c0_20, %c0_21] : memref<2x16x128xbf16, #tpu.memory_space<vmem>>, vector<1x16x128xbf16>
    %23 = vector.shape_cast %22 : vector<1x16x128xbf16> to vector<16x128xbf16>
    %c0_22 = arith.constant 0 : index
    %c0_23 = arith.constant 0 : index
    %c0_24 = arith.constant 0 : index
    %24 = vector.load %arg10[%c0_22, %c0_23, %c0_24] : memref<2x16x128xbf16, #tpu.memory_space<vmem>>, vector<1x16x128xbf16>
    %25 = vector.shape_cast %24 : vector<1x16x128xbf16> to vector<16x128xbf16>
    %26 = arith.mulf %23, %25 : vector<16x128xbf16>
    %cst_25 = arith.constant dense<0.000000e+00> : vector<16x4xf32>
    %27 = tpu.matmul %26, %19, %cst_25 {dimension_numbers = #tpu.dot_dimension_numbers<[1], [0], [0], [1], [0, 0, 1, 1], [], []>} : vector<16x128xbf16>, vector<128x4xbf16>, vector<16x4xf32> -> vector<16x4xf32>
    %c0_26 = arith.constant 0 : index
    %c0_27 = arith.constant 0 : index
    %c0_28 = arith.constant 0 : index
    %28 = vector.load %arg13[%c0_26, %c0_27, %c0_28] : memref<2x16x4xf32, #tpu.memory_space<vmem>>, vector<1x16x4xf32>
    %29 = vector.shape_cast %28 : vector<1x16x4xf32> to vector<16x4xf32>
    %30 = vector.shape_cast %27 : vector<16x4xf32> to vector<1x16x4xf32>
    tpu.vector_store %arg13[%c0_26, %c0_27, %c0_28], %30 {strides = array<i32>} : memref<2x16x4xf32, #tpu.memory_space<vmem>>, vector<1x16x4xf32>,
    %c1 = arith.constant 1 : index
    %c0_29 = arith.constant 0 : index
    %c0_30 = arith.constant 0 : index
    %31 = vector.load %arg10[%c1, %c0_29, %c0_30] : memref<2x16x128xbf16, #tpu.memory_space<vmem>>, vector<1x16x128xbf16>
    %32 = vector.shape_cast %31 : vector<1x16x128xbf16> to vector<16x128xbf16>
    %33 = arith.mulf %23, %32 : vector<16x128xbf16>
    %cst_31 = arith.constant dense<0.000000e+00> : vector<16x4xf32>
    %34 = tpu.matmul %33, %19, %cst_31 {dimension_numbers = #tpu.dot_dimension_numbers<[1], [0], [0], [1], [0, 0, 1, 1], [], []>} : vector<16x128xbf16>, vector<128x4xbf16>, vector<16x4xf32> -> vector<16x4xf32>
    %c1_32 = arith.constant 1 : index
    %c0_33 = arith.constant 0 : index
    %c0_34 = arith.constant 0 : index
    %35 = vector.load %arg13[%c1_32, %c0_33, %c0_34] : memref<2x16x4xf32, #tpu.memory_space<vmem>>, vector<1x16x4xf32>
    %36 = vector.shape_cast %35 : vector<1x16x4xf32> to vector<16x4xf32>
    %37 = vector.shape_cast %34 : vector<16x4xf32> to vector<1x16x4xf32>
    tpu.vector_store %arg13[%c1_32, %c0_33, %c0_34], %37 {strides = array<i32>} : memref<2x16x4xf32, #tpu.memory_space<vmem>>, vector<1x16x4xf32>,
    %38 = arith.maximumf %27, %34 : vector<16x4xf32>
    %c0_35 = arith.constant 0 : index
    %c0_36 = arith.constant 0 : index
    %c0_37 = arith.constant 0 : index
    %39 = vector.load %arg13[%c0_35, %c0_36, %c0_37] : memref<2x16x4xf32, #tpu.memory_space<vmem>>, vector<1x16x4xf32>
    %40 = vector.shape_cast %39 : vector<1x16x4xf32> to vector<16x4xf32>
    %41 = arith.subf %40, %38 : vector<16x4xf32>
    %42 = math.exp %41 : vector<16x4xf32>
    %43 = arith.truncf %42 : vector<16x4xf32> to vector<16x4xbf16>
    %cst_38 = arith.constant dense<0.000000e+00> : vector<16x128xf32>
    %44 = tpu.matmul %43, %20, %cst_38 {dimension_numbers = #tpu.dot_dimension_numbers<[1], [0], [0], [1], [0, 0, 1, 1], [], []>} : vector<16x4xbf16>, vector<4x128xbf16>, vector<16x128xf32> -> vector<16x128xf32>
    %c0_39 = arith.constant 0 : index
    %c0_40 = arith.constant 0 : index
    %c0_41 = arith.constant 0 : index
    %45 = vector.load %arg11[%c0_39, %c0_40, %c0_41] : memref<2x16x128xbf16, #tpu.memory_space<vmem>>, vector<1x16x128xbf16>
    %46 = vector.shape_cast %45 : vector<1x16x128xbf16> to vector<16x128xbf16>
    %47 = arith.extf %46 : vector<16x128xbf16> to vector<16x128xf32>
    %48 = arith.mulf %44, %47 : vector<16x128xf32>
    %c1_42 = arith.constant 1 : index
    %c0_43 = arith.constant 0 : index
    %c0_44 = arith.constant 0 : index
    %49 = vector.load %arg13[%c1_42, %c0_43, %c0_44] : memref<2x16x4xf32, #tpu.memory_space<vmem>>, vector<1x16x4xf32>
    %50 = vector.shape_cast %49 : vector<1x16x4xf32> to vector<16x4xf32>
    %51 = arith.subf %50, %38 : vector<16x4xf32>
    %52 = math.exp %51 : vector<16x4xf32>
    %53 = arith.addf %42, %52 : vector<16x4xf32>
    %54 = arith.truncf %52 : vector<16x4xf32> to vector<16x4xbf16>
    %cst_45 = arith.constant dense<0.000000e+00> : vector<16x128xf32>
    %55 = tpu.matmul %54, %20, %cst_45 {dimension_numbers = #tpu.dot_dimension_numbers<[1], [0], [0], [1], [0, 0, 1, 1], [], []>} : vector<16x4xbf16>, vector<4x128xbf16>, vector<16x128xf32> -> vector<16x128xf32>
    %c1_46 = arith.constant 1 : index
    %c0_47 = arith.constant 0 : index
    %c0_48 = arith.constant 0 : index
    %56 = vector.load %arg11[%c1_46, %c0_47, %c0_48] : memref<2x16x128xbf16, #tpu.memory_space<vmem>>, vector<1x16x128xbf16>
    %57 = vector.shape_cast %56 : vector<1x16x128xbf16> to vector<16x128xbf16>
    %58 = arith.extf %57 : vector<16x128xbf16> to vector<16x128xf32>
    %59 = arith.mulf %55, %58 : vector<16x128xf32>
    %60 = arith.addf %48, %59 : vector<16x128xf32>
    %61 = tpu.reciprocal %53 {approx = true} : vector<16x4xf32> -> vector<16x4xf32>
    %cst_49 = arith.constant dense<0.000000e+00> : vector<16x128xf32>
    %62 = tpu.matmul %61, %21, %cst_49 {dimension_numbers = #tpu.dot_dimension_numbers<[1], [0], [0], [1], [0, 0, 1, 1], [], []>} : vector<16x4xf32>, vector<4x128xf32>, vector<16x128xf32> -> vector<16x128xf32>
    %63 = arith.mulf %60, %62 : vector<16x128xf32>
    %c0_50 = arith.constant 0 : index
    %c0_51 = arith.constant 0 : index
    %c0_52 = arith.constant 0 : index
    %64 = vector.load %arg12[%c0_50, %c0_51, %c0_52] : memref<2x16x128xf32, #tpu.memory_space<vmem>>, vector<1x16x128xf32>
    %65 = vector.shape_cast %64 : vector<1x16x128xf32> to vector<16x128xf32>
    %66 = vector.shape_cast %63 : vector<16x128xf32> to vector<1x16x128xf32>
    tpu.vector_store %arg12[%c0_50, %c0_51, %c0_52], %66 {strides = array<i32>} : memref<2x16x128xf32, #tpu.memory_space<vmem>>, vector<1x16x128xf32>,
    %c1_53 = arith.constant 1 : index
    %c0_54 = arith.constant 0 : index
    %c0_55 = arith.constant 0 : index
    %67 = vector.load %arg9[%c1_53, %c0_54, %c0_55] : memref<2x16x128xbf16, #tpu.memory_space<vmem>>, vector<1x16x128xbf16>
    %68 = vector.shape_cast %67 : vector<1x16x128xbf16> to vector<16x128xbf16>
    %c0_56 = arith.constant 0 : index
    %c0_57 = arith.constant 0 : index
    %c0_58 = arith.constant 0 : index
    %69 = vector.load %arg10[%c0_56, %c0_57, %c0_58] : memref<2x16x128xbf16, #tpu.memory_space<vmem>>, vector<1x16x128xbf16>
    %70 = vector.shape_cast %69 : vector<1x16x128xbf16> to vector<16x128xbf16>
    %71 = arith.mulf %68, %70 : vector<16x128xbf16>
    %cst_59 = arith.constant dense<0.000000e+00> : vector<16x4xf32>
    %72 = tpu.matmul %71, %19, %cst_59 {dimension_numbers = #tpu.dot_dimension_numbers<[1], [0], [0], [1], [0, 0, 1, 1], [], []>} : vector<16x128xbf16>, vector<128x4xbf16>, vector<16x4xf32> -> vector<16x4xf32>
    %c0_60 = arith.constant 0 : index
    %c0_61 = arith.constant 0 : index
    %c0_62 = arith.constant 0 : index
    %73 = vector.load %arg13[%c0_60, %c0_61, %c0_62] : memref<2x16x4xf32, #tpu.memory_space<vmem>>, vector<1x16x4xf32>
    %74 = vector.shape_cast %73 : vector<1x16x4xf32> to vector<16x4xf32>
    %75 = vector.shape_cast %72 : vector<16x4xf32> to vector<1x16x4xf32>
    tpu.vector_store %arg13[%c0_60, %c0_61, %c0_62], %75 {strides = array<i32>} : memref<2x16x4xf32, #tpu.memory_space<vmem>>, vector<1x16x4xf32>,
    %c1_63 = arith.constant 1 : index
    %c0_64 = arith.constant 0 : index
    %c0_65 = arith.constant 0 : index
    %76 = vector.load %arg10[%c1_63, %c0_64, %c0_65] : memref<2x16x128xbf16, #tpu.memory_space<vmem>>, vector<1x16x128xbf16>
    %77 = vector.shape_cast %76 : vector<1x16x128xbf16> to vector<16x128xbf16>
    %78 = arith.mulf %68, %77 : vector<16x128xbf16>
    %cst_66 = arith.constant dense<0.000000e+00> : vector<16x4xf32>
    %79 = tpu.matmul %78, %19, %cst_66 {dimension_numbers = #tpu.dot_dimension_numbers<[1], [0], [0], [1], [0, 0, 1, 1], [], []>} : vector<16x128xbf16>, vector<128x4xbf16>, vector<16x4xf32> -> vector<16x4xf32>
    %c1_67 = arith.constant 1 : index
    %c0_68 = arith.constant 0 : index
    %c0_69 = arith.constant 0 : index
    %80 = vector.load %arg13[%c1_67, %c0_68, %c0_69] : memref<2x16x4xf32, #tpu.memory_space<vmem>>, vector<1x16x4xf32>
    %81 = vector.shape_cast %80 : vector<1x16x4xf32> to vector<16x4xf32>
    %82 = vector.shape_cast %79 : vector<16x4xf32> to vector<1x16x4xf32>
    tpu.vector_store %arg13[%c1_67, %c0_68, %c0_69], %82 {strides = array<i32>} : memref<2x16x4xf32, #tpu.memory_space<vmem>>, vector<1x16x4xf32>,
    %83 = arith.maximumf %72, %79 : vector<16x4xf32>
    %c0_70 = arith.constant 0 : index
    %c0_71 = arith.constant 0 : index
    %c0_72 = arith.constant 0 : index
    %84 = vector.load %arg13[%c0_70, %c0_71, %c0_72] : memref<2x16x4xf32, #tpu.memory_space<vmem>>, vector<1x16x4xf32>
    %85 = vector.shape_cast %84 : vector<1x16x4xf32> to vector<16x4xf32>
    %86 = arith.subf %85, %83 : vector<16x4xf32>
    %87 = math.exp %86 : vector<16x4xf32>
    %88 = arith.truncf %87 : vector<16x4xf32> to vector<16x4xbf16>
    %cst_73 = arith.constant dense<0.000000e+00> : vector<16x128xf32>
    %89 = tpu.matmul %88, %20, %cst_73 {dimension_numbers = #tpu.dot_dimension_numbers<[1], [0], [0], [1], [0, 0, 1, 1], [], []>} : vector<16x4xbf16>, vector<4x128xbf16>, vector<16x128xf32> -> vector<16x128xf32>
    %c0_74 = arith.constant 0 : index
    %c0_75 = arith.constant 0 : index
    %c0_76 = arith.constant 0 : index
    %90 = vector.load %arg11[%c0_74, %c0_75, %c0_76] : memref<2x16x128xbf16, #tpu.memory_space<vmem>>, vector<1x16x128xbf16>
    %91 = vector.shape_cast %90 : vector<1x16x128xbf16> to vector<16x128xbf16>
    %92 = arith.extf %91 : vector<16x128xbf16> to vector<16x128xf32>
    %93 = arith.mulf %89, %92 : vector<16x128xf32>
    %c1_77 = arith.constant 1 : index
    %c0_78 = arith.constant 0 : index
    %c0_79 = arith.constant 0 : index
    %94 = vector.load %arg13[%c1_77, %c0_78, %c0_79] : memref<2x16x4xf32, #tpu.memory_space<vmem>>, vector<1x16x4xf32>
    %95 = vector.shape_cast %94 : vector<1x16x4xf32> to vector<16x4xf32>
    %96 = arith.subf %95, %83 : vector<16x4xf32>
    %97 = math.exp %96 : vector<16x4xf32>
    %98 = arith.addf %87, %97 : vector<16x4xf32>
    %99 = arith.truncf %97 : vector<16x4xf32> to vector<16x4xbf16>
    %cst_80 = arith.constant dense<0.000000e+00> : vector<16x128xf32>
    %100 = tpu.matmul %99, %20, %cst_80 {dimension_numbers = #tpu.dot_dimension_numbers<[1], [0], [0], [1], [0, 0, 1, 1], [], []>} : vector<16x4xbf16>, vector<4x128xbf16>, vector<16x128xf32> -> vector<16x128xf32>
    %c1_81 = arith.constant 1 : index
    %c0_82 = arith.constant 0 : index
    %c0_83 = arith.constant 0 : index
    %101 = vector.load %arg11[%c1_81, %c0_82, %c0_83] : memref<2x16x128xbf16, #tpu.memory_space<vmem>>, vector<1x16x128xbf16>
    %102 = vector.shape_cast %101 : vector<1x16x128xbf16> to vector<16x128xbf16>
    %103 = arith.extf %102 : vector<16x128xbf16> to vector<16x128xf32>
    %104 = arith.mulf %100, %103 : vector<16x128xf32>
    %105 = arith.addf %93, %104 : vector<16x128xf32>
    %106 = tpu.reciprocal %98 {approx = true} : vector<16x4xf32> -> vector<16x4xf32>
    %cst_84 = arith.constant dense<0.000000e+00> : vector<16x128xf32>
    %107 = tpu.matmul %106, %21, %cst_84 {dimension_numbers = #tpu.dot_dimension_numbers<[1], [0], [0], [1], [0, 0, 1, 1], [], []>} : vector<16x4xf32>, vector<4x128xf32>, vector<16x128xf32> -> vector<16x128xf32>
    %108 = arith.mulf %105, %107 : vector<16x128xf32>
    %c1_85 = arith.constant 1 : index
    %c0_86 = arith.constant 0 : index
    %c0_87 = arith.constant 0 : index
    %109 = vector.load %arg12[%c1_85, %c0_86, %c0_87] : memref<2x16x128xf32, #tpu.memory_space<vmem>>, vector<1x16x128xf32>
    %110 = vector.shape_cast %109 : vector<1x16x128xf32> to vector<16x128xf32>
    %111 = vector.shape_cast %108 : vector<16x128xf32> to vector<1x16x128xf32>
    tpu.vector_store %arg12[%c1_85, %c0_86, %c0_87], %111 {strides = array<i32>} : memref<2x16x128xf32, #tpu.memory_space<vmem>>, vector<1x16x128xf32>,
    %c0_88 = arith.constant 0 : index
    %c0_89 = arith.constant 0 : index
    %c0_90 = arith.constant 0 : index
    %112 = vector.load %arg12[%c0_88, %c0_89, %c0_90] : memref<2x16x128xf32, #tpu.memory_space<vmem>>, vector<2x16x128xf32>
    %113 = vector.shape_cast %112 : vector<2x16x128xf32> to vector<32x128xf32>
    %114 = arith.truncf %113 : vector<32x128xf32> to vector<32x128xbf16>
    %c0_91 = arith.constant 0 : index
    %c0_92 = arith.constant 0 : index
    %115 = vector.load %arg4[%c0_91, %c0_92] : memref<128x128xbf16, #tpu.memory_space<vmem>>, vector<128x128xbf16>
    %cst_93 = arith.constant dense<0.000000e+00> : vector<32x128xf32>
    %116 = tpu.matmul %114, %115, %cst_93 {dimension_numbers = #tpu.dot_dimension_numbers<[1], [0], [0], [1], [0, 0, 1, 1], [], []>} : vector<32x128xbf16>, vector<128x128xbf16>, vector<32x128xf32> -> vector<32x128xf32>
    %c0_94 = arith.constant 0 : index
    %c0_95 = arith.constant 0 : index
    %117 = vector.load %arg5[%c0_94, %c0_95] : memref<1x128xf32, #tpu.memory_space<vmem>>, vector<1x128xf32>
    %118 = vector.broadcast %117 : vector<1x128xf32> to vector<32x128xf32>
    %119 = arith.addf %116, %118 : vector<32x128xf32>
    %c0_96 = arith.constant 0 : index
    %c0_97 = arith.constant 0 : index
    %c0_98 = arith.constant 0 : index
    %120 = vector.load %arg1[%c0_96, %c0_97, %c0_98] : memref<2x16x128xbf16, #tpu.memory_space<vmem>>, vector<2x16x128xbf16>
    %121 = vector.shape_cast %120 : vector<2x16x128xbf16> to vector<32x128xbf16>
    %122 = arith.extf %121 : vector<32x128xbf16> to vector<32x128xf32>
    %123 = arith.addf %119, %122 : vector<32x128xf32>
    %124 = vector.shape_cast %123 : vector<32x128xf32> to vector<2x16x128xf32>
    %125 = arith.truncf %124 : vector<2x16x128xf32> to vector<2x16x128xbf16>
    %c0_99 = arith.constant 0 : index
    %c0_100 = arith.constant 0 : index
    %c0_101 = arith.constant 0 : index
    %126 = vector.load %arg8[%c0_99, %c0_100, %c0_101] : memref<2x16x128xbf16, #tpu.memory_space<vmem>>, vector<2x16x128xbf16>
    tpu.vector_store %arg8[%c0_99, %c0_100, %c0_101], %125 {strides = array<i32>} : memref<2x16x128xbf16, #tpu.memory_space<vmem>>, vector<2x16x128xbf16>,
    return
  }
  func.func @transform_0(%arg0: i32) -> (i32, i32, i32) {
    %c0_i32 = arith.constant 0 : i32
    %c0_i32_0 = arith.constant 0 : i32
    %c0_i32_1 = arith.constant 0 : i32
    return %c0_i32, %arg0, %c0_i32_0 : i32, i32, i32
  }
  func.func @transform_1(%arg0: i32) -> (i32, i32) {
    %c0_i32 = arith.constant 0 : i32
    %c0_i32_0 = arith.constant 0 : i32
    %c0_i32_1 = arith.constant 0 : i32
    return %c0_i32, %c0_i32_0 : i32, i32
  }
  func.func @transform_2(%arg0: i32) -> (i32, i32) {
    %c0_i32 = arith.constant 0 : i32
    %c0_i32_0 = arith.constant 0 : i32
    %c0_i32_1 = arith.constant 0 : i32
    return %c0_i32, %c0_i32_0 : i32, i32
  }
  func.func @transform_3(%arg0: i32) -> (i32, i32) {
    %c0_i32 = arith.constant 0 : i32
    %c0_i32_0 = arith.constant 0 : i32
    %c0_i32_1 = arith.constant 0 : i32
    return %c0_i32, %c0_i32_0 : i32, i32
  }
  func.func @transform_4(%arg0: i32) -> (i32, i32) {
    %c0_i32 = arith.constant 0 : i32
    %c0_i32_0 = arith.constant 0 : i32
    %c0_i32_1 = arith.constant 0 : i32
    return %c0_i32, %c0_i32_0 : i32, i32
  }
  func.func @transform_5(%arg0: i32) -> (i32, i32) {
    %c0_i32 = arith.constant 0 : i32
    %c0_i32_0 = arith.constant 0 : i32
    %c0_i32_1 = arith.constant 0 : i32
    return %c0_i32, %c0_i32_0 : i32, i32
  }
  func.func @transform_6(%arg0: i32) -> (i32, i32) {
    %c0_i32 = arith.constant 0 : i32
    %c0_i32_0 = arith.constant 0 : i32
    %c0_i32_1 = arith.constant 0 : i32
    return %c0_i32, %c0_i32_0 : i32, i32
  }
  func.func @transform_7(%arg0: i32) -> (i32, i32, i32) {
    %c0_i32 = arith.constant 0 : i32
    %c0_i32_0 = arith.constant 0 : i32
    %c0_i32_1 = arith.constant 0 : i32
    return %c0_i32, %arg0, %c0_i32_0 : i32, i32, i32
  }
}

module attributes {stable_mosaic.version = 11 : i64} {
  func.func @edgeconv_kernel(%arg0: i32, %arg1: i32, %arg2: memref<1x4x16x128xbf16, #tpu.memory_space<vmem>>, %arg3: memref<1x16x128xbf16, #tpu.memory_space<vmem>>, %arg4: memref<128x256xbf16, #tpu.memory_space<vmem>>, %arg5: memref<128x256xbf16, #tpu.memory_space<vmem>>, %arg6: memref<1x256xf32, #tpu.memory_space<vmem>>, %arg7: memref<1x16x256xbf16, #tpu.memory_space<vmem>>) attributes {dimension_semantics = [#tpu.dimension_semantics<parallel>, #tpu.dimension_semantics<parallel>], iteration_bounds = array<i64: 2, 1>, scalar_prefetch = 0 : i64, scratch_operands = 0 : i64, tpu.core_type = #tpu.core_type<tc>, window_params = [{transform_indices = @transform_0, window_bounds = array<i64: 1, 4, 16, 128>}, {transform_indices = @transform_1, window_bounds = array<i64: 1, 16, 128>}, {pipeline_mode = #tpu.pipeline_mode<synchronous>, transform_indices = @transform_2, window_bounds = array<i64: 128, 256>}, {pipeline_mode = #tpu.pipeline_mode<synchronous>, transform_indices = @transform_3, window_bounds = array<i64: 128, 256>}, {pipeline_mode = #tpu.pipeline_mode<synchronous>, transform_indices = @transform_4, window_bounds = array<i64: 1, 256>}, {transform_indices = @transform_5, window_bounds = array<i64: 1, 16, 256>}]} {
    %c0 = arith.constant 0 : index
    %c0_0 = arith.constant 0 : index
    %c0_1 = arith.constant 0 : index
    %0 = vector.load %arg3[%c0, %c0_0, %c0_1] : memref<1x16x128xbf16, #tpu.memory_space<vmem>>, vector<1x16x128xbf16>
    %1 = vector.shape_cast %0 : vector<1x16x128xbf16> to vector<16x128xbf16>
    %c0_2 = arith.constant 0 : index
    %c0_3 = arith.constant 0 : index
    %2 = vector.load %arg5[%c0_2, %c0_3] : memref<128x256xbf16, #tpu.memory_space<vmem>>, vector<128x256xbf16>
    %cst = arith.constant dense<0.000000e+00> : vector<16x256xf32>
    %3 = tpu.matmul %1, %2, %cst {dimension_numbers = #tpu.dot_dimension_numbers<[1], [0], [0], [1], [0, 0, 1, 1], [], []>} : vector<16x128xbf16>, vector<128x256xbf16>, vector<16x256xf32> -> vector<16x256xf32>
    %c0_4 = arith.constant 0 : index
    %c0_5 = arith.constant 0 : index
    %4 = vector.load %arg6[%c0_4, %c0_5] : memref<1x256xf32, #tpu.memory_space<vmem>>, vector<1x256xf32>
    %5 = vector.broadcast %4 : vector<1x256xf32> to vector<16x256xf32>
    %6 = arith.addf %3, %5 : vector<16x256xf32>
    %c0_6 = arith.constant 0 : index
    %c0_7 = arith.constant 0 : index
    %c0_8 = arith.constant 0 : index
    %c0_9 = arith.constant 0 : index
    %7 = vector.load %arg2[%c0_6, %c0_7, %c0_8, %c0_9] : memref<1x4x16x128xbf16, #tpu.memory_space<vmem>>, vector<1x4x16x128xbf16>
    %8 = vector.shape_cast %7 : vector<1x4x16x128xbf16> to vector<4x16x128xbf16>
    %9 = vector.shape_cast %8 : vector<4x16x128xbf16> to vector<64x128xbf16>
    %c0_10 = arith.constant 0 : index
    %c0_11 = arith.constant 0 : index
    %10 = vector.load %arg4[%c0_10, %c0_11] : memref<128x256xbf16, #tpu.memory_space<vmem>>, vector<128x256xbf16>
    %cst_12 = arith.constant dense<0.000000e+00> : vector<64x256xf32>
    %11 = tpu.matmul %9, %10, %cst_12 {dimension_numbers = #tpu.dot_dimension_numbers<[1], [0], [0], [1], [0, 0, 1, 1], [], []>} : vector<64x128xbf16>, vector<128x256xbf16>, vector<64x256xf32> -> vector<64x256xf32>
    %12 = vector.extract_strided_slice %11 {offsets = [0, 0], sizes = [16, 256], strides = [1, 1]} : vector<64x256xf32> to vector<16x256xf32>
    %13 = vector.extract_strided_slice %11 {offsets = [16, 0], sizes = [16, 256], strides = [1, 1]} : vector<64x256xf32> to vector<16x256xf32>
    %14 = arith.maximumf %12, %13 : vector<16x256xf32>
    %15 = vector.extract_strided_slice %11 {offsets = [32, 0], sizes = [16, 256], strides = [1, 1]} : vector<64x256xf32> to vector<16x256xf32>
    %16 = arith.maximumf %14, %15 : vector<16x256xf32>
    %17 = vector.extract_strided_slice %11 {offsets = [48, 0], sizes = [16, 256], strides = [1, 1]} : vector<64x256xf32> to vector<16x256xf32>
    %18 = arith.maximumf %16, %17 : vector<16x256xf32>
    %19 = arith.addf %18, %6 : vector<16x256xf32>
    %cst_13 = arith.constant 0.000000e+00 : f32
    %20 = vector.broadcast %cst_13 : f32 to vector<16x256xf32>
    %21 = arith.cmpf ogt, %19, %20 : vector<16x256xf32>
    %cst_14 = arith.constant 2.000000e-01 : f32
    %22 = vector.broadcast %cst_14 : f32 to vector<16x256xf32>
    %23 = arith.mulf %22, %19 : vector<16x256xf32>
    %24 = arith.select %21, %19, %23 : vector<16x256xi1>, vector<16x256xf32>
    %25 = arith.truncf %24 : vector<16x256xf32> to vector<16x256xbf16>
    %c0_15 = arith.constant 0 : index
    %c0_16 = arith.constant 0 : index
    %c0_17 = arith.constant 0 : index
    %26 = vector.load %arg7[%c0_15, %c0_16, %c0_17] : memref<1x16x256xbf16, #tpu.memory_space<vmem>>, vector<1x16x256xbf16>
    %27 = vector.shape_cast %26 : vector<1x16x256xbf16> to vector<16x256xbf16>
    %28 = vector.shape_cast %25 : vector<16x256xbf16> to vector<1x16x256xbf16>
    tpu.vector_store %arg7[%c0_15, %c0_16, %c0_17], %28 {strides = array<i32>} : memref<1x16x256xbf16, #tpu.memory_space<vmem>>, vector<1x16x256xbf16>,
    return
  }
  func.func @transform_0(%arg0: i32, %arg1: i32) -> (i32, i32, i32, i32) {
    %c0_i32 = arith.constant 0 : i32
    %c0_i32_0 = arith.constant 0 : i32
    %c0_i32_1 = arith.constant 0 : i32
    return %arg0, %c0_i32, %arg1, %c0_i32_0 : i32, i32, i32, i32
  }
  func.func @transform_1(%arg0: i32, %arg1: i32) -> (i32, i32, i32) {
    %c0_i32 = arith.constant 0 : i32
    %c0_i32_0 = arith.constant 0 : i32
    return %arg0, %arg1, %c0_i32 : i32, i32, i32
  }
  func.func @transform_2(%arg0: i32, %arg1: i32) -> (i32, i32) {
    %c0_i32 = arith.constant 0 : i32
    %c0_i32_0 = arith.constant 0 : i32
    %c0_i32_1 = arith.constant 0 : i32
    return %c0_i32, %c0_i32_0 : i32, i32
  }
  func.func @transform_3(%arg0: i32, %arg1: i32) -> (i32, i32) {
    %c0_i32 = arith.constant 0 : i32
    %c0_i32_0 = arith.constant 0 : i32
    %c0_i32_1 = arith.constant 0 : i32
    return %c0_i32, %c0_i32_0 : i32, i32
  }
  func.func @transform_4(%arg0: i32, %arg1: i32) -> (i32, i32) {
    %c0_i32 = arith.constant 0 : i32
    %c0_i32_0 = arith.constant 0 : i32
    %c0_i32_1 = arith.constant 0 : i32
    return %c0_i32, %c0_i32_0 : i32, i32
  }
  func.func @transform_5(%arg0: i32, %arg1: i32) -> (i32, i32, i32) {
    %c0_i32 = arith.constant 0 : i32
    %c0_i32_0 = arith.constant 0 : i32
    return %arg0, %arg1, %c0_i32 : i32, i32, i32
  }
}

module attributes {stable_mosaic.version = 11 : i64} {
  func.func @mha_kernel(%arg0: i32, %arg1: memref<2x16x256xbf16, #tpu.memory_space<vmem>>, %arg2: memref<256x768xbf16, #tpu.memory_space<vmem>>, %arg3: memref<1x768xf32, #tpu.memory_space<vmem>>, %arg4: memref<256x256xbf16, #tpu.memory_space<vmem>>, %arg5: memref<1x256xf32, #tpu.memory_space<vmem>>, %arg6: memref<256x4xbf16, #tpu.memory_space<vmem>>, %arg7: memref<4x256xbf16, #tpu.memory_space<vmem>>, %arg8: memref<2x16x256xbf16, #tpu.memory_space<vmem>>, %arg9: memref<2x16x256xbf16, #tpu.memory_space<vmem>>, %arg10: memref<2x16x256xbf16, #tpu.memory_space<vmem>>, %arg11: memref<2x16x256xbf16, #tpu.memory_space<vmem>>, %arg12: memref<2x16x256xf32, #tpu.memory_space<vmem>>, %arg13: memref<2x16x4xf32, #tpu.memory_space<vmem>>) attributes {dimension_semantics = [#tpu.dimension_semantics<parallel>], iteration_bounds = array<i64: 1>, scalar_prefetch = 0 : i64, scratch_operands = 5 : i64, tpu.core_type = #tpu.core_type<tc>, window_params = [{transform_indices = @transform_0, window_bounds = array<i64: 2, 16, 256>}, {pipeline_mode = #tpu.pipeline_mode<synchronous>, transform_indices = @transform_1, window_bounds = array<i64: 256, 768>}, {pipeline_mode = #tpu.pipeline_mode<synchronous>, transform_indices = @transform_2, window_bounds = array<i64: 1, 768>}, {pipeline_mode = #tpu.pipeline_mode<synchronous>, transform_indices = @transform_3, window_bounds = array<i64: 256, 256>}, {pipeline_mode = #tpu.pipeline_mode<synchronous>, transform_indices = @transform_4, window_bounds = array<i64: 1, 256>}, {pipeline_mode = #tpu.pipeline_mode<synchronous>, transform_indices = @transform_5, window_bounds = array<i64: 256, 4>}, {pipeline_mode = #tpu.pipeline_mode<synchronous>, transform_indices = @transform_6, window_bounds = array<i64: 4, 256>}, {transform_indices = @transform_7, window_bounds = array<i64: 2, 16, 256>}]} {
    %c0 = arith.constant 0 : index
    %c0_0 = arith.constant 0 : index
    %c0_1 = arith.constant 0 : index
    %0 = vector.load %arg1[%c0, %c0_0, %c0_1] : memref<2x16x256xbf16, #tpu.memory_space<vmem>>, vector<2x16x256xbf16>
    %1 = vector.shape_cast %0 : vector<2x16x256xbf16> to vector<32x256xbf16>
    %c0_2 = arith.constant 0 : index
    %c0_3 = arith.constant 0 : index
    %2 = vector.load %arg2[%c0_2, %c0_3] : memref<256x768xbf16, #tpu.memory_space<vmem>>, vector<256x768xbf16>
    %cst = arith.constant dense<0.000000e+00> : vector<32x768xf32>
    %3 = tpu.matmul %1, %2, %cst {dimension_numbers = #tpu.dot_dimension_numbers<[1], [0], [0], [1], [0, 0, 1, 1], [], []>} : vector<32x256xbf16>, vector<256x768xbf16>, vector<32x768xf32> -> vector<32x768xf32>
    %c0_4 = arith.constant 0 : index
    %c0_5 = arith.constant 0 : index
    %4 = vector.load %arg3[%c0_4, %c0_5] : memref<1x768xf32, #tpu.memory_space<vmem>>, vector<1x768xf32>
    %5 = vector.broadcast %4 : vector<1x768xf32> to vector<32x768xf32>
    %6 = arith.addf %3, %5 : vector<32x768xf32>
    %7 = vector.extract_strided_slice %6 {offsets = [0, 0], sizes = [32, 256], strides = [1, 1]} : vector<32x768xf32> to vector<32x256xf32>
    %8 = vector.shape_cast %7 : vector<32x256xf32> to vector<2x16x256xf32>
    %9 = arith.truncf %8 : vector<2x16x256xf32> to vector<2x16x256xbf16>
    %c0_6 = arith.constant 0 : index
    %c0_7 = arith.constant 0 : index
    %c0_8 = arith.constant 0 : index
    %10 = vector.load %arg9[%c0_6, %c0_7, %c0_8] : memref<2x16x256xbf16, #tpu.memory_space<vmem>>, vector<2x16x256xbf16>
    tpu.vector_store %arg9[%c0_6, %c0_7, %c0_8], %9 {strides = array<i32>} : memref<2x16x256xbf16, #tpu.memory_space<vmem>>, vector<2x16x256xbf16>,
    %11 = vector.extract_strided_slice %6 {offsets = [0, 256], sizes = [32, 256], strides = [1, 1]} : vector<32x768xf32> to vector<32x256xf32>
    %12 = vector.shape_cast %11 : vector<32x256xf32> to vector<2x16x256xf32>
    %13 = arith.truncf %12 : vector<2x16x256xf32> to vector<2x16x256xbf16>
    %c0_9 = arith.constant 0 : index
    %c0_10 = arith.constant 0 : index
    %c0_11 = arith.constant 0 : index
    %14 = vector.load %arg10[%c0_9, %c0_10, %c0_11] : memref<2x16x256xbf16, #tpu.memory_space<vmem>>, vector<2x16x256xbf16>
    tpu.vector_store %arg10[%c0_9, %c0_10, %c0_11], %13 {strides = array<i32>} : memref<2x16x256xbf16, #tpu.memory_space<vmem>>, vector<2x16x256xbf16>,
    %15 = vector.extract_strided_slice %6 {offsets = [0, 512], sizes = [32, 256], strides = [1, 1]} : vector<32x768xf32> to vector<32x256xf32>
    %16 = vector.shape_cast %15 : vector<32x256xf32> to vector<2x16x256xf32>
    %17 = arith.truncf %16 : vector<2x16x256xf32> to vector<2x16x256xbf16>
    %c0_12 = arith.constant 0 : index
    %c0_13 = arith.constant 0 : index
    %c0_14 = arith.constant 0 : index
    %18 = vector.load %arg11[%c0_12, %c0_13, %c0_14] : memref<2x16x256xbf16, #tpu.memory_space<vmem>>, vector<2x16x256xbf16>
    tpu.vector_store %arg11[%c0_12, %c0_13, %c0_14], %17 {strides = array<i32>} : memref<2x16x256xbf16, #tpu.memory_space<vmem>>, vector<2x16x256xbf16>,
    %c0_15 = arith.constant 0 : index
    %c0_16 = arith.constant 0 : index
    %19 = vector.load %arg6[%c0_15, %c0_16] : memref<256x4xbf16, #tpu.memory_space<vmem>>, vector<256x4xbf16>
    %c0_17 = arith.constant 0 : index
    %c0_18 = arith.constant 0 : index
    %20 = vector.load %arg7[%c0_17, %c0_18] : memref<4x256xbf16, #tpu.memory_space<vmem>>, vector<4x256xbf16>
    %21 = arith.extf %20 : vector<4x256xbf16> to vector<4x256xf32>
    %c0_19 = arith.constant 0 : index
    %c0_20 = arith.constant 0 : index
    %c0_21 = arith.constant 0 : index
    %22 = vector.load %arg9[%c0_19, %c0_20, %c0_21] : memref<2x16x256xbf16, #tpu.memory_space<vmem>>, vector<1x16x256xbf16>
    %23 = vector.shape_cast %22 : vector<1x16x256xbf16> to vector<16x256xbf16>
    %c0_22 = arith.constant 0 : index
    %c0_23 = arith.constant 0 : index
    %c0_24 = arith.constant 0 : index
    %24 = vector.load %arg10[%c0_22, %c0_23, %c0_24] : memref<2x16x256xbf16, #tpu.memory_space<vmem>>, vector<1x16x256xbf16>
    %25 = vector.shape_cast %24 : vector<1x16x256xbf16> to vector<16x256xbf16>
    %26 = arith.mulf %23, %25 : vector<16x256xbf16>
    %cst_25 = arith.constant dense<0.000000e+00> : vector<16x4xf32>
    %27 = tpu.matmul %26, %19, %cst_25 {dimension_numbers = #tpu.dot_dimension_numbers<[1], [0], [0], [1], [0, 0, 1, 1], [], []>} : vector<16x256xbf16>, vector<256x4xbf16>, vector<16x4xf32> -> vector<16x4xf32>
    %c0_26 = arith.constant 0 : index
    %c0_27 = arith.constant 0 : index
    %c0_28 = arith.constant 0 : index
    %28 = vector.load %arg13[%c0_26, %c0_27, %c0_28] : memref<2x16x4xf32, #tpu.memory_space<vmem>>, vector<1x16x4xf32>
    %29 = vector.shape_cast %28 : vector<1x16x4xf32> to vector<16x4xf32>
    %30 = vector.shape_cast %27 : vector<16x4xf32> to vector<1x16x4xf32>
    tpu.vector_store %arg13[%c0_26, %c0_27, %c0_28], %30 {strides = array<i32>} : memref<2x16x4xf32, #tpu.memory_space<vmem>>, vector<1x16x4xf32>,
    %c1 = arith.constant 1 : index
    %c0_29 = arith.constant 0 : index
    %c0_30 = arith.constant 0 : index
    %31 = vector.load %arg10[%c1, %c0_29, %c0_30] : memref<2x16x256xbf16, #tpu.memory_space<vmem>>, vector<1x16x256xbf16>
    %32 = vector.shape_cast %31 : vector<1x16x256xbf16> to vector<16x256xbf16>
    %33 = arith.mulf %23, %32 : vector<16x256xbf16>
    %cst_31 = arith.constant dense<0.000000e+00> : vector<16x4xf32>
    %34 = tpu.matmul %33, %19, %cst_31 {dimension_numbers = #tpu.dot_dimension_numbers<[1], [0], [0], [1], [0, 0, 1, 1], [], []>} : vector<16x256xbf16>, vector<256x4xbf16>, vector<16x4xf32> -> vector<16x4xf32>
    %c1_32 = arith.constant 1 : index
    %c0_33 = arith.constant 0 : index
    %c0_34 = arith.constant 0 : index
    %35 = vector.load %arg13[%c1_32, %c0_33, %c0_34] : memref<2x16x4xf32, #tpu.memory_space<vmem>>, vector<1x16x4xf32>
    %36 = vector.shape_cast %35 : vector<1x16x4xf32> to vector<16x4xf32>
    %37 = vector.shape_cast %34 : vector<16x4xf32> to vector<1x16x4xf32>
    tpu.vector_store %arg13[%c1_32, %c0_33, %c0_34], %37 {strides = array<i32>} : memref<2x16x4xf32, #tpu.memory_space<vmem>>, vector<1x16x4xf32>,
    %38 = arith.maximumf %27, %34 : vector<16x4xf32>
    %c0_35 = arith.constant 0 : index
    %c0_36 = arith.constant 0 : index
    %c0_37 = arith.constant 0 : index
    %39 = vector.load %arg13[%c0_35, %c0_36, %c0_37] : memref<2x16x4xf32, #tpu.memory_space<vmem>>, vector<1x16x4xf32>
    %40 = vector.shape_cast %39 : vector<1x16x4xf32> to vector<16x4xf32>
    %41 = arith.subf %40, %38 : vector<16x4xf32>
    %42 = math.exp %41 : vector<16x4xf32>
    %43 = arith.truncf %42 : vector<16x4xf32> to vector<16x4xbf16>
    %cst_38 = arith.constant dense<0.000000e+00> : vector<16x256xf32>
    %44 = tpu.matmul %43, %20, %cst_38 {dimension_numbers = #tpu.dot_dimension_numbers<[1], [0], [0], [1], [0, 0, 1, 1], [], []>} : vector<16x4xbf16>, vector<4x256xbf16>, vector<16x256xf32> -> vector<16x256xf32>
    %c0_39 = arith.constant 0 : index
    %c0_40 = arith.constant 0 : index
    %c0_41 = arith.constant 0 : index
    %45 = vector.load %arg11[%c0_39, %c0_40, %c0_41] : memref<2x16x256xbf16, #tpu.memory_space<vmem>>, vector<1x16x256xbf16>
    %46 = vector.shape_cast %45 : vector<1x16x256xbf16> to vector<16x256xbf16>
    %47 = arith.extf %46 : vector<16x256xbf16> to vector<16x256xf32>
    %48 = arith.mulf %44, %47 : vector<16x256xf32>
    %c1_42 = arith.constant 1 : index
    %c0_43 = arith.constant 0 : index
    %c0_44 = arith.constant 0 : index
    %49 = vector.load %arg13[%c1_42, %c0_43, %c0_44] : memref<2x16x4xf32, #tpu.memory_space<vmem>>, vector<1x16x4xf32>
    %50 = vector.shape_cast %49 : vector<1x16x4xf32> to vector<16x4xf32>
    %51 = arith.subf %50, %38 : vector<16x4xf32>
    %52 = math.exp %51 : vector<16x4xf32>
    %53 = arith.addf %42, %52 : vector<16x4xf32>
    %54 = arith.truncf %52 : vector<16x4xf32> to vector<16x4xbf16>
    %cst_45 = arith.constant dense<0.000000e+00> : vector<16x256xf32>
    %55 = tpu.matmul %54, %20, %cst_45 {dimension_numbers = #tpu.dot_dimension_numbers<[1], [0], [0], [1], [0, 0, 1, 1], [], []>} : vector<16x4xbf16>, vector<4x256xbf16>, vector<16x256xf32> -> vector<16x256xf32>
    %c1_46 = arith.constant 1 : index
    %c0_47 = arith.constant 0 : index
    %c0_48 = arith.constant 0 : index
    %56 = vector.load %arg11[%c1_46, %c0_47, %c0_48] : memref<2x16x256xbf16, #tpu.memory_space<vmem>>, vector<1x16x256xbf16>
    %57 = vector.shape_cast %56 : vector<1x16x256xbf16> to vector<16x256xbf16>
    %58 = arith.extf %57 : vector<16x256xbf16> to vector<16x256xf32>
    %59 = arith.mulf %55, %58 : vector<16x256xf32>
    %60 = arith.addf %48, %59 : vector<16x256xf32>
    %61 = tpu.reciprocal %53 {approx = true} : vector<16x4xf32> -> vector<16x4xf32>
    %cst_49 = arith.constant dense<0.000000e+00> : vector<16x256xf32>
    %62 = tpu.matmul %61, %21, %cst_49 {dimension_numbers = #tpu.dot_dimension_numbers<[1], [0], [0], [1], [0, 0, 1, 1], [], []>} : vector<16x4xf32>, vector<4x256xf32>, vector<16x256xf32> -> vector<16x256xf32>
    %63 = arith.mulf %60, %62 : vector<16x256xf32>
    %c0_50 = arith.constant 0 : index
    %c0_51 = arith.constant 0 : index
    %c0_52 = arith.constant 0 : index
    %64 = vector.load %arg12[%c0_50, %c0_51, %c0_52] : memref<2x16x256xf32, #tpu.memory_space<vmem>>, vector<1x16x256xf32>
    %65 = vector.shape_cast %64 : vector<1x16x256xf32> to vector<16x256xf32>
    %66 = vector.shape_cast %63 : vector<16x256xf32> to vector<1x16x256xf32>
    tpu.vector_store %arg12[%c0_50, %c0_51, %c0_52], %66 {strides = array<i32>} : memref<2x16x256xf32, #tpu.memory_space<vmem>>, vector<1x16x256xf32>,
    %c1_53 = arith.constant 1 : index
    %c0_54 = arith.constant 0 : index
    %c0_55 = arith.constant 0 : index
    %67 = vector.load %arg9[%c1_53, %c0_54, %c0_55] : memref<2x16x256xbf16, #tpu.memory_space<vmem>>, vector<1x16x256xbf16>
    %68 = vector.shape_cast %67 : vector<1x16x256xbf16> to vector<16x256xbf16>
    %c0_56 = arith.constant 0 : index
    %c0_57 = arith.constant 0 : index
    %c0_58 = arith.constant 0 : index
    %69 = vector.load %arg10[%c0_56, %c0_57, %c0_58] : memref<2x16x256xbf16, #tpu.memory_space<vmem>>, vector<1x16x256xbf16>
    %70 = vector.shape_cast %69 : vector<1x16x256xbf16> to vector<16x256xbf16>
    %71 = arith.mulf %68, %70 : vector<16x256xbf16>
    %cst_59 = arith.constant dense<0.000000e+00> : vector<16x4xf32>
    %72 = tpu.matmul %71, %19, %cst_59 {dimension_numbers = #tpu.dot_dimension_numbers<[1], [0], [0], [1], [0, 0, 1, 1], [], []>} : vector<16x256xbf16>, vector<256x4xbf16>, vector<16x4xf32> -> vector<16x4xf32>
    %c0_60 = arith.constant 0 : index
    %c0_61 = arith.constant 0 : index
    %c0_62 = arith.constant 0 : index
    %73 = vector.load %arg13[%c0_60, %c0_61, %c0_62] : memref<2x16x4xf32, #tpu.memory_space<vmem>>, vector<1x16x4xf32>
    %74 = vector.shape_cast %73 : vector<1x16x4xf32> to vector<16x4xf32>
    %75 = vector.shape_cast %72 : vector<16x4xf32> to vector<1x16x4xf32>
    tpu.vector_store %arg13[%c0_60, %c0_61, %c0_62], %75 {strides = array<i32>} : memref<2x16x4xf32, #tpu.memory_space<vmem>>, vector<1x16x4xf32>,
    %c1_63 = arith.constant 1 : index
    %c0_64 = arith.constant 0 : index
    %c0_65 = arith.constant 0 : index
    %76 = vector.load %arg10[%c1_63, %c0_64, %c0_65] : memref<2x16x256xbf16, #tpu.memory_space<vmem>>, vector<1x16x256xbf16>
    %77 = vector.shape_cast %76 : vector<1x16x256xbf16> to vector<16x256xbf16>
    %78 = arith.mulf %68, %77 : vector<16x256xbf16>
    %cst_66 = arith.constant dense<0.000000e+00> : vector<16x4xf32>
    %79 = tpu.matmul %78, %19, %cst_66 {dimension_numbers = #tpu.dot_dimension_numbers<[1], [0], [0], [1], [0, 0, 1, 1], [], []>} : vector<16x256xbf16>, vector<256x4xbf16>, vector<16x4xf32> -> vector<16x4xf32>
    %c1_67 = arith.constant 1 : index
    %c0_68 = arith.constant 0 : index
    %c0_69 = arith.constant 0 : index
    %80 = vector.load %arg13[%c1_67, %c0_68, %c0_69] : memref<2x16x4xf32, #tpu.memory_space<vmem>>, vector<1x16x4xf32>
    %81 = vector.shape_cast %80 : vector<1x16x4xf32> to vector<16x4xf32>
    %82 = vector.shape_cast %79 : vector<16x4xf32> to vector<1x16x4xf32>
    tpu.vector_store %arg13[%c1_67, %c0_68, %c0_69], %82 {strides = array<i32>} : memref<2x16x4xf32, #tpu.memory_space<vmem>>, vector<1x16x4xf32>,
    %83 = arith.maximumf %72, %79 : vector<16x4xf32>
    %c0_70 = arith.constant 0 : index
    %c0_71 = arith.constant 0 : index
    %c0_72 = arith.constant 0 : index
    %84 = vector.load %arg13[%c0_70, %c0_71, %c0_72] : memref<2x16x4xf32, #tpu.memory_space<vmem>>, vector<1x16x4xf32>
    %85 = vector.shape_cast %84 : vector<1x16x4xf32> to vector<16x4xf32>
    %86 = arith.subf %85, %83 : vector<16x4xf32>
    %87 = math.exp %86 : vector<16x4xf32>
    %88 = arith.truncf %87 : vector<16x4xf32> to vector<16x4xbf16>
    %cst_73 = arith.constant dense<0.000000e+00> : vector<16x256xf32>
    %89 = tpu.matmul %88, %20, %cst_73 {dimension_numbers = #tpu.dot_dimension_numbers<[1], [0], [0], [1], [0, 0, 1, 1], [], []>} : vector<16x4xbf16>, vector<4x256xbf16>, vector<16x256xf32> -> vector<16x256xf32>
    %c0_74 = arith.constant 0 : index
    %c0_75 = arith.constant 0 : index
    %c0_76 = arith.constant 0 : index
    %90 = vector.load %arg11[%c0_74, %c0_75, %c0_76] : memref<2x16x256xbf16, #tpu.memory_space<vmem>>, vector<1x16x256xbf16>
    %91 = vector.shape_cast %90 : vector<1x16x256xbf16> to vector<16x256xbf16>
    %92 = arith.extf %91 : vector<16x256xbf16> to vector<16x256xf32>
    %93 = arith.mulf %89, %92 : vector<16x256xf32>
    %c1_77 = arith.constant 1 : index
    %c0_78 = arith.constant 0 : index
    %c0_79 = arith.constant 0 : index
    %94 = vector.load %arg13[%c1_77, %c0_78, %c0_79] : memref<2x16x4xf32, #tpu.memory_space<vmem>>, vector<1x16x4xf32>
    %95 = vector.shape_cast %94 : vector<1x16x4xf32> to vector<16x4xf32>
    %96 = arith.subf %95, %83 : vector<16x4xf32>
    %97 = math.exp %96 : vector<16x4xf32>
    %98 = arith.addf %87, %97 : vector<16x4xf32>
    %99 = arith.truncf %97 : vector<16x4xf32> to vector<16x4xbf16>
    %cst_80 = arith.constant dense<0.000000e+00> : vector<16x256xf32>
    %100 = tpu.matmul %99, %20, %cst_80 {dimension_numbers = #tpu.dot_dimension_numbers<[1], [0], [0], [1], [0, 0, 1, 1], [], []>} : vector<16x4xbf16>, vector<4x256xbf16>, vector<16x256xf32> -> vector<16x256xf32>
    %c1_81 = arith.constant 1 : index
    %c0_82 = arith.constant 0 : index
    %c0_83 = arith.constant 0 : index
    %101 = vector.load %arg11[%c1_81, %c0_82, %c0_83] : memref<2x16x256xbf16, #tpu.memory_space<vmem>>, vector<1x16x256xbf16>
    %102 = vector.shape_cast %101 : vector<1x16x256xbf16> to vector<16x256xbf16>
    %103 = arith.extf %102 : vector<16x256xbf16> to vector<16x256xf32>
    %104 = arith.mulf %100, %103 : vector<16x256xf32>
    %105 = arith.addf %93, %104 : vector<16x256xf32>
    %106 = tpu.reciprocal %98 {approx = true} : vector<16x4xf32> -> vector<16x4xf32>
    %cst_84 = arith.constant dense<0.000000e+00> : vector<16x256xf32>
    %107 = tpu.matmul %106, %21, %cst_84 {dimension_numbers = #tpu.dot_dimension_numbers<[1], [0], [0], [1], [0, 0, 1, 1], [], []>} : vector<16x4xf32>, vector<4x256xf32>, vector<16x256xf32> -> vector<16x256xf32>
    %108 = arith.mulf %105, %107 : vector<16x256xf32>
    %c1_85 = arith.constant 1 : index
    %c0_86 = arith.constant 0 : index
    %c0_87 = arith.constant 0 : index
    %109 = vector.load %arg12[%c1_85, %c0_86, %c0_87] : memref<2x16x256xf32, #tpu.memory_space<vmem>>, vector<1x16x256xf32>
    %110 = vector.shape_cast %109 : vector<1x16x256xf32> to vector<16x256xf32>
    %111 = vector.shape_cast %108 : vector<16x256xf32> to vector<1x16x256xf32>
    tpu.vector_store %arg12[%c1_85, %c0_86, %c0_87], %111 {strides = array<i32>} : memref<2x16x256xf32, #tpu.memory_space<vmem>>, vector<1x16x256xf32>,
    %c0_88 = arith.constant 0 : index
    %c0_89 = arith.constant 0 : index
    %c0_90 = arith.constant 0 : index
    %112 = vector.load %arg12[%c0_88, %c0_89, %c0_90] : memref<2x16x256xf32, #tpu.memory_space<vmem>>, vector<2x16x256xf32>
    %113 = vector.shape_cast %112 : vector<2x16x256xf32> to vector<32x256xf32>
    %114 = arith.truncf %113 : vector<32x256xf32> to vector<32x256xbf16>
    %c0_91 = arith.constant 0 : index
    %c0_92 = arith.constant 0 : index
    %115 = vector.load %arg4[%c0_91, %c0_92] : memref<256x256xbf16, #tpu.memory_space<vmem>>, vector<256x256xbf16>
    %cst_93 = arith.constant dense<0.000000e+00> : vector<32x256xf32>
    %116 = tpu.matmul %114, %115, %cst_93 {dimension_numbers = #tpu.dot_dimension_numbers<[1], [0], [0], [1], [0, 0, 1, 1], [], []>} : vector<32x256xbf16>, vector<256x256xbf16>, vector<32x256xf32> -> vector<32x256xf32>
    %c0_94 = arith.constant 0 : index
    %c0_95 = arith.constant 0 : index
    %117 = vector.load %arg5[%c0_94, %c0_95] : memref<1x256xf32, #tpu.memory_space<vmem>>, vector<1x256xf32>
    %118 = vector.broadcast %117 : vector<1x256xf32> to vector<32x256xf32>
    %119 = arith.addf %116, %118 : vector<32x256xf32>
    %c0_96 = arith.constant 0 : index
    %c0_97 = arith.constant 0 : index
    %c0_98 = arith.constant 0 : index
    %120 = vector.load %arg1[%c0_96, %c0_97, %c0_98] : memref<2x16x256xbf16, #tpu.memory_space<vmem>>, vector<2x16x256xbf16>
    %121 = vector.shape_cast %120 : vector<2x16x256xbf16> to vector<32x256xbf16>
    %122 = arith.extf %121 : vector<32x256xbf16> to vector<32x256xf32>
    %123 = arith.addf %119, %122 : vector<32x256xf32>
    %124 = vector.shape_cast %123 : vector<32x256xf32> to vector<2x16x256xf32>
    %125 = arith.truncf %124 : vector<2x16x256xf32> to vector<2x16x256xbf16>
    %c0_99 = arith.constant 0 : index
    %c0_100 = arith.constant 0 : index
    %c0_101 = arith.constant 0 : index
    %126 = vector.load %arg8[%c0_99, %c0_100, %c0_101] : memref<2x16x256xbf16, #tpu.memory_space<vmem>>, vector<2x16x256xbf16>
    tpu.vector_store %arg8[%c0_99, %c0_100, %c0_101], %125 {strides = array<i32>} : memref<2x16x256xbf16, #tpu.memory_space<vmem>>, vector<2x16x256xbf16>,
    return
  }
  func.func @transform_0(%arg0: i32) -> (i32, i32, i32) {
    %c0_i32 = arith.constant 0 : i32
    %c0_i32_0 = arith.constant 0 : i32
    %c0_i32_1 = arith.constant 0 : i32
    return %c0_i32, %arg0, %c0_i32_0 : i32, i32, i32
  }
  func.func @transform_1(%arg0: i32) -> (i32, i32) {
    %c0_i32 = arith.constant 0 : i32
    %c0_i32_0 = arith.constant 0 : i32
    %c0_i32_1 = arith.constant 0 : i32
    return %c0_i32, %c0_i32_0 : i32, i32
  }
  func.func @transform_2(%arg0: i32) -> (i32, i32) {
    %c0_i32 = arith.constant 0 : i32
    %c0_i32_0 = arith.constant 0 : i32
    %c0_i32_1 = arith.constant 0 : i32
    return %c0_i32, %c0_i32_0 : i32, i32
  }
  func.func @transform_3(%arg0: i32) -> (i32, i32) {
    %c0_i32 = arith.constant 0 : i32
    %c0_i32_0 = arith.constant 0 : i32
    %c0_i32_1 = arith.constant 0 : i32
    return %c0_i32, %c0_i32_0 : i32, i32
  }
  func.func @transform_4(%arg0: i32) -> (i32, i32) {
    %c0_i32 = arith.constant 0 : i32
    %c0_i32_0 = arith.constant 0 : i32
    %c0_i32_1 = arith.constant 0 : i32
    return %c0_i32, %c0_i32_0 : i32, i32
  }
  func.func @transform_5(%arg0: i32) -> (i32, i32) {
    %c0_i32 = arith.constant 0 : i32
    %c0_i32_0 = arith.constant 0 : i32
    %c0_i32_1 = arith.constant 0 : i32
    return %c0_i32, %c0_i32_0 : i32, i32
  }
  func.func @transform_6(%arg0: i32) -> (i32, i32) {
    %c0_i32 = arith.constant 0 : i32
    %c0_i32_0 = arith.constant 0 : i32
    %c0_i32_1 = arith.constant 0 : i32
    return %c0_i32, %c0_i32_0 : i32, i32
  }
  func.func @transform_7(%arg0: i32) -> (i32, i32, i32) {
    %c0_i32 = arith.constant 0 : i32
    %c0_i32_0 = arith.constant 0 : i32
    %c0_i32_1 = arith.constant 0 : i32
    return %c0_i32, %arg0, %c0_i32_0 : i32, i32, i32
  }
}

module attributes {stable_mosaic.version = 11 : i64} {
  func.func @pool_kernel(%arg0: i32, %arg1: i32, %arg2: memref<1x16x64xbf16, #tpu.memory_space<vmem>>, %arg3: memref<1x16x64xbf16, #tpu.memory_space<vmem>>, %arg4: memref<1x16x128xbf16, #tpu.memory_space<vmem>>, %arg5: memref<1x16x256xbf16, #tpu.memory_space<vmem>>, %arg6: memref<64x64xbf16, #tpu.memory_space<vmem>>, %arg7: memref<64x64xbf16, #tpu.memory_space<vmem>>, %arg8: memref<128x64xbf16, #tpu.memory_space<vmem>>, %arg9: memref<256x64xbf16, #tpu.memory_space<vmem>>, %arg10: memref<1x64xf32, #tpu.memory_space<vmem>>, %arg11: memref<1x1x64xf32, #tpu.memory_space<vmem>>, %arg12: memref<1x1x64xf32, #tpu.memory_space<vmem>>) attributes {dimension_semantics = [#tpu.dimension_semantics<parallel>, #tpu.dimension_semantics<arbitrary>], iteration_bounds = array<i64: 2, 1>, scalar_prefetch = 0 : i64, scratch_operands = 0 : i64, tpu.core_type = #tpu.core_type<tc>, window_params = [{transform_indices = @transform_0, window_bounds = array<i64: 1, 16, 64>}, {transform_indices = @transform_1, window_bounds = array<i64: 1, 16, 64>}, {transform_indices = @transform_2, window_bounds = array<i64: 1, 16, 128>}, {transform_indices = @transform_3, window_bounds = array<i64: 1, 16, 256>}, {pipeline_mode = #tpu.pipeline_mode<synchronous>, transform_indices = @transform_4, window_bounds = array<i64: 64, 64>}, {pipeline_mode = #tpu.pipeline_mode<synchronous>, transform_indices = @transform_5, window_bounds = array<i64: 64, 64>}, {pipeline_mode = #tpu.pipeline_mode<synchronous>, transform_indices = @transform_6, window_bounds = array<i64: 128, 64>}, {pipeline_mode = #tpu.pipeline_mode<synchronous>, transform_indices = @transform_7, window_bounds = array<i64: 256, 64>}, {pipeline_mode = #tpu.pipeline_mode<synchronous>, transform_indices = @transform_8, window_bounds = array<i64: 1, 64>}, {transform_indices = @transform_9, window_bounds = array<i64: 1, 1, 64>}, {transform_indices = @transform_10, window_bounds = array<i64: 1, 1, 64>}]} {
    %c0 = arith.constant 0 : index
    %c0_0 = arith.constant 0 : index
    %c0_1 = arith.constant 0 : index
    %0 = vector.load %arg2[%c0, %c0_0, %c0_1] : memref<1x16x64xbf16, #tpu.memory_space<vmem>>, vector<1x16x64xbf16>
    %1 = vector.shape_cast %0 : vector<1x16x64xbf16> to vector<16x64xbf16>
    %c0_2 = arith.constant 0 : index
    %c0_3 = arith.constant 0 : index
    %2 = vector.load %arg6[%c0_2, %c0_3] : memref<64x64xbf16, #tpu.memory_space<vmem>>, vector<64x64xbf16>
    %cst = arith.constant dense<0.000000e+00> : vector<16x64xf32>
    %3 = tpu.matmul %1, %2, %cst {dimension_numbers = #tpu.dot_dimension_numbers<[1], [0], [0], [1], [0, 0, 1, 1], [], []>} : vector<16x64xbf16>, vector<64x64xbf16>, vector<16x64xf32> -> vector<16x64xf32>
    %c0_4 = arith.constant 0 : index
    %c0_5 = arith.constant 0 : index
    %c0_6 = arith.constant 0 : index
    %4 = vector.load %arg3[%c0_4, %c0_5, %c0_6] : memref<1x16x64xbf16, #tpu.memory_space<vmem>>, vector<1x16x64xbf16>
    %5 = vector.shape_cast %4 : vector<1x16x64xbf16> to vector<16x64xbf16>
    %c0_7 = arith.constant 0 : index
    %c0_8 = arith.constant 0 : index
    %6 = vector.load %arg7[%c0_7, %c0_8] : memref<64x64xbf16, #tpu.memory_space<vmem>>, vector<64x64xbf16>
    %cst_9 = arith.constant dense<0.000000e+00> : vector<16x64xf32>
    %7 = tpu.matmul %5, %6, %cst_9 {dimension_numbers = #tpu.dot_dimension_numbers<[1], [0], [0], [1], [0, 0, 1, 1], [], []>} : vector<16x64xbf16>, vector<64x64xbf16>, vector<16x64xf32> -> vector<16x64xf32>
    %8 = arith.addf %3, %7 : vector<16x64xf32>
    %c0_10 = arith.constant 0 : index
    %c0_11 = arith.constant 0 : index
    %c0_12 = arith.constant 0 : index
    %9 = vector.load %arg4[%c0_10, %c0_11, %c0_12] : memref<1x16x128xbf16, #tpu.memory_space<vmem>>, vector<1x16x128xbf16>
    %10 = vector.shape_cast %9 : vector<1x16x128xbf16> to vector<16x128xbf16>
    %c0_13 = arith.constant 0 : index
    %c0_14 = arith.constant 0 : index
    %11 = vector.load %arg8[%c0_13, %c0_14] : memref<128x64xbf16, #tpu.memory_space<vmem>>, vector<128x64xbf16>
    %cst_15 = arith.constant dense<0.000000e+00> : vector<16x64xf32>
    %12 = tpu.matmul %10, %11, %cst_15 {dimension_numbers = #tpu.dot_dimension_numbers<[1], [0], [0], [1], [0, 0, 1, 1], [], []>} : vector<16x128xbf16>, vector<128x64xbf16>, vector<16x64xf32> -> vector<16x64xf32>
    %13 = arith.addf %8, %12 : vector<16x64xf32>
    %c0_16 = arith.constant 0 : index
    %c0_17 = arith.constant 0 : index
    %c0_18 = arith.constant 0 : index
    %14 = vector.load %arg5[%c0_16, %c0_17, %c0_18] : memref<1x16x256xbf16, #tpu.memory_space<vmem>>, vector<1x16x256xbf16>
    %15 = vector.shape_cast %14 : vector<1x16x256xbf16> to vector<16x256xbf16>
    %c0_19 = arith.constant 0 : index
    %c0_20 = arith.constant 0 : index
    %16 = vector.load %arg9[%c0_19, %c0_20] : memref<256x64xbf16, #tpu.memory_space<vmem>>, vector<256x64xbf16>
    %cst_21 = arith.constant dense<0.000000e+00> : vector<16x64xf32>
    %17 = tpu.matmul %15, %16, %cst_21 {dimension_numbers = #tpu.dot_dimension_numbers<[1], [0], [0], [1], [0, 0, 1, 1], [], []>} : vector<16x256xbf16>, vector<256x64xbf16>, vector<16x64xf32> -> vector<16x64xf32>
    %18 = arith.addf %13, %17 : vector<16x64xf32>
    %c0_22 = arith.constant 0 : index
    %c0_23 = arith.constant 0 : index
    %19 = vector.load %arg10[%c0_22, %c0_23] : memref<1x64xf32, #tpu.memory_space<vmem>>, vector<1x64xf32>
    %20 = vector.broadcast %19 : vector<1x64xf32> to vector<16x64xf32>
    %21 = arith.addf %18, %20 : vector<16x64xf32>
    %cst_24 = arith.constant 0.000000e+00 : f32
    %22 = vector.broadcast %cst_24 : f32 to vector<16x64xf32>
    %23 = arith.cmpf ogt, %21, %22 : vector<16x64xf32>
    %cst_25 = arith.constant 2.000000e-01 : f32
    %24 = vector.broadcast %cst_25 : f32 to vector<16x64xf32>
    %25 = arith.mulf %24, %21 : vector<16x64xf32>
    %26 = arith.select %23, %21, %25 : vector<16x64xi1>, vector<16x64xf32>
    %cst_26 = arith.constant dense<0xFF800000> : vector<64xf32>
    %27 = vector.multi_reduction <maximumf>, %26, %cst_26 [0] : vector<16x64xf32> to vector<64xf32>
    %28 = vector.shape_cast %27 : vector<64xf32> to vector<1x64xf32>
    %cst_27 = arith.constant dense<0.000000e+00> : vector<64xf32>
    %29 = vector.multi_reduction <add>, %26, %cst_27 [0] : vector<16x64xf32> to vector<64xf32>
    %30 = vector.shape_cast %29 : vector<64xf32> to vector<1x64xf32>
    %c0_i32 = arith.constant 0 : i32
    %31 = arith.cmpi eq, %arg1, %c0_i32 : i32
    %32 = arith.extui %31 : i1 to i32
    %c0_i32_28 = arith.constant 0 : i32
    %33 = arith.cmpi ne, %32, %c0_i32_28 : i32
    scf.if %33 {
      %c0_33 = arith.constant 0 : index
      %c0_34 = arith.constant 0 : index
      %c0_35 = arith.constant 0 : index
      %40 = vector.load %arg11[%c0_33, %c0_34, %c0_35] : memref<1x1x64xf32, #tpu.memory_space<vmem>>, vector<1x1x64xf32>
      %41 = vector.shape_cast %40 : vector<1x1x64xf32> to vector<1x64xf32>
      %42 = vector.shape_cast %28 : vector<1x64xf32> to vector<1x1x64xf32>
      tpu.vector_store %arg11[%c0_33, %c0_34, %c0_35], %42 {strides = array<i32>} : memref<1x1x64xf32, #tpu.memory_space<vmem>>, vector<1x1x64xf32>,
      %c0_36 = arith.constant 0 : index
      %c0_37 = arith.constant 0 : index
      %c0_38 = arith.constant 0 : index
      %43 = vector.load %arg12[%c0_36, %c0_37, %c0_38] : memref<1x1x64xf32, #tpu.memory_space<vmem>>, vector<1x1x64xf32>
      %44 = vector.shape_cast %43 : vector<1x1x64xf32> to vector<1x64xf32>
      %45 = vector.shape_cast %30 : vector<1x64xf32> to vector<1x1x64xf32>
      tpu.vector_store %arg12[%c0_36, %c0_37, %c0_38], %45 {strides = array<i32>} : memref<1x1x64xf32, #tpu.memory_space<vmem>>, vector<1x1x64xf32>,
    } else {
    }
    %c0_i32_29 = arith.constant 0 : i32
    %34 = arith.cmpi sgt, %arg1, %c0_i32_29 : i32
    %35 = arith.extui %34 : i1 to i32
    %c0_i32_30 = arith.constant 0 : i32
    %36 = arith.cmpi ne, %35, %c0_i32_30 : i32
    scf.if %36 {
      %c0_33 = arith.constant 0 : index
      %c0_34 = arith.constant 0 : index
      %c0_35 = arith.constant 0 : index
      %40 = vector.load %arg11[%c0_33, %c0_34, %c0_35] : memref<1x1x64xf32, #tpu.memory_space<vmem>>, vector<1x1x64xf32>
      %41 = vector.shape_cast %40 : vector<1x1x64xf32> to vector<1x64xf32>
      %42 = arith.maximumf %41, %28 : vector<1x64xf32>
      %c0_36 = arith.constant 0 : index
      %c0_37 = arith.constant 0 : index
      %c0_38 = arith.constant 0 : index
      %43 = vector.load %arg11[%c0_36, %c0_37, %c0_38] : memref<1x1x64xf32, #tpu.memory_space<vmem>>, vector<1x1x64xf32>
      %44 = vector.shape_cast %43 : vector<1x1x64xf32> to vector<1x64xf32>
      %45 = vector.shape_cast %42 : vector<1x64xf32> to vector<1x1x64xf32>
      tpu.vector_store %arg11[%c0_36, %c0_37, %c0_38], %45 {strides = array<i32>} : memref<1x1x64xf32, #tpu.memory_space<vmem>>, vector<1x1x64xf32>,
      %c0_39 = arith.constant 0 : index
      %c0_40 = arith.constant 0 : index
      %c0_41 = arith.constant 0 : index
      %46 = vector.load %arg12[%c0_39, %c0_40, %c0_41] : memref<1x1x64xf32, #tpu.memory_space<vmem>>, vector<1x1x64xf32>
      %47 = vector.shape_cast %46 : vector<1x1x64xf32> to vector<1x64xf32>
      %48 = arith.addf %47, %30 : vector<1x64xf32>
      %c0_42 = arith.constant 0 : index
      %c0_43 = arith.constant 0 : index
      %c0_44 = arith.constant 0 : index
      %49 = vector.load %arg12[%c0_42, %c0_43, %c0_44] : memref<1x1x64xf32, #tpu.memory_space<vmem>>, vector<1x1x64xf32>
      %50 = vector.shape_cast %49 : vector<1x1x64xf32> to vector<1x64xf32>
      %51 = vector.shape_cast %48 : vector<1x64xf32> to vector<1x1x64xf32>
      tpu.vector_store %arg12[%c0_42, %c0_43, %c0_44], %51 {strides = array<i32>} : memref<1x1x64xf32, #tpu.memory_space<vmem>>, vector<1x1x64xf32>,
    } else {
    }
    %c0_i32_31 = arith.constant 0 : i32
    %37 = arith.cmpi eq, %arg1, %c0_i32_31 : i32
    %38 = arith.extui %37 : i1 to i32
    %c0_i32_32 = arith.constant 0 : i32
    %39 = arith.cmpi ne, %38, %c0_i32_32 : i32
    scf.if %39 {
      %c0_33 = arith.constant 0 : index
      %c0_34 = arith.constant 0 : index
      %c0_35 = arith.constant 0 : index
      %40 = vector.load %arg12[%c0_33, %c0_34, %c0_35] : memref<1x1x64xf32, #tpu.memory_space<vmem>>, vector<1x1x64xf32>
      %41 = vector.shape_cast %40 : vector<1x1x64xf32> to vector<1x64xf32>
      %cst_36 = arith.constant 6.250000e-02 : f32
      %42 = vector.broadcast %cst_36 : f32 to vector<1x64xf32>
      %43 = arith.mulf %41, %42 : vector<1x64xf32>
      %c0_37 = arith.constant 0 : index
      %c0_38 = arith.constant 0 : index
      %c0_39 = arith.constant 0 : index
      %44 = vector.load %arg12[%c0_37, %c0_38, %c0_39] : memref<1x1x64xf32, #tpu.memory_space<vmem>>, vector<1x1x64xf32>
      %45 = vector.shape_cast %44 : vector<1x1x64xf32> to vector<1x64xf32>
      %46 = vector.shape_cast %43 : vector<1x64xf32> to vector<1x1x64xf32>
      tpu.vector_store %arg12[%c0_37, %c0_38, %c0_39], %46 {strides = array<i32>} : memref<1x1x64xf32, #tpu.memory_space<vmem>>, vector<1x1x64xf32>,
    } else {
    }
    return
  }
  func.func @transform_0(%arg0: i32, %arg1: i32) -> (i32, i32, i32) {
    %c0_i32 = arith.constant 0 : i32
    %c0_i32_0 = arith.constant 0 : i32
    return %arg0, %arg1, %c0_i32 : i32, i32, i32
  }
  func.func @transform_1(%arg0: i32, %arg1: i32) -> (i32, i32, i32) {
    %c0_i32 = arith.constant 0 : i32
    %c0_i32_0 = arith.constant 0 : i32
    return %arg0, %arg1, %c0_i32 : i32, i32, i32
  }
  func.func @transform_2(%arg0: i32, %arg1: i32) -> (i32, i32, i32) {
    %c0_i32 = arith.constant 0 : i32
    %c0_i32_0 = arith.constant 0 : i32
    return %arg0, %arg1, %c0_i32 : i32, i32, i32
  }
  func.func @transform_3(%arg0: i32, %arg1: i32) -> (i32, i32, i32) {
    %c0_i32 = arith.constant 0 : i32
    %c0_i32_0 = arith.constant 0 : i32
    return %arg0, %arg1, %c0_i32 : i32, i32, i32
  }
  func.func @transform_4(%arg0: i32, %arg1: i32) -> (i32, i32) {
    %c0_i32 = arith.constant 0 : i32
    %c0_i32_0 = arith.constant 0 : i32
    %c0_i32_1 = arith.constant 0 : i32
    return %c0_i32, %c0_i32_0 : i32, i32
  }
  func.func @transform_5(%arg0: i32, %arg1: i32) -> (i32, i32) {
    %c0_i32 = arith.constant 0 : i32
    %c0_i32_0 = arith.constant 0 : i32
    %c0_i32_1 = arith.constant 0 : i32
    return %c0_i32, %c0_i32_0 : i32, i32
  }
  func.func @transform_6(%arg0: i32, %arg1: i32) -> (i32, i32) {
    %c0_i32 = arith.constant 0 : i32
    %c0_i32_0 = arith.constant 0 : i32
    %c0_i32_1 = arith.constant 0 : i32
    return %c0_i32, %c0_i32_0 : i32, i32
  }
  func.func @transform_7(%arg0: i32, %arg1: i32) -> (i32, i32) {
    %c0_i32 = arith.constant 0 : i32
    %c0_i32_0 = arith.constant 0 : i32
    %c0_i32_1 = arith.constant 0 : i32
    return %c0_i32, %c0_i32_0 : i32, i32
  }
  func.func @transform_8(%arg0: i32, %arg1: i32) -> (i32, i32) {
    %c0_i32 = arith.constant 0 : i32
    %c0_i32_0 = arith.constant 0 : i32
    %c0_i32_1 = arith.constant 0 : i32
    return %c0_i32, %c0_i32_0 : i32, i32
  }
  func.func @transform_9(%arg0: i32, %arg1: i32) -> (i32, i32, i32) {
    %c0_i32 = arith.constant 0 : i32
    %c0_i32_0 = arith.constant 0 : i32
    %c0_i32_1 = arith.constant 0 : i32
    return %arg0, %c0_i32, %c0_i32_0 : i32, i32, i32
  }
  func.func @transform_10(%arg0: i32, %arg1: i32) -> (i32, i32, i32) {
    %c0_i32 = arith.constant 0 : i32
    %c0_i32_0 = arith.constant 0 : i32
    %c0_i32_1 = arith.constant 0 : i32
    return %arg0, %c0_i32, %c0_i32_0 : i32, i32, i32
  }
}

module attributes {stable_mosaic.version = 11 : i64} {
  func.func @head_kernel(%arg0: memref<2x64xf32, #tpu.memory_space<vmem>>, %arg1: memref<2x64xf32, #tpu.memory_space<vmem>>, %arg2: memref<64x512xf32, #tpu.memory_space<vmem>>, %arg3: memref<64x512xf32, #tpu.memory_space<vmem>>, %arg4: memref<1x512xf32, #tpu.memory_space<vmem>>, %arg5: memref<512x256xf32, #tpu.memory_space<vmem>>, %arg6: memref<1x256xf32, #tpu.memory_space<vmem>>, %arg7: memref<256x8xf32, #tpu.memory_space<vmem>>, %arg8: memref<1x8xf32, #tpu.memory_space<vmem>>, %arg9: memref<2x8xf32, #tpu.memory_space<vmem>>) attributes {dimension_semantics = [], scalar_prefetch = 0 : i64, scratch_operands = 0 : i64, tpu.core_type = #tpu.core_type<tc>} {
    %c0 = arith.constant 0 : index
    %c0_0 = arith.constant 0 : index
    %0 = vector.load %arg0[%c0, %c0_0] : memref<2x64xf32, #tpu.memory_space<vmem>>, vector<2x64xf32>
    %c0_1 = arith.constant 0 : index
    %c0_2 = arith.constant 0 : index
    %1 = vector.load %arg2[%c0_1, %c0_2] : memref<64x512xf32, #tpu.memory_space<vmem>>, vector<64x512xf32>
    %cst = arith.constant dense<0.000000e+00> : vector<2x512xf32>
    %2 = tpu.matmul %0, %1, %cst {dimension_numbers = #tpu.dot_dimension_numbers<[1], [0], [0], [1], [0, 0, 1, 1], [], []>} : vector<2x64xf32>, vector<64x512xf32>, vector<2x512xf32> -> vector<2x512xf32>
    %c0_3 = arith.constant 0 : index
    %c0_4 = arith.constant 0 : index
    %3 = vector.load %arg1[%c0_3, %c0_4] : memref<2x64xf32, #tpu.memory_space<vmem>>, vector<2x64xf32>
    %c0_5 = arith.constant 0 : index
    %c0_6 = arith.constant 0 : index
    %4 = vector.load %arg3[%c0_5, %c0_6] : memref<64x512xf32, #tpu.memory_space<vmem>>, vector<64x512xf32>
    %cst_7 = arith.constant dense<0.000000e+00> : vector<2x512xf32>
    %5 = tpu.matmul %3, %4, %cst_7 {dimension_numbers = #tpu.dot_dimension_numbers<[1], [0], [0], [1], [0, 0, 1, 1], [], []>} : vector<2x64xf32>, vector<64x512xf32>, vector<2x512xf32> -> vector<2x512xf32>
    %6 = arith.addf %2, %5 : vector<2x512xf32>
    %c0_8 = arith.constant 0 : index
    %c0_9 = arith.constant 0 : index
    %7 = vector.load %arg4[%c0_8, %c0_9] : memref<1x512xf32, #tpu.memory_space<vmem>>, vector<1x512xf32>
    %8 = vector.broadcast %7 : vector<1x512xf32> to vector<2x512xf32>
    %9 = arith.addf %6, %8 : vector<2x512xf32>
    %cst_10 = arith.constant 0.000000e+00 : f32
    %10 = vector.broadcast %cst_10 : f32 to vector<2x512xf32>
    %11 = arith.cmpf ogt, %9, %10 : vector<2x512xf32>
    %cst_11 = arith.constant 2.000000e-01 : f32
    %12 = vector.broadcast %cst_11 : f32 to vector<2x512xf32>
    %13 = arith.mulf %12, %9 : vector<2x512xf32>
    %14 = arith.select %11, %9, %13 : vector<2x512xi1>, vector<2x512xf32>
    %c0_12 = arith.constant 0 : index
    %c0_13 = arith.constant 0 : index
    %15 = vector.load %arg5[%c0_12, %c0_13] : memref<512x256xf32, #tpu.memory_space<vmem>>, vector<512x256xf32>
    %cst_14 = arith.constant dense<0.000000e+00> : vector<2x256xf32>
    %16 = tpu.matmul %14, %15, %cst_14 {dimension_numbers = #tpu.dot_dimension_numbers<[1], [0], [0], [1], [0, 0, 1, 1], [], []>} : vector<2x512xf32>, vector<512x256xf32>, vector<2x256xf32> -> vector<2x256xf32>
    %c0_15 = arith.constant 0 : index
    %c0_16 = arith.constant 0 : index
    %17 = vector.load %arg6[%c0_15, %c0_16] : memref<1x256xf32, #tpu.memory_space<vmem>>, vector<1x256xf32>
    %18 = vector.broadcast %17 : vector<1x256xf32> to vector<2x256xf32>
    %19 = arith.addf %16, %18 : vector<2x256xf32>
    %cst_17 = arith.constant 0.000000e+00 : f32
    %20 = vector.broadcast %cst_17 : f32 to vector<2x256xf32>
    %21 = arith.cmpf ogt, %19, %20 : vector<2x256xf32>
    %cst_18 = arith.constant 2.000000e-01 : f32
    %22 = vector.broadcast %cst_18 : f32 to vector<2x256xf32>
    %23 = arith.mulf %22, %19 : vector<2x256xf32>
    %24 = arith.select %21, %19, %23 : vector<2x256xi1>, vector<2x256xf32>
    %c0_19 = arith.constant 0 : index
    %c0_20 = arith.constant 0 : index
    %25 = vector.load %arg7[%c0_19, %c0_20] : memref<256x8xf32, #tpu.memory_space<vmem>>, vector<256x8xf32>
    %cst_21 = arith.constant dense<0.000000e+00> : vector<2x8xf32>
    %26 = tpu.matmul %24, %25, %cst_21 {dimension_numbers = #tpu.dot_dimension_numbers<[1], [0], [0], [1], [0, 0, 1, 1], [], []>} : vector<2x256xf32>, vector<256x8xf32>, vector<2x8xf32> -> vector<2x8xf32>
    %c0_22 = arith.constant 0 : index
    %c0_23 = arith.constant 0 : index
    %27 = vector.load %arg8[%c0_22, %c0_23] : memref<1x8xf32, #tpu.memory_space<vmem>>, vector<1x8xf32>
    %28 = vector.broadcast %27 : vector<1x8xf32> to vector<2x8xf32>
    %29 = arith.addf %26, %28 : vector<2x8xf32>
    %c0_24 = arith.constant 0 : index
    %c0_25 = arith.constant 0 : index
    %30 = vector.load %arg9[%c0_24, %c0_25] : memref<2x8xf32, #tpu.memory_space<vmem>>, vector<2x8xf32>
    tpu.vector_store %arg9[%c0_24, %c0_25], %29 {strides = array<i32>} : memref<2x8xf32, #tpu.memory_space<vmem>>, vector<2x8xf32>,
    return
  }
}

</mosaic_0001>

<llo_original>
// kernel: attention_dgcnn_forward.10
$region0: #{attention_dgcnn_forward.10}
  #allocation0 [shape = 'u32[]', space=smem, size = 0x4, offset = 0x4, fixed_abs, tag = 'smem constant byte address 0x4 - core index']
  #allocation1 [shape = 'u32[144,128]{1,0:T(1,128)}', space=vmem, size = 0x12000, scoped, tag = 'internal scratch']
  %s0 = inlined_call_operand.vmem [shape: bf16[2,4,16,3], index: 0, kind: input, shape index: {}]
  %s1 = inlined_call_operand.vmem [shape: bf16[2,16,3], index: 1, kind: input, shape index: {}]
  %s2 = inlined_call_operand.vmem [shape: bf16[3,64], index: 2, kind: input, shape index: {}]
  %s3 = inlined_call_operand.vmem [shape: bf16[3,64], index: 3, kind: input, shape index: {}]
  %s4 = inlined_call_operand.vmem [shape: f32[1,64], index: 4, kind: input, shape index: {}]
  %s5 = inlined_call_operand.vmem [shape: bf16[2,16,64], index: 5, kind: output, shape index: {}]
  %s6 = sld [smem:[#allocation0]]
  $region53: #{attention_dgcnn_forward.10} parent=0
    _
  %s8 = ssub.s32 1, %s6
  %s9 = scalar_select 0, %s8, %s6
  loop: start=0, step=1, limit=4
  $region2: #{attention_dgcnn_forward.10} parent=0 // loop_pre_header
    _
  $region3: #{attention_dgcnn_forward.10} parent=0 // loop_header
    %s11 = sphi 0, %s15
    %p12 = scmp.ge.s32.totalorder %s11, 4
    %s18 = sphi 0, %s30
    %s19 = sphi 0, %s26
    %s20 = sphi 0, %s18
    %s21 = sphi 0, %s19
    %s22 = sphi 0, %s20
    %s23 = sphi 0, %s21
    %s35 = sphi 0, %s37
    %s38 = sphi 0, %s35
    %s39 = sphi 0, %s38
    %s55 = sphi 0, %s39
    %s63 = sphi 0, %s65
    %s66 = sphi 0, %s63
    %s67 = sphi 0, %s66
    %s83 = sphi 0, %s67
    %s87 = sphi 0, %s87
    %s89 = sphi 0, %s87
    %s90 = sphi 0, %s89
    %s104 = sphi 0, %s90
    %s108 = sphi 0, %s108
    %s110 = sphi 0, %s108
    %s111 = sphi 0, %s110
    %s125 = sphi 0, %s111
    %s129 = sphi 0, %s129
    %s131 = sphi 0, %s129
    %s132 = sphi 0, %s131
    %s146 = sphi 0, %s132
    %s154 = sphi 0, %s156
    %s157 = sphi 0, %s154
    %s158 = sphi 0, %s157
    %s174 = sphi 0, %s158
  $region4: #{attention_dgcnn_forward.10} parent=0 // loop_header_branch
    %14 = sbr.rel (%p12) target = $region8
  $region5: #{attention_dgcnn_forward.10} parent=0 // loop_body
    %s16 = ssub.s32 %s11, 1
    %s17 = ssub.s32 %s11, 2
    %s24 = sadd.s32 1, %s19
    %p25 = scmp.ge.s32.totalorder %s24, 1
    %s26 = scalar_select %p25, 0, %s24
    %s27 = sadd.s32 1, %s18
    %s28 = scalar_select %p25, %s27, %s18
    %p29 = scmp.ge.s32.totalorder %s28, 2
    %s30 = scalar_select %p29, 0, %s28
    %s31 = ssub.s32 %s18, %s30
    %s32 = ssub.s32 %s19, %s26
    %s33 = sor.u32 %s31, %s32
    %p34 = scmp.eq.s32.totalorder %s33, 0
    %s36 = sadd.s32 %s35, 1
    %s37 = scalar_select %p34, %s35, %s36
    %p40 = pneg %p34
    %p41 = scmp.eq.s32.totalorder %s11, 1
    %p42 = por %p40, %p41
    %p43 = scmp.ne.s32.totalorder %s35, %s38
    %p44 = scmp.eq.s32.totalorder %s11, 0
    %p45 = por %p43, %p44
    %p46 = scmp.ne.s32.totalorder %s35, %s38
    %p47 = scmp.eq.s32.totalorder %s16, 1
    %p48 = por %p46, %p47
    %p49 = scmp.ne.s32.totalorder %s38, %s39
    %p50 = scmp.eq.s32.totalorder %s16, 0
    %p51 = por %p49, %p50
    %p52 = scmp.ne.s32.totalorder %s38, %s39
    %p53 = scmp.eq.s32.totalorder %s17, 1
    %p54 = por %p52, %p53
    %p56 = scmp.ne.s32.totalorder %s39, %s55
    %p57 = scmp.eq.s32.totalorder %s17, 0
    %p58 = por %p56, %p57
    %s59 = ssub.s32 %s18, %s30
    %s60 = ssub.s32 %s19, %s26
    %s61 = sor.u32 %s59, %s60
    %p62 = scmp.eq.s32.totalorder %s61, 0
    %s64 = sadd.s32 %s63, 1
    %s65 = scalar_select %p62, %s63, %s64
    %p68 = pneg %p62
    %p69 = scmp.eq.s32.totalorder %s11, 1
    %p70 = por %p68, %p69
    %p71 = scmp.ne.s32.totalorder %s63, %s66
    %p72 = scmp.eq.s32.totalorder %s11, 0
    %p73 = por %p71, %p72
    %p74 = scmp.ne.s32.totalorder %s63, %s66
    %p75 = scmp.eq.s32.totalorder %s16, 1
    %p76 = por %p74, %p75
    %p77 = scmp.ne.s32.totalorder %s66, %s67
    %p78 = scmp.eq.s32.totalorder %s16, 0
    %p79 = por %p77, %p78
    %p80 = scmp.ne.s32.totalorder %s66, %s67
    %p81 = scmp.eq.s32.totalorder %s17, 1
    %p82 = por %p80, %p81
    %p84 = scmp.ne.s32.totalorder %s67, %s83
    %p85 = scmp.eq.s32.totalorder %s17, 0
    %p86 = por %p84, %p85
    %s88 = sadd.s32 %s87, 1
    %p91 = scmp.eq.s32.totalorder %s11, 1
    %p92 = scmp.ne.s32.totalorder %s87, %s89
    %p93 = scmp.eq.s32.totalorder %s11, 0
    %p94 = por %p92, %p93
    %p95 = scmp.ne.s32.totalorder %s87, %s89
    %p96 = scmp.eq.s32.totalorder %s16, 1
    %p97 = por %p95, %p96
    %p98 = scmp.ne.s32.totalorder %s89, %s90
    %p99 = scmp.eq.s32.totalorder %s16, 0
    %p100 = por %p98, %p99
    %p101 = scmp.ne.s32.totalorder %s89, %s90
    %p102 = scmp.eq.s32.totalorder %s17, 1
    %p103 = por %p101, %p102
    %p105 = scmp.ne.s32.totalorder %s90, %s104
    %p106 = scmp.eq.s32.totalorder %s17, 0
    %p107 = por %p105, %p106
    %s109 = sadd.s32 %s108, 1
    %p112 = scmp.eq.s32.totalorder %s11, 1
    %p113 = scmp.ne.s32.totalorder %s108, %s110
    %p114 = scmp.eq.s32.totalorder %s11, 0
    %p115 = por %p113, %p114
    %p116 = scmp.ne.s32.totalorder %s108, %s110
    %p117 = scmp.eq.s32.totalorder %s16, 1
    %p118 = por %p116, %p117
    %p119 = scmp.ne.s32.totalorder %s110, %s111
    %p120 = scmp.eq.s32.totalorder %s16, 0
    %p121 = por %p119, %p120
    %p122 = scmp.ne.s32.totalorder %s110, %s111
    %p123 = scmp.eq.s32.totalorder %s17, 1
    %p124 = por %p122, %p123
    %p126 = scmp.ne.s32.totalorder %s111, %s125
    %p127 = scmp.eq.s32.totalorder %s17, 0
    %p128 = por %p126, %p127
    %s130 = sadd.s32 %s129, 1
    %p133 = scmp.eq.s32.totalorder %s11, 1
    %p134 = scmp.ne.s32.totalorder %s129, %s131
    %p135 = scmp.eq.s32.totalorder %s11, 0
    %p136 = por %p134, %p135
    %p137 = scmp.ne.s32.totalorder %s129, %s131
    %p138 = scmp.eq.s32.totalorder %s16, 1
    %p139 = por %p137, %p138
    %p140 = scmp.ne.s32.totalorder %s131, %s132
    %p141 = scmp.eq.s32.totalorder %s16, 0
    %p142 = por %p140, %p141
    %p143 = scmp.ne.s32.totalorder %s131, %s132
    %p144 = scmp.eq.s32.totalorder %s17, 1
    %p145 = por %p143, %p144
    %p147 = scmp.ne.s32.totalorder %s132, %s146
    %p148 = scmp.eq.s32.totalorder %s17, 0
    %p149 = por %p147, %p148
    %s150 = ssub.s32 %s18, %s30
    %s151 = ssub.s32 %s19, %s26
    %s152 = sor.u32 %s150, %s151
    %p153 = scmp.eq.s32.totalorder %s152, 0
    %s155 = sadd.s32 %s154, 1
    %s156 = scalar_select %p153, %s154, %s155
    %p159 = pneg %p153
    %p160 = scmp.eq.s32.totalorder %s11, 1
    %p161 = por %p159, %p160
    %p162 = scmp.ne.s32.totalorder %s154, %s157
    %p163 = scmp.eq.s32.totalorder %s11, 0
    %p164 = por %p162, %p163
    %p165 = scmp.ne.s32.totalorder %s154, %s157
    %p166 = scmp.eq.s32.totalorder %s16, 1
    %p167 = por %p165, %p166
    %p168 = scmp.ne.s32.totalorder %s157, %s158
    %p169 = scmp.eq.s32.totalorder %s16, 0
    %p170 = por %p168, %p169
    %p171 = scmp.ne.s32.totalorder %s157, %s158
    %p172 = scmp.eq.s32.totalorder %s17, 1
    %p173 = por %p171, %p172
    %p175 = scmp.ne.s32.totalorder %s158, %s174
    %p176 = scmp.eq.s32.totalorder %s17, 0
    %p177 = por %p175, %p176
    %p178 = scmp.le.s32.totalorder 1, %s11
    %p179 = scmp.lt.s32.totalorder %s11, 3
    %p180 = pnand %p178, %p179
    %p181 = pneg %p180
    // Predicated region
    $region9: #{attention_dgcnn_forward.10} parent=5 // pred_check
      _
    $region10: #{attention_dgcnn_forward.10} parent=5 // pred_check_branch
      %183 = sbr.rel (%p180) target = $region12
    $region11: #{attention_dgcnn_forward.10} parent=5 // pred_region
      %s184 = ssub.s32 %s11, 1
      // Predicated region
      $region13: #{attention_dgcnn_forward.10} parent=11 // pred_check
        %p185 = pneg %p100
      $region14: #{attention_dgcnn_forward.10} parent=11 // pred_check_branch
        %187 = sbr.rel (%p185) target = $region16
      $region15: #{attention_dgcnn_forward.10} parent=11 // pred_region
        _
      $region16: #{attention_dgcnn_forward.10} parent=11 // pred_fallthru
        _
      // Predicated region
      $region17: #{attention_dgcnn_forward.10} parent=11 // pred_check
        %p188 = pneg %p121
      $region18: #{attention_dgcnn_forward.10} parent=11 // pred_check_branch
        %190 = sbr.rel (%p188) target = $region20
      $region19: #{attention_dgcnn_forward.10} parent=11 // pred_region
        _
      $region20: #{attention_dgcnn_forward.10} parent=11 // pred_fallthru
        _
      // Predicated region
      $region21: #{attention_dgcnn_forward.10} parent=11 // pred_check
        %p191 = pneg %p142
      $region22: #{attention_dgcnn_forward.10} parent=11 // pred_check_branch
        %193 = sbr.rel (%p191) target = $region24
      $region23: #{attention_dgcnn_forward.10} parent=11 // pred_region
        _
      $region24: #{attention_dgcnn_forward.10} parent=11 // pred_fallthru
        _
    $region12: #{attention_dgcnn_forward.10} parent=5 // pred_fallthru
      _
    %p194 = scmp.lt.s32.totalorder %s11, 2
    // Predicated region
    $region25: #{attention_dgcnn_forward.10} parent=5 // pred_check
      %p195 = pneg %p194
    $region26: #{attention_dgcnn_forward.10} parent=5 // pred_check_branch
      %197 = sbr.rel (%p195) target = $region28
    $region27: #{attention_dgcnn_forward.10} parent=5 // pred_region
      // Predicated region
      $region29: #{attention_dgcnn_forward.10} parent=27 // pred_check
        %p198 = pneg %p45
      $region30: #{attention_dgcnn_forward.10} parent=27 // pred_check_branch
        %200 = sbr.rel (%p198) target = $region32
      $region31: #{attention_dgcnn_forward.10} parent=27 // pred_region
        %s201 = smul.u32 2, %s19
        %p202 = scmp.lt.s32.totalorder %s18, 1
        %s203 = scalar_select %p202, %s18, 1
        %p204 = scmp.lt.s32.totalorder %s201, 1
        %s205 = scalar_select %p204, %s201, 1
        %s206 = smul.addr %s203, 8
        %s207 = sadd.s32 %s205, %s206
        %s208 = smul.addr %s207, 4
        %s209 = scalar_lea.vmem %s0, %s208
        %s210 = smul.u32 2, %s19
      $region32: #{attention_dgcnn_forward.10} parent=27 // pred_fallthru
        _
      // Predicated region
      $region33: #{attention_dgcnn_forward.10} parent=27 // pred_check
        %p211 = pneg %p73
      $region34: #{attention_dgcnn_forward.10} parent=27 // pred_check_branch
        %213 = sbr.rel (%p211) target = $region36
      $region35: #{attention_dgcnn_forward.10} parent=27 // pred_region
        %s214 = smul.u32 2, %s19
        %p215 = scmp.lt.s32.totalorder %s18, 1
        %s216 = scalar_select %p215, %s18, 1
        %p217 = scmp.lt.s32.totalorder %s214, 1
        %s218 = scalar_select %p217, %s214, 1
        %s219 = smul.addr %s216, 2
        %s220 = sadd.s32 %s218, %s219
        %s221 = smul.addr %s220, 4
        %s222 = scalar_lea.vmem %s1, %s221
        %s223 = smul.u32 2, %s19
      $region36: #{attention_dgcnn_forward.10} parent=27 // pred_fallthru
        _
    $region28: #{attention_dgcnn_forward.10} parent=5 // pred_fallthru
      _
    %p224 = scmp.le.s32.totalorder 1, %s11
    %p225 = scmp.lt.s32.totalorder %s11, 3
    %p226 = pnand %p224, %p225
    %p227 = pneg %p226
    // Predicated region
    $region37: #{attention_dgcnn_forward.10} parent=5 // pred_check
      _
    $region38: #{attention_dgcnn_forward.10} parent=5 // pred_check_branch
      %229 = sbr.rel (%p226) target = $region40
    $region39: #{attention_dgcnn_forward.10} parent=5 // pred_region
      %s230 = ssub.s32 %s11, 1
      %s231 = smul.u32 2, %s21
      %p232 = scmp.lt.s32.totalorder %s20, 1
      %s233 = scalar_select %p232, %s20, 1
      %p234 = scmp.lt.s32.totalorder %s231, 1
      %s235 = scalar_select %p234, %s231, 1
      %s236 = smul.addr %s233, 8
      %s237 = sadd.s32 %s235, %s236
      %s238 = smul.addr %s237, 4
      %s239 = scalar_lea.vmem %s0, %s238
      %p240 = pneg %p51
      %p241 = pneg %p48
      %s242 = smul.u32 2, %s21
      %p243 = scmp.lt.s32.totalorder %s20, 1
      %s244 = scalar_select %p243, %s20, 1
      %p245 = scmp.lt.s32.totalorder %s242, 1
      %s246 = scalar_select %p245, %s242, 1
      %s247 = smul.addr %s244, 2
      %s248 = sadd.s32 %s246, %s247
      %s249 = smul.addr %s248, 4
      %s250 = scalar_lea.vmem %s1, %s249
      %p251 = pneg %p79
      %p252 = pneg %p76
      %p253 = pneg %p100
      %p254 = pneg %p97
      %p255 = pneg %p121
      %p256 = pneg %p118
      %p257 = pneg %p142
      %p258 = pneg %p139
      %p259 = pneg %p170
      %p260 = pneg %p167
      %s261 = smul.u32 2, %s21
      %p262 = scmp.lt.s32.totalorder %s20, 1
      %s263 = scalar_select %p262, %s20, 1
      %p264 = scmp.lt.s32.totalorder %s261, 1
      %s265 = scalar_select %p264, %s261, 1
      %s266 = smul.addr %s263, 2
      %s267 = sadd.s32 %s265, %s266
      %s268 = smul.addr %s267, 4
      %s269 = scalar_lea.vmem %s5, %s268
      %s270 = smul.u32 2, %s21
      %p271 = scmp.lt.s32.totalorder %s20, 1
      %s272 = scalar_select %p271, %s20, 1
      %p273 = scmp.lt.s32.totalorder %s270, 1
      %s274 = scalar_select %p273, %s270, 1
      %s275 = smul.addr %s272, 8
      %s276 = sadd.s32 %s274, %s275
      %s277 = smul.addr %s276, 4
      %s278 = scalar_lea.vmem %s0, %s277
      %s279 = smul.u32 2, %s21
      %s280 = smul.u32 2, %s21
      %p281 = scmp.lt.s32.totalorder %s20, 1
      %s282 = scalar_select %p281, %s20, 1
      %p283 = scmp.lt.s32.totalorder %s280, 1
      %s284 = scalar_select %p283, %s280, 1
      %s285 = smul.addr %s282, 2
      %s286 = sadd.s32 %s284, %s285
      %s287 = smul.addr %s286, 4
      %s288 = scalar_lea.vmem %s1, %s287
      %s289 = smul.u32 2, %s21
      %s290 = smul.u32 2, %s21
      %p291 = scmp.lt.s32.totalorder %s20, 1
      %s292 = scalar_select %p291, %s20, 1
      %p293 = scmp.lt.s32.totalorder %s290, 1
      %s294 = scalar_select %p293, %s290, 1
      %s295 = smul.addr %s292, 2
      %s296 = sadd.s32 %s294, %s295
      %s297 = smul.addr %s296, 4
      %s298 = scalar_lea.vmem %s5, %s297
      %s299 = smul.u32 2, %s21
      %v301 = vld [vmem:[%s288] sm:$0xf]
      %v302 = vld [vmem:[%s288 + $0x4] sm:$0xf]
      %v303 = vld [vmem:[%s3] sm:$0x3]
      %v304 = vld [vmem:[%s4] sm:$0x1]
      %v306 = vlaneseq
      %v307 = vshrl.u32 %v306, 7
      %v308 = vsub.s32 0, %v307
      %v309 = vrot.slane %v304, %v308
      %v313 = vunpack.c.l.b16 %v301
      %v314 = vunpack.c.l.b16 %v302
      %v315 = vpack.c.b16 %v314, %v313
      %vm316 = vcmask 23552
      %v318 = vsel %vm316, %v315, 0
      %vm320 = vcmask 1040384
      %vm321 = vcmask 1041408
      %v322 = vsel %vm320, 4294967295, 65535
      %v323 = vsel %vm321, %v322, 0
      %v325 = vand.u32 %v303, %v323
      %327 = vmatprep.subr.bf16.mxu0 0
      %328 = vmatpush1.bf16.msra.mxu0 %v325
      %329 = vmatprep.subr.bf16.mxu0 0
      %330 = vmatpush1.bf16.msra.mxu0 0
      %331 = vmatprep.subr.bf16.mxu0 0
      %332 = vmatpush1.bf16.msra.mxu0 0
      %333 = vmatprep.subr.bf16.mxu0 0
      %334 = vmatpush1.bf16.msra.mxu0 0
      %335 = vmatprep.subr.bf16.mxu0 0
      %336 = vmatpush1.bf16.msra.mxu0 0
      %337 = vmatprep.subr.bf16.mxu0 0
      %338 = vmatpush1.bf16.msra.mxu0 0
      %339 = vmatprep.subr.bf16.mxu0 0
      %340 = vmatpush1.bf16.msra.mxu0 0
      %341 = vmatprep.subr.bf16.mxu0 0
      %342 = vmatpush1.bf16.msra.mxu0 0
      %343 = vmatprep.subr.bf16.mxu0 0
      %344 = vmatpush1.bf16.msra.mxu0 0
      %345 = vmatprep.subr.bf16.mxu0 0
      %346 = vmatpush1.bf16.msra.mxu0 0
      %347 = vmatprep.subr.bf16.mxu0 0
      %348 = vmatpush1.bf16.msra.mxu0 0
      %349 = vmatprep.subr.bf16.mxu0 0
      %350 = vmatpush1.bf16.msra.mxu0 0
      %351 = vmatprep.subr.bf16.mxu0 0
      %352 = vmatpush1.bf16.msra.mxu0 0
      %353 = vmatprep.subr.bf16.mxu0 0
      %354 = vmatpush1.bf16.msra.mxu0 0
      %355 = vmatprep.subr.bf16.mxu0 0
      %356 = vmatpush1.bf16.msra.mxu0 0
      %357 = vmatprep.subr.bf16.mxu0 0
      %358 = vmatpush1.bf16.msra.mxu0 0
      %359 = vmatprep.mubr.bf16.mxu0 0
      %360 = vmatmul.mubr.bf16.gmra.mrb[0].mxu0 %v318
      %v361 = vpop.f32.mrb[0].mxu0
      %v362 = vadd.f32 %v309, %v361
      %v363 = vpop.f32.mrb[0].mxu0
      %v364 = vpop.f32.mrb[0].mxu0
      %v365 = vadd.f32 %v309, %v364
      %v366 = vpop.f32.mrb[0].mxu0
      %367 = vdwg.mxu0
      %v368 = vld [vmem:[%s278] sm:$0xf]
      %v369 = vld [vmem:[%s278 + $0x4] sm:$0xf]
      %v370 = vld [vmem:[%s278 + $0x8] sm:$0xf]
      %v371 = vld [vmem:[%s278 + $0xc] sm:$0xf]
      %v372 = vld [vmem:[%s278 + $0x10] sm:$0xf]
      %v373 = vld [vmem:[%s278 + $0x14] sm:$0xf]
      %v374 = vld [vmem:[%s278 + $0x18] sm:$0xf]
      %v375 = vld [vmem:[%s278 + $0x1c] sm:$0xf]
      %v376 = vld [vmem:[%s2] sm:$0x3]
      %v385 = vunpack.c.l.b16 %v368
      %v386 = vunpack.c.l.b16 %v369
      %v387 = vunpack.c.l.b16 %v370
      %v388 = vunpack.c.l.b16 %v371
      %v389 = vunpack.c.l.b16 %v372
      %v390 = vunpack.c.l.b16 %v373
      %v391 = vunpack.c.l.b16 %v374
      %v392 = vunpack.c.l.b16 %v375
      %v393 = vpack.c.b16 %v386, %v385
      %v394 = vpack.c.b16 %v388, %v387
      %v395 = vpack.c.b16 %v390, %v389
      %v396 = vpack.c.b16 %v392, %v391
      %v398 = vsel %vm316, %v393, 0
      %v401 = vsel %vm316, %v394, 0
      %v404 = vsel %vm316, %v395, 0
      %v407 = vsel %vm316, %v396, 0
      %v410 = vand.u32 %v376, %v323
      %412 = vmatprep.subr.bf16.mxu0 0
      %413 = vmatpush1.bf16.msra.mxu0 %v410
      %414 = vmatprep.subr.bf16.mxu0 0
      %415 = vmatpush1.bf16.msra.mxu0 0
      %416 = vmatprep.subr.bf16.mxu0 0
      %417 = vmatpush1.bf16.msra.mxu0 0
      %418 = vmatprep.subr.bf16.mxu0 0
      %419 = vmatpush1.bf16.msra.mxu0 0
      %420 = vmatprep.subr.bf16.mxu0 0
      %421 = vmatpush1.bf16.msra.mxu0 0
      %422 = vmatprep.subr.bf16.mxu0 0
      %423 = vmatpush1.bf16.msra.mxu0 0
      %424 = vmatprep.subr.bf16.mxu0 0
      %425 = vmatpush1.bf16.msra.mxu0 0
      %426 = vmatprep.subr.bf16.mxu0 0
      %427 = vmatpush1.bf16.msra.mxu0 0
      %428 = vmatprep.subr.bf16.mxu0 0
      %429 = vmatpush1.bf16.msra.mxu0 0
      %430 = vmatprep.subr.bf16.mxu0 0
      %431 = vmatpush1.bf16.msra.mxu0 0
      %432 = vmatprep.subr.bf16.mxu0 0
      %433 = vmatpush1.bf16.msra.mxu0 0
      %434 = vmatprep.subr.bf16.mxu0 0
      %435 = vmatpush1.bf16.msra.mxu0 0
      %436 = vmatprep.subr.bf16.mxu0 0
      %437 = vmatpush1.bf16.msra.mxu0 0
      %438 = vmatprep.subr.bf16.mxu0 0
      %439 = vmatpush1.bf16.msra.mxu0 0
      %440 = vmatprep.subr.bf16.mxu0 0
      %441 = vmatpush1.bf16.msra.mxu0 0
      %442 = vmatprep.subr.bf16.mxu0 0
      %443 = vmatpush1.bf16.msra.mxu0 0
      %444 = vmatprep.mubr.bf16.mxu0 0
      %445 = vmatmul.mubr.bf16.gmra.mrb[0].mxu0 %v398
      %v446 = vpop.f32.mrb[0].mxu0
      %v447 = vadd.f32 0.0, %v446
      %v448 = vpop.f32.mrb[0].mxu0
      %v449 = vpop.f32.mrb[0].mxu0
      %v450 = vadd.f32 0.0, %v449
      %v451 = vpop.f32.mrb[0].mxu0
      %452 = vmatprep.mubr.bf16.mxu0 0
      %453 = vmatmul.mubr.bf16.gmra.mrb[0].mxu0 %v401
      %v454 = vpop.f32.mrb[0].mxu0
      %v455 = vadd.f32 0.0, %v454
      %v456 = vpop.f32.mrb[0].mxu0
      %v457 = vpop.f32.mrb[0].mxu0
      %v458 = vadd.f32 0.0, %v457
      %v459 = vpop.f32.mrb[0].mxu0
      %460 = vmatprep.mubr.bf16.mxu0 0
      %461 = vmatmul.mubr.bf16.gmra.mrb[0].mxu0 %v404
      %v462 = vpop.f32.mrb[0].mxu0
      %v463 = vadd.f32 0.0, %v462
      %v464 = vpop.f32.mrb[0].mxu0
      %v465 = vpop.f32.mrb[0].mxu0
      %v466 = vadd.f32 0.0, %v465
      %v467 = vpop.f32.mrb[0].mxu0
      %468 = vmatprep.mubr.bf16.mxu0 0
      %469 = vmatmul.mubr.bf16.gmra.mrb[0].mxu0 %v407
      %v470 = vpop.f32.mrb[0].mxu0
      %v471 = vadd.f32 0.0, %v470
      %v472 = vpop.f32.mrb[0].mxu0
      %v473 = vpop.f32.mrb[0].mxu0
      %v474 = vadd.f32 0.0, %v473
      %v475 = vpop.f32.mrb[0].mxu0
      %476 = vdwg.mxu0
      %v477 = vmax.f32 %v447, %v455
      %v478 = vmax.f32 %v450, %v458
      %v479 = vmax.f32 %v477, %v463
      %v480 = vmax.f32 %v478, %v466
      %v481 = vmax.f32 %v479, %v471
      %v482 = vmax.f32 %v480, %v474
      %v483 = vadd.f32 %v481, %v362
      %v484 = vadd.f32 %v482, %v365
      %vm485 = vcmp.gt.f32.partialorder %v483, 0.0
      %vm486 = vcmp.gt.f32.partialorder %v484, 0.0
      %v487 = vmul.f32 %v483, 0.2
      %v488 = vmul.f32 %v484, 0.2
      %v489 = vsel %vm485, %v483, %v487
      %v490 = vsel %vm486, %v484, %v488
      %v491 = vpack.c.bf16 %v490, %v489
      %v493 = vunpack.c.l.b16 %v491
      %v494 = vunpack.c.h.b16 %v491
      %v495 = vpack.c.b16 %v493, %v493
      %v496 = vpack.c.b16 %v494, %v494
      %vm499 = vcmask 519168
      %500 = vst.msk [vmem:[%s298] sm:$0xf] %vm499, %v495
      %501 = vst.msk [vmem:[%s298 + $0x4] sm:$0xf] %vm499, %v496
      %s502 = smul.u32 2, %s21
      %p503 = scmp.lt.s32.totalorder %s20, 1
      %s504 = scalar_select %p503, %s20, 1
      %p505 = scmp.lt.s32.totalorder %s502, 1
      %s506 = scalar_select %p505, %s502, 1
      %s507 = smul.addr %s504, 2
      %s508 = sadd.s32 %s506, %s507
      %s509 = smul.addr %s508, 4
      %s510 = scalar_lea.vmem %s5, %s509
      // Predicated region
      $region41: #{attention_dgcnn_forward.10} parent=39 // pred_check
        %p511 = pneg %p167
      $region42: #{attention_dgcnn_forward.10} parent=39 // pred_check_branch
        %513 = sbr.rel (%p511) target = $region44
      $region43: #{attention_dgcnn_forward.10} parent=39 // pred_region
        %s514 = smul.u32 2, %s21
      $region44: #{attention_dgcnn_forward.10} parent=39 // pred_fallthru
        _
    $region40: #{attention_dgcnn_forward.10} parent=5 // pred_fallthru
      _
    %p515 = scmp.le.s32.totalorder 2, %s11
    // Predicated region
    $region45: #{attention_dgcnn_forward.10} parent=5 // pred_check
      %p516 = pneg %p515
    $region46: #{attention_dgcnn_forward.10} parent=5 // pred_check_branch
      %518 = sbr.rel (%p516) target = $region48
    $region47: #{attention_dgcnn_forward.10} parent=5 // pred_region
      %s519 = ssub.s32 %s11, 2
      // Predicated region
      $region49: #{attention_dgcnn_forward.10} parent=47 // pred_check
        %p520 = pneg %p173
      $region50: #{attention_dgcnn_forward.10} parent=47 // pred_check_branch
        %522 = sbr.rel (%p520) target = $region52
      $region51: #{attention_dgcnn_forward.10} parent=47 // pred_region
        %s523 = smul.u32 2, %s23
        %p524 = scmp.lt.s32.totalorder %s22, 1
        %s525 = scalar_select %p524, %s22, 1
        %p526 = scmp.lt.s32.totalorder %s523, 1
        %s527 = scalar_select %p526, %s523, 1
        %s528 = smul.addr %s525, 2
        %s529 = sadd.s32 %s527, %s528
        %s530 = smul.addr %s529, 4
        %s531 = scalar_lea.vmem %s5, %s530
      $region52: #{attention_dgcnn_forward.10} parent=47 // pred_fallthru
        _
    $region48: #{attention_dgcnn_forward.10} parent=5 // pred_fallthru
      _
  $region6: #{attention_dgcnn_forward.10} parent=0 // loop_footer
    %s15 = sadd.s32 1, %s11
  $region7: #{attention_dgcnn_forward.10} parent=0 // loop_footer_branch
    %10 = sbr.rel target = $region3
  $region8: #{attention_dgcnn_forward.10} parent=0 // loop_exit
    _

// kernel: attention_dgcnn_forward.11
$region0: #{attention_dgcnn_forward.11}
  #allocation0 [shape = 'u32[]', space=smem, size = 0x4, offset = 0x4, fixed_abs, tag = 'smem constant byte address 0x4 - core index']
  #allocation1 [shape = 'u32[144,128]{1,0:T(1,128)}', space=vmem, size = 0x12000, scoped, tag = 'internal scratch']
  #allocation2 [shape = 'bf16[2,16,64]{2,1,0:T(16,128)(2,1)}', space=vmem, size = 0x2000, scoped, tag = 'scratch operand']
  #allocation3 [shape = 'bf16[2,16,64]{2,1,0:T(16,128)(2,1)}', space=vmem, size = 0x2000, scoped, tag = 'scratch operand']
  #allocation4 [shape = 'bf16[2,16,64]{2,1,0:T(16,128)(2,1)}', space=vmem, size = 0x2000, scoped, tag = 'scratch operand']
  #allocation5 [shape = 'f32[2,16,64]{2,1,0:T(8,128)}', space=vmem, size = 0x4000, scoped, tag = 'scratch operand']
  #allocation6 [shape = 'f32[2,16,4]{2,1,0:T(8,128)}', space=vmem, size = 0x4000, scoped, tag = 'scratch operand']
  %s0 = inlined_call_operand.vmem [shape: bf16[2,16,64], index: 0, kind: input, shape index: {}]
  %s1 = inlined_call_operand.vmem [shape: bf16[64,192], index: 1, kind: input, shape index: {}]
  %s2 = inlined_call_operand.vmem [shape: f32[1,192], index: 2, kind: input, shape index: {}]
  %s3 = inlined_call_operand.vmem [shape: bf16[64,64], index: 3, kind: input, shape index: {}]
  %s4 = inlined_call_operand.vmem [shape: f32[1,64], index: 4, kind: input, shape index: {}]
  %s5 = inlined_call_operand.vmem [shape: bf16[64,4], index: 5, kind: input, shape index: {}]
  %s6 = inlined_call_operand.vmem [shape: bf16[4,64], index: 6, kind: input, shape index: {}]
  %s7 = inlined_call_operand.vmem [shape: bf16[2,16,64], index: 7, kind: output, shape index: {}]
  %s8 = sld [smem:[#allocation0]]
  $region38: #{attention_dgcnn_forward.11} parent=0
    _
  %s10 = ssub.s32 1, %s8
  %s11 = scalar_select 0, %s10, %s8
  // Predicated region
  $region2: #{attention_dgcnn_forward.11} parent=0 // pred_check
    _
  $region3: #{attention_dgcnn_forward.11} parent=0 // pred_check_branch
    %13 = sbr.rel (0) target = $region5
  $region4: #{attention_dgcnn_forward.11} parent=0 // pred_region
    _
  $region5: #{attention_dgcnn_forward.11} parent=0 // pred_fallthru
    _
  // Predicated region
  $region6: #{attention_dgcnn_forward.11} parent=0 // pred_check
    _
  $region7: #{attention_dgcnn_forward.11} parent=0 // pred_check_branch
    %15 = sbr.rel (0) target = $region9
  $region8: #{attention_dgcnn_forward.11} parent=0 // pred_region
    _
  $region9: #{attention_dgcnn_forward.11} parent=0 // pred_fallthru
    _
  // Predicated region
  $region10: #{attention_dgcnn_forward.11} parent=0 // pred_check
    _
  $region11: #{attention_dgcnn_forward.11} parent=0 // pred_check_branch
    %17 = sbr.rel (0) target = $region13
  $region12: #{attention_dgcnn_forward.11} parent=0 // pred_region
    _
  $region13: #{attention_dgcnn_forward.11} parent=0 // pred_fallthru
    _
  // Predicated region
  $region14: #{attention_dgcnn_forward.11} parent=0 // pred_check
    _
  $region15: #{attention_dgcnn_forward.11} parent=0 // pred_check_branch
    %19 = sbr.rel (0) target = $region17
  $region16: #{attention_dgcnn_forward.11} parent=0 // pred_region
    _
  $region17: #{attention_dgcnn_forward.11} parent=0 // pred_fallthru
    _
  // Predicated region
  $region18: #{attention_dgcnn_forward.11} parent=0 // pred_check
    _
  $region19: #{attention_dgcnn_forward.11} parent=0 // pred_check_branch
    %21 = sbr.rel (0) target = $region21
  $region20: #{attention_dgcnn_forward.11} parent=0 // pred_region
    _
  $region21: #{attention_dgcnn_forward.11} parent=0 // pred_fallthru
    _
  // Predicated region
  $region22: #{attention_dgcnn_forward.11} parent=0 // pred_check
    _
  $region23: #{attention_dgcnn_forward.11} parent=0 // pred_check_branch
    %23 = sbr.rel (0) target = $region25
  $region24: #{attention_dgcnn_forward.11} parent=0 // pred_region
    _
  $region25: #{attention_dgcnn_forward.11} parent=0 // pred_fallthru
    _
  // Predicated region
  $region26: #{attention_dgcnn_forward.11} parent=0 // pred_check
    _
  $region27: #{attention_dgcnn_forward.11} parent=0 // pred_check_branch
    %25 = sbr.rel (0) target = $region29
  $region28: #{attention_dgcnn_forward.11} parent=0 // pred_region
    _
  $region29: #{attention_dgcnn_forward.11} parent=0 // pred_fallthru
    _
  %v27 = vld [vmem:[%s0] sm:$0xf]
  %v28 = vld [vmem:[%s0 + $0x4] sm:$0xf]
  %v29 = vld [vmem:[%s0 + $0x8] sm:$0xf]
  %v30 = vld [vmem:[%s0 + $0xc] sm:$0xf]
  %v31 = vld [vmem:[%s1] sm:$0xff]
  %v32 = vld [vmem:[%s1 + $0x8] sm:$0xff]
  %v33 = vld [vmem:[%s1 + $0x10] sm:$0xff]
  %v34 = vld [vmem:[%s1 + $0x18] sm:$0xff]
  %v35 = vld [vmem:[%s1 + $0x20] sm:$0xff]
  %v36 = vld [vmem:[%s1 + $0x28] sm:$0xff]
  %v37 = vld [vmem:[%s1 + $0x30] sm:$0xff]
  %v38 = vld [vmem:[%s1 + $0x38] sm:$0xff]
  %v39 = vld [vmem:[%s2] sm:$0x3]
  %v41 = vlaneseq
  %v42 = vshrl.u32 %v41, 7
  %v43 = vsub.s32 0, %v42
  %v44 = vrot.slane %v39, %v43
  %v45 = vlaneseq
  %v46 = vshrl.u32 %v45, 7
  %v47 = vsub.s32 1, %v46
  %v48 = vrot.slane %v39, %v47
  %v55 = vunpack.c.l.b16 %v27
  %v56 = vunpack.c.l.b16 %v28
  %v57 = vunpack.c.l.b16 %v29
  %v58 = vunpack.c.l.b16 %v30
  %v59 = vpack.c.b16 %v56, %v55
  %v60 = vpack.c.b16 %v58, %v57
  %v69 = vunpack.c.l.b16 %v31
  %v70 = vunpack.c.h.b16 %v31
  %v71 = vunpack.c.l.b16 %v32
  %v72 = vunpack.c.h.b16 %v32
  %v73 = vunpack.c.l.b16 %v33
  %v74 = vunpack.c.h.b16 %v33
  %v75 = vunpack.c.l.b16 %v34
  %v76 = vunpack.c.h.b16 %v34
  %v77 = vunpack.c.l.b16 %v35
  %v78 = vunpack.c.h.b16 %v35
  %v79 = vunpack.c.l.b16 %v36
  %v80 = vunpack.c.h.b16 %v36
  %v81 = vunpack.c.l.b16 %v37
  %v82 = vunpack.c.h.b16 %v37
  %v83 = vunpack.c.l.b16 %v38
  %v84 = vunpack.c.h.b16 %v38
  %v85 = vpack.c.b16 %v71, %v69
  %v86 = vpack.c.b16 %v72, %v70
  %v87 = vpack.c.b16 %v75, %v73
  %v88 = vpack.c.b16 %v76, %v74
  %v89 = vpack.c.b16 %v79, %v77
  %v90 = vpack.c.b16 %v80, %v78
  %v91 = vpack.c.b16 %v83, %v81
  %v92 = vpack.c.b16 %v84, %v82
  %vm101 = vcmask 523264
  %v103 = vsel %vm101, %v59, 0
  %v106 = vsel %vm101, %v60, 0
  %108 = vmatprep.subr.bf16.mxu0 %v86
  %109 = vmatpush1.bf16.msra.mxu0 %v85
  %110 = vmatprep.subr.bf16.mxu0 %v88
  %111 = vmatpush1.bf16.msra.mxu0 %v87
  %112 = vmatprep.subr.bf16.mxu0 %v90
  %113 = vmatpush1.bf16.msra.mxu0 %v89
  %114 = vmatprep.subr.bf16.mxu0 %v92
  %115 = vmatpush1.bf16.msra.mxu0 %v91
  %116 = vmatprep.subr.bf16.mxu0 0
  %117 = vmatpush1.bf16.msra.mxu0 0
  %118 = vmatprep.subr.bf16.mxu0 0
  %119 = vmatpush1.bf16.msra.mxu0 0
  %120 = vmatprep.subr.bf16.mxu0 0
  %121 = vmatpush1.bf16.msra.mxu0 0
  %122 = vmatprep.subr.bf16.mxu0 0
  %123 = vmatpush1.bf16.msra.mxu0 0
  %124 = vmatprep.subr.bf16.mxu0 0
  %125 = vmatpush1.bf16.msra.mxu0 0
  %126 = vmatprep.subr.bf16.mxu0 0
  %127 = vmatpush1.bf16.msra.mxu0 0
  %128 = vmatprep.subr.bf16.mxu0 0
  %129 = vmatpush1.bf16.msra.mxu0 0
  %130 = vmatprep.subr.bf16.mxu0 0
  %131 = vmatpush1.bf16.msra.mxu0 0
  %132 = vmatprep.subr.bf16.mxu0 0
  %133 = vmatpush1.bf16.msra.mxu0 0
  %134 = vmatprep.subr.bf16.mxu0 0
  %135 = vmatpush1.bf16.msra.mxu0 0
  %136 = vmatprep.subr.bf16.mxu0 0
  %137 = vmatpush1.bf16.msra.mxu0 0
  %138 = vmatprep.subr.bf16.mxu0 0
  %139 = vmatpush1.bf16.msra.mxu0 0
  %140 = vmatprep.mubr.bf16.mxu0 0
  %141 = vmatmul.mubr.bf16.gmra.mrb[0].mxu0 %v103
  %v142 = vpop.f32.mrb[0].mxu0
  %v143 = vadd.f32 %v44, %v142
  %v144 = vpop.f32.mrb[0].mxu0
  %v145 = vadd.f32 %v48, %v144
  %v146 = vpop.f32.mrb[0].mxu0
  %v147 = vadd.f32 %v44, %v146
  %v148 = vpop.f32.mrb[0].mxu0
  %v149 = vadd.f32 %v48, %v148
  %150 = vmatprep.mubr.bf16.mxu0 0
  %151 = vmatmul.mubr.bf16.gmra.mrb[0].mxu0 %v106
  %v152 = vpop.f32.mrb[0].mxu0
  %v153 = vadd.f32 %v44, %v152
  %v154 = vpop.f32.mrb[0].mxu0
  %v155 = vadd.f32 %v48, %v154
  %v156 = vpop.f32.mrb[0].mxu0
  %v157 = vadd.f32 %v44, %v156
  %v158 = vpop.f32.mrb[0].mxu0
  %v159 = vadd.f32 %v48, %v158
  %160 = vdwg.mxu0
  %v161 = vpack.c.bf16 %v147, %v143
  %v162 = vpack.c.bf16 %v157, %v153
  %163 = vst.msk [vmem:[#allocation2] sm:$0xff] %vm101, %v161
  %164 = vst.msk [vmem:[#allocation2 + $0x8] sm:$0xff] %vm101, %v162
  %167 = vrot.lane.b32.xlu0 %v161, 64
  %v168 = vpop.permute.xlu0 %167
  %169 = vrot.lane.b32.xlu0 %v162, 64
  %v170 = vpop.permute.xlu0 %169
  %173 = vst.msk [vmem:[#allocation3] sm:$0xff] %vm101, %v168
  %174 = vst.msk [vmem:[#allocation3 + $0x8] sm:$0xff] %vm101, %v170
  %v175 = vpack.c.bf16 %v149, %v145
  %v176 = vpack.c.bf16 %v159, %v155
  %177 = vst.msk [vmem:[#allocation4] sm:$0xff] %vm101, %v175
  %178 = vst.msk [vmem:[#allocation4 + $0x8] sm:$0xff] %vm101, %v176
  %v179 = vld [vmem:[%s5] sm:$0xf]
  %v180 = vld [vmem:[%s5 + $0x4] sm:$0xf]
  %v181 = vld [vmem:[%s5 + $0x8] sm:$0xf]
  %v182 = vld [vmem:[%s5 + $0xc] sm:$0xf]
  %v183 = vld [vmem:[%s5 + $0x10] sm:$0xf]
  %v184 = vld [vmem:[%s5 + $0x14] sm:$0xf]
  %v185 = vld [vmem:[%s5 + $0x18] sm:$0xf]
  %v186 = vld [vmem:[%s5 + $0x1c] sm:$0xf]
  %v187 = vld [vmem:[%s6] sm:$0x3]
  %v188 = vunpack.c.l.bf16 %v187
  %v189 = vld [vmem:[#allocation2] sm:$0xff]
  %v190 = vld [vmem:[#allocation3] sm:$0xff]
  %v191 = vmul.bf16 %v189, %v190
  %v200 = vunpack.c.l.b16 %v179
  %v201 = vunpack.c.l.b16 %v180
  %v202 = vunpack.c.l.b16 %v181
  %v203 = vunpack.c.l.b16 %v182
  %v204 = vunpack.c.l.b16 %v183
  %v205 = vunpack.c.l.b16 %v184
  %v206 = vunpack.c.l.b16 %v185
  %v207 = vunpack.c.l.b16 %v186
  %v208 = vpack.c.b16 %v201, %v200
  %v209 = vpack.c.b16 %v203, %v202
  %v210 = vpack.c.b16 %v205, %v204
  %v211 = vpack.c.b16 %v207, %v206
  %v217 = vsel %vm101, %v191, 0
  %219 = vmatprep.subr.bf16.mxu0 0
  %220 = vmatpush1.bf16.msra.mxu0 %v208
  %221 = vmatprep.subr.bf16.mxu0 0
  %222 = vmatpush1.bf16.msra.mxu0 %v209
  %223 = vmatprep.subr.bf16.mxu0 0
  %224 = vmatpush1.bf16.msra.mxu0 %v210
  %225 = vmatprep.subr.bf16.mxu0 0
  %226 = vmatpush1.bf16.msra.mxu0 %v211
  %227 = vmatprep.subr.bf16.mxu0 0
  %228 = vmatpush1.bf16.msra.mxu0 0
  %229 = vmatprep.subr.bf16.mxu0 0
  %230 = vmatpush1.bf16.msra.mxu0 0
  %231 = vmatprep.subr.bf16.mxu0 0
  %232 = vmatpush1.bf16.msra.mxu0 0
  %233 = vmatprep.subr.bf16.mxu0 0
  %234 = vmatpush1.bf16.msra.mxu0 0
  %235 = vmatprep.subr.bf16.mxu0 0
  %236 = vmatpush1.bf16.msra.mxu0 0
  %237 = vmatprep.subr.bf16.mxu0 0
  %238 = vmatpush1.bf16.msra.mxu0 0
  %239 = vmatprep.subr.bf16.mxu0 0
  %240 = vmatpush1.bf16.msra.mxu0 0
  %241 = vmatprep.subr.bf16.mxu0 0
  %242 = vmatpush1.bf16.msra.mxu0 0
  %243 = vmatprep.subr.bf16.mxu0 0
  %244 = vmatpush1.bf16.msra.mxu0 0
  %245 = vmatprep.subr.bf16.mxu0 0
  %246 = vmatpush1.bf16.msra.mxu0 0
  %247 = vmatprep.subr.bf16.mxu0 0
  %248 = vmatpush1.bf16.msra.mxu0 0
  %249 = vmatprep.subr.bf16.mxu0 0
  %250 = vmatpush1.bf16.msra.mxu0 0
  %251 = vmatprep.mubr.bf16.mxu0 0
  %252 = vmatmul.mubr.bf16.gmra.mrb[0].mxu0 %v217
  %v253 = vpop.f32.mrb[0].mxu0
  %v254 = vadd.f32 0.0, %v253
  %v255 = vpop.f32.mrb[0].mxu0
  %v256 = vpop.f32.mrb[0].mxu0
  %v257 = vadd.f32 0.0, %v256
  %v258 = vpop.f32.mrb[0].mxu0
  %259 = vdwg.mxu0
  %vm260 = vcmask 31744
  %261 = vst.msk [vmem:[#allocation6] sm:$0xff] %vm260, %v254
  %262 = vst.msk [vmem:[#allocation6 + $0x8] sm:$0xff] %vm260, %v257
  %s263 = scalar_lea.vmem [#allocation3], 8
  %v264 = vld [vmem:[%s263] sm:$0xff]
  %v265 = vmul.bf16 %v189, %v264
  %v267 = vsel %vm101, %v265, 0
  %269 = vmatprep.subr.bf16.mxu0 0
  %270 = vmatpush1.bf16.msra.mxu0 %v208
  %271 = vmatprep.subr.bf16.mxu0 0
  %272 = vmatpush1.bf16.msra.mxu0 %v209
  %273 = vmatprep.subr.bf16.mxu0 0
  %274 = vmatpush1.bf16.msra.mxu0 %v210
  %275 = vmatprep.subr.bf16.mxu0 0
  %276 = vmatpush1.bf16.msra.mxu0 %v211
  %277 = vmatprep.subr.bf16.mxu0 0
  %278 = vmatpush1.bf16.msra.mxu0 0
  %279 = vmatprep.subr.bf16.mxu0 0
  %280 = vmatpush1.bf16.msra.mxu0 0
  %281 = vmatprep.subr.bf16.mxu0 0
  %282 = vmatpush1.bf16.msra.mxu0 0
  %283 = vmatprep.subr.bf16.mxu0 0
  %284 = vmatpush1.bf16.msra.mxu0 0
  %285 = vmatprep.subr.bf16.mxu0 0
  %286 = vmatpush1.bf16.msra.mxu0 0
  %287 = vmatprep.subr.bf16.mxu0 0
  %288 = vmatpush1.bf16.msra.mxu0 0
  %289 = vmatprep.subr.bf16.mxu0 0
  %290 = vmatpush1.bf16.msra.mxu0 0
  %291 = vmatprep.subr.bf16.mxu0 0
  %292 = vmatpush1.bf16.msra.mxu0 0
  %293 = vmatprep.subr.bf16.mxu0 0
  %294 = vmatpush1.bf16.msra.mxu0 0
  %295 = vmatprep.subr.bf16.mxu0 0
  %296 = vmatpush1.bf16.msra.mxu0 0
  %297 = vmatprep.subr.bf16.mxu0 0
  %298 = vmatpush1.bf16.msra.mxu0 0
  %299 = vmatprep.subr.bf16.mxu0 0
  %300 = vmatpush1.bf16.msra.mxu0 0
  %301 = vmatprep.mubr.bf16.mxu0 0
  %302 = vmatmul.mubr.bf16.gmra.mrb[0].mxu0 %v267
  %v303 = vpop.f32.mrb[0].mxu0
  %v304 = vadd.f32 0.0, %v303
  %v305 = vpop.f32.mrb[0].mxu0
  %v306 = vpop.f32.mrb[0].mxu0
  %v307 = vadd.f32 0.0, %v306
  %v308 = vpop.f32.mrb[0].mxu0
  %309 = vdwg.mxu0
  %s310 = scalar_lea.vmem [#allocation6], 16
  %311 = vst.msk [vmem:[%s310] sm:$0xff] %vm260, %v304
  %312 = vst.msk [vmem:[%s310 + $0x8] sm:$0xff] %vm260, %v307
  %v313 = vmax.f32 %v254, %v304
  %v314 = vmax.f32 %v257, %v307
  %v315 = vld [vmem:[#allocation6] sm:$0xff]
  %v316 = vld [vmem:[#allocation6 + $0x8] sm:$0xff]
  %v317 = vsub.f32 %v315, %v313
  %v318 = vsub.f32 %v316, %v314
  %v319 = vmul.f32 %v317, 1.442695
  %v320 = vpow.pop %v319
  %v321 = vmul.f32 %v318, 1.442695
  %v322 = vpow.pop %v321
  %v323 = vpack.c.bf16 %v322, %v320
  %v325 = vsel %vm260, %v323, 0
  %vm327 = vcmask 1041408
  %v329 = vsel %vm327, %v187, 0
  %331 = vmatprep.subr.bf16.mxu0 0
  %332 = vmatpush1.bf16.msra.mxu0 %v329
  %333 = vmatprep.subr.bf16.mxu0 0
  %334 = vmatpush1.bf16.msra.mxu0 0
  %335 = vmatprep.subr.bf16.mxu0 0
  %336 = vmatpush1.bf16.msra.mxu0 0
  %337 = vmatprep.subr.bf16.mxu0 0
  %338 = vmatpush1.bf16.msra.mxu0 0
  %339 = vmatprep.subr.bf16.mxu0 0
  %340 = vmatpush1.bf16.msra.mxu0 0
  %341 = vmatprep.subr.bf16.mxu0 0
  %342 = vmatpush1.bf16.msra.mxu0 0
  %343 = vmatprep.subr.bf16.mxu0 0
  %344 = vmatpush1.bf16.msra.mxu0 0
  %345 = vmatprep.subr.bf16.mxu0 0
  %346 = vmatpush1.bf16.msra.mxu0 0
  %347 = vmatprep.subr.bf16.mxu0 0
  %348 = vmatpush1.bf16.msra.mxu0 0
  %349 = vmatprep.subr.bf16.mxu0 0
  %350 = vmatpush1.bf16.msra.mxu0 0
  %351 = vmatprep.subr.bf16.mxu0 0
  %352 = vmatpush1.bf16.msra.mxu0 0
  %353 = vmatprep.subr.bf16.mxu0 0
  %354 = vmatpush1.bf16.msra.mxu0 0
  %355 = vmatprep.subr.bf16.mxu0 0
  %356 = vmatpush1.bf16.msra.mxu0 0
  %357 = vmatprep.subr.bf16.mxu0 0
  %358 = vmatpush1.bf16.msra.mxu0 0
  %359 = vmatprep.subr.bf16.mxu0 0
  %360 = vmatpush1.bf16.msra.mxu0 0
  %361 = vmatprep.subr.bf16.mxu0 0
  %362 = vmatpush1.bf16.msra.mxu0 0
  %363 = vmatprep.mubr.bf16.mxu0 0
  %364 = vmatmul.mubr.bf16.gmra.mrb[0].mxu0 %v325
  %v365 = vpop.f32.mrb[0].mxu0
  %v366 = vadd.f32 0.0, %v365
  %v367 = vpop.f32.mrb[0].mxu0
  %v368 = vpop.f32.mrb[0].mxu0
  %v369 = vadd.f32 0.0, %v368
  %v370 = vpop.f32.mrb[0].mxu0
  %371 = vdwg.mxu0
  %v372 = vld [vmem:[#allocation4] sm:$0xff]
  %v373 = vunpack.c.l.bf16 %v372
  %v374 = vunpack.c.h.bf16 %v372
  %v375 = vmul.f32 %v366, %v373
  %v376 = vmul.f32 %v369, %v374
  %v377 = vld [vmem:[%s310] sm:$0xff]
  %v378 = vld [vmem:[%s310 + $0x8] sm:$0xff]
  %v379 = vsub.f32 %v377, %v313
  %v380 = vsub.f32 %v378, %v314
  %v381 = vmul.f32 %v379, 1.442695
  %v382 = vpow.pop %v381
  %v383 = vmul.f32 %v380, 1.442695
  %v384 = vpow.pop %v383
  %v385 = vadd.f32 %v320, %v382
  %v386 = vadd.f32 %v322, %v384
  %v387 = vpack.c.bf16 %v384, %v382
  %v389 = vsel %vm260, %v387, 0
  %391 = vmatprep.subr.bf16.mxu0 0
  %392 = vmatpush1.bf16.msra.mxu0 %v329
  %393 = vmatprep.subr.bf16.mxu0 0
  %394 = vmatpush1.bf16.msra.mxu0 0
  %395 = vmatprep.subr.bf16.mxu0 0
  %396 = vmatpush1.bf16.msra.mxu0 0
  %397 = vmatprep.subr.bf16.mxu0 0
  %398 = vmatpush1.bf16.msra.mxu0 0
  %399 = vmatprep.subr.bf16.mxu0 0
  %400 = vmatpush1.bf16.msra.mxu0 0
  %401 = vmatprep.subr.bf16.mxu0 0
  %402 = vmatpush1.bf16.msra.mxu0 0
  %403 = vmatprep.subr.bf16.mxu0 0
  %404 = vmatpush1.bf16.msra.mxu0 0
  %405 = vmatprep.subr.bf16.mxu0 0
  %406 = vmatpush1.bf16.msra.mxu0 0
  %407 = vmatprep.subr.bf16.mxu0 0
  %408 = vmatpush1.bf16.msra.mxu0 0
  %409 = vmatprep.subr.bf16.mxu0 0
  %410 = vmatpush1.bf16.msra.mxu0 0
  %411 = vmatprep.subr.bf16.mxu0 0
  %412 = vmatpush1.bf16.msra.mxu0 0
  %413 = vmatprep.subr.bf16.mxu0 0
  %414 = vmatpush1.bf16.msra.mxu0 0
  %415 = vmatprep.subr.bf16.mxu0 0
  %416 = vmatpush1.bf16.msra.mxu0 0
  %417 = vmatprep.subr.bf16.mxu0 0
  %418 = vmatpush1.bf16.msra.mxu0 0
  %419 = vmatprep.subr.bf16.mxu0 0
  %420 = vmatpush1.bf16.msra.mxu0 0
  %421 = vmatprep.subr.bf16.mxu0 0
  %422 = vmatpush1.bf16.msra.mxu0 0
  %423 = vmatprep.mubr.bf16.mxu0 0
  %424 = vmatmul.mubr.bf16.gmra.mrb[0].mxu0 %v389
  %v425 = vpop.f32.mrb[0].mxu0
  %v426 = vadd.f32 0.0, %v425
  %v427 = vpop.f32.mrb[0].mxu0
  %v428 = vpop.f32.mrb[0].mxu0
  %v429 = vadd.f32 0.0, %v428
  %v430 = vpop.f32.mrb[0].mxu0
  %431 = vdwg.mxu0
  %s432 = scalar_lea.vmem [#allocation4], 8
  %v433 = vld [vmem:[%s432] sm:$0xff]
  %v434 = vunpack.c.l.bf16 %v433
  %v435 = vunpack.c.h.bf16 %v433
  %v436 = vmul.f32 %v426, %v434
  %v437 = vmul.f32 %v429, %v435
  %v438 = vadd.f32 %v375, %v436
  %v439 = vadd.f32 %v376, %v437
  %v440 = vrcp.pop %v385
  %v441 = vrcp.pop %v386
  %v443 = vsel %vm260, %v440, 0
  %v446 = vsel %vm260, %v441, 0
  %vm448 = vcmask 1043456
  %v450 = vsel %vm448, %v188, 0
  %452 = vmatprep.subr.mxu0 0.0
  %453 = vmatpush1.msra.mxu0 %v450
  %454 = vmatprep.subr.mxu0 0.0
  %455 = vmatpush1.msra.mxu0 0.0
  %456 = vmatprep.subr.mxu0 0.0
  %457 = vmatpush1.msra.mxu0 0.0
  %458 = vmatprep.subr.mxu0 0.0
  %459 = vmatpush1.msra.mxu0 0.0
  %460 = vmatprep.subr.mxu0 0.0
  %461 = vmatpush1.msra.mxu0 0.0
  %462 = vmatprep.subr.mxu0 0.0
  %463 = vmatpush1.msra.mxu0 0.0
  %464 = vmatprep.subr.mxu0 0.0
  %465 = vmatpush1.msra.mxu0 0.0
  %466 = vmatprep.subr.mxu0 0.0
  %467 = vmatpush1.msra.mxu0 0.0
  %468 = vmatprep.subr.mxu0 0.0
  %469 = vmatpush1.msra.mxu0 0.0
  %470 = vmatprep.subr.mxu0 0.0
  %471 = vmatpush1.msra.mxu0 0.0
  %472 = vmatprep.subr.mxu0 0.0
  %473 = vmatpush1.msra.mxu0 0.0
  %474 = vmatprep.subr.mxu0 0.0
  %475 = vmatpush1.msra.mxu0 0.0
  %476 = vmatprep.subr.mxu0 0.0
  %477 = vmatpush1.msra.mxu0 0.0
  %478 = vmatprep.subr.mxu0 0.0
  %479 = vmatpush1.msra.mxu0 0.0
  %480 = vmatprep.subr.mxu0 0.0
  %481 = vmatpush1.msra.mxu0 0.0
  %482 = vmatprep.subr.mxu0 0.0
  %483 = vmatpush1.msra.mxu0 0.0
  %484 = vmatprep.subr.mxu0 0.0
  %485 = vmatpush1.msra.mxu0 0.0
  %486 = vmatprep.subr.mxu0 0.0
  %487 = vmatpush1.msra.mxu0 0.0
  %488 = vmatprep.subr.mxu0 0.0
  %489 = vmatpush1.msra.mxu0 0.0
  %490 = vmatprep.subr.mxu0 0.0
  %491 = vmatpush1.msra.mxu0 0.0
  %492 = vmatprep.subr.mxu0 0.0
  %493 = vmatpush1.msra.mxu0 0.0
  %494 = vmatprep.subr.mxu0 0.0
  %495 = vmatpush1.msra.mxu0 0.0
  %496 = vmatprep.subr.mxu0 0.0
  %497 = vmatpush1.msra.mxu0 0.0
  %498 = vmatprep.subr.mxu0 0.0
  %499 = vmatpush1.msra.mxu0 0.0
  %500 = vmatprep.subr.mxu0 0.0
  %501 = vmatpush1.msra.mxu0 0.0
  %502 = vmatprep.subr.mxu0 0.0
  %503 = vmatpush1.msra.mxu0 0.0
  %504 = vmatprep.subr.mxu0 0.0
  %505 = vmatpush1.msra.mxu0 0.0
  %506 = vmatprep.subr.mxu0 0.0
  %507 = vmatpush1.msra.mxu0 0.0
  %508 = vmatprep.subr.mxu0 0.0
  %509 = vmatpush1.msra.mxu0 0.0
  %510 = vmatprep.subr.mxu0 0.0
  %511 = vmatpush1.msra.mxu0 0.0
  %512 = vmatprep.subr.mxu0 0.0
  %513 = vmatpush1.msra.mxu0 0.0
  %514 = vmatprep.subr.mxu0 0.0
  %515 = vmatpush1.msra.mxu0 0.0
  %516 = vmatprep.mubr.f32.mxu0 0.0
  %517 = vmatmul.mubr.f32.gmra.mrb[0].mxu0 %v443
  %v518 = vpop.f32.mrb[0].mxu0
  %v519 = vadd.f32 0.0, %v518
  %v520 = vpop.f32.mrb[0].mxu0
  %521 = vmatprep.mubr.f32.mxu0 0.0
  %522 = vmatmul.mubr.f32.gmra.mrb[0].mxu0 %v446
  %v523 = vpop.f32.mrb[0].mxu0
  %v524 = vadd.f32 0.0, %v523
  %v525 = vpop.f32.mrb[0].mxu0
  %526 = vdwg.mxu0
  %v527 = vmul.f32 %v438, %v519
  %v528 = vmul.f32 %v439, %v524
  %529 = vst.msk [vmem:[#allocation5] sm:$0xff] %vm101, %v527
  %530 = vst.msk [vmem:[#allocation5 + $0x8] sm:$0xff] %vm101, %v528
  %s531 = scalar_lea.vmem [#allocation2], 8
  %v532 = vld [vmem:[%s531] sm:$0xff]
  %v533 = vld [vmem:[#allocation3] sm:$0xff]
  %v534 = vmul.bf16 %v532, %v533
  %v536 = vsel %vm101, %v534, 0
  %538 = vmatprep.subr.bf16.mxu0 0
  %539 = vmatpush1.bf16.msra.mxu0 %v208
  %540 = vmatprep.subr.bf16.mxu0 0
  %541 = vmatpush1.bf16.msra.mxu0 %v209
  %542 = vmatprep.subr.bf16.mxu0 0
  %543 = vmatpush1.bf16.msra.mxu0 %v210
  %544 = vmatprep.subr.bf16.mxu0 0
  %545 = vmatpush1.bf16.msra.mxu0 %v211
  %546 = vmatprep.subr.bf16.mxu0 0
  %547 = vmatpush1.bf16.msra.mxu0 0
  %548 = vmatprep.subr.bf16.mxu0 0
  %549 = vmatpush1.bf16.msra.mxu0 0
  %550 = vmatprep.subr.bf16.mxu0 0
  %551 = vmatpush1.bf16.msra.mxu0 0
  %552 = vmatprep.subr.bf16.mxu0 0
  %553 = vmatpush1.bf16.msra.mxu0 0
  %554 = vmatprep.subr.bf16.mxu0 0
  %555 = vmatpush1.bf16.msra.mxu0 0
  %556 = vmatprep.subr.bf16.mxu0 0
  %557 = vmatpush1.bf16.msra.mxu0 0
  %558 = vmatprep.subr.bf16.mxu0 0
  %559 = vmatpush1.bf16.msra.mxu0 0
  %560 = vmatprep.subr.bf16.mxu0 0
  %561 = vmatpush1.bf16.msra.mxu0 0
  %562 = vmatprep.subr.bf16.mxu0 0
  %563 = vmatpush1.bf16.msra.mxu0 0
  %564 = vmatprep.subr.bf16.mxu0 0
  %565 = vmatpush1.bf16.msra.mxu0 0
  %566 = vmatprep.subr.bf16.mxu0 0
  %567 = vmatpush1.bf16.msra.mxu0 0
  %568 = vmatprep.subr.bf16.mxu0 0
  %569 = vmatpush1.bf16.msra.mxu0 0
  %570 = vmatprep.mubr.bf16.mxu0 0
  %571 = vmatmul.mubr.bf16.gmra.mrb[0].mxu0 %v536
  %v572 = vpop.f32.mrb[0].mxu0
  %v573 = vadd.f32 0.0, %v572
  %v574 = vpop.f32.mrb[0].mxu0
  %v575 = vpop.f32.mrb[0].mxu0
  %v576 = vadd.f32 0.0, %v575
  %v577 = vpop.f32.mrb[0].mxu0
  %578 = vdwg.mxu0
  %579 = vst.msk [vmem:[#allocation6] sm:$0xff] %vm260, %v573
  %580 = vst.msk [vmem:[#allocation6 + $0x8] sm:$0xff] %vm260, %v576
  %v581 = vld [vmem:[%s263] sm:$0xff]
  %v582 = vmul.bf16 %v532, %v581
  %v584 = vsel %vm101, %v582, 0
  %586 = vmatprep.subr.bf16.mxu0 0
  %587 = vmatpush1.bf16.msra.mxu0 %v208
  %588 = vmatprep.subr.bf16.mxu0 0
  %589 = vmatpush1.bf16.msra.mxu0 %v209
  %590 = vmatprep.subr.bf16.mxu0 0
  %591 = vmatpush1.bf16.msra.mxu0 %v210
  %592 = vmatprep.subr.bf16.mxu0 0
  %593 = vmatpush1.bf16.msra.mxu0 %v211
  %594 = vmatprep.subr.bf16.mxu0 0
  %595 = vmatpush1.bf16.msra.mxu0 0
  %596 = vmatprep.subr.bf16.mxu0 0
  %597 = vmatpush1.bf16.msra.mxu0 0
  %598 = vmatprep.subr.bf16.mxu0 0
  %599 = vmatpush1.bf16.msra.mxu0 0
  %600 = vmatprep.subr.bf16.mxu0 0
  %601 = vmatpush1.bf16.msra.mxu0 0
  %602 = vmatprep.subr.bf16.mxu0 0
  %603 = vmatpush1.bf16.msra.mxu0 0
  %604 = vmatprep.subr.bf16.mxu0 0
  %605 = vmatpush1.bf16.msra.mxu0 0
  %606 = vmatprep.subr.bf16.mxu0 0
  %607 = vmatpush1.bf16.msra.mxu0 0
  %608 = vmatprep.subr.bf16.mxu0 0
  %609 = vmatpush1.bf16.msra.mxu0 0
  %610 = vmatprep.subr.bf16.mxu0 0
  %611 = vmatpush1.bf16.msra.mxu0 0
  %612 = vmatprep.subr.bf16.mxu0 0
  %613 = vmatpush1.bf16.msra.mxu0 0
  %614 = vmatprep.subr.bf16.mxu0 0
  %615 = vmatpush1.bf16.msra.mxu0 0
  %616 = vmatprep.subr.bf16.mxu0 0
  %617 = vmatpush1.bf16.msra.mxu0 0
  %618 = vmatprep.mubr.bf16.mxu0 0
  %619 = vmatmul.mubr.bf16.gmra.mrb[0].mxu0 %v584
  %v620 = vpop.f32.mrb[0].mxu0
  %v621 = vadd.f32 0.0, %v620
  %v622 = vpop.f32.mrb[0].mxu0
  %v623 = vpop.f32.mrb[0].mxu0
  %v624 = vadd.f32 0.0, %v623
  %v625 = vpop.f32.mrb[0].mxu0
  %626 = vdwg.mxu0
  %627 = vst.msk [vmem:[%s310] sm:$0xff] %vm260, %v621
  %628 = vst.msk [vmem:[%s310 + $0x8] sm:$0xff] %vm260, %v624
  %v629 = vmax.f32 %v573, %v621
  %v630 = vmax.f32 %v576, %v624
  %v631 = vld [vmem:[#allocation6] sm:$0xff]
  %v632 = vld [vmem:[#allocation6 + $0x8] sm:$0xff]
  %v633 = vsub.f32 %v631, %v629
  %v634 = vsub.f32 %v632, %v630
  %v635 = vmul.f32 %v633, 1.442695
  %v636 = vpow.pop %v635
  %v637 = vmul.f32 %v634, 1.442695
  %v638 = vpow.pop %v637
  %v639 = vpack.c.bf16 %v638, %v636
  %v641 = vsel %vm260, %v639, 0
  %643 = vmatprep.subr.bf16.mxu0 0
  %644 = vmatpush1.bf16.msra.mxu0 %v329
  %645 = vmatprep.subr.bf16.mxu0 0
  %646 = vmatpush1.bf16.msra.mxu0 0
  %647 = vmatprep.subr.bf16.mxu0 0
  %648 = vmatpush1.bf16.msra.mxu0 0
  %649 = vmatprep.subr.bf16.mxu0 0
  %650 = vmatpush1.bf16.msra.mxu0 0
  %651 = vmatprep.subr.bf16.mxu0 0
  %652 = vmatpush1.bf16.msra.mxu0 0
  %653 = vmatprep.subr.bf16.mxu0 0
  %654 = vmatpush1.bf16.msra.mxu0 0
  %655 = vmatprep.subr.bf16.mxu0 0
  %656 = vmatpush1.bf16.msra.mxu0 0
  %657 = vmatprep.subr.bf16.mxu0 0
  %658 = vmatpush1.bf16.msra.mxu0 0
  %659 = vmatprep.subr.bf16.mxu0 0
  %660 = vmatpush1.bf16.msra.mxu0 0
  %661 = vmatprep.subr.bf16.mxu0 0
  %662 = vmatpush1.bf16.msra.mxu0 0
  %663 = vmatprep.subr.bf16.mxu0 0
  %664 = vmatpush1.bf16.msra.mxu0 0
  %665 = vmatprep.subr.bf16.mxu0 0
  %666 = vmatpush1.bf16.msra.mxu0 0
  %667 = vmatprep.subr.bf16.mxu0 0
  %668 = vmatpush1.bf16.msra.mxu0 0
  %669 = vmatprep.subr.bf16.mxu0 0
  %670 = vmatpush1.bf16.msra.mxu0 0
  %671 = vmatprep.subr.bf16.mxu0 0
  %672 = vmatpush1.bf16.msra.mxu0 0
  %673 = vmatprep.subr.bf16.mxu0 0
  %674 = vmatpush1.bf16.msra.mxu0 0
  %675 = vmatprep.mubr.bf16.mxu0 0
  %676 = vmatmul.mubr.bf16.gmra.mrb[0].mxu0 %v641
  %v677 = vpop.f32.mrb[0].mxu0
  %v678 = vadd.f32 0.0, %v677
  %v679 = vpop.f32.mrb[0].mxu0
  %v680 = vpop.f32.mrb[0].mxu0
  %v681 = vadd.f32 0.0, %v680
  %v682 = vpop.f32.mrb[0].mxu0
  %683 = vdwg.mxu0
  %v684 = vld [vmem:[#allocation4] sm:$0xff]
  %v685 = vunpack.c.l.bf16 %v684
  %v686 = vunpack.c.h.bf16 %v684
  %v687 = vmul.f32 %v678, %v685
  %v688 = vmul.f32 %v681, %v686
  %v689 = vld [vmem:[%s310] sm:$0xff]
  %v690 = vld [vmem:[%s310 + $0x8] sm:$0xff]
  %v691 = vsub.f32 %v689, %v629
  %v692 = vsub.f32 %v690, %v630
  %v693 = vmul.f32 %v691, 1.442695
  %v694 = vpow.pop %v693
  %v695 = vmul.f32 %v692, 1.442695
  %v696 = vpow.pop %v695
  %v697 = vadd.f32 %v636, %v694
  %v698 = vadd.f32 %v638, %v696
  %v699 = vpack.c.bf16 %v696, %v694
  %v701 = vsel %vm260, %v699, 0
  %703 = vmatprep.subr.bf16.mxu0 0
  %704 = vmatpush1.bf16.msra.mxu0 %v329
  %705 = vmatprep.subr.bf16.mxu0 0
  %706 = vmatpush1.bf16.msra.mxu0 0
  %707 = vmatprep.subr.bf16.mxu0 0
  %708 = vmatpush1.bf16.msra.mxu0 0
  %709 = vmatprep.subr.bf16.mxu0 0
  %710 = vmatpush1.bf16.msra.mxu0 0
  %711 = vmatprep.subr.bf16.mxu0 0
  %712 = vmatpush1.bf16.msra.mxu0 0
  %713 = vmatprep.subr.bf16.mxu0 0
  %714 = vmatpush1.bf16.msra.mxu0 0
  %715 = vmatprep.subr.bf16.mxu0 0
  %716 = vmatpush1.bf16.msra.mxu0 0
  %717 = vmatprep.subr.bf16.mxu0 0
  %718 = vmatpush1.bf16.msra.mxu0 0
  %719 = vmatprep.subr.bf16.mxu0 0
  %720 = vmatpush1.bf16.msra.mxu0 0
  %721 = vmatprep.subr.bf16.mxu0 0
  %722 = vmatpush1.bf16.msra.mxu0 0
  %723 = vmatprep.subr.bf16.mxu0 0
  %724 = vmatpush1.bf16.msra.mxu0 0
  %725 = vmatprep.subr.bf16.mxu0 0
  %726 = vmatpush1.bf16.msra.mxu0 0
  %727 = vmatprep.subr.bf16.mxu0 0
  %728 = vmatpush1.bf16.msra.mxu0 0
  %729 = vmatprep.subr.bf16.mxu0 0
  %730 = vmatpush1.bf16.msra.mxu0 0
  %731 = vmatprep.subr.bf16.mxu0 0
  %732 = vmatpush1.bf16.msra.mxu0 0
  %733 = vmatprep.subr.bf16.mxu0 0
  %734 = vmatpush1.bf16.msra.mxu0 0
  %735 = vmatprep.mubr.bf16.mxu0 0
  %736 = vmatmul.mubr.bf16.gmra.mrb[0].mxu0 %v701
  %v737 = vpop.f32.mrb[0].mxu0
  %v738 = vadd.f32 0.0, %v737
  %v739 = vpop.f32.mrb[0].mxu0
  %v740 = vpop.f32.mrb[0].mxu0
  %v741 = vadd.f32 0.0, %v740
  %v742 = vpop.f32.mrb[0].mxu0
  %743 = vdwg.mxu0
  %v744 = vld [vmem:[%s432] sm:$0xff]
  %v745 = vunpack.c.l.bf16 %v744
  %v746 = vunpack.c.h.bf16 %v744
  %v747 = vmul.f32 %v738, %v745
  %v748 = vmul.f32 %v741, %v746
  %v749 = vadd.f32 %v687, %v747
  %v750 = vadd.f32 %v688, %v748
  %v751 = vrcp.pop %v697
  %v752 = vrcp.pop %v698
  %v754 = vsel %vm260, %v751, 0
  %v757 = vsel %vm260, %v752, 0
  %759 = vmatprep.subr.mxu0 0.0
  %760 = vmatpush1.msra.mxu0 %v450
  %761 = vmatprep.subr.mxu0 0.0
  %762 = vmatpush1.msra.mxu0 0.0
  %763 = vmatprep.subr.mxu0 0.0
  %764 = vmatpush1.msra.mxu0 0.0
  %765 = vmatprep.subr.mxu0 0.0
  %766 = vmatpush1.msra.mxu0 0.0
  %767 = vmatprep.subr.mxu0 0.0
  %768 = vmatpush1.msra.mxu0 0.0
  %769 = vmatprep.subr.mxu0 0.0
  %770 = vmatpush1.msra.mxu0 0.0
  %771 = vmatprep.subr.mxu0 0.0
  %772 = vmatpush1.msra.mxu0 0.0
  %773 = vmatprep.subr.mxu0 0.0
  %774 = vmatpush1.msra.mxu0 0.0
  %775 = vmatprep.subr.mxu0 0.0
  %776 = vmatpush1.msra.mxu0 0.0
  %777 = vmatprep.subr.mxu0 0.0
  %778 = vmatpush1.msra.mxu0 0.0
  %779 = vmatprep.subr.mxu0 0.0
  %780 = vmatpush1.msra.mxu0 0.0
  %781 = vmatprep.subr.mxu0 0.0
  %782 = vmatpush1.msra.mxu0 0.0
  %783 = vmatprep.subr.mxu0 0.0
  %784 = vmatpush1.msra.mxu0 0.0
  %785 = vmatprep.subr.mxu0 0.0
  %786 = vmatpush1.msra.mxu0 0.0
  %787 = vmatprep.subr.mxu0 0.0
  %788 = vmatpush1.msra.mxu0 0.0
  %789 = vmatprep.subr.mxu0 0.0
  %790 = vmatpush1.msra.mxu0 0.0
  %791 = vmatprep.subr.mxu0 0.0
  %792 = vmatpush1.msra.mxu0 0.0
  %793 = vmatprep.subr.mxu0 0.0
  %794 = vmatpush1.msra.mxu0 0.0
  %795 = vmatprep.subr.mxu0 0.0
  %796 = vmatpush1.msra.mxu0 0.0
  %797 = vmatprep.subr.mxu0 0.0
  %798 = vmatpush1.msra.mxu0 0.0
  %799 = vmatprep.subr.mxu0 0.0
  %800 = vmatpush1.msra.mxu0 0.0
  %801 = vmatprep.subr.mxu0 0.0
  %802 = vmatpush1.msra.mxu0 0.0
  %803 = vmatprep.subr.mxu0 0.0
  %804 = vmatpush1.msra.mxu0 0.0
  %805 = vmatprep.subr.mxu0 0.0
  %806 = vmatpush1.msra.mxu0 0.0
  %807 = vmatprep.subr.mxu0 0.0
  %808 = vmatpush1.msra.mxu0 0.0
  %809 = vmatprep.subr.mxu0 0.0
  %810 = vmatpush1.msra.mxu0 0.0
  %811 = vmatprep.subr.mxu0 0.0
  %812 = vmatpush1.msra.mxu0 0.0
  %813 = vmatprep.subr.mxu0 0.0
  %814 = vmatpush1.msra.mxu0 0.0
  %815 = vmatprep.subr.mxu0 0.0
  %816 = vmatpush1.msra.mxu0 0.0
  %817 = vmatprep.subr.mxu0 0.0
  %818 = vmatpush1.msra.mxu0 0.0
  %819 = vmatprep.subr.mxu0 0.0
  %820 = vmatpush1.msra.mxu0 0.0
  %821 = vmatprep.subr.mxu0 0.0
  %822 = vmatpush1.msra.mxu0 0.0
  %823 = vmatprep.mubr.f32.mxu0 0.0
  %824 = vmatmul.mubr.f32.gmra.mrb[0].mxu0 %v754
  %v825 = vpop.f32.mrb[0].mxu0
  %v826 = vadd.f32 0.0, %v825
  %v827 = vpop.f32.mrb[0].mxu0
  %828 = vmatprep.mubr.f32.mxu0 0.0
  %829 = vmatmul.mubr.f32.gmra.mrb[0].mxu0 %v757
  %v830 = vpop.f32.mrb[0].mxu0
  %v831 = vadd.f32 0.0, %v830
  %v832 = vpop.f32.mrb[0].mxu0
  %833 = vdwg.mxu0
  %v834 = vmul.f32 %v749, %v826
  %v835 = vmul.f32 %v750, %v831
  %s836 = scalar_lea.vmem [#allocation5], 16
  %837 = vst.msk [vmem:[%s836] sm:$0xff] %vm101, %v834
  %838 = vst.msk [vmem:[%s836 + $0x8] sm:$0xff] %vm101, %v835
  %v839 = vld [vmem:[#allocation5] sm:$0xff]
  %v840 = vld [vmem:[#allocation5 + $0x8] sm:$0xff]
  %v841 = vld [vmem:[#allocation5 + $0x10] sm:$0xff]
  %v842 = vld [vmem:[#allocation5 + $0x18] sm:$0xff]
  %v843 = vpack.c.bf16 %v840, %v839
  %v844 = vpack.c.bf16 %v842, %v841
  %v845 = vld [vmem:[%s3] sm:$0xf]
  %v846 = vld [vmem:[%s3 + $0x4] sm:$0xf]
  %v847 = vld [vmem:[%s3 + $0x8] sm:$0xf]
  %v848 = vld [vmem:[%s3 + $0xc] sm:$0xf]
  %v849 = vld [vmem:[%s3 + $0x10] sm:$0xf]
  %v850 = vld [vmem:[%s3 + $0x14] sm:$0xf]
  %v851 = vld [vmem:[%s3 + $0x18] sm:$0xf]
  %v852 = vld [vmem:[%s3 + $0x1c] sm:$0xf]
  %v853 = vld [vmem:[%s4] sm:$0x1]
  %v855 = vlaneseq
  %v856 = vshrl.u32 %v855, 7
  %v857 = vsub.s32 0, %v856
  %v858 = vrot.slane %v853, %v857
  %v868 = vunpack.c.l.b16 %v845
  %v869 = vunpack.c.l.b16 %v846
  %v870 = vunpack.c.l.b16 %v847
  %v871 = vunpack.c.l.b16 %v848
  %v872 = vunpack.c.l.b16 %v849
  %v873 = vunpack.c.l.b16 %v850
  %v874 = vunpack.c.l.b16 %v851
  %v875 = vunpack.c.l.b16 %v852
  %v876 = vpack.c.b16 %v869, %v868
  %v877 = vpack.c.b16 %v871, %v870
  %v878 = vpack.c.b16 %v873, %v872
  %v879 = vpack.c.b16 %v875, %v874
  %v885 = vsel %vm101, %v843, 0
  %v888 = vsel %vm101, %v844, 0
  %890 = vmatprep.subr.bf16.mxu0 0
  %891 = vmatpush1.bf16.msra.mxu0 %v876
  %892 = vmatprep.subr.bf16.mxu0 0
  %893 = vmatpush1.bf16.msra.mxu0 %v877
  %894 = vmatprep.subr.bf16.mxu0 0
  %895 = vmatpush1.bf16.msra.mxu0 %v878
  %896 = vmatprep.subr.bf16.mxu0 0
  %897 = vmatpush1.bf16.msra.mxu0 %v879
  %898 = vmatprep.subr.bf16.mxu0 0
  %899 = vmatpush1.bf16.msra.mxu0 0
  %900 = vmatprep.subr.bf16.mxu0 0
  %901 = vmatpush1.bf16.msra.mxu0 0
  %902 = vmatprep.subr.bf16.mxu0 0
  %903 = vmatpush1.bf16.msra.mxu0 0
  %904 = vmatprep.subr.bf16.mxu0 0
  %905 = vmatpush1.bf16.msra.mxu0 0
  %906 = vmatprep.subr.bf16.mxu0 0
  %907 = vmatpush1.bf16.msra.mxu0 0
  %908 = vmatprep.subr.bf16.mxu0 0
  %909 = vmatpush1.bf16.msra.mxu0 0
  %910 = vmatprep.subr.bf16.mxu0 0
  %911 = vmatpush1.bf16.msra.mxu0 0
  %912 = vmatprep.subr.bf16.mxu0 0
  %913 = vmatpush1.bf16.msra.mxu0 0
  %914 = vmatprep.subr.bf16.mxu0 0
  %915 = vmatpush1.bf16.msra.mxu0 0
  %916 = vmatprep.subr.bf16.mxu0 0
  %917 = vmatpush1.bf16.msra.mxu0 0
  %918 = vmatprep.subr.bf16.mxu0 0
  %919 = vmatpush1.bf16.msra.mxu0 0
  %920 = vmatprep.subr.bf16.mxu0 0
  %921 = vmatpush1.bf16.msra.mxu0 0
  %922 = vmatprep.mubr.bf16.mxu0 0
  %923 = vmatmul.mubr.bf16.gmra.mrb[0].mxu0 %v885
  %v924 = vpop.f32.mrb[0].mxu0
  %v925 = vadd.f32 %v858, %v924
  %v926 = vpop.f32.mrb[0].mxu0
  %v927 = vpop.f32.mrb[0].mxu0
  %v928 = vadd.f32 %v858, %v927
  %v929 = vpop.f32.mrb[0].mxu0
  %930 = vmatprep.mubr.bf16.mxu0 0
  %931 = vmatmul.mubr.bf16.gmra.mrb[0].mxu0 %v888
  %v932 = vpop.f32.mrb[0].mxu0
  %v933 = vadd.f32 %v858, %v932
  %v934 = vpop.f32.mrb[0].mxu0
  %v935 = vpop.f32.mrb[0].mxu0
  %v936 = vadd.f32 %v858, %v935
  %v937 = vpop.f32.mrb[0].mxu0
  %938 = vdwg.mxu0
  %v939 = vld [vmem:[%s0] sm:$0xf]
  %v940 = vld [vmem:[%s0 + $0x4] sm:$0xf]
  %v941 = vld [vmem:[%s0 + $0x8] sm:$0xf]
  %v942 = vld [vmem:[%s0 + $0xc] sm:$0xf]
  %v943 = vunpack.c.l.bf16 %v939
  %v944 = vunpack.c.l.bf16 %v940
  %v945 = vunpack.c.l.bf16 %v941
  %v946 = vunpack.c.l.bf16 %v942
  %v947 = vadd.f32 %v925, %v943
  %v948 = vadd.f32 %v928, %v944
  %v949 = vadd.f32 %v933, %v945
  %v950 = vadd.f32 %v936, %v946
  %v951 = vpack.c.bf16 %v948, %v947
  %v952 = vpack.c.bf16 %v950, %v949
  %v955 = vunpack.c.l.b16 %v951
  %v956 = vunpack.c.h.b16 %v951
  %v957 = vunpack.c.l.b16 %v952
  %v958 = vunpack.c.h.b16 %v952
  %v959 = vpack.c.b16 %v955, %v955
  %v960 = vpack.c.b16 %v956, %v956
  %v961 = vpack.c.b16 %v957, %v957
  %v962 = vpack.c.b16 %v958, %v958
  %vm967 = vcmask 519168
  %968 = vst.msk [vmem:[%s7] sm:$0xf] %vm967, %v959
  %969 = vst.msk [vmem:[%s7 + $0x4] sm:$0xf] %vm967, %v960
  %970 = vst.msk [vmem:[%s7 + $0x8] sm:$0xf] %vm967, %v961
  %971 = vst.msk [vmem:[%s7 + $0xc] sm:$0xf] %vm967, %v962
  // Predicated region
  $region30: #{attention_dgcnn_forward.11} parent=0 // pred_check
    _
  $region31: #{attention_dgcnn_forward.11} parent=0 // pred_check_branch
    %973 = sbr.rel (0) target = $region33
  $region32: #{attention_dgcnn_forward.11} parent=0 // pred_region
    _
  $region33: #{attention_dgcnn_forward.11} parent=0 // pred_fallthru
    _
  // Predicated region
  $region34: #{attention_dgcnn_forward.11} parent=0 // pred_check
    _
  $region35: #{attention_dgcnn_forward.11} parent=0 // pred_check_branch
    %975 = sbr.rel (0) target = $region37
  $region36: #{attention_dgcnn_forward.11} parent=0 // pred_region
    _
  $region37: #{attention_dgcnn_forward.11} parent=0 // pred_fallthru
    _

// kernel: attention_dgcnn_forward.12
$region0: #{attention_dgcnn_forward.12}
  #allocation0 [shape = 'u32[]', space=smem, size = 0x4, offset = 0x4, fixed_abs, tag = 'smem constant byte address 0x4 - core index']
  #allocation1 [shape = 'u32[144,128]{1,0:T(1,128)}', space=vmem, size = 0x12000, scoped, tag = 'internal scratch']
  %s0 = inlined_call_operand.vmem [shape: bf16[2,4,16,64], index: 0, kind: input, shape index: {}]
  %s1 = inlined_call_operand.vmem [shape: bf16[2,16,64], index: 1, kind: input, shape index: {}]
  %s2 = inlined_call_operand.vmem [shape: bf16[64,64], index: 2, kind: input, shape index: {}]
  %s3 = inlined_call_operand.vmem [shape: bf16[64,64], index: 3, kind: input, shape index: {}]
  %s4 = inlined_call_operand.vmem [shape: f32[1,64], index: 4, kind: input, shape index: {}]
  %s5 = inlined_call_operand.vmem [shape: bf16[2,16,64], index: 5, kind: output, shape index: {}]
  %s6 = sld [smem:[#allocation0]]
  $region53: #{attention_dgcnn_forward.12} parent=0
    _
  %s8 = ssub.s32 1, %s6
  %s9 = scalar_select 0, %s8, %s6
  loop: start=0, step=1, limit=4
  $region2: #{attention_dgcnn_forward.12} parent=0 // loop_pre_header
    _
  $region3: #{attention_dgcnn_forward.12} parent=0 // loop_header
    %s11 = sphi 0, %s15
    %p12 = scmp.ge.s32.totalorder %s11, 4
    %s18 = sphi 0, %s30
    %s19 = sphi 0, %s26
    %s20 = sphi 0, %s18
    %s21 = sphi 0, %s19
    %s22 = sphi 0, %s20
    %s23 = sphi 0, %s21
    %s35 = sphi 0, %s37
    %s38 = sphi 0, %s35
    %s39 = sphi 0, %s38
    %s55 = sphi 0, %s39
    %s63 = sphi 0, %s65
    %s66 = sphi 0, %s63
    %s67 = sphi 0, %s66
    %s83 = sphi 0, %s67
    %s87 = sphi 0, %s87
    %s89 = sphi 0, %s87
    %s90 = sphi 0, %s89
    %s104 = sphi 0, %s90
    %s108 = sphi 0, %s108
    %s110 = sphi 0, %s108
    %s111 = sphi 0, %s110
    %s125 = sphi 0, %s111
    %s129 = sphi 0, %s129
    %s131 = sphi 0, %s129
    %s132 = sphi 0, %s131
    %s146 = sphi 0, %s132
    %s154 = sphi 0, %s156
    %s157 = sphi 0, %s154
    %s158 = sphi 0, %s157
    %s174 = sphi 0, %s158
  $region4: #{attention_dgcnn_forward.12} parent=0 // loop_header_branch
    %14 = sbr.rel (%p12) target = $region8
  $region5: #{attention_dgcnn_forward.12} parent=0 // loop_body
    %s16 = ssub.s32 %s11, 1
    %s17 = ssub.s32 %s11, 2
    %s24 = sadd.s32 1, %s19
    %p25 = scmp.ge.s32.totalorder %s24, 1
    %s26 = scalar_select %p25, 0, %s24
    %s27 = sadd.s32 1, %s18
    %s28 = scalar_select %p25, %s27, %s18
    %p29 = scmp.ge.s32.totalorder %s28, 2
    %s30 = scalar_select %p29, 0, %s28
    %s31 = ssub.s32 %s18, %s30
    %s32 = ssub.s32 %s19, %s26
    %s33 = sor.u32 %s31, %s32
    %p34 = scmp.eq.s32.totalorder %s33, 0
    %s36 = sadd.s32 %s35, 1
    %s37 = scalar_select %p34, %s35, %s36
    %p40 = pneg %p34
    %p41 = scmp.eq.s32.totalorder %s11, 1
    %p42 = por %p40, %p41
    %p43 = scmp.ne.s32.totalorder %s35, %s38
    %p44 = scmp.eq.s32.totalorder %s11, 0
    %p45 = por %p43, %p44
    %p46 = scmp.ne.s32.totalorder %s35, %s38
    %p47 = scmp.eq.s32.totalorder %s16, 1
    %p48 = por %p46, %p47
    %p49 = scmp.ne.s32.totalorder %s38, %s39
    %p50 = scmp.eq.s32.totalorder %s16, 0
    %p51 = por %p49, %p50
    %p52 = scmp.ne.s32.totalorder %s38, %s39
    %p53 = scmp.eq.s32.totalorder %s17, 1
    %p54 = por %p52, %p53
    %p56 = scmp.ne.s32.totalorder %s39, %s55
    %p57 = scmp.eq.s32.totalorder %s17, 0
    %p58 = por %p56, %p57
    %s59 = ssub.s32 %s18, %s30
    %s60 = ssub.s32 %s19, %s26
    %s61 = sor.u32 %s59, %s60
    %p62 = scmp.eq.s32.totalorder %s61, 0
    %s64 = sadd.s32 %s63, 1
    %s65 = scalar_select %p62, %s63, %s64
    %p68 = pneg %p62
    %p69 = scmp.eq.s32.totalorder %s11, 1
    %p70 = por %p68, %p69
    %p71 = scmp.ne.s32.totalorder %s63, %s66
    %p72 = scmp.eq.s32.totalorder %s11, 0
    %p73 = por %p71, %p72
    %p74 = scmp.ne.s32.totalorder %s63, %s66
    %p75 = scmp.eq.s32.totalorder %s16, 1
    %p76 = por %p74, %p75
    %p77 = scmp.ne.s32.totalorder %s66, %s67
    %p78 = scmp.eq.s32.totalorder %s16, 0
    %p79 = por %p77, %p78
    %p80 = scmp.ne.s32.totalorder %s66, %s67
    %p81 = scmp.eq.s32.totalorder %s17, 1
    %p82 = por %p80, %p81
    %p84 = scmp.ne.s32.totalorder %s67, %s83
    %p85 = scmp.eq.s32.totalorder %s17, 0
    %p86 = por %p84, %p85
    %s88 = sadd.s32 %s87, 1
    %p91 = scmp.eq.s32.totalorder %s11, 1
    %p92 = scmp.ne.s32.totalorder %s87, %s89
    %p93 = scmp.eq.s32.totalorder %s11, 0
    %p94 = por %p92, %p93
    %p95 = scmp.ne.s32.totalorder %s87, %s89
    %p96 = scmp.eq.s32.totalorder %s16, 1
    %p97 = por %p95, %p96
    %p98 = scmp.ne.s32.totalorder %s89, %s90
    %p99 = scmp.eq.s32.totalorder %s16, 0
    %p100 = por %p98, %p99
    %p101 = scmp.ne.s32.totalorder %s89, %s90
    %p102 = scmp.eq.s32.totalorder %s17, 1
    %p103 = por %p101, %p102
    %p105 = scmp.ne.s32.totalorder %s90, %s104
    %p106 = scmp.eq.s32.totalorder %s17, 0
    %p107 = por %p105, %p106
    %s109 = sadd.s32 %s108, 1
    %p112 = scmp.eq.s32.totalorder %s11, 1
    %p113 = scmp.ne.s32.totalorder %s108, %s110
    %p114 = scmp.eq.s32.totalorder %s11, 0
    %p115 = por %p113, %p114
    %p116 = scmp.ne.s32.totalorder %s108, %s110
    %p117 = scmp.eq.s32.totalorder %s16, 1
    %p118 = por %p116, %p117
    %p119 = scmp.ne.s32.totalorder %s110, %s111
    %p120 = scmp.eq.s32.totalorder %s16, 0
    %p121 = por %p119, %p120
    %p122 = scmp.ne.s32.totalorder %s110, %s111
    %p123 = scmp.eq.s32.totalorder %s17, 1
    %p124 = por %p122, %p123
    %p126 = scmp.ne.s32.totalorder %s111, %s125
    %p127 = scmp.eq.s32.totalorder %s17, 0
    %p128 = por %p126, %p127
    %s130 = sadd.s32 %s129, 1
    %p133 = scmp.eq.s32.totalorder %s11, 1
    %p134 = scmp.ne.s32.totalorder %s129, %s131
    %p135 = scmp.eq.s32.totalorder %s11, 0
    %p136 = por %p134, %p135
    %p137 = scmp.ne.s32.totalorder %s129, %s131
    %p138 = scmp.eq.s32.totalorder %s16, 1
    %p139 = por %p137, %p138
    %p140 = scmp.ne.s32.totalorder %s131, %s132
    %p141 = scmp.eq.s32.totalorder %s16, 0
    %p142 = por %p140, %p141
    %p143 = scmp.ne.s32.totalorder %s131, %s132
    %p144 = scmp.eq.s32.totalorder %s17, 1
    %p145 = por %p143, %p144
    %p147 = scmp.ne.s32.totalorder %s132, %s146
    %p148 = scmp.eq.s32.totalorder %s17, 0
    %p149 = por %p147, %p148
    %s150 = ssub.s32 %s18, %s30
    %s151 = ssub.s32 %s19, %s26
    %s152 = sor.u32 %s150, %s151
    %p153 = scmp.eq.s32.totalorder %s152, 0
    %s155 = sadd.s32 %s154, 1
    %s156 = scalar_select %p153, %s154, %s155
    %p159 = pneg %p153
    %p160 = scmp.eq.s32.totalorder %s11, 1
    %p161 = por %p159, %p160
    %p162 = scmp.ne.s32.totalorder %s154, %s157
    %p163 = scmp.eq.s32.totalorder %s11, 0
    %p164 = por %p162, %p163
    %p165 = scmp.ne.s32.totalorder %s154, %s157
    %p166 = scmp.eq.s32.totalorder %s16, 1
    %p167 = por %p165, %p166
    %p168 = scmp.ne.s32.totalorder %s157, %s158
    %p169 = scmp.eq.s32.totalorder %s16, 0
    %p170 = por %p168, %p169
    %p171 = scmp.ne.s32.totalorder %s157, %s158
    %p172 = scmp.eq.s32.totalorder %s17, 1
    %p173 = por %p171, %p172
    %p175 = scmp.ne.s32.totalorder %s158, %s174
    %p176 = scmp.eq.s32.totalorder %s17, 0
    %p177 = por %p175, %p176
    %p178 = scmp.le.s32.totalorder 1, %s11
    %p179 = scmp.lt.s32.totalorder %s11, 3
    %p180 = pnand %p178, %p179
    %p181 = pneg %p180
    // Predicated region
    $region9: #{attention_dgcnn_forward.12} parent=5 // pred_check
      _
    $region10: #{attention_dgcnn_forward.12} parent=5 // pred_check_branch
      %183 = sbr.rel (%p180) target = $region12
    $region11: #{attention_dgcnn_forward.12} parent=5 // pred_region
      %s184 = ssub.s32 %s11, 1
      // Predicated region
      $region13: #{attention_dgcnn_forward.12} parent=11 // pred_check
        %p185 = pneg %p100
      $region14: #{attention_dgcnn_forward.12} parent=11 // pred_check_branch
        %187 = sbr.rel (%p185) target = $region16
      $region15: #{attention_dgcnn_forward.12} parent=11 // pred_region
        _
      $region16: #{attention_dgcnn_forward.12} parent=11 // pred_fallthru
        _
      // Predicated region
      $region17: #{attention_dgcnn_forward.12} parent=11 // pred_check
        %p188 = pneg %p121
      $region18: #{attention_dgcnn_forward.12} parent=11 // pred_check_branch
        %190 = sbr.rel (%p188) target = $region20
      $region19: #{attention_dgcnn_forward.12} parent=11 // pred_region
        _
      $region20: #{attention_dgcnn_forward.12} parent=11 // pred_fallthru
        _
      // Predicated region
      $region21: #{attention_dgcnn_forward.12} parent=11 // pred_check
        %p191 = pneg %p142
      $region22: #{attention_dgcnn_forward.12} parent=11 // pred_check_branch
        %193 = sbr.rel (%p191) target = $region24
      $region23: #{attention_dgcnn_forward.12} parent=11 // pred_region
        _
      $region24: #{attention_dgcnn_forward.12} parent=11 // pred_fallthru
        _
    $region12: #{attention_dgcnn_forward.12} parent=5 // pred_fallthru
      _
    %p194 = scmp.lt.s32.totalorder %s11, 2
    // Predicated region
    $region25: #{attention_dgcnn_forward.12} parent=5 // pred_check
      %p195 = pneg %p194
    $region26: #{attention_dgcnn_forward.12} parent=5 // pred_check_branch
      %197 = sbr.rel (%p195) target = $region28
    $region27: #{attention_dgcnn_forward.12} parent=5 // pred_region
      // Predicated region
      $region29: #{attention_dgcnn_forward.12} parent=27 // pred_check
        %p198 = pneg %p45
      $region30: #{attention_dgcnn_forward.12} parent=27 // pred_check_branch
        %200 = sbr.rel (%p198) target = $region32
      $region31: #{attention_dgcnn_forward.12} parent=27 // pred_region
        %s201 = smul.u32 2, %s19
        %p202 = scmp.lt.s32.totalorder %s18, 1
        %s203 = scalar_select %p202, %s18, 1
        %p204 = scmp.lt.s32.totalorder %s201, 1
        %s205 = scalar_select %p204, %s201, 1
        %s206 = smul.addr %s203, 8
        %s207 = sadd.s32 %s205, %s206
        %s208 = smul.addr %s207, 4
        %s209 = scalar_lea.vmem %s0, %s208
        %s210 = smul.u32 2, %s19
      $region32: #{attention_dgcnn_forward.12} parent=27 // pred_fallthru
        _
      // Predicated region
      $region33: #{attention_dgcnn_forward.12} parent=27 // pred_check
        %p211 = pneg %p73
      $region34: #{attention_dgcnn_forward.12} parent=27 // pred_check_branch
        %213 = sbr.rel (%p211) target = $region36
      $region35: #{attention_dgcnn_forward.12} parent=27 // pred_region
        %s214 = smul.u32 2, %s19
        %p215 = scmp.lt.s32.totalorder %s18, 1
        %s216 = scalar_select %p215, %s18, 1
        %p217 = scmp.lt.s32.totalorder %s214, 1
        %s218 = scalar_select %p217, %s214, 1
        %s219 = smul.addr %s216, 2
        %s220 = sadd.s32 %s218, %s219
        %s221 = smul.addr %s220, 4
        %s222 = scalar_lea.vmem %s1, %s221
        %s223 = smul.u32 2, %s19
      $region36: #{attention_dgcnn_forward.12} parent=27 // pred_fallthru
        _
    $region28: #{attention_dgcnn_forward.12} parent=5 // pred_fallthru
      _
    %p224 = scmp.le.s32.totalorder 1, %s11
    %p225 = scmp.lt.s32.totalorder %s11, 3
    %p226 = pnand %p224, %p225
    %p227 = pneg %p226
    // Predicated region
    $region37: #{attention_dgcnn_forward.12} parent=5 // pred_check
      _
    $region38: #{attention_dgcnn_forward.12} parent=5 // pred_check_branch
      %229 = sbr.rel (%p226) target = $region40
    $region39: #{attention_dgcnn_forward.12} parent=5 // pred_region
      %s230 = ssub.s32 %s11, 1
      %s231 = smul.u32 2, %s21
      %p232 = scmp.lt.s32.totalorder %s20, 1
      %s233 = scalar_select %p232, %s20, 1
      %p234 = scmp.lt.s32.totalorder %s231, 1
      %s235 = scalar_select %p234, %s231, 1
      %s236 = smul.addr %s233, 8
      %s237 = sadd.s32 %s235, %s236
      %s238 = smul.addr %s237, 4
      %s239 = scalar_lea.vmem %s0, %s238
      %p240 = pneg %p51
      %p241 = pneg %p48
      %s242 = smul.u32 2, %s21
      %p243 = scmp.lt.s32.totalorder %s20, 1
      %s244 = scalar_select %p243, %s20, 1
      %p245 = scmp.lt.s32.totalorder %s242, 1
      %s246 = scalar_select %p245, %s242, 1
      %s247 = smul.addr %s244, 2
      %s248 = sadd.s32 %s246, %s247
      %s249 = smul.addr %s248, 4
      %s250 = scalar_lea.vmem %s1, %s249
      %p251 = pneg %p79
      %p252 = pneg %p76
      %p253 = pneg %p100
      %p254 = pneg %p97
      %p255 = pneg %p121
      %p256 = pneg %p118
      %p257 = pneg %p142
      %p258 = pneg %p139
      %p259 = pneg %p170
      %p260 = pneg %p167
      %s261 = smul.u32 2, %s21
      %p262 = scmp.lt.s32.totalorder %s20, 1
      %s263 = scalar_select %p262, %s20, 1
      %p264 = scmp.lt.s32.totalorder %s261, 1
      %s265 = scalar_select %p264, %s261, 1
      %s266 = smul.addr %s263, 2
      %s267 = sadd.s32 %s265, %s266
      %s268 = smul.addr %s267, 4
      %s269 = scalar_lea.vmem %s5, %s268
      %s270 = smul.u32 2, %s21
      %p271 = scmp.lt.s32.totalorder %s20, 1
      %s272 = scalar_select %p271, %s20, 1
      %p273 = scmp.lt.s32.totalorder %s270, 1
      %s274 = scalar_select %p273, %s270, 1
      %s275 = smul.addr %s272, 8
      %s276 = sadd.s32 %s274, %s275
      %s277 = smul.addr %s276, 4
      %s278 = scalar_lea.vmem %s0, %s277
      %s279 = smul.u32 2, %s21
      %s280 = smul.u32 2, %s21
      %p281 = scmp.lt.s32.totalorder %s20, 1
      %s282 = scalar_select %p281, %s20, 1
      %p283 = scmp.lt.s32.totalorder %s280, 1
      %s284 = scalar_select %p283, %s280, 1
      %s285 = smul.addr %s282, 2
      %s286 = sadd.s32 %s284, %s285
      %s287 = smul.addr %s286, 4
      %s288 = scalar_lea.vmem %s1, %s287
      %s289 = smul.u32 2, %s21
      %s290 = smul.u32 2, %s21
      %p291 = scmp.lt.s32.totalorder %s20, 1
      %s292 = scalar_select %p291, %s20, 1
      %p293 = scmp.lt.s32.totalorder %s290, 1
      %s294 = scalar_select %p293, %s290, 1
      %s295 = smul.addr %s292, 2
      %s296 = sadd.s32 %s294, %s295
      %s297 = smul.addr %s296, 4
      %s298 = scalar_lea.vmem %s5, %s297
      %s299 = smul.u32 2, %s21
      %v301 = vld [vmem:[%s288] sm:$0xf]
      %v302 = vld [vmem:[%s288 + $0x4] sm:$0xf]
      %v303 = vld [vmem:[%s3] sm:$0xf]
      %v304 = vld [vmem:[%s3 + $0x4] sm:$0xf]
      %v305 = vld [vmem:[%s3 + $0x8] sm:$0xf]
      %v306 = vld [vmem:[%s3 + $0xc] sm:$0xf]
      %v307 = vld [vmem:[%s3 + $0x10] sm:$0xf]
      %v308 = vld [vmem:[%s3 + $0x14] sm:$0xf]
      %v309 = vld [vmem:[%s3 + $0x18] sm:$0xf]
      %v310 = vld [vmem:[%s3 + $0x1c] sm:$0xf]
      %v311 = vld [vmem:[%s4] sm:$0x1]
      %v313 = vlaneseq
      %v314 = vshrl.u32 %v313, 7
      %v315 = vsub.s32 0, %v314
      %v316 = vrot.slane %v311, %v315
      %v320 = vunpack.c.l.b16 %v301
      %v321 = vunpack.c.l.b16 %v302
      %v322 = vpack.c.b16 %v321, %v320
      %v331 = vunpack.c.l.b16 %v303
      %v332 = vunpack.c.l.b16 %v304
      %v333 = vunpack.c.l.b16 %v305
      %v334 = vunpack.c.l.b16 %v306
      %v335 = vunpack.c.l.b16 %v307
      %v336 = vunpack.c.l.b16 %v308
      %v337 = vunpack.c.l.b16 %v309
      %v338 = vunpack.c.l.b16 %v310
      %v339 = vpack.c.b16 %v332, %v331
      %v340 = vpack.c.b16 %v334, %v333
      %v341 = vpack.c.b16 %v336, %v335
      %v342 = vpack.c.b16 %v338, %v337
      %vm347 = vcmask 523264
      %v349 = vsel %vm347, %v322, 0
      %351 = vmatprep.subr.bf16.mxu0 0
      %352 = vmatpush1.bf16.msra.mxu0 %v339
      %353 = vmatprep.subr.bf16.mxu0 0
      %354 = vmatpush1.bf16.msra.mxu0 %v340
      %355 = vmatprep.subr.bf16.mxu0 0
      %356 = vmatpush1.bf16.msra.mxu0 %v341
      %357 = vmatprep.subr.bf16.mxu0 0
      %358 = vmatpush1.bf16.msra.mxu0 %v342
      %359 = vmatprep.subr.bf16.mxu0 0
      %360 = vmatpush1.bf16.msra.mxu0 0
      %361 = vmatprep.subr.bf16.mxu0 0
      %362 = vmatpush1.bf16.msra.mxu0 0
      %363 = vmatprep.subr.bf16.mxu0 0
      %364 = vmatpush1.bf16.msra.mxu0 0
      %365 = vmatprep.subr.bf16.mxu0 0
      %366 = vmatpush1.bf16.msra.mxu0 0
      %367 = vmatprep.subr.bf16.mxu0 0
      %368 = vmatpush1.bf16.msra.mxu0 0
      %369 = vmatprep.subr.bf16.mxu0 0
      %370 = vmatpush1.bf16.msra.mxu0 0
      %371 = vmatprep.subr.bf16.mxu0 0
      %372 = vmatpush1.bf16.msra.mxu0 0
      %373 = vmatprep.subr.bf16.mxu0 0
      %374 = vmatpush1.bf16.msra.mxu0 0
      %375 = vmatprep.subr.bf16.mxu0 0
      %376 = vmatpush1.bf16.msra.mxu0 0
      %377 = vmatprep.subr.bf16.mxu0 0
      %378 = vmatpush1.bf16.msra.mxu0 0
      %379 = vmatprep.subr.bf16.mxu0 0
      %380 = vmatpush1.bf16.msra.mxu0 0
      %381 = vmatprep.subr.bf16.mxu0 0
      %382 = vmatpush1.bf16.msra.mxu0 0
      %383 = vmatprep.mubr.bf16.mxu0 0
      %384 = vmatmul.mubr.bf16.gmra.mrb[0].mxu0 %v349
      %v385 = vpop.f32.mrb[0].mxu0
      %v386 = vadd.f32 %v316, %v385
      %v387 = vpop.f32.mrb[0].mxu0
      %v388 = vpop.f32.mrb[0].mxu0
      %v389 = vadd.f32 %v316, %v388
      %v390 = vpop.f32.mrb[0].mxu0
      %391 = vdwg.mxu0
      %v392 = vld [vmem:[%s278] sm:$0xf]
      %v393 = vld [vmem:[%s278 + $0x4] sm:$0xf]
      %v394 = vld [vmem:[%s278 + $0x8] sm:$0xf]
      %v395 = vld [vmem:[%s278 + $0xc] sm:$0xf]
      %v396 = vld [vmem:[%s278 + $0x10] sm:$0xf]
      %v397 = vld [vmem:[%s278 + $0x14] sm:$0xf]
      %v398 = vld [vmem:[%s278 + $0x18] sm:$0xf]
      %v399 = vld [vmem:[%s278 + $0x1c] sm:$0xf]
      %v400 = vld [vmem:[%s2] sm:$0xf]
      %v401 = vld [vmem:[%s2 + $0x4] sm:$0xf]
      %v402 = vld [vmem:[%s2 + $0x8] sm:$0xf]
      %v403 = vld [vmem:[%s2 + $0xc] sm:$0xf]
      %v404 = vld [vmem:[%s2 + $0x10] sm:$0xf]
      %v405 = vld [vmem:[%s2 + $0x14] sm:$0xf]
      %v406 = vld [vmem:[%s2 + $0x18] sm:$0xf]
      %v407 = vld [vmem:[%s2 + $0x1c] sm:$0xf]
      %v416 = vunpack.c.l.b16 %v392
      %v417 = vunpack.c.l.b16 %v393
      %v418 = vunpack.c.l.b16 %v394
      %v419 = vunpack.c.l.b16 %v395
      %v420 = vunpack.c.l.b16 %v396
      %v421 = vunpack.c.l.b16 %v397
      %v422 = vunpack.c.l.b16 %v398
      %v423 = vunpack.c.l.b16 %v399
      %v424 = vpack.c.b16 %v417, %v416
      %v425 = vpack.c.b16 %v419, %v418
      %v426 = vpack.c.b16 %v421, %v420
      %v427 = vpack.c.b16 %v423, %v422
      %v436 = vunpack.c.l.b16 %v400
      %v437 = vunpack.c.l.b16 %v401
      %v438 = vunpack.c.l.b16 %v402
      %v439 = vunpack.c.l.b16 %v403
      %v440 = vunpack.c.l.b16 %v404
      %v441 = vunpack.c.l.b16 %v405
      %v442 = vunpack.c.l.b16 %v406
      %v443 = vunpack.c.l.b16 %v407
      %v444 = vpack.c.b16 %v437, %v436
      %v445 = vpack.c.b16 %v439, %v438
      %v446 = vpack.c.b16 %v441, %v440
      %v447 = vpack.c.b16 %v443, %v442
      %v453 = vsel %vm347, %v424, 0
      %v456 = vsel %vm347, %v425, 0
      %v459 = vsel %vm347, %v426, 0
      %v462 = vsel %vm347, %v427, 0
      %464 = vmatprep.subr.bf16.mxu0 0
      %465 = vmatpush1.bf16.msra.mxu0 %v444
      %466 = vmatprep.subr.bf16.mxu0 0
      %467 = vmatpush1.bf16.msra.mxu0 %v445
      %468 = vmatprep.subr.bf16.mxu0 0
      %469 = vmatpush1.bf16.msra.mxu0 %v446
      %470 = vmatprep.subr.bf16.mxu0 0
      %471 = vmatpush1.bf16.msra.mxu0 %v447
      %472 = vmatprep.subr.bf16.mxu0 0
      %473 = vmatpush1.bf16.msra.mxu0 0
      %474 = vmatprep.subr.bf16.mxu0 0
      %475 = vmatpush1.bf16.msra.mxu0 0
      %476 = vmatprep.subr.bf16.mxu0 0
      %477 = vmatpush1.bf16.msra.mxu0 0
      %478 = vmatprep.subr.bf16.mxu0 0
      %479 = vmatpush1.bf16.msra.mxu0 0
      %480 = vmatprep.subr.bf16.mxu0 0
      %481 = vmatpush1.bf16.msra.mxu0 0
      %482 = vmatprep.subr.bf16.mxu0 0
      %483 = vmatpush1.bf16.msra.mxu0 0
      %484 = vmatprep.subr.bf16.mxu0 0
      %485 = vmatpush1.bf16.msra.mxu0 0
      %486 = vmatprep.subr.bf16.mxu0 0
      %487 = vmatpush1.bf16.msra.mxu0 0
      %488 = vmatprep.subr.bf16.mxu0 0
      %489 = vmatpush1.bf16.msra.mxu0 0
      %490 = vmatprep.subr.bf16.mxu0 0
      %491 = vmatpush1.bf16.msra.mxu0 0
      %492 = vmatprep.subr.bf16.mxu0 0
      %493 = vmatpush1.bf16.msra.mxu0 0
      %494 = vmatprep.subr.bf16.mxu0 0
      %495 = vmatpush1.bf16.msra.mxu0 0
      %496 = vmatprep.mubr.bf16.mxu0 0
      %497 = vmatmul.mubr.bf16.gmra.mrb[0].mxu0 %v453
      %v498 = vpop.f32.mrb[0].mxu0
      %v499 = vadd.f32 0.0, %v498
      %v500 = vpop.f32.mrb[0].mxu0
      %v501 = vpop.f32.mrb[0].mxu0
      %v502 = vadd.f32 0.0, %v501
      %v503 = vpop.f32.mrb[0].mxu0
      %504 = vmatprep.mubr.bf16.mxu0 0
      %505 = vmatmul.mubr.bf16.gmra.mrb[0].mxu0 %v456
      %v506 = vpop.f32.mrb[0].mxu0
      %v507 = vadd.f32 0.0, %v506
      %v508 = vpop.f32.mrb[0].mxu0
      %v509 = vpop.f32.mrb[0].mxu0
      %v510 = vadd.f32 0.0, %v509
      %v511 = vpop.f32.mrb[0].mxu0
      %512 = vmatprep.mubr.bf16.mxu0 0
      %513 = vmatmul.mubr.bf16.gmra.mrb[0].mxu0 %v459
      %v514 = vpop.f32.mrb[0].mxu0
      %v515 = vadd.f32 0.0, %v514
      %v516 = vpop.f32.mrb[0].mxu0
      %v517 = vpop.f32.mrb[0].mxu0
      %v518 = vadd.f32 0.0, %v517
      %v519 = vpop.f32.mrb[0].mxu0
      %520 = vmatprep.mubr.bf16.mxu0 0
      %521 = vmatmul.mubr.bf16.gmra.mrb[0].mxu0 %v462
      %v522 = vpop.f32.mrb[0].mxu0
      %v523 = vadd.f32 0.0, %v522
      %v524 = vpop.f32.mrb[0].mxu0
      %v525 = vpop.f32.mrb[0].mxu0
      %v526 = vadd.f32 0.0, %v525
      %v527 = vpop.f32.mrb[0].mxu0
      %528 = vdwg.mxu0
      %v529 = vmax.f32 %v499, %v507
      %v530 = vmax.f32 %v502, %v510
      %v531 = vmax.f32 %v529, %v515
      %v532 = vmax.f32 %v530, %v518
      %v533 = vmax.f32 %v531, %v523
      %v534 = vmax.f32 %v532, %v526
      %v535 = vadd.f32 %v533, %v386
      %v536 = vadd.f32 %v534, %v389
      %vm537 = vcmp.gt.f32.partialorder %v535, 0.0
      %vm538 = vcmp.gt.f32.partialorder %v536, 0.0
      %v539 = vmul.f32 %v535, 0.2
      %v540 = vmul.f32 %v536, 0.2
      %v541 = vsel %vm537, %v535, %v539
      %v542 = vsel %vm538, %v536, %v540
      %v543 = vpack.c.bf16 %v542, %v541
      %v545 = vunpack.c.l.b16 %v543
      %v546 = vunpack.c.h.b16 %v543
      %v547 = vpack.c.b16 %v545, %v545
      %v548 = vpack.c.b16 %v546, %v546
      %vm551 = vcmask 519168
      %552 = vst.msk [vmem:[%s298] sm:$0xf] %vm551, %v547
      %553 = vst.msk [vmem:[%s298 + $0x4] sm:$0xf] %vm551, %v548
      %s554 = smul.u32 2, %s21
      %p555 = scmp.lt.s32.totalorder %s20, 1
      %s556 = scalar_select %p555, %s20, 1
      %p557 = scmp.lt.s32.totalorder %s554, 1
      %s558 = scalar_select %p557, %s554, 1
      %s559 = smul.addr %s556, 2
      %s560 = sadd.s32 %s558, %s559
      %s561 = smul.addr %s560, 4
      %s562 = scalar_lea.vmem %s5, %s561
      // Predicated region
      $region41: #{attention_dgcnn_forward.12} parent=39 // pred_check
        %p563 = pneg %p167
      $region42: #{attention_dgcnn_forward.12} parent=39 // pred_check_branch
        %565 = sbr.rel (%p563) target = $region44
      $region43: #{attention_dgcnn_forward.12} parent=39 // pred_region
        %s566 = smul.u32 2, %s21
      $region44: #{attention_dgcnn_forward.12} parent=39 // pred_fallthru
        _
    $region40: #{attention_dgcnn_forward.12} parent=5 // pred_fallthru
      _
    %p567 = scmp.le.s32.totalorder 2, %s11
    // Predicated region
    $region45: #{attention_dgcnn_forward.12} parent=5 // pred_check
      %p568 = pneg %p567
    $region46: #{attention_dgcnn_forward.12} parent=5 // pred_check_branch
      %570 = sbr.rel (%p568) target = $region48
    $region47: #{attention_dgcnn_forward.12} parent=5 // pred_region
      %s571 = ssub.s32 %s11, 2
      // Predicated region
      $region49: #{attention_dgcnn_forward.12} parent=47 // pred_check
        %p572 = pneg %p173
      $region50: #{attention_dgcnn_forward.12} parent=47 // pred_check_branch
        %574 = sbr.rel (%p572) target = $region52
      $region51: #{attention_dgcnn_forward.12} parent=47 // pred_region
        %s575 = smul.u32 2, %s23
        %p576 = scmp.lt.s32.totalorder %s22, 1
        %s577 = scalar_select %p576, %s22, 1
        %p578 = scmp.lt.s32.totalorder %s575, 1
        %s579 = scalar_select %p578, %s575, 1
        %s580 = smul.addr %s577, 2
        %s581 = sadd.s32 %s579, %s580
        %s582 = smul.addr %s581, 4
        %s583 = scalar_lea.vmem %s5, %s582
      $region52: #{attention_dgcnn_forward.12} parent=47 // pred_fallthru
        _
    $region48: #{attention_dgcnn_forward.12} parent=5 // pred_fallthru
      _
  $region6: #{attention_dgcnn_forward.12} parent=0 // loop_footer
    %s15 = sadd.s32 1, %s11
  $region7: #{attention_dgcnn_forward.12} parent=0 // loop_footer_branch
    %10 = sbr.rel target = $region3
  $region8: #{attention_dgcnn_forward.12} parent=0 // loop_exit
    _

// kernel: attention_dgcnn_forward.14
$region0: #{attention_dgcnn_forward.14}
  #allocation0 [shape = 'u32[]', space=smem, size = 0x4, offset = 0x4, fixed_abs, tag = 'smem constant byte address 0x4 - core index']
  #allocation1 [shape = 'u32[144,128]{1,0:T(1,128)}', space=vmem, size = 0x12000, scoped, tag = 'internal scratch']
  %s0 = inlined_call_operand.vmem [shape: bf16[2,4,16,64], index: 0, kind: input, shape index: {}]
  %s1 = inlined_call_operand.vmem [shape: bf16[2,16,64], index: 1, kind: input, shape index: {}]
  %s2 = inlined_call_operand.vmem [shape: bf16[64,128], index: 2, kind: input, shape index: {}]
  %s3 = inlined_call_operand.vmem [shape: bf16[64,128], index: 3, kind: input, shape index: {}]
  %s4 = inlined_call_operand.vmem [shape: f32[1,128], index: 4, kind: input, shape index: {}]
  %s5 = inlined_call_operand.vmem [shape: bf16[2,16,128], index: 5, kind: output, shape index: {}]
  %s6 = sld [smem:[#allocation0]]
  $region53: #{attention_dgcnn_forward.14} parent=0
    _
  %s8 = ssub.s32 1, %s6
  %s9 = scalar_select 0, %s8, %s6
  loop: start=0, step=1, limit=4
  $region2: #{attention_dgcnn_forward.14} parent=0 // loop_pre_header
    _
  $region3: #{attention_dgcnn_forward.14} parent=0 // loop_header
    %s11 = sphi 0, %s15
    %p12 = scmp.ge.s32.totalorder %s11, 4
    %s18 = sphi 0, %s30
    %s19 = sphi 0, %s26
    %s20 = sphi 0, %s18
    %s21 = sphi 0, %s19
    %s22 = sphi 0, %s20
    %s23 = sphi 0, %s21
    %s35 = sphi 0, %s37
    %s38 = sphi 0, %s35
    %s39 = sphi 0, %s38
    %s55 = sphi 0, %s39
    %s63 = sphi 0, %s65
    %s66 = sphi 0, %s63
    %s67 = sphi 0, %s66
    %s83 = sphi 0, %s67
    %s87 = sphi 0, %s87
    %s89 = sphi 0, %s87
    %s90 = sphi 0, %s89
    %s104 = sphi 0, %s90
    %s108 = sphi 0, %s108
    %s110 = sphi 0, %s108
    %s111 = sphi 0, %s110
    %s125 = sphi 0, %s111
    %s129 = sphi 0, %s129
    %s131 = sphi 0, %s129
    %s132 = sphi 0, %s131
    %s146 = sphi 0, %s132
    %s154 = sphi 0, %s156
    %s157 = sphi 0, %s154
    %s158 = sphi 0, %s157
    %s174 = sphi 0, %s158
  $region4: #{attention_dgcnn_forward.14} parent=0 // loop_header_branch
    %14 = sbr.rel (%p12) target = $region8
  $region5: #{attention_dgcnn_forward.14} parent=0 // loop_body
    %s16 = ssub.s32 %s11, 1
    %s17 = ssub.s32 %s11, 2
    %s24 = sadd.s32 1, %s19
    %p25 = scmp.ge.s32.totalorder %s24, 1
    %s26 = scalar_select %p25, 0, %s24
    %s27 = sadd.s32 1, %s18
    %s28 = scalar_select %p25, %s27, %s18
    %p29 = scmp.ge.s32.totalorder %s28, 2
    %s30 = scalar_select %p29, 0, %s28
    %s31 = ssub.s32 %s18, %s30
    %s32 = ssub.s32 %s19, %s26
    %s33 = sor.u32 %s31, %s32
    %p34 = scmp.eq.s32.totalorder %s33, 0
    %s36 = sadd.s32 %s35, 1
    %s37 = scalar_select %p34, %s35, %s36
    %p40 = pneg %p34
    %p41 = scmp.eq.s32.totalorder %s11, 1
    %p42 = por %p40, %p41
    %p43 = scmp.ne.s32.totalorder %s35, %s38
    %p44 = scmp.eq.s32.totalorder %s11, 0
    %p45 = por %p43, %p44
    %p46 = scmp.ne.s32.totalorder %s35, %s38
    %p47 = scmp.eq.s32.totalorder %s16, 1
    %p48 = por %p46, %p47
    %p49 = scmp.ne.s32.totalorder %s38, %s39
    %p50 = scmp.eq.s32.totalorder %s16, 0
    %p51 = por %p49, %p50
    %p52 = scmp.ne.s32.totalorder %s38, %s39
    %p53 = scmp.eq.s32.totalorder %s17, 1
    %p54 = por %p52, %p53
    %p56 = scmp.ne.s32.totalorder %s39, %s55
    %p57 = scmp.eq.s32.totalorder %s17, 0
    %p58 = por %p56, %p57
    %s59 = ssub.s32 %s18, %s30
    %s60 = ssub.s32 %s19, %s26
    %s61 = sor.u32 %s59, %s60
    %p62 = scmp.eq.s32.totalorder %s61, 0
    %s64 = sadd.s32 %s63, 1
    %s65 = scalar_select %p62, %s63, %s64
    %p68 = pneg %p62
    %p69 = scmp.eq.s32.totalorder %s11, 1
    %p70 = por %p68, %p69
    %p71 = scmp.ne.s32.totalorder %s63, %s66
    %p72 = scmp.eq.s32.totalorder %s11, 0
    %p73 = por %p71, %p72
    %p74 = scmp.ne.s32.totalorder %s63, %s66
    %p75 = scmp.eq.s32.totalorder %s16, 1
    %p76 = por %p74, %p75
    %p77 = scmp.ne.s32.totalorder %s66, %s67
    %p78 = scmp.eq.s32.totalorder %s16, 0
    %p79 = por %p77, %p78
    %p80 = scmp.ne.s32.totalorder %s66, %s67
    %p81 = scmp.eq.s32.totalorder %s17, 1
    %p82 = por %p80, %p81
    %p84 = scmp.ne.s32.totalorder %s67, %s83
    %p85 = scmp.eq.s32.totalorder %s17, 0
    %p86 = por %p84, %p85
    %s88 = sadd.s32 %s87, 1
    %p91 = scmp.eq.s32.totalorder %s11, 1
    %p92 = scmp.ne.s32.totalorder %s87, %s89
    %p93 = scmp.eq.s32.totalorder %s11, 0
    %p94 = por %p92, %p93
    %p95 = scmp.ne.s32.totalorder %s87, %s89
    %p96 = scmp.eq.s32.totalorder %s16, 1
    %p97 = por %p95, %p96
    %p98 = scmp.ne.s32.totalorder %s89, %s90
    %p99 = scmp.eq.s32.totalorder %s16, 0
    %p100 = por %p98, %p99
    %p101 = scmp.ne.s32.totalorder %s89, %s90
    %p102 = scmp.eq.s32.totalorder %s17, 1
    %p103 = por %p101, %p102
    %p105 = scmp.ne.s32.totalorder %s90, %s104
    %p106 = scmp.eq.s32.totalorder %s17, 0
    %p107 = por %p105, %p106
    %s109 = sadd.s32 %s108, 1
    %p112 = scmp.eq.s32.totalorder %s11, 1
    %p113 = scmp.ne.s32.totalorder %s108, %s110
    %p114 = scmp.eq.s32.totalorder %s11, 0
    %p115 = por %p113, %p114
    %p116 = scmp.ne.s32.totalorder %s108, %s110
    %p117 = scmp.eq.s32.totalorder %s16, 1
    %p118 = por %p116, %p117
    %p119 = scmp.ne.s32.totalorder %s110, %s111
    %p120 = scmp.eq.s32.totalorder %s16, 0
    %p121 = por %p119, %p120
    %p122 = scmp.ne.s32.totalorder %s110, %s111
    %p123 = scmp.eq.s32.totalorder %s17, 1
    %p124 = por %p122, %p123
    %p126 = scmp.ne.s32.totalorder %s111, %s125
    %p127 = scmp.eq.s32.totalorder %s17, 0
    %p128 = por %p126, %p127
    %s130 = sadd.s32 %s129, 1
    %p133 = scmp.eq.s32.totalorder %s11, 1
    %p134 = scmp.ne.s32.totalorder %s129, %s131
    %p135 = scmp.eq.s32.totalorder %s11, 0
    %p136 = por %p134, %p135
    %p137 = scmp.ne.s32.totalorder %s129, %s131
    %p138 = scmp.eq.s32.totalorder %s16, 1
    %p139 = por %p137, %p138
    %p140 = scmp.ne.s32.totalorder %s131, %s132
    %p141 = scmp.eq.s32.totalorder %s16, 0
    %p142 = por %p140, %p141
    %p143 = scmp.ne.s32.totalorder %s131, %s132
    %p144 = scmp.eq.s32.totalorder %s17, 1
    %p145 = por %p143, %p144
    %p147 = scmp.ne.s32.totalorder %s132, %s146
    %p148 = scmp.eq.s32.totalorder %s17, 0
    %p149 = por %p147, %p148
    %s150 = ssub.s32 %s18, %s30
    %s151 = ssub.s32 %s19, %s26
    %s152 = sor.u32 %s150, %s151
    %p153 = scmp.eq.s32.totalorder %s152, 0
    %s155 = sadd.s32 %s154, 1
    %s156 = scalar_select %p153, %s154, %s155
    %p159 = pneg %p153
    %p160 = scmp.eq.s32.totalorder %s11, 1
    %p161 = por %p159, %p160
    %p162 = scmp.ne.s32.totalorder %s154, %s157
    %p163 = scmp.eq.s32.totalorder %s11, 0
    %p164 = por %p162, %p163
    %p165 = scmp.ne.s32.totalorder %s154, %s157
    %p166 = scmp.eq.s32.totalorder %s16, 1
    %p167 = por %p165, %p166
    %p168 = scmp.ne.s32.totalorder %s157, %s158
    %p169 = scmp.eq.s32.totalorder %s16, 0
    %p170 = por %p168, %p169
    %p171 = scmp.ne.s32.totalorder %s157, %s158
    %p172 = scmp.eq.s32.totalorder %s17, 1
    %p173 = por %p171, %p172
    %p175 = scmp.ne.s32.totalorder %s158, %s174
    %p176 = scmp.eq.s32.totalorder %s17, 0
    %p177 = por %p175, %p176
    %p178 = scmp.le.s32.totalorder 1, %s11
    %p179 = scmp.lt.s32.totalorder %s11, 3
    %p180 = pnand %p178, %p179
    %p181 = pneg %p180
    // Predicated region
    $region9: #{attention_dgcnn_forward.14} parent=5 // pred_check
      _
    $region10: #{attention_dgcnn_forward.14} parent=5 // pred_check_branch
      %183 = sbr.rel (%p180) target = $region12
    $region11: #{attention_dgcnn_forward.14} parent=5 // pred_region
      %s184 = ssub.s32 %s11, 1
      // Predicated region
      $region13: #{attention_dgcnn_forward.14} parent=11 // pred_check
        %p185 = pneg %p100
      $region14: #{attention_dgcnn_forward.14} parent=11 // pred_check_branch
        %187 = sbr.rel (%p185) target = $region16
      $region15: #{attention_dgcnn_forward.14} parent=11 // pred_region
        _
      $region16: #{attention_dgcnn_forward.14} parent=11 // pred_fallthru
        _
      // Predicated region
      $region17: #{attention_dgcnn_forward.14} parent=11 // pred_check
        %p188 = pneg %p121
      $region18: #{attention_dgcnn_forward.14} parent=11 // pred_check_branch
        %190 = sbr.rel (%p188) target = $region20
      $region19: #{attention_dgcnn_forward.14} parent=11 // pred_region
        _
      $region20: #{attention_dgcnn_forward.14} parent=11 // pred_fallthru
        _
      // Predicated region
      $region21: #{attention_dgcnn_forward.14} parent=11 // pred_check
        %p191 = pneg %p142
      $region22: #{attention_dgcnn_forward.14} parent=11 // pred_check_branch
        %193 = sbr.rel (%p191) target = $region24
      $region23: #{attention_dgcnn_forward.14} parent=11 // pred_region
        _
      $region24: #{attention_dgcnn_forward.14} parent=11 // pred_fallthru
        _
    $region12: #{attention_dgcnn_forward.14} parent=5 // pred_fallthru
      _
    %p194 = scmp.lt.s32.totalorder %s11, 2
    // Predicated region
    $region25: #{attention_dgcnn_forward.14} parent=5 // pred_check
      %p195 = pneg %p194
    $region26: #{attention_dgcnn_forward.14} parent=5 // pred_check_branch
      %197 = sbr.rel (%p195) target = $region28
    $region27: #{attention_dgcnn_forward.14} parent=5 // pred_region
      // Predicated region
      $region29: #{attention_dgcnn_forward.14} parent=27 // pred_check
        %p198 = pneg %p45
      $region30: #{attention_dgcnn_forward.14} parent=27 // pred_check_branch
        %200 = sbr.rel (%p198) target = $region32
      $region31: #{attention_dgcnn_forward.14} parent=27 // pred_region
        %s201 = smul.u32 2, %s19
        %p202 = scmp.lt.s32.totalorder %s18, 1
        %s203 = scalar_select %p202, %s18, 1
        %p204 = scmp.lt.s32.totalorder %s201, 1
        %s205 = scalar_select %p204, %s201, 1
        %s206 = smul.addr %s203, 8
        %s207 = sadd.s32 %s205, %s206
        %s208 = smul.addr %s207, 4
        %s209 = scalar_lea.vmem %s0, %s208
        %s210 = smul.u32 2, %s19
      $region32: #{attention_dgcnn_forward.14} parent=27 // pred_fallthru
        _
      // Predicated region
      $region33: #{attention_dgcnn_forward.14} parent=27 // pred_check
        %p211 = pneg %p73
      $region34: #{attention_dgcnn_forward.14} parent=27 // pred_check_branch
        %213 = sbr.rel (%p211) target = $region36
      $region35: #{attention_dgcnn_forward.14} parent=27 // pred_region
        %s214 = smul.u32 2, %s19
        %p215 = scmp.lt.s32.totalorder %s18, 1
        %s216 = scalar_select %p215, %s18, 1
        %p217 = scmp.lt.s32.totalorder %s214, 1
        %s218 = scalar_select %p217, %s214, 1
        %s219 = smul.addr %s216, 2
        %s220 = sadd.s32 %s218, %s219
        %s221 = smul.addr %s220, 4
        %s222 = scalar_lea.vmem %s1, %s221
        %s223 = smul.u32 2, %s19
      $region36: #{attention_dgcnn_forward.14} parent=27 // pred_fallthru
        _
    $region28: #{attention_dgcnn_forward.14} parent=5 // pred_fallthru
      _
    %p224 = scmp.le.s32.totalorder 1, %s11
    %p225 = scmp.lt.s32.totalorder %s11, 3
    %p226 = pnand %p224, %p225
    %p227 = pneg %p226
    // Predicated region
    $region37: #{attention_dgcnn_forward.14} parent=5 // pred_check
      _
    $region38: #{attention_dgcnn_forward.14} parent=5 // pred_check_branch
      %229 = sbr.rel (%p226) target = $region40
    $region39: #{attention_dgcnn_forward.14} parent=5 // pred_region
      %s230 = ssub.s32 %s11, 1
      %s231 = smul.u32 2, %s21
      %p232 = scmp.lt.s32.totalorder %s20, 1
      %s233 = scalar_select %p232, %s20, 1
      %p234 = scmp.lt.s32.totalorder %s231, 1
      %s235 = scalar_select %p234, %s231, 1
      %s236 = smul.addr %s233, 8
      %s237 = sadd.s32 %s235, %s236
      %s238 = smul.addr %s237, 4
      %s239 = scalar_lea.vmem %s0, %s238
      %p240 = pneg %p51
      %p241 = pneg %p48
      %s242 = smul.u32 2, %s21
      %p243 = scmp.lt.s32.totalorder %s20, 1
      %s244 = scalar_select %p243, %s20, 1
      %p245 = scmp.lt.s32.totalorder %s242, 1
      %s246 = scalar_select %p245, %s242, 1
      %s247 = smul.addr %s244, 2
      %s248 = sadd.s32 %s246, %s247
      %s249 = smul.addr %s248, 4
      %s250 = scalar_lea.vmem %s1, %s249
      %p251 = pneg %p79
      %p252 = pneg %p76
      %p253 = pneg %p100
      %p254 = pneg %p97
      %p255 = pneg %p121
      %p256 = pneg %p118
      %p257 = pneg %p142
      %p258 = pneg %p139
      %p259 = pneg %p170
      %p260 = pneg %p167
      %s261 = smul.u32 2, %s21
      %p262 = scmp.lt.s32.totalorder %s20, 1
      %s263 = scalar_select %p262, %s20, 1
      %p264 = scmp.lt.s32.totalorder %s261, 1
      %s265 = scalar_select %p264, %s261, 1
      %s266 = smul.addr %s263, 2
      %s267 = sadd.s32 %s265, %s266
      %s268 = smul.addr %s267, 4
      %s269 = scalar_lea.vmem %s5, %s268
      %s270 = smul.u32 2, %s21
      %p271 = scmp.lt.s32.totalorder %s20, 1
      %s272 = scalar_select %p271, %s20, 1
      %p273 = scmp.lt.s32.totalorder %s270, 1
      %s274 = scalar_select %p273, %s270, 1
      %s275 = smul.addr %s272, 8
      %s276 = sadd.s32 %s274, %s275
      %s277 = smul.addr %s276, 4
      %s278 = scalar_lea.vmem %s0, %s277
      %s279 = smul.u32 2, %s21
      %s280 = smul.u32 2, %s21
      %p281 = scmp.lt.s32.totalorder %s20, 1
      %s282 = scalar_select %p281, %s20, 1
      %p283 = scmp.lt.s32.totalorder %s280, 1
      %s284 = scalar_select %p283, %s280, 1
      %s285 = smul.addr %s282, 2
      %s286 = sadd.s32 %s284, %s285
      %s287 = smul.addr %s286, 4
      %s288 = scalar_lea.vmem %s1, %s287
      %s289 = smul.u32 2, %s21
      %s290 = smul.u32 2, %s21
      %p291 = scmp.lt.s32.totalorder %s20, 1
      %s292 = scalar_select %p291, %s20, 1
      %p293 = scmp.lt.s32.totalorder %s290, 1
      %s294 = scalar_select %p293, %s290, 1
      %s295 = smul.addr %s292, 2
      %s296 = sadd.s32 %s294, %s295
      %s297 = smul.addr %s296, 4
      %s298 = scalar_lea.vmem %s5, %s297
      %s299 = smul.u32 2, %s21
      %v301 = vld [vmem:[%s288] sm:$0xf]
      %v302 = vld [vmem:[%s288 + $0x4] sm:$0xf]
      %v303 = vld [vmem:[%s3] sm:$0xf]
      %v304 = vld [vmem:[%s3 + $0x4] sm:$0xf]
      %v305 = vld [vmem:[%s3 + $0x8] sm:$0xf]
      %v306 = vld [vmem:[%s3 + $0xc] sm:$0xf]
      %v307 = vld [vmem:[%s3 + $0x10] sm:$0xf]
      %v308 = vld [vmem:[%s3 + $0x14] sm:$0xf]
      %v309 = vld [vmem:[%s3 + $0x18] sm:$0xf]
      %v310 = vld [vmem:[%s3 + $0x1c] sm:$0xf]
      %v311 = vld [vmem:[%s4] sm:$0x1]
      %v313 = vlaneseq
      %v314 = vshrl.u32 %v313, 7
      %v315 = vsub.s32 0, %v314
      %v316 = vrot.slane %v311, %v315
      %v320 = vunpack.c.l.b16 %v301
      %v321 = vunpack.c.l.b16 %v302
      %v322 = vpack.c.b16 %v321, %v320
      %v331 = vunpack.c.l.b16 %v303
      %v332 = vunpack.c.l.b16 %v304
      %v333 = vunpack.c.l.b16 %v305
      %v334 = vunpack.c.l.b16 %v306
      %v335 = vunpack.c.l.b16 %v307
      %v336 = vunpack.c.l.b16 %v308
      %v337 = vunpack.c.l.b16 %v309
      %v338 = vunpack.c.l.b16 %v310
      %v339 = vpack.c.b16 %v332, %v331
      %v340 = vpack.c.b16 %v334, %v333
      %v341 = vpack.c.b16 %v336, %v335
      %v342 = vpack.c.b16 %v338, %v337
      %vm347 = vcmask 523264
      %v349 = vsel %vm347, %v322, 0
      %351 = vmatprep.subr.bf16.mxu0 0
      %352 = vmatpush1.bf16.msra.mxu0 %v339
      %353 = vmatprep.subr.bf16.mxu0 0
      %354 = vmatpush1.bf16.msra.mxu0 %v340
      %355 = vmatprep.subr.bf16.mxu0 0
      %356 = vmatpush1.bf16.msra.mxu0 %v341
      %357 = vmatprep.subr.bf16.mxu0 0
      %358 = vmatpush1.bf16.msra.mxu0 %v342
      %359 = vmatprep.subr.bf16.mxu0 0
      %360 = vmatpush1.bf16.msra.mxu0 0
      %361 = vmatprep.subr.bf16.mxu0 0
      %362 = vmatpush1.bf16.msra.mxu0 0
      %363 = vmatprep.subr.bf16.mxu0 0
      %364 = vmatpush1.bf16.msra.mxu0 0
      %365 = vmatprep.subr.bf16.mxu0 0
      %366 = vmatpush1.bf16.msra.mxu0 0
      %367 = vmatprep.subr.bf16.mxu0 0
      %368 = vmatpush1.bf16.msra.mxu0 0
      %369 = vmatprep.subr.bf16.mxu0 0
      %370 = vmatpush1.bf16.msra.mxu0 0
      %371 = vmatprep.subr.bf16.mxu0 0
      %372 = vmatpush1.bf16.msra.mxu0 0
      %373 = vmatprep.subr.bf16.mxu0 0
      %374 = vmatpush1.bf16.msra.mxu0 0
      %375 = vmatprep.subr.bf16.mxu0 0
      %376 = vmatpush1.bf16.msra.mxu0 0
      %377 = vmatprep.subr.bf16.mxu0 0
      %378 = vmatpush1.bf16.msra.mxu0 0
      %379 = vmatprep.subr.bf16.mxu0 0
      %380 = vmatpush1.bf16.msra.mxu0 0
      %381 = vmatprep.subr.bf16.mxu0 0
      %382 = vmatpush1.bf16.msra.mxu0 0
      %383 = vmatprep.mubr.bf16.mxu0 0
      %384 = vmatmul.mubr.bf16.gmra.mrb[0].mxu0 %v349
      %v385 = vpop.f32.mrb[0].mxu0
      %v386 = vadd.f32 %v316, %v385
      %v387 = vpop.f32.mrb[0].mxu0
      %v388 = vpop.f32.mrb[0].mxu0
      %v389 = vadd.f32 %v316, %v388
      %v390 = vpop.f32.mrb[0].mxu0
      %391 = vdwg.mxu0
      %v392 = vld [vmem:[%s278] sm:$0xf]
      %v393 = vld [vmem:[%s278 + $0x4] sm:$0xf]
      %v394 = vld [vmem:[%s278 + $0x8] sm:$0xf]
      %v395 = vld [vmem:[%s278 + $0xc] sm:$0xf]
      %v396 = vld [vmem:[%s278 + $0x10] sm:$0xf]
      %v397 = vld [vmem:[%s278 + $0x14] sm:$0xf]
      %v398 = vld [vmem:[%s278 + $0x18] sm:$0xf]
      %v399 = vld [vmem:[%s278 + $0x1c] sm:$0xf]
      %v400 = vld [vmem:[%s2] sm:$0xf]
      %v401 = vld [vmem:[%s2 + $0x4] sm:$0xf]
      %v402 = vld [vmem:[%s2 + $0x8] sm:$0xf]
      %v403 = vld [vmem:[%s2 + $0xc] sm:$0xf]
      %v404 = vld [vmem:[%s2 + $0x10] sm:$0xf]
      %v405 = vld [vmem:[%s2 + $0x14] sm:$0xf]
      %v406 = vld [vmem:[%s2 + $0x18] sm:$0xf]
      %v407 = vld [vmem:[%s2 + $0x1c] sm:$0xf]
      %v416 = vunpack.c.l.b16 %v392
      %v417 = vunpack.c.l.b16 %v393
      %v418 = vunpack.c.l.b16 %v394
      %v419 = vunpack.c.l.b16 %v395
      %v420 = vunpack.c.l.b16 %v396
      %v421 = vunpack.c.l.b16 %v397
      %v422 = vunpack.c.l.b16 %v398
      %v423 = vunpack.c.l.b16 %v399
      %v424 = vpack.c.b16 %v417, %v416
      %v425 = vpack.c.b16 %v419, %v418
      %v426 = vpack.c.b16 %v421, %v420
      %v427 = vpack.c.b16 %v423, %v422
      %v436 = vunpack.c.l.b16 %v400
      %v437 = vunpack.c.l.b16 %v401
      %v438 = vunpack.c.l.b16 %v402
      %v439 = vunpack.c.l.b16 %v403
      %v440 = vunpack.c.l.b16 %v404
      %v441 = vunpack.c.l.b16 %v405
      %v442 = vunpack.c.l.b16 %v406
      %v443 = vunpack.c.l.b16 %v407
      %v444 = vpack.c.b16 %v437, %v436
      %v445 = vpack.c.b16 %v439, %v438
      %v446 = vpack.c.b16 %v441, %v440
      %v447 = vpack.c.b16 %v443, %v442
      %v453 = vsel %vm347, %v424, 0
      %v456 = vsel %vm347, %v425, 0
      %v459 = vsel %vm347, %v426, 0
      %v462 = vsel %vm347, %v427, 0
      %464 = vmatprep.subr.bf16.mxu0 0
      %465 = vmatpush1.bf16.msra.mxu0 %v444
      %466 = vmatprep.subr.bf16.mxu0 0
      %467 = vmatpush1.bf16.msra.mxu0 %v445
      %468 = vmatprep.subr.bf16.mxu0 0
      %469 = vmatpush1.bf16.msra.mxu0 %v446
      %470 = vmatprep.subr.bf16.mxu0 0
      %471 = vmatpush1.bf16.msra.mxu0 %v447
      %472 = vmatprep.subr.bf16.mxu0 0
      %473 = vmatpush1.bf16.msra.mxu0 0
      %474 = vmatprep.subr.bf16.mxu0 0
      %475 = vmatpush1.bf16.msra.mxu0 0
      %476 = vmatprep.subr.bf16.mxu0 0
      %477 = vmatpush1.bf16.msra.mxu0 0
      %478 = vmatprep.subr.bf16.mxu0 0
      %479 = vmatpush1.bf16.msra.mxu0 0
      %480 = vmatprep.subr.bf16.mxu0 0
      %481 = vmatpush1.bf16.msra.mxu0 0
      %482 = vmatprep.subr.bf16.mxu0 0
      %483 = vmatpush1.bf16.msra.mxu0 0
      %484 = vmatprep.subr.bf16.mxu0 0
      %485 = vmatpush1.bf16.msra.mxu0 0
      %486 = vmatprep.subr.bf16.mxu0 0
      %487 = vmatpush1.bf16.msra.mxu0 0
      %488 = vmatprep.subr.bf16.mxu0 0
      %489 = vmatpush1.bf16.msra.mxu0 0
      %490 = vmatprep.subr.bf16.mxu0 0
      %491 = vmatpush1.bf16.msra.mxu0 0
      %492 = vmatprep.subr.bf16.mxu0 0
      %493 = vmatpush1.bf16.msra.mxu0 0
      %494 = vmatprep.subr.bf16.mxu0 0
      %495 = vmatpush1.bf16.msra.mxu0 0
      %496 = vmatprep.mubr.bf16.mxu0 0
      %497 = vmatmul.mubr.bf16.gmra.mrb[0].mxu0 %v453
      %v498 = vpop.f32.mrb[0].mxu0
      %v499 = vadd.f32 0.0, %v498
      %v500 = vpop.f32.mrb[0].mxu0
      %v501 = vpop.f32.mrb[0].mxu0
      %v502 = vadd.f32 0.0, %v501
      %v503 = vpop.f32.mrb[0].mxu0
      %504 = vmatprep.mubr.bf16.mxu0 0
      %505 = vmatmul.mubr.bf16.gmra.mrb[0].mxu0 %v456
      %v506 = vpop.f32.mrb[0].mxu0
      %v507 = vadd.f32 0.0, %v506
      %v508 = vpop.f32.mrb[0].mxu0
      %v509 = vpop.f32.mrb[0].mxu0
      %v510 = vadd.f32 0.0, %v509
      %v511 = vpop.f32.mrb[0].mxu0
      %512 = vmatprep.mubr.bf16.mxu0 0
      %513 = vmatmul.mubr.bf16.gmra.mrb[0].mxu0 %v459
      %v514 = vpop.f32.mrb[0].mxu0
      %v515 = vadd.f32 0.0, %v514
      %v516 = vpop.f32.mrb[0].mxu0
      %v517 = vpop.f32.mrb[0].mxu0
      %v518 = vadd.f32 0.0, %v517
      %v519 = vpop.f32.mrb[0].mxu0
      %520 = vmatprep.mubr.bf16.mxu0 0
      %521 = vmatmul.mubr.bf16.gmra.mrb[0].mxu0 %v462
      %v522 = vpop.f32.mrb[0].mxu0
      %v523 = vadd.f32 0.0, %v522
      %v524 = vpop.f32.mrb[0].mxu0
      %v525 = vpop.f32.mrb[0].mxu0
      %v526 = vadd.f32 0.0, %v525
      %v527 = vpop.f32.mrb[0].mxu0
      %528 = vdwg.mxu0
      %v529 = vmax.f32 %v499, %v507
      %v530 = vmax.f32 %v502, %v510
      %v531 = vmax.f32 %v529, %v515
      %v532 = vmax.f32 %v530, %v518
      %v533 = vmax.f32 %v531, %v523
      %v534 = vmax.f32 %v532, %v526
      %v535 = vadd.f32 %v533, %v386
      %v536 = vadd.f32 %v534, %v389
      %vm537 = vcmp.gt.f32.partialorder %v535, 0.0
      %vm538 = vcmp.gt.f32.partialorder %v536, 0.0
      %v539 = vmul.f32 %v535, 0.2
      %v540 = vmul.f32 %v536, 0.2
      %v541 = vsel %vm537, %v535, %v539
      %v542 = vsel %vm538, %v536, %v540
      %v543 = vpack.c.bf16 %v542, %v541
      %v545 = vunpack.c.l.b16 %v543
      %v546 = vunpack.c.h.b16 %v543
      %v547 = vpack.c.b16 %v545, %v545
      %v548 = vpack.c.b16 %v546, %v546
      %551 = vst [vmem:[%s298] sm:$0xf] %v547
      %552 = vst [vmem:[%s298 + $0x4] sm:$0xf] %v548
      %s553 = smul.u32 2, %s21
      %p554 = scmp.lt.s32.totalorder %s20, 1
      %s555 = scalar_select %p554, %s20, 1
      %p556 = scmp.lt.s32.totalorder %s553, 1
      %s557 = scalar_select %p556, %s553, 1
      %s558 = smul.addr %s555, 2
      %s559 = sadd.s32 %s557, %s558
      %s560 = smul.addr %s559, 4
      %s561 = scalar_lea.vmem %s5, %s560
      // Predicated region
      $region41: #{attention_dgcnn_forward.14} parent=39 // pred_check
        %p562 = pneg %p167
      $region42: #{attention_dgcnn_forward.14} parent=39 // pred_check_branch
        %564 = sbr.rel (%p562) target = $region44
      $region43: #{attention_dgcnn_forward.14} parent=39 // pred_region
        %s565 = smul.u32 2, %s21
      $region44: #{attention_dgcnn_forward.14} parent=39 // pred_fallthru
        _
    $region40: #{attention_dgcnn_forward.14} parent=5 // pred_fallthru
      _
    %p566 = scmp.le.s32.totalorder 2, %s11
    // Predicated region
    $region45: #{attention_dgcnn_forward.14} parent=5 // pred_check
      %p567 = pneg %p566
    $region46: #{attention_dgcnn_forward.14} parent=5 // pred_check_branch
      %569 = sbr.rel (%p567) target = $region48
    $region47: #{attention_dgcnn_forward.14} parent=5 // pred_region
      %s570 = ssub.s32 %s11, 2
      // Predicated region
      $region49: #{attention_dgcnn_forward.14} parent=47 // pred_check
        %p571 = pneg %p173
      $region50: #{attention_dgcnn_forward.14} parent=47 // pred_check_branch
        %573 = sbr.rel (%p571) target = $region52
      $region51: #{attention_dgcnn_forward.14} parent=47 // pred_region
        %s574 = smul.u32 2, %s23
        %p575 = scmp.lt.s32.totalorder %s22, 1
        %s576 = scalar_select %p575, %s22, 1
        %p577 = scmp.lt.s32.totalorder %s574, 1
        %s578 = scalar_select %p577, %s574, 1
        %s579 = smul.addr %s576, 2
        %s580 = sadd.s32 %s578, %s579
        %s581 = smul.addr %s580, 4
        %s582 = scalar_lea.vmem %s5, %s581
      $region52: #{attention_dgcnn_forward.14} parent=47 // pred_fallthru
        _
    $region48: #{attention_dgcnn_forward.14} parent=5 // pred_fallthru
      _
  $region6: #{attention_dgcnn_forward.14} parent=0 // loop_footer
    %s15 = sadd.s32 1, %s11
  $region7: #{attention_dgcnn_forward.14} parent=0 // loop_footer_branch
    %10 = sbr.rel target = $region3
  $region8: #{attention_dgcnn_forward.14} parent=0 // loop_exit
    _

// kernel: attention_dgcnn_forward.16
$region0: #{attention_dgcnn_forward.16}
  #allocation0 [shape = 'u32[]', space=smem, size = 0x4, offset = 0x4, fixed_abs, tag = 'smem constant byte address 0x4 - core index']
  #allocation1 [shape = 'u32[144,128]{1,0:T(1,128)}', space=vmem, size = 0x12000, scoped, tag = 'internal scratch']
  %s0 = inlined_call_operand.vmem [shape: bf16[2,4,16,128], index: 0, kind: input, shape index: {}]
  %s1 = inlined_call_operand.vmem [shape: bf16[2,16,128], index: 1, kind: input, shape index: {}]
  %s2 = inlined_call_operand.vmem [shape: bf16[128,256], index: 2, kind: input, shape index: {}]
  %s3 = inlined_call_operand.vmem [shape: bf16[128,256], index: 3, kind: input, shape index: {}]
  %s4 = inlined_call_operand.vmem [shape: f32[1,256], index: 4, kind: input, shape index: {}]
  %s5 = inlined_call_operand.vmem [shape: bf16[2,16,256], index: 5, kind: output, shape index: {}]
  %s6 = sld [smem:[#allocation0]]
  $region53: #{attention_dgcnn_forward.16} parent=0
    _
  %s8 = ssub.s32 1, %s6
  %s9 = scalar_select 0, %s8, %s6
  loop: start=0, step=1, limit=4
  $region2: #{attention_dgcnn_forward.16} parent=0 // loop_pre_header
    _
  $region3: #{attention_dgcnn_forward.16} parent=0 // loop_header
    %s11 = sphi 0, %s15
    %p12 = scmp.ge.s32.totalorder %s11, 4
    %s18 = sphi 0, %s30
    %s19 = sphi 0, %s26
    %s20 = sphi 0, %s18
    %s21 = sphi 0, %s19
    %s22 = sphi 0, %s20
    %s23 = sphi 0, %s21
    %s35 = sphi 0, %s37
    %s38 = sphi 0, %s35
    %s39 = sphi 0, %s38
    %s55 = sphi 0, %s39
    %s63 = sphi 0, %s65
    %s66 = sphi 0, %s63
    %s67 = sphi 0, %s66
    %s83 = sphi 0, %s67
    %s87 = sphi 0, %s87
    %s89 = sphi 0, %s87
    %s90 = sphi 0, %s89
    %s104 = sphi 0, %s90
    %s108 = sphi 0, %s108
    %s110 = sphi 0, %s108
    %s111 = sphi 0, %s110
    %s125 = sphi 0, %s111
    %s129 = sphi 0, %s129
    %s131 = sphi 0, %s129
    %s132 = sphi 0, %s131
    %s146 = sphi 0, %s132
    %s154 = sphi 0, %s156
    %s157 = sphi 0, %s154
    %s158 = sphi 0, %s157
    %s174 = sphi 0, %s158
  $region4: #{attention_dgcnn_forward.16} parent=0 // loop_header_branch
    %14 = sbr.rel (%p12) target = $region8
  $region5: #{attention_dgcnn_forward.16} parent=0 // loop_body
    %s16 = ssub.s32 %s11, 1
    %s17 = ssub.s32 %s11, 2
    %s24 = sadd.s32 1, %s19
    %p25 = scmp.ge.s32.totalorder %s24, 1
    %s26 = scalar_select %p25, 0, %s24
    %s27 = sadd.s32 1, %s18
    %s28 = scalar_select %p25, %s27, %s18
    %p29 = scmp.ge.s32.totalorder %s28, 2
    %s30 = scalar_select %p29, 0, %s28
    %s31 = ssub.s32 %s18, %s30
    %s32 = ssub.s32 %s19, %s26
    %s33 = sor.u32 %s31, %s32
    %p34 = scmp.eq.s32.totalorder %s33, 0
    %s36 = sadd.s32 %s35, 1
    %s37 = scalar_select %p34, %s35, %s36
    %p40 = pneg %p34
    %p41 = scmp.eq.s32.totalorder %s11, 1
    %p42 = por %p40, %p41
    %p43 = scmp.ne.s32.totalorder %s35, %s38
    %p44 = scmp.eq.s32.totalorder %s11, 0
    %p45 = por %p43, %p44
    %p46 = scmp.ne.s32.totalorder %s35, %s38
    %p47 = scmp.eq.s32.totalorder %s16, 1
    %p48 = por %p46, %p47
    %p49 = scmp.ne.s32.totalorder %s38, %s39
    %p50 = scmp.eq.s32.totalorder %s16, 0
    %p51 = por %p49, %p50
    %p52 = scmp.ne.s32.totalorder %s38, %s39
    %p53 = scmp.eq.s32.totalorder %s17, 1
    %p54 = por %p52, %p53
    %p56 = scmp.ne.s32.totalorder %s39, %s55
    %p57 = scmp.eq.s32.totalorder %s17, 0
    %p58 = por %p56, %p57
    %s59 = ssub.s32 %s18, %s30
    %s60 = ssub.s32 %s19, %s26
    %s61 = sor.u32 %s59, %s60
    %p62 = scmp.eq.s32.totalorder %s61, 0
    %s64 = sadd.s32 %s63, 1
    %s65 = scalar_select %p62, %s63, %s64
    %p68 = pneg %p62
    %p69 = scmp.eq.s32.totalorder %s11, 1
    %p70 = por %p68, %p69
    %p71 = scmp.ne.s32.totalorder %s63, %s66
    %p72 = scmp.eq.s32.totalorder %s11, 0
    %p73 = por %p71, %p72
    %p74 = scmp.ne.s32.totalorder %s63, %s66
    %p75 = scmp.eq.s32.totalorder %s16, 1
    %p76 = por %p74, %p75
    %p77 = scmp.ne.s32.totalorder %s66, %s67
    %p78 = scmp.eq.s32.totalorder %s16, 0
    %p79 = por %p77, %p78
    %p80 = scmp.ne.s32.totalorder %s66, %s67
    %p81 = scmp.eq.s32.totalorder %s17, 1
    %p82 = por %p80, %p81
    %p84 = scmp.ne.s32.totalorder %s67, %s83
    %p85 = scmp.eq.s32.totalorder %s17, 0
    %p86 = por %p84, %p85
    %s88 = sadd.s32 %s87, 1
    %p91 = scmp.eq.s32.totalorder %s11, 1
    %p92 = scmp.ne.s32.totalorder %s87, %s89
    %p93 = scmp.eq.s32.totalorder %s11, 0
    %p94 = por %p92, %p93
    %p95 = scmp.ne.s32.totalorder %s87, %s89
    %p96 = scmp.eq.s32.totalorder %s16, 1
    %p97 = por %p95, %p96
    %p98 = scmp.ne.s32.totalorder %s89, %s90
    %p99 = scmp.eq.s32.totalorder %s16, 0
    %p100 = por %p98, %p99
    %p101 = scmp.ne.s32.totalorder %s89, %s90
    %p102 = scmp.eq.s32.totalorder %s17, 1
    %p103 = por %p101, %p102
    %p105 = scmp.ne.s32.totalorder %s90, %s104
    %p106 = scmp.eq.s32.totalorder %s17, 0
    %p107 = por %p105, %p106
    %s109 = sadd.s32 %s108, 1
    %p112 = scmp.eq.s32.totalorder %s11, 1
    %p113 = scmp.ne.s32.totalorder %s108, %s110
    %p114 = scmp.eq.s32.totalorder %s11, 0
    %p115 = por %p113, %p114
    %p116 = scmp.ne.s32.totalorder %s108, %s110
    %p117 = scmp.eq.s32.totalorder %s16, 1
    %p118 = por %p116, %p117
    %p119 = scmp.ne.s32.totalorder %s110, %s111
    %p120 = scmp.eq.s32.totalorder %s16, 0
    %p121 = por %p119, %p120
    %p122 = scmp.ne.s32.totalorder %s110, %s111
    %p123 = scmp.eq.s32.totalorder %s17, 1
    %p124 = por %p122, %p123
    %p126 = scmp.ne.s32.totalorder %s111, %s125
    %p127 = scmp.eq.s32.totalorder %s17, 0
    %p128 = por %p126, %p127
    %s130 = sadd.s32 %s129, 1
    %p133 = scmp.eq.s32.totalorder %s11, 1
    %p134 = scmp.ne.s32.totalorder %s129, %s131
    %p135 = scmp.eq.s32.totalorder %s11, 0
    %p136 = por %p134, %p135
    %p137 = scmp.ne.s32.totalorder %s129, %s131
    %p138 = scmp.eq.s32.totalorder %s16, 1
    %p139 = por %p137, %p138
    %p140 = scmp.ne.s32.totalorder %s131, %s132
    %p141 = scmp.eq.s32.totalorder %s16, 0
    %p142 = por %p140, %p141
    %p143 = scmp.ne.s32.totalorder %s131, %s132
    %p144 = scmp.eq.s32.totalorder %s17, 1
    %p145 = por %p143, %p144
    %p147 = scmp.ne.s32.totalorder %s132, %s146
    %p148 = scmp.eq.s32.totalorder %s17, 0
    %p149 = por %p147, %p148
    %s150 = ssub.s32 %s18, %s30
    %s151 = ssub.s32 %s19, %s26
    %s152 = sor.u32 %s150, %s151
    %p153 = scmp.eq.s32.totalorder %s152, 0
    %s155 = sadd.s32 %s154, 1
    %s156 = scalar_select %p153, %s154, %s155
    %p159 = pneg %p153
    %p160 = scmp.eq.s32.totalorder %s11, 1
    %p161 = por %p159, %p160
    %p162 = scmp.ne.s32.totalorder %s154, %s157
    %p163 = scmp.eq.s32.totalorder %s11, 0
    %p164 = por %p162, %p163
    %p165 = scmp.ne.s32.totalorder %s154, %s157
    %p166 = scmp.eq.s32.totalorder %s16, 1
    %p167 = por %p165, %p166
    %p168 = scmp.ne.s32.totalorder %s157, %s158
    %p169 = scmp.eq.s32.totalorder %s16, 0
    %p170 = por %p168, %p169
    %p171 = scmp.ne.s32.totalorder %s157, %s158
    %p172 = scmp.eq.s32.totalorder %s17, 1
    %p173 = por %p171, %p172
    %p175 = scmp.ne.s32.totalorder %s158, %s174
    %p176 = scmp.eq.s32.totalorder %s17, 0
    %p177 = por %p175, %p176
    %p178 = scmp.le.s32.totalorder 1, %s11
    %p179 = scmp.lt.s32.totalorder %s11, 3
    %p180 = pnand %p178, %p179
    %p181 = pneg %p180
    // Predicated region
    $region9: #{attention_dgcnn_forward.16} parent=5 // pred_check
      _
    $region10: #{attention_dgcnn_forward.16} parent=5 // pred_check_branch
      %183 = sbr.rel (%p180) target = $region12
    $region11: #{attention_dgcnn_forward.16} parent=5 // pred_region
      %s184 = ssub.s32 %s11, 1
      // Predicated region
      $region13: #{attention_dgcnn_forward.16} parent=11 // pred_check
        %p185 = pneg %p100
      $region14: #{attention_dgcnn_forward.16} parent=11 // pred_check_branch
        %187 = sbr.rel (%p185) target = $region16
      $region15: #{attention_dgcnn_forward.16} parent=11 // pred_region
        _
      $region16: #{attention_dgcnn_forward.16} parent=11 // pred_fallthru
        _
      // Predicated region
      $region17: #{attention_dgcnn_forward.16} parent=11 // pred_check
        %p188 = pneg %p121
      $region18: #{attention_dgcnn_forward.16} parent=11 // pred_check_branch
        %190 = sbr.rel (%p188) target = $region20
      $region19: #{attention_dgcnn_forward.16} parent=11 // pred_region
        _
      $region20: #{attention_dgcnn_forward.16} parent=11 // pred_fallthru
        _
      // Predicated region
      $region21: #{attention_dgcnn_forward.16} parent=11 // pred_check
        %p191 = pneg %p142
      $region22: #{attention_dgcnn_forward.16} parent=11 // pred_check_branch
        %193 = sbr.rel (%p191) target = $region24
      $region23: #{attention_dgcnn_forward.16} parent=11 // pred_region
        _
      $region24: #{attention_dgcnn_forward.16} parent=11 // pred_fallthru
        _
    $region12: #{attention_dgcnn_forward.16} parent=5 // pred_fallthru
      _
    %p194 = scmp.lt.s32.totalorder %s11, 2
    // Predicated region
    $region25: #{attention_dgcnn_forward.16} parent=5 // pred_check
      %p195 = pneg %p194
    $region26: #{attention_dgcnn_forward.16} parent=5 // pred_check_branch
      %197 = sbr.rel (%p195) target = $region28
    $region27: #{attention_dgcnn_forward.16} parent=5 // pred_region
      // Predicated region
      $region29: #{attention_dgcnn_forward.16} parent=27 // pred_check
        %p198 = pneg %p45
      $region30: #{attention_dgcnn_forward.16} parent=27 // pred_check_branch
        %200 = sbr.rel (%p198) target = $region32
      $region31: #{attention_dgcnn_forward.16} parent=27 // pred_region
        %s201 = smul.u32 2, %s19
        %p202 = scmp.lt.s32.totalorder %s18, 1
        %s203 = scalar_select %p202, %s18, 1
        %p204 = scmp.lt.s32.totalorder %s201, 1
        %s205 = scalar_select %p204, %s201, 1
        %s206 = smul.addr %s203, 8
        %s207 = sadd.s32 %s205, %s206
        %s208 = smul.addr %s207, 4
        %s209 = scalar_lea.vmem %s0, %s208
        %s210 = smul.u32 2, %s19
      $region32: #{attention_dgcnn_forward.16} parent=27 // pred_fallthru
        _
      // Predicated region
      $region33: #{attention_dgcnn_forward.16} parent=27 // pred_check
        %p211 = pneg %p73
      $region34: #{attention_dgcnn_forward.16} parent=27 // pred_check_branch
        %213 = sbr.rel (%p211) target = $region36
      $region35: #{attention_dgcnn_forward.16} parent=27 // pred_region
        %s214 = smul.u32 2, %s19
        %p215 = scmp.lt.s32.totalorder %s18, 1
        %s216 = scalar_select %p215, %s18, 1
        %p217 = scmp.lt.s32.totalorder %s214, 1
        %s218 = scalar_select %p217, %s214, 1
        %s219 = smul.addr %s216, 2
        %s220 = sadd.s32 %s218, %s219
        %s221 = smul.addr %s220, 4
        %s222 = scalar_lea.vmem %s1, %s221
        %s223 = smul.u32 2, %s19
      $region36: #{attention_dgcnn_forward.16} parent=27 // pred_fallthru
        _
    $region28: #{attention_dgcnn_forward.16} parent=5 // pred_fallthru
      _
    %p224 = scmp.le.s32.totalorder 1, %s11
    %p225 = scmp.lt.s32.totalorder %s11, 3
    %p226 = pnand %p224, %p225
    %p227 = pneg %p226
    // Predicated region
    $region37: #{attention_dgcnn_forward.16} parent=5 // pred_check
      _
    $region38: #{attention_dgcnn_forward.16} parent=5 // pred_check_branch
      %229 = sbr.rel (%p226) target = $region40
    $region39: #{attention_dgcnn_forward.16} parent=5 // pred_region
      %s230 = ssub.s32 %s11, 1
      %s231 = smul.u32 2, %s21
      %p232 = scmp.lt.s32.totalorder %s20, 1
      %s233 = scalar_select %p232, %s20, 1
      %p234 = scmp.lt.s32.totalorder %s231, 1
      %s235 = scalar_select %p234, %s231, 1
      %s236 = smul.addr %s233, 8
      %s237 = sadd.s32 %s235, %s236
      %s238 = smul.addr %s237, 4
      %s239 = scalar_lea.vmem %s0, %s238
      %p240 = pneg %p51
      %p241 = pneg %p48
      %s242 = smul.u32 2, %s21
      %p243 = scmp.lt.s32.totalorder %s20, 1
      %s244 = scalar_select %p243, %s20, 1
      %p245 = scmp.lt.s32.totalorder %s242, 1
      %s246 = scalar_select %p245, %s242, 1
      %s247 = smul.addr %s244, 2
      %s248 = sadd.s32 %s246, %s247
      %s249 = smul.addr %s248, 4
      %s250 = scalar_lea.vmem %s1, %s249
      %p251 = pneg %p79
      %p252 = pneg %p76
      %p253 = pneg %p100
      %p254 = pneg %p97
      %p255 = pneg %p121
      %p256 = pneg %p118
      %p257 = pneg %p142
      %p258 = pneg %p139
      %p259 = pneg %p170
      %p260 = pneg %p167
      %s261 = smul.u32 2, %s21
      %p262 = scmp.lt.s32.totalorder %s20, 1
      %s263 = scalar_select %p262, %s20, 1
      %p264 = scmp.lt.s32.totalorder %s261, 1
      %s265 = scalar_select %p264, %s261, 1
      %s266 = smul.addr %s265, 2
      %s267 = smul.addr %s263, 4
      %s268 = sadd.s32 %s266, %s267
      %s269 = smul.addr %s268, 4
      %s270 = scalar_lea.vmem %s5, %s269
      %s271 = smul.u32 2, %s21
      %p272 = scmp.lt.s32.totalorder %s20, 1
      %s273 = scalar_select %p272, %s20, 1
      %p274 = scmp.lt.s32.totalorder %s271, 1
      %s275 = scalar_select %p274, %s271, 1
      %s276 = smul.addr %s273, 8
      %s277 = sadd.s32 %s275, %s276
      %s278 = smul.addr %s277, 4
      %s279 = scalar_lea.vmem %s0, %s278
      %s280 = smul.u32 2, %s21
      %s281 = smul.u32 2, %s21
      %p282 = scmp.lt.s32.totalorder %s20, 1
      %s283 = scalar_select %p282, %s20, 1
      %p284 = scmp.lt.s32.totalorder %s281, 1
      %s285 = scalar_select %p284, %s281, 1
      %s286 = smul.addr %s283, 2
      %s287 = sadd.s32 %s285, %s286
      %s288 = smul.addr %s287, 4
      %s289 = scalar_lea.vmem %s1, %s288
      %s290 = smul.u32 2, %s21
      %s291 = smul.u32 2, %s21
      %p292 = scmp.lt.s32.totalorder %s20, 1
      %s293 = scalar_select %p292, %s20, 1
      %p294 = scmp.lt.s32.totalorder %s291, 1
      %s295 = scalar_select %p294, %s291, 1
      %s296 = smul.addr %s295, 2
      %s297 = smul.addr %s293, 4
      %s298 = sadd.s32 %s296, %s297
      %s299 = smul.addr %s298, 4
      %s300 = scalar_lea.vmem %s5, %s299
      %s301 = smul.u32 2, %s21
      %v303 = vld [vmem:[%s289] sm:$0xf]
      %v304 = vld [vmem:[%s289 + $0x4] sm:$0xf]
      %v305 = vld [vmem:[%s3] sm:$0xff]
      %v306 = vld [vmem:[%s3 + $0x8] sm:$0xff]
      %v307 = vld [vmem:[%s3 + $0x10] sm:$0xff]
      %v308 = vld [vmem:[%s3 + $0x18] sm:$0xff]
      %v309 = vld [vmem:[%s3 + $0x20] sm:$0xff]
      %v310 = vld [vmem:[%s3 + $0x28] sm:$0xff]
      %v311 = vld [vmem:[%s3 + $0x30] sm:$0xff]
      %v312 = vld [vmem:[%s3 + $0x38] sm:$0xff]
      %v313 = vld [vmem:[%s3 + $0x40] sm:$0xff]
      %v314 = vld [vmem:[%s3 + $0x48] sm:$0xff]
      %v315 = vld [vmem:[%s3 + $0x50] sm:$0xff]
      %v316 = vld [vmem:[%s3 + $0x58] sm:$0xff]
      %v317 = vld [vmem:[%s3 + $0x60] sm:$0xff]
      %v318 = vld [vmem:[%s3 + $0x68] sm:$0xff]
      %v319 = vld [vmem:[%s3 + $0x70] sm:$0xff]
      %v320 = vld [vmem:[%s3 + $0x78] sm:$0xff]
      %v321 = vld [vmem:[%s4] sm:$0x3]
      %v323 = vlaneseq
      %v324 = vshrl.u32 %v323, 7
      %v325 = vsub.s32 0, %v324
      %v326 = vrot.slane %v321, %v325
      %v327 = vlaneseq
      %v328 = vshrl.u32 %v327, 7
      %v329 = vsub.s32 1, %v328
      %v330 = vrot.slane %v321, %v329
      %v335 = vunpack.c.l.b16 %v303
      %v336 = vunpack.c.l.b16 %v304
      %v337 = vpack.c.b16 %v336, %v335
      %v355 = vunpack.c.l.b16 %v305
      %v356 = vunpack.c.h.b16 %v305
      %v357 = vunpack.c.l.b16 %v306
      %v358 = vunpack.c.h.b16 %v306
      %v359 = vunpack.c.l.b16 %v307
      %v360 = vunpack.c.h.b16 %v307
      %v361 = vunpack.c.l.b16 %v308
      %v362 = vunpack.c.h.b16 %v308
      %v363 = vunpack.c.l.b16 %v309
      %v364 = vunpack.c.h.b16 %v309
      %v365 = vunpack.c.l.b16 %v310
      %v366 = vunpack.c.h.b16 %v310
      %v367 = vunpack.c.l.b16 %v311
      %v368 = vunpack.c.h.b16 %v311
      %v369 = vunpack.c.l.b16 %v312
      %v370 = vunpack.c.h.b16 %v312
      %v371 = vunpack.c.l.b16 %v313
      %v372 = vunpack.c.h.b16 %v313
      %v373 = vunpack.c.l.b16 %v314
      %v374 = vunpack.c.h.b16 %v314
      %v375 = vunpack.c.l.b16 %v315
      %v376 = vunpack.c.h.b16 %v315
      %v377 = vunpack.c.l.b16 %v316
      %v378 = vunpack.c.h.b16 %v316
      %v379 = vunpack.c.l.b16 %v317
      %v380 = vunpack.c.h.b16 %v317
      %v381 = vunpack.c.l.b16 %v318
      %v382 = vunpack.c.h.b16 %v318
      %v383 = vunpack.c.l.b16 %v319
      %v384 = vunpack.c.h.b16 %v319
      %v385 = vunpack.c.l.b16 %v320
      %v386 = vunpack.c.h.b16 %v320
      %v387 = vpack.c.b16 %v357, %v355
      %v388 = vpack.c.b16 %v358, %v356
      %v389 = vpack.c.b16 %v361, %v359
      %v390 = vpack.c.b16 %v362, %v360
      %v391 = vpack.c.b16 %v365, %v363
      %v392 = vpack.c.b16 %v366, %v364
      %v393 = vpack.c.b16 %v369, %v367
      %v394 = vpack.c.b16 %v370, %v368
      %v395 = vpack.c.b16 %v373, %v371
      %v396 = vpack.c.b16 %v374, %v372
      %v397 = vpack.c.b16 %v377, %v375
      %v398 = vpack.c.b16 %v378, %v376
      %v399 = vpack.c.b16 %v381, %v379
      %v400 = vpack.c.b16 %v382, %v380
      %v401 = vpack.c.b16 %v385, %v383
      %v402 = vpack.c.b16 %v386, %v384
      %419 = vmatprep.subr.bf16.mxu0 %v388
      %420 = vmatpush1.bf16.msra.mxu0 %v387
      %421 = vmatprep.subr.bf16.mxu0 %v390
      %422 = vmatpush1.bf16.msra.mxu0 %v389
      %423 = vmatprep.subr.bf16.mxu0 %v392
      %424 = vmatpush1.bf16.msra.mxu0 %v391
      %425 = vmatprep.subr.bf16.mxu0 %v394
      %426 = vmatpush1.bf16.msra.mxu0 %v393
      %427 = vmatprep.subr.bf16.mxu0 %v396
      %428 = vmatpush1.bf16.msra.mxu0 %v395
      %429 = vmatprep.subr.bf16.mxu0 %v398
      %430 = vmatpush1.bf16.msra.mxu0 %v397
      %431 = vmatprep.subr.bf16.mxu0 %v400
      %432 = vmatpush1.bf16.msra.mxu0 %v399
      %433 = vmatprep.subr.bf16.mxu0 %v402
      %434 = vmatpush1.bf16.msra.mxu0 %v401
      %435 = vmatprep.subr.bf16.mxu0 0
      %436 = vmatpush1.bf16.msra.mxu0 0
      %437 = vmatprep.subr.bf16.mxu0 0
      %438 = vmatpush1.bf16.msra.mxu0 0
      %439 = vmatprep.subr.bf16.mxu0 0
      %440 = vmatpush1.bf16.msra.mxu0 0
      %441 = vmatprep.subr.bf16.mxu0 0
      %442 = vmatpush1.bf16.msra.mxu0 0
      %443 = vmatprep.subr.bf16.mxu0 0
      %444 = vmatpush1.bf16.msra.mxu0 0
      %445 = vmatprep.subr.bf16.mxu0 0
      %446 = vmatpush1.bf16.msra.mxu0 0
      %447 = vmatprep.subr.bf16.mxu0 0
      %448 = vmatpush1.bf16.msra.mxu0 0
      %449 = vmatprep.subr.bf16.mxu0 0
      %450 = vmatpush1.bf16.msra.mxu0 0
      %451 = vmatprep.mubr.bf16.mxu0 0
      %452 = vmatmul.mubr.bf16.gmra.mrb[0].mxu0 %v337
      %v453 = vpop.f32.mrb[0].mxu0
      %v454 = vadd.f32 %v326, %v453
      %v455 = vpop.f32.mrb[0].mxu0
      %v456 = vadd.f32 %v330, %v455
      %v457 = vpop.f32.mrb[0].mxu0
      %v458 = vadd.f32 %v326, %v457
      %v459 = vpop.f32.mrb[0].mxu0
      %v460 = vadd.f32 %v330, %v459
      %461 = vdwg.mxu0
      %v462 = vld [vmem:[%s279] sm:$0xf]
      %v463 = vld [vmem:[%s279 + $0x4] sm:$0xf]
      %v464 = vld [vmem:[%s279 + $0x8] sm:$0xf]
      %v465 = vld [vmem:[%s279 + $0xc] sm:$0xf]
      %v466 = vld [vmem:[%s279 + $0x10] sm:$0xf]
      %v467 = vld [vmem:[%s279 + $0x14] sm:$0xf]
      %v468 = vld [vmem:[%s279 + $0x18] sm:$0xf]
      %v469 = vld [vmem:[%s279 + $0x1c] sm:$0xf]
      %v470 = vld [vmem:[%s2] sm:$0xff]
      %v471 = vld [vmem:[%s2 + $0x8] sm:$0xff]
      %v472 = vld [vmem:[%s2 + $0x10] sm:$0xff]
      %v473 = vld [vmem:[%s2 + $0x18] sm:$0xff]
      %v474 = vld [vmem:[%s2 + $0x20] sm:$0xff]
      %v475 = vld [vmem:[%s2 + $0x28] sm:$0xff]
      %v476 = vld [vmem:[%s2 + $0x30] sm:$0xff]
      %v477 = vld [vmem:[%s2 + $0x38] sm:$0xff]
      %v478 = vld [vmem:[%s2 + $0x40] sm:$0xff]
      %v479 = vld [vmem:[%s2 + $0x48] sm:$0xff]
      %v480 = vld [vmem:[%s2 + $0x50] sm:$0xff]
      %v481 = vld [vmem:[%s2 + $0x58] sm:$0xff]
      %v482 = vld [vmem:[%s2 + $0x60] sm:$0xff]
      %v483 = vld [vmem:[%s2 + $0x68] sm:$0xff]
      %v484 = vld [vmem:[%s2 + $0x70] sm:$0xff]
      %v485 = vld [vmem:[%s2 + $0x78] sm:$0xff]
      %v494 = vunpack.c.l.b16 %v462
      %v495 = vunpack.c.l.b16 %v463
      %v496 = vunpack.c.l.b16 %v464
      %v497 = vunpack.c.l.b16 %v465
      %v498 = vunpack.c.l.b16 %v466
      %v499 = vunpack.c.l.b16 %v467
      %v500 = vunpack.c.l.b16 %v468
      %v501 = vunpack.c.l.b16 %v469
      %v502 = vpack.c.b16 %v495, %v494
      %v503 = vpack.c.b16 %v497, %v496
      %v504 = vpack.c.b16 %v499, %v498
      %v505 = vpack.c.b16 %v501, %v500
      %v526 = vunpack.c.l.b16 %v470
      %v527 = vunpack.c.h.b16 %v470
      %v528 = vunpack.c.l.b16 %v471
      %v529 = vunpack.c.h.b16 %v471
      %v530 = vunpack.c.l.b16 %v472
      %v531 = vunpack.c.h.b16 %v472
      %v532 = vunpack.c.l.b16 %v473
      %v533 = vunpack.c.h.b16 %v473
      %v534 = vunpack.c.l.b16 %v474
      %v535 = vunpack.c.h.b16 %v474
      %v536 = vunpack.c.l.b16 %v475
      %v537 = vunpack.c.h.b16 %v475
      %v538 = vunpack.c.l.b16 %v476
      %v539 = vunpack.c.h.b16 %v476
      %v540 = vunpack.c.l.b16 %v477
      %v541 = vunpack.c.h.b16 %v477
      %v542 = vunpack.c.l.b16 %v478
      %v543 = vunpack.c.h.b16 %v478
      %v544 = vunpack.c.l.b16 %v479
      %v545 = vunpack.c.h.b16 %v479
      %v546 = vunpack.c.l.b16 %v480
      %v547 = vunpack.c.h.b16 %v480
      %v548 = vunpack.c.l.b16 %v481
      %v549 = vunpack.c.h.b16 %v481
      %v550 = vunpack.c.l.b16 %v482
      %v551 = vunpack.c.h.b16 %v482
      %v552 = vunpack.c.l.b16 %v483
      %v553 = vunpack.c.h.b16 %v483
      %v554 = vunpack.c.l.b16 %v484
      %v555 = vunpack.c.h.b16 %v484
      %v556 = vunpack.c.l.b16 %v485
      %v557 = vunpack.c.h.b16 %v485
      %v558 = vpack.c.b16 %v528, %v526
      %v559 = vpack.c.b16 %v529, %v527
      %v560 = vpack.c.b16 %v532, %v530
      %v561 = vpack.c.b16 %v533, %v531
      %v562 = vpack.c.b16 %v536, %v534
      %v563 = vpack.c.b16 %v537, %v535
      %v564 = vpack.c.b16 %v540, %v538
      %v565 = vpack.c.b16 %v541, %v539
      %v566 = vpack.c.b16 %v544, %v542
      %v567 = vpack.c.b16 %v545, %v543
      %v568 = vpack.c.b16 %v548, %v546
      %v569 = vpack.c.b16 %v549, %v547
      %v570 = vpack.c.b16 %v552, %v550
      %v571 = vpack.c.b16 %v553, %v551
      %v572 = vpack.c.b16 %v556, %v554
      %v573 = vpack.c.b16 %v557, %v555
      %590 = vmatprep.subr.bf16.mxu0 %v559
      %591 = vmatpush1.bf16.msra.mxu0 %v558
      %592 = vmatprep.subr.bf16.mxu0 %v561
      %593 = vmatpush1.bf16.msra.mxu0 %v560
      %594 = vmatprep.subr.bf16.mxu0 %v563
      %595 = vmatpush1.bf16.msra.mxu0 %v562
      %596 = vmatprep.subr.bf16.mxu0 %v565
      %597 = vmatpush1.bf16.msra.mxu0 %v564
      %598 = vmatprep.subr.bf16.mxu0 %v567
      %599 = vmatpush1.bf16.msra.mxu0 %v566
      %600 = vmatprep.subr.bf16.mxu0 %v569
      %601 = vmatpush1.bf16.msra.mxu0 %v568
      %602 = vmatprep.subr.bf16.mxu0 %v571
      %603 = vmatpush1.bf16.msra.mxu0 %v570
      %604 = vmatprep.subr.bf16.mxu0 %v573
      %605 = vmatpush1.bf16.msra.mxu0 %v572
      %606 = vmatprep.subr.bf16.mxu0 0
      %607 = vmatpush1.bf16.msra.mxu0 0
      %608 = vmatprep.subr.bf16.mxu0 0
      %609 = vmatpush1.bf16.msra.mxu0 0
      %610 = vmatprep.subr.bf16.mxu0 0
      %611 = vmatpush1.bf16.msra.mxu0 0
      %612 = vmatprep.subr.bf16.mxu0 0
      %613 = vmatpush1.bf16.msra.mxu0 0
      %614 = vmatprep.subr.bf16.mxu0 0
      %615 = vmatpush1.bf16.msra.mxu0 0
      %616 = vmatprep.subr.bf16.mxu0 0
      %617 = vmatpush1.bf16.msra.mxu0 0
      %618 = vmatprep.subr.bf16.mxu0 0
      %619 = vmatpush1.bf16.msra.mxu0 0
      %620 = vmatprep.subr.bf16.mxu0 0
      %621 = vmatpush1.bf16.msra.mxu0 0
      %622 = vmatprep.mubr.bf16.mxu0 0
      %623 = vmatmul.mubr.bf16.gmra.mrb[0].mxu0 %v502
      %v624 = vpop.f32.mrb[0].mxu0
      %v625 = vadd.f32 0.0, %v624
      %v626 = vpop.f32.mrb[0].mxu0
      %v627 = vadd.f32 0.0, %v626
      %v628 = vpop.f32.mrb[0].mxu0
      %v629 = vadd.f32 0.0, %v628
      %v630 = vpop.f32.mrb[0].mxu0
      %v631 = vadd.f32 0.0, %v630
      %632 = vmatprep.mubr.bf16.mxu0 0
      %633 = vmatmul.mubr.bf16.gmra.mrb[0].mxu0 %v503
      %v634 = vpop.f32.mrb[0].mxu0
      %v635 = vadd.f32 0.0, %v634
      %v636 = vpop.f32.mrb[0].mxu0
      %v637 = vadd.f32 0.0, %v636
      %v638 = vpop.f32.mrb[0].mxu0
      %v639 = vadd.f32 0.0, %v638
      %v640 = vpop.f32.mrb[0].mxu0
      %v641 = vadd.f32 0.0, %v640
      %642 = vmatprep.mubr.bf16.mxu0 0
      %643 = vmatmul.mubr.bf16.gmra.mrb[0].mxu0 %v504
      %v644 = vpop.f32.mrb[0].mxu0
      %v645 = vadd.f32 0.0, %v644
      %v646 = vpop.f32.mrb[0].mxu0
      %v647 = vadd.f32 0.0, %v646
      %v648 = vpop.f32.mrb[0].mxu0
      %v649 = vadd.f32 0.0, %v648
      %v650 = vpop.f32.mrb[0].mxu0
      %v651 = vadd.f32 0.0, %v650
      %652 = vmatprep.mubr.bf16.mxu0 0
      %653 = vmatmul.mubr.bf16.gmra.mrb[0].mxu0 %v505
      %v654 = vpop.f32.mrb[0].mxu0
      %v655 = vadd.f32 0.0, %v654
      %v656 = vpop.f32.mrb[0].mxu0
      %v657 = vadd.f32 0.0, %v656
      %v658 = vpop.f32.mrb[0].mxu0
      %v659 = vadd.f32 0.0, %v658
      %v660 = vpop.f32.mrb[0].mxu0
      %v661 = vadd.f32 0.0, %v660
      %662 = vdwg.mxu0
      %v663 = vmax.f32 %v625, %v635
      %v664 = vmax.f32 %v627, %v637
      %v665 = vmax.f32 %v629, %v639
      %v666 = vmax.f32 %v631, %v641
      %v667 = vmax.f32 %v663, %v645
      %v668 = vmax.f32 %v664, %v647
      %v669 = vmax.f32 %v665, %v649
      %v670 = vmax.f32 %v666, %v651
      %v671 = vmax.f32 %v667, %v655
      %v672 = vmax.f32 %v668, %v657
      %v673 = vmax.f32 %v669, %v659
      %v674 = vmax.f32 %v670, %v661
      %v675 = vadd.f32 %v671, %v454
      %v676 = vadd.f32 %v672, %v456
      %v677 = vadd.f32 %v673, %v458
      %v678 = vadd.f32 %v674, %v460
      %vm679 = vcmp.gt.f32.partialorder %v675, 0.0
      %vm680 = vcmp.gt.f32.partialorder %v676, 0.0
      %vm681 = vcmp.gt.f32.partialorder %v677, 0.0
      %vm682 = vcmp.gt.f32.partialorder %v678, 0.0
      %v683 = vmul.f32 %v675, 0.2
      %v684 = vmul.f32 %v676, 0.2
      %v685 = vmul.f32 %v677, 0.2
      %v686 = vmul.f32 %v678, 0.2
      %v687 = vsel %vm679, %v675, %v683
      %v688 = vsel %vm680, %v676, %v684
      %v689 = vsel %vm681, %v677, %v685
      %v690 = vsel %vm682, %v678, %v686
      %v691 = vpack.c.bf16 %v689, %v687
      %v692 = vpack.c.bf16 %v690, %v688
      %v695 = vunpack.c.l.b16 %v691
      %v696 = vunpack.c.l.b16 %v692
      %v697 = vunpack.c.h.b16 %v691
      %v698 = vunpack.c.h.b16 %v692
      %v699 = vpack.c.b16 %v696, %v695
      %v700 = vpack.c.b16 %v698, %v697
      %703 = vst [vmem:[%s300] sm:$0xff] %v699
      %704 = vst [vmem:[%s300 + $0x8] sm:$0xff] %v700
      %s705 = smul.u32 2, %s21
      %p706 = scmp.lt.s32.totalorder %s20, 1
      %s707 = scalar_select %p706, %s20, 1
      %p708 = scmp.lt.s32.totalorder %s705, 1
      %s709 = scalar_select %p708, %s705, 1
      %s710 = smul.addr %s709, 2
      %s711 = smul.addr %s707, 4
      %s712 = sadd.s32 %s710, %s711
      %s713 = smul.addr %s712, 4
      %s714 = scalar_lea.vmem %s5, %s713
      // Predicated region
      $region41: #{attention_dgcnn_forward.16} parent=39 // pred_check
        %p715 = pneg %p167
      $region42: #{attention_dgcnn_forward.16} parent=39 // pred_check_branch
        %717 = sbr.rel (%p715) target = $region44
      $region43: #{attention_dgcnn_forward.16} parent=39 // pred_region
        %s718 = smul.u32 2, %s21
      $region44: #{attention_dgcnn_forward.16} parent=39 // pred_fallthru
        _
    $region40: #{attention_dgcnn_forward.16} parent=5 // pred_fallthru
      _
    %p719 = scmp.le.s32.totalorder 2, %s11
    // Predicated region
    $region45: #{attention_dgcnn_forward.16} parent=5 // pred_check
      %p720 = pneg %p719
    $region46: #{attention_dgcnn_forward.16} parent=5 // pred_check_branch
      %722 = sbr.rel (%p720) target = $region48
    $region47: #{attention_dgcnn_forward.16} parent=5 // pred_region
      %s723 = ssub.s32 %s11, 2
      // Predicated region
      $region49: #{attention_dgcnn_forward.16} parent=47 // pred_check
        %p724 = pneg %p173
      $region50: #{attention_dgcnn_forward.16} parent=47 // pred_check_branch
        %726 = sbr.rel (%p724) target = $region52
      $region51: #{attention_dgcnn_forward.16} parent=47 // pred_region
        %s727 = smul.u32 2, %s23
        %p728 = scmp.lt.s32.totalorder %s22, 1
        %s729 = scalar_select %p728, %s22, 1
        %p730 = scmp.lt.s32.totalorder %s727, 1
        %s731 = scalar_select %p730, %s727, 1
        %s732 = smul.addr %s731, 2
        %s733 = smul.addr %s729, 4
        %s734 = sadd.s32 %s732, %s733
        %s735 = smul.addr %s734, 4
        %s736 = scalar_lea.vmem %s5, %s735
      $region52: #{attention_dgcnn_forward.16} parent=47 // pred_fallthru
        _
    $region48: #{attention_dgcnn_forward.16} parent=5 // pred_fallthru
      _
  $region6: #{attention_dgcnn_forward.16} parent=0 // loop_footer
    %s15 = sadd.s32 1, %s11
  $region7: #{attention_dgcnn_forward.16} parent=0 // loop_footer_branch
    %10 = sbr.rel target = $region3
  $region8: #{attention_dgcnn_forward.16} parent=0 // loop_exit
    _

// kernel: attention_dgcnn_forward.15
$region0: #{attention_dgcnn_forward.15}
  #allocation0 [shape = 'u32[]', space=smem, size = 0x4, offset = 0x4, fixed_abs, tag = 'smem constant byte address 0x4 - core index']
  #allocation1 [shape = 'u32[144,128]{1,0:T(1,128)}', space=vmem, size = 0x12000, scoped, tag = 'internal scratch']
  #allocation2 [shape = 'bf16[2,16,128]{2,1,0:T(16,128)(2,1)}', space=vmem, size = 0x2000, scoped, tag = 'scratch operand']
  #allocation3 [shape = 'bf16[2,16,128]{2,1,0:T(16,128)(2,1)}', space=vmem, size = 0x2000, scoped, tag = 'scratch operand']
  #allocation4 [shape = 'bf16[2,16,128]{2,1,0:T(16,128)(2,1)}', space=vmem, size = 0x2000, scoped, tag = 'scratch operand']
  #allocation5 [shape = 'f32[2,16,128]{2,1,0:T(8,128)}', space=vmem, size = 0x4000, scoped, tag = 'scratch operand']
  #allocation6 [shape = 'f32[2,16,4]{2,1,0:T(8,128)}', space=vmem, size = 0x4000, scoped, tag = 'scratch operand']
  %s0 = inlined_call_operand.vmem [shape: bf16[2,16,128], index: 0, kind: input, shape index: {}]
  %s1 = inlined_call_operand.vmem [shape: bf16[128,384], index: 1, kind: input, shape index: {}]
  %s2 = inlined_call_operand.vmem [shape: f32[1,384], index: 2, kind: input, shape index: {}]
  %s3 = inlined_call_operand.vmem [shape: bf16[128,128], index: 3, kind: input, shape index: {}]
  %s4 = inlined_call_operand.vmem [shape: f32[1,128], index: 4, kind: input, shape index: {}]
  %s5 = inlined_call_operand.vmem [shape: bf16[128,4], index: 5, kind: input, shape index: {}]
  %s6 = inlined_call_operand.vmem [shape: bf16[4,128], index: 6, kind: input, shape index: {}]
  %s7 = inlined_call_operand.vmem [shape: bf16[2,16,128], index: 7, kind: output, shape index: {}]
  %s8 = sld [smem:[#allocation0]]
  $region38: #{attention_dgcnn_forward.15} parent=0
    _
  %s10 = ssub.s32 1, %s8
  %s11 = scalar_select 0, %s10, %s8
  // Predicated region
  $region2: #{attention_dgcnn_forward.15} parent=0 // pred_check
    _
  $region3: #{attention_dgcnn_forward.15} parent=0 // pred_check_branch
    %13 = sbr.rel (0) target = $region5
  $region4: #{attention_dgcnn_forward.15} parent=0 // pred_region
    _
  $region5: #{attention_dgcnn_forward.15} parent=0 // pred_fallthru
    _
  // Predicated region
  $region6: #{attention_dgcnn_forward.15} parent=0 // pred_check
    _
  $region7: #{attention_dgcnn_forward.15} parent=0 // pred_check_branch
    %15 = sbr.rel (0) target = $region9
  $region8: #{attention_dgcnn_forward.15} parent=0 // pred_region
    _
  $region9: #{attention_dgcnn_forward.15} parent=0 // pred_fallthru
    _
  // Predicated region
  $region10: #{attention_dgcnn_forward.15} parent=0 // pred_check
    _
  $region11: #{attention_dgcnn_forward.15} parent=0 // pred_check_branch
    %17 = sbr.rel (0) target = $region13
  $region12: #{attention_dgcnn_forward.15} parent=0 // pred_region
    _
  $region13: #{attention_dgcnn_forward.15} parent=0 // pred_fallthru
    _
  // Predicated region
  $region14: #{attention_dgcnn_forward.15} parent=0 // pred_check
    _
  $region15: #{attention_dgcnn_forward.15} parent=0 // pred_check_branch
    %19 = sbr.rel (0) target = $region17
  $region16: #{attention_dgcnn_forward.15} parent=0 // pred_region
    _
  $region17: #{attention_dgcnn_forward.15} parent=0 // pred_fallthru
    _
  // Predicated region
  $region18: #{attention_dgcnn_forward.15} parent=0 // pred_check
    _
  $region19: #{attention_dgcnn_forward.15} parent=0 // pred_check_branch
    %21 = sbr.rel (0) target = $region21
  $region20: #{attention_dgcnn_forward.15} parent=0 // pred_region
    _
  $region21: #{attention_dgcnn_forward.15} parent=0 // pred_fallthru
    _
  // Predicated region
  $region22: #{attention_dgcnn_forward.15} parent=0 // pred_check
    _
  $region23: #{attention_dgcnn_forward.15} parent=0 // pred_check_branch
    %23 = sbr.rel (0) target = $region25
  $region24: #{attention_dgcnn_forward.15} parent=0 // pred_region
    _
  $region25: #{attention_dgcnn_forward.15} parent=0 // pred_fallthru
    _
  // Predicated region
  $region26: #{attention_dgcnn_forward.15} parent=0 // pred_check
    _
  $region27: #{attention_dgcnn_forward.15} parent=0 // pred_check_branch
    %25 = sbr.rel (0) target = $region29
  $region28: #{attention_dgcnn_forward.15} parent=0 // pred_region
    _
  $region29: #{attention_dgcnn_forward.15} parent=0 // pred_fallthru
    _
  %v27 = vld [vmem:[%s0] sm:$0xf]
  %v28 = vld [vmem:[%s0 + $0x4] sm:$0xf]
  %v29 = vld [vmem:[%s0 + $0x8] sm:$0xf]
  %v30 = vld [vmem:[%s0 + $0xc] sm:$0xf]
  %v31 = vld [vmem:[%s1] sm:$0xff]
  %v32 = vld [vmem:[%s1 + $0x8] sm:$0xf]
  %v33 = vld [vmem:[%s1 + $0xc] sm:$0xff]
  %v34 = vld [vmem:[%s1 + $0x14] sm:$0xf]
  %v35 = vld [vmem:[%s1 + $0x18] sm:$0xff]
  %v36 = vld [vmem:[%s1 + $0x20] sm:$0xf]
  %v37 = vld [vmem:[%s1 + $0x24] sm:$0xff]
  %v38 = vld [vmem:[%s1 + $0x2c] sm:$0xf]
  %v39 = vld [vmem:[%s1 + $0x30] sm:$0xff]
  %v40 = vld [vmem:[%s1 + $0x38] sm:$0xf]
  %v41 = vld [vmem:[%s1 + $0x3c] sm:$0xff]
  %v42 = vld [vmem:[%s1 + $0x44] sm:$0xf]
  %v43 = vld [vmem:[%s1 + $0x48] sm:$0xff]
  %v44 = vld [vmem:[%s1 + $0x50] sm:$0xf]
  %v45 = vld [vmem:[%s1 + $0x54] sm:$0xff]
  %v46 = vld [vmem:[%s1 + $0x5c] sm:$0xf]
  %v47 = vld [vmem:[%s1 + $0x60] sm:$0xff]
  %v48 = vld [vmem:[%s1 + $0x68] sm:$0xf]
  %v49 = vld [vmem:[%s1 + $0x6c] sm:$0xff]
  %v50 = vld [vmem:[%s1 + $0x74] sm:$0xf]
  %v51 = vld [vmem:[%s1 + $0x78] sm:$0xff]
  %v52 = vld [vmem:[%s1 + $0x80] sm:$0xf]
  %v53 = vld [vmem:[%s1 + $0x84] sm:$0xff]
  %v54 = vld [vmem:[%s1 + $0x8c] sm:$0xf]
  %v55 = vld [vmem:[%s1 + $0x90] sm:$0xff]
  %v56 = vld [vmem:[%s1 + $0x98] sm:$0xf]
  %v57 = vld [vmem:[%s1 + $0x9c] sm:$0xff]
  %v58 = vld [vmem:[%s1 + $0xa4] sm:$0xf]
  %v59 = vld [vmem:[%s1 + $0xa8] sm:$0xff]
  %v60 = vld [vmem:[%s1 + $0xb0] sm:$0xf]
  %v61 = vld [vmem:[%s1 + $0xb4] sm:$0xff]
  %v62 = vld [vmem:[%s1 + $0xbc] sm:$0xf]
  %v63 = vld [vmem:[%s2] sm:$0x7]
  %v65 = vlaneseq
  %v66 = vshrl.u32 %v65, 7
  %v67 = vsub.s32 0, %v66
  %v68 = vrot.slane %v63, %v67
  %v69 = vlaneseq
  %v70 = vshrl.u32 %v69, 7
  %v71 = vsub.s32 1, %v70
  %v72 = vrot.slane %v63, %v71
  %v73 = vlaneseq
  %v74 = vshrl.u32 %v73, 7
  %v75 = vsub.s32 2, %v74
  %v76 = vrot.slane %v63, %v75
  %v84 = vunpack.c.l.b16 %v27
  %v85 = vunpack.c.l.b16 %v28
  %v86 = vunpack.c.l.b16 %v29
  %v87 = vunpack.c.l.b16 %v30
  %v88 = vpack.c.b16 %v85, %v84
  %v89 = vpack.c.b16 %v87, %v86
  %v124 = vunpack.c.l.b16 %v31
  %v125 = vunpack.c.h.b16 %v31
  %v126 = vunpack.c.l.b16 %v32
  %v127 = vunpack.c.l.b16 %v33
  %v128 = vunpack.c.h.b16 %v33
  %v129 = vunpack.c.l.b16 %v34
  %v130 = vunpack.c.l.b16 %v35
  %v131 = vunpack.c.h.b16 %v35
  %v132 = vunpack.c.l.b16 %v36
  %v133 = vunpack.c.l.b16 %v37
  %v134 = vunpack.c.h.b16 %v37
  %v135 = vunpack.c.l.b16 %v38
  %v136 = vunpack.c.l.b16 %v39
  %v137 = vunpack.c.h.b16 %v39
  %v138 = vunpack.c.l.b16 %v40
  %v139 = vunpack.c.l.b16 %v41
  %v140 = vunpack.c.h.b16 %v41
  %v141 = vunpack.c.l.b16 %v42
  %v142 = vunpack.c.l.b16 %v43
  %v143 = vunpack.c.h.b16 %v43
  %v144 = vunpack.c.l.b16 %v44
  %v145 = vunpack.c.l.b16 %v45
  %v146 = vunpack.c.h.b16 %v45
  %v147 = vunpack.c.l.b16 %v46
  %v148 = vunpack.c.l.b16 %v47
  %v149 = vunpack.c.h.b16 %v47
  %v150 = vunpack.c.l.b16 %v48
  %v151 = vunpack.c.l.b16 %v49
  %v152 = vunpack.c.h.b16 %v49
  %v153 = vunpack.c.l.b16 %v50
  %v154 = vunpack.c.l.b16 %v51
  %v155 = vunpack.c.h.b16 %v51
  %v156 = vunpack.c.l.b16 %v52
  %v157 = vunpack.c.l.b16 %v53
  %v158 = vunpack.c.h.b16 %v53
  %v159 = vunpack.c.l.b16 %v54
  %v160 = vunpack.c.l.b16 %v55
  %v161 = vunpack.c.h.b16 %v55
  %v162 = vunpack.c.l.b16 %v56
  %v163 = vunpack.c.l.b16 %v57
  %v164 = vunpack.c.h.b16 %v57
  %v165 = vunpack.c.l.b16 %v58
  %v166 = vunpack.c.l.b16 %v59
  %v167 = vunpack.c.h.b16 %v59
  %v168 = vunpack.c.l.b16 %v60
  %v169 = vunpack.c.l.b16 %v61
  %v170 = vunpack.c.h.b16 %v61
  %v171 = vunpack.c.l.b16 %v62
  %v172 = vpack.c.b16 %v127, %v124
  %v173 = vpack.c.b16 %v128, %v125
  %v174 = vpack.c.b16 %v129, %v126
  %v175 = vpack.c.b16 %v133, %v130
  %v176 = vpack.c.b16 %v134, %v131
  %v177 = vpack.c.b16 %v135, %v132
  %v178 = vpack.c.b16 %v139, %v136
  %v179 = vpack.c.b16 %v140, %v137
  %v180 = vpack.c.b16 %v141, %v138
  %v181 = vpack.c.b16 %v145, %v142
  %v182 = vpack.c.b16 %v146, %v143
  %v183 = vpack.c.b16 %v147, %v144
  %v184 = vpack.c.b16 %v151, %v148
  %v185 = vpack.c.b16 %v152, %v149
  %v186 = vpack.c.b16 %v153, %v150
  %v187 = vpack.c.b16 %v157, %v154
  %v188 = vpack.c.b16 %v158, %v155
  %v189 = vpack.c.b16 %v159, %v156
  %v190 = vpack.c.b16 %v163, %v160
  %v191 = vpack.c.b16 %v164, %v161
  %v192 = vpack.c.b16 %v165, %v162
  %v193 = vpack.c.b16 %v169, %v166
  %v194 = vpack.c.b16 %v170, %v167
  %v195 = vpack.c.b16 %v171, %v168
  %220 = vmatprep.subr.bf16.mxu0 %v173
  %221 = vmatpush1.bf16.msra.mxu0 %v172
  %222 = vmatprep.subr.bf16.mxu0 %v176
  %223 = vmatpush1.bf16.msra.mxu0 %v175
  %224 = vmatprep.subr.bf16.mxu0 %v179
  %225 = vmatpush1.bf16.msra.mxu0 %v178
  %226 = vmatprep.subr.bf16.mxu0 %v182
  %227 = vmatpush1.bf16.msra.mxu0 %v181
  %228 = vmatprep.subr.bf16.mxu0 %v185
  %229 = vmatpush1.bf16.msra.mxu0 %v184
  %230 = vmatprep.subr.bf16.mxu0 %v188
  %231 = vmatpush1.bf16.msra.mxu0 %v187
  %232 = vmatprep.subr.bf16.mxu0 %v191
  %233 = vmatpush1.bf16.msra.mxu0 %v190
  %234 = vmatprep.subr.bf16.mxu0 %v194
  %235 = vmatpush1.bf16.msra.mxu0 %v193
  %236 = vmatprep.subr.bf16.mxu0 0
  %237 = vmatpush1.bf16.msra.mxu0 0
  %238 = vmatprep.subr.bf16.mxu0 0
  %239 = vmatpush1.bf16.msra.mxu0 0
  %240 = vmatprep.subr.bf16.mxu0 0
  %241 = vmatpush1.bf16.msra.mxu0 0
  %242 = vmatprep.subr.bf16.mxu0 0
  %243 = vmatpush1.bf16.msra.mxu0 0
  %244 = vmatprep.subr.bf16.mxu0 0
  %245 = vmatpush1.bf16.msra.mxu0 0
  %246 = vmatprep.subr.bf16.mxu0 0
  %247 = vmatpush1.bf16.msra.mxu0 0
  %248 = vmatprep.subr.bf16.mxu0 0
  %249 = vmatpush1.bf16.msra.mxu0 0
  %250 = vmatprep.subr.bf16.mxu0 0
  %251 = vmatpush1.bf16.msra.mxu0 0
  %252 = vmatprep.mubr.bf16.mxu0 0
  %253 = vmatmul.mubr.bf16.gmra.mrb[0].mxu0 %v88
  %v254 = vpop.f32.mrb[0].mxu0
  %v255 = vadd.f32 %v68, %v254
  %v256 = vpop.f32.mrb[0].mxu0
  %v257 = vadd.f32 %v72, %v256
  %v258 = vpop.f32.mrb[0].mxu0
  %v259 = vadd.f32 %v68, %v258
  %v260 = vpop.f32.mrb[0].mxu0
  %v261 = vadd.f32 %v72, %v260
  %262 = vmatprep.mubr.bf16.mxu0 0
  %263 = vmatmul.mubr.bf16.gmra.mrb[0].mxu0 %v89
  %v264 = vpop.f32.mrb[0].mxu0
  %v265 = vadd.f32 %v68, %v264
  %v266 = vpop.f32.mrb[0].mxu0
  %v267 = vadd.f32 %v72, %v266
  %v268 = vpop.f32.mrb[0].mxu0
  %v269 = vadd.f32 %v68, %v268
  %v270 = vpop.f32.mrb[0].mxu0
  %v271 = vadd.f32 %v72, %v270
  %272 = vdwg.mxu0
  %273 = vmatprep.subr.bf16.mxu0 0
  %274 = vmatpush1.bf16.msra.mxu0 %v174
  %275 = vmatprep.subr.bf16.mxu0 0
  %276 = vmatpush1.bf16.msra.mxu0 %v177
  %277 = vmatprep.subr.bf16.mxu0 0
  %278 = vmatpush1.bf16.msra.mxu0 %v180
  %279 = vmatprep.subr.bf16.mxu0 0
  %280 = vmatpush1.bf16.msra.mxu0 %v183
  %281 = vmatprep.subr.bf16.mxu0 0
  %282 = vmatpush1.bf16.msra.mxu0 %v186
  %283 = vmatprep.subr.bf16.mxu0 0
  %284 = vmatpush1.bf16.msra.mxu0 %v189
  %285 = vmatprep.subr.bf16.mxu0 0
  %286 = vmatpush1.bf16.msra.mxu0 %v192
  %287 = vmatprep.subr.bf16.mxu0 0
  %288 = vmatpush1.bf16.msra.mxu0 %v195
  %289 = vmatprep.subr.bf16.mxu0 0
  %290 = vmatpush1.bf16.msra.mxu0 0
  %291 = vmatprep.subr.bf16.mxu0 0
  %292 = vmatpush1.bf16.msra.mxu0 0
  %293 = vmatprep.subr.bf16.mxu0 0
  %294 = vmatpush1.bf16.msra.mxu0 0
  %295 = vmatprep.subr.bf16.mxu0 0
  %296 = vmatpush1.bf16.msra.mxu0 0
  %297 = vmatprep.subr.bf16.mxu0 0
  %298 = vmatpush1.bf16.msra.mxu0 0
  %299 = vmatprep.subr.bf16.mxu0 0
  %300 = vmatpush1.bf16.msra.mxu0 0
  %301 = vmatprep.subr.bf16.mxu0 0
  %302 = vmatpush1.bf16.msra.mxu0 0
  %303 = vmatprep.subr.bf16.mxu0 0
  %304 = vmatpush1.bf16.msra.mxu0 0
  %305 = vmatprep.mubr.bf16.mxu0 0
  %306 = vmatmul.mubr.bf16.gmra.mrb[0].mxu0 %v88
  %v307 = vpop.f32.mrb[0].mxu0
  %v308 = vadd.f32 %v76, %v307
  %v309 = vpop.f32.mrb[0].mxu0
  %v310 = vpop.f32.mrb[0].mxu0
  %v311 = vadd.f32 %v76, %v310
  %v312 = vpop.f32.mrb[0].mxu0
  %313 = vmatprep.mubr.bf16.mxu0 0
  %314 = vmatmul.mubr.bf16.gmra.mrb[0].mxu0 %v89
  %v315 = vpop.f32.mrb[0].mxu0
  %v316 = vadd.f32 %v76, %v315
  %v317 = vpop.f32.mrb[0].mxu0
  %v318 = vpop.f32.mrb[0].mxu0
  %v319 = vadd.f32 %v76, %v318
  %v320 = vpop.f32.mrb[0].mxu0
  %321 = vdwg.mxu0
  %v322 = vpack.c.bf16 %v259, %v255
  %v323 = vpack.c.bf16 %v269, %v265
  %324 = vst [vmem:[#allocation2] sm:$0xff] %v322
  %325 = vst [vmem:[#allocation2 + $0x8] sm:$0xff] %v323
  %v326 = vpack.c.bf16 %v261, %v257
  %v327 = vpack.c.bf16 %v271, %v267
  %328 = vst [vmem:[#allocation3] sm:$0xff] %v326
  %329 = vst [vmem:[#allocation3 + $0x8] sm:$0xff] %v327
  %v330 = vpack.c.bf16 %v311, %v308
  %v331 = vpack.c.bf16 %v319, %v316
  %332 = vst [vmem:[#allocation4] sm:$0xff] %v330
  %333 = vst [vmem:[#allocation4 + $0x8] sm:$0xff] %v331
  %v334 = vld [vmem:[%s5] sm:$0xf]
  %v335 = vld [vmem:[%s5 + $0x4] sm:$0xf]
  %v336 = vld [vmem:[%s5 + $0x8] sm:$0xf]
  %v337 = vld [vmem:[%s5 + $0xc] sm:$0xf]
  %v338 = vld [vmem:[%s5 + $0x10] sm:$0xf]
  %v339 = vld [vmem:[%s5 + $0x14] sm:$0xf]
  %v340 = vld [vmem:[%s5 + $0x18] sm:$0xf]
  %v341 = vld [vmem:[%s5 + $0x1c] sm:$0xf]
  %v342 = vld [vmem:[%s5 + $0x20] sm:$0xf]
  %v343 = vld [vmem:[%s5 + $0x24] sm:$0xf]
  %v344 = vld [vmem:[%s5 + $0x28] sm:$0xf]
  %v345 = vld [vmem:[%s5 + $0x2c] sm:$0xf]
  %v346 = vld [vmem:[%s5 + $0x30] sm:$0xf]
  %v347 = vld [vmem:[%s5 + $0x34] sm:$0xf]
  %v348 = vld [vmem:[%s5 + $0x38] sm:$0xf]
  %v349 = vld [vmem:[%s5 + $0x3c] sm:$0xf]
  %v350 = vld [vmem:[%s6] sm:$0x3]
  %v351 = vunpack.c.l.bf16 %v350
  %v352 = vld [vmem:[#allocation2] sm:$0xff]
  %v353 = vld [vmem:[#allocation3] sm:$0xff]
  %v354 = vmul.bf16 %v352, %v353
  %v371 = vunpack.c.l.b16 %v334
  %v372 = vunpack.c.l.b16 %v335
  %v373 = vunpack.c.l.b16 %v336
  %v374 = vunpack.c.l.b16 %v337
  %v375 = vunpack.c.l.b16 %v338
  %v376 = vunpack.c.l.b16 %v339
  %v377 = vunpack.c.l.b16 %v340
  %v378 = vunpack.c.l.b16 %v341
  %v379 = vunpack.c.l.b16 %v342
  %v380 = vunpack.c.l.b16 %v343
  %v381 = vunpack.c.l.b16 %v344
  %v382 = vunpack.c.l.b16 %v345
  %v383 = vunpack.c.l.b16 %v346
  %v384 = vunpack.c.l.b16 %v347
  %v385 = vunpack.c.l.b16 %v348
  %v386 = vunpack.c.l.b16 %v349
  %v387 = vpack.c.b16 %v372, %v371
  %v388 = vpack.c.b16 %v374, %v373
  %v389 = vpack.c.b16 %v376, %v375
  %v390 = vpack.c.b16 %v378, %v377
  %v391 = vpack.c.b16 %v380, %v379
  %v392 = vpack.c.b16 %v382, %v381
  %v393 = vpack.c.b16 %v384, %v383
  %v394 = vpack.c.b16 %v386, %v385
  %403 = vmatprep.subr.bf16.mxu0 0
  %404 = vmatpush1.bf16.msra.mxu0 %v387
  %405 = vmatprep.subr.bf16.mxu0 0
  %406 = vmatpush1.bf16.msra.mxu0 %v388
  %407 = vmatprep.subr.bf16.mxu0 0
  %408 = vmatpush1.bf16.msra.mxu0 %v389
  %409 = vmatprep.subr.bf16.mxu0 0
  %410 = vmatpush1.bf16.msra.mxu0 %v390
  %411 = vmatprep.subr.bf16.mxu0 0
  %412 = vmatpush1.bf16.msra.mxu0 %v391
  %413 = vmatprep.subr.bf16.mxu0 0
  %414 = vmatpush1.bf16.msra.mxu0 %v392
  %415 = vmatprep.subr.bf16.mxu0 0
  %416 = vmatpush1.bf16.msra.mxu0 %v393
  %417 = vmatprep.subr.bf16.mxu0 0
  %418 = vmatpush1.bf16.msra.mxu0 %v394
  %419 = vmatprep.subr.bf16.mxu0 0
  %420 = vmatpush1.bf16.msra.mxu0 0
  %421 = vmatprep.subr.bf16.mxu0 0
  %422 = vmatpush1.bf16.msra.mxu0 0
  %423 = vmatprep.subr.bf16.mxu0 0
  %424 = vmatpush1.bf16.msra.mxu0 0
  %425 = vmatprep.subr.bf16.mxu0 0
  %426 = vmatpush1.bf16.msra.mxu0 0
  %427 = vmatprep.subr.bf16.mxu0 0
  %428 = vmatpush1.bf16.msra.mxu0 0
  %429 = vmatprep.subr.bf16.mxu0 0
  %430 = vmatpush1.bf16.msra.mxu0 0
  %431 = vmatprep.subr.bf16.mxu0 0
  %432 = vmatpush1.bf16.msra.mxu0 0
  %433 = vmatprep.subr.bf16.mxu0 0
  %434 = vmatpush1.bf16.msra.mxu0 0
  %435 = vmatprep.mubr.bf16.mxu0 0
  %436 = vmatmul.mubr.bf16.gmra.mrb[0].mxu0 %v354
  %v437 = vpop.f32.mrb[0].mxu0
  %v438 = vadd.f32 0.0, %v437
  %v439 = vpop.f32.mrb[0].mxu0
  %v440 = vpop.f32.mrb[0].mxu0
  %v441 = vadd.f32 0.0, %v440
  %v442 = vpop.f32.mrb[0].mxu0
  %443 = vdwg.mxu0
  %vm444 = vcmask 31744
  %445 = vst.msk [vmem:[#allocation6] sm:$0xff] %vm444, %v438
  %446 = vst.msk [vmem:[#allocation6 + $0x8] sm:$0xff] %vm444, %v441
  %s447 = scalar_lea.vmem [#allocation3], 8
  %v448 = vld [vmem:[%s447] sm:$0xff]
  %v449 = vmul.bf16 %v352, %v448
  %450 = vmatprep.subr.bf16.mxu0 0
  %451 = vmatpush1.bf16.msra.mxu0 %v387
  %452 = vmatprep.subr.bf16.mxu0 0
  %453 = vmatpush1.bf16.msra.mxu0 %v388
  %454 = vmatprep.subr.bf16.mxu0 0
  %455 = vmatpush1.bf16.msra.mxu0 %v389
  %456 = vmatprep.subr.bf16.mxu0 0
  %457 = vmatpush1.bf16.msra.mxu0 %v390
  %458 = vmatprep.subr.bf16.mxu0 0
  %459 = vmatpush1.bf16.msra.mxu0 %v391
  %460 = vmatprep.subr.bf16.mxu0 0
  %461 = vmatpush1.bf16.msra.mxu0 %v392
  %462 = vmatprep.subr.bf16.mxu0 0
  %463 = vmatpush1.bf16.msra.mxu0 %v393
  %464 = vmatprep.subr.bf16.mxu0 0
  %465 = vmatpush1.bf16.msra.mxu0 %v394
  %466 = vmatprep.subr.bf16.mxu0 0
  %467 = vmatpush1.bf16.msra.mxu0 0
  %468 = vmatprep.subr.bf16.mxu0 0
  %469 = vmatpush1.bf16.msra.mxu0 0
  %470 = vmatprep.subr.bf16.mxu0 0
  %471 = vmatpush1.bf16.msra.mxu0 0
  %472 = vmatprep.subr.bf16.mxu0 0
  %473 = vmatpush1.bf16.msra.mxu0 0
  %474 = vmatprep.subr.bf16.mxu0 0
  %475 = vmatpush1.bf16.msra.mxu0 0
  %476 = vmatprep.subr.bf16.mxu0 0
  %477 = vmatpush1.bf16.msra.mxu0 0
  %478 = vmatprep.subr.bf16.mxu0 0
  %479 = vmatpush1.bf16.msra.mxu0 0
  %480 = vmatprep.subr.bf16.mxu0 0
  %481 = vmatpush1.bf16.msra.mxu0 0
  %482 = vmatprep.mubr.bf16.mxu0 0
  %483 = vmatmul.mubr.bf16.gmra.mrb[0].mxu0 %v449
  %v484 = vpop.f32.mrb[0].mxu0
  %v485 = vadd.f32 0.0, %v484
  %v486 = vpop.f32.mrb[0].mxu0
  %v487 = vpop.f32.mrb[0].mxu0
  %v488 = vadd.f32 0.0, %v487
  %v489 = vpop.f32.mrb[0].mxu0
  %490 = vdwg.mxu0
  %s491 = scalar_lea.vmem [#allocation6], 16
  %492 = vst.msk [vmem:[%s491] sm:$0xff] %vm444, %v485
  %493 = vst.msk [vmem:[%s491 + $0x8] sm:$0xff] %vm444, %v488
  %v494 = vmax.f32 %v438, %v485
  %v495 = vmax.f32 %v441, %v488
  %v496 = vld [vmem:[#allocation6] sm:$0xff]
  %v497 = vld [vmem:[#allocation6 + $0x8] sm:$0xff]
  %v498 = vsub.f32 %v496, %v494
  %v499 = vsub.f32 %v497, %v495
  %v500 = vmul.f32 %v498, 1.442695
  %v501 = vpow.pop %v500
  %v502 = vmul.f32 %v499, 1.442695
  %v503 = vpow.pop %v502
  %v504 = vpack.c.bf16 %v503, %v501
  %v506 = vsel %vm444, %v504, 0
  %vm508 = vcmask 1041408
  %v510 = vsel %vm508, %v350, 0
  %512 = vmatprep.subr.bf16.mxu0 0
  %513 = vmatpush1.bf16.msra.mxu0 %v510
  %514 = vmatprep.subr.bf16.mxu0 0
  %515 = vmatpush1.bf16.msra.mxu0 0
  %516 = vmatprep.subr.bf16.mxu0 0
  %517 = vmatpush1.bf16.msra.mxu0 0
  %518 = vmatprep.subr.bf16.mxu0 0
  %519 = vmatpush1.bf16.msra.mxu0 0
  %520 = vmatprep.subr.bf16.mxu0 0
  %521 = vmatpush1.bf16.msra.mxu0 0
  %522 = vmatprep.subr.bf16.mxu0 0
  %523 = vmatpush1.bf16.msra.mxu0 0
  %524 = vmatprep.subr.bf16.mxu0 0
  %525 = vmatpush1.bf16.msra.mxu0 0
  %526 = vmatprep.subr.bf16.mxu0 0
  %527 = vmatpush1.bf16.msra.mxu0 0
  %528 = vmatprep.subr.bf16.mxu0 0
  %529 = vmatpush1.bf16.msra.mxu0 0
  %530 = vmatprep.subr.bf16.mxu0 0
  %531 = vmatpush1.bf16.msra.mxu0 0
  %532 = vmatprep.subr.bf16.mxu0 0
  %533 = vmatpush1.bf16.msra.mxu0 0
  %534 = vmatprep.subr.bf16.mxu0 0
  %535 = vmatpush1.bf16.msra.mxu0 0
  %536 = vmatprep.subr.bf16.mxu0 0
  %537 = vmatpush1.bf16.msra.mxu0 0
  %538 = vmatprep.subr.bf16.mxu0 0
  %539 = vmatpush1.bf16.msra.mxu0 0
  %540 = vmatprep.subr.bf16.mxu0 0
  %541 = vmatpush1.bf16.msra.mxu0 0
  %542 = vmatprep.subr.bf16.mxu0 0
  %543 = vmatpush1.bf16.msra.mxu0 0
  %544 = vmatprep.mubr.bf16.mxu0 0
  %545 = vmatmul.mubr.bf16.gmra.mrb[0].mxu0 %v506
  %v546 = vpop.f32.mrb[0].mxu0
  %v547 = vadd.f32 0.0, %v546
  %v548 = vpop.f32.mrb[0].mxu0
  %v549 = vpop.f32.mrb[0].mxu0
  %v550 = vadd.f32 0.0, %v549
  %v551 = vpop.f32.mrb[0].mxu0
  %552 = vdwg.mxu0
  %v553 = vld [vmem:[#allocation4] sm:$0xff]
  %v554 = vunpack.c.l.bf16 %v553
  %v555 = vunpack.c.h.bf16 %v553
  %v556 = vmul.f32 %v547, %v554
  %v557 = vmul.f32 %v550, %v555
  %v558 = vld [vmem:[%s491] sm:$0xff]
  %v559 = vld [vmem:[%s491 + $0x8] sm:$0xff]
  %v560 = vsub.f32 %v558, %v494
  %v561 = vsub.f32 %v559, %v495
  %v562 = vmul.f32 %v560, 1.442695
  %v563 = vpow.pop %v562
  %v564 = vmul.f32 %v561, 1.442695
  %v565 = vpow.pop %v564
  %v566 = vadd.f32 %v501, %v563
  %v567 = vadd.f32 %v503, %v565
  %v568 = vpack.c.bf16 %v565, %v563
  %v570 = vsel %vm444, %v568, 0
  %572 = vmatprep.subr.bf16.mxu0 0
  %573 = vmatpush1.bf16.msra.mxu0 %v510
  %574 = vmatprep.subr.bf16.mxu0 0
  %575 = vmatpush1.bf16.msra.mxu0 0
  %576 = vmatprep.subr.bf16.mxu0 0
  %577 = vmatpush1.bf16.msra.mxu0 0
  %578 = vmatprep.subr.bf16.mxu0 0
  %579 = vmatpush1.bf16.msra.mxu0 0
  %580 = vmatprep.subr.bf16.mxu0 0
  %581 = vmatpush1.bf16.msra.mxu0 0
  %582 = vmatprep.subr.bf16.mxu0 0
  %583 = vmatpush1.bf16.msra.mxu0 0
  %584 = vmatprep.subr.bf16.mxu0 0
  %585 = vmatpush1.bf16.msra.mxu0 0
  %586 = vmatprep.subr.bf16.mxu0 0
  %587 = vmatpush1.bf16.msra.mxu0 0
  %588 = vmatprep.subr.bf16.mxu0 0
  %589 = vmatpush1.bf16.msra.mxu0 0
  %590 = vmatprep.subr.bf16.mxu0 0
  %591 = vmatpush1.bf16.msra.mxu0 0
  %592 = vmatprep.subr.bf16.mxu0 0
  %593 = vmatpush1.bf16.msra.mxu0 0
  %594 = vmatprep.subr.bf16.mxu0 0
  %595 = vmatpush1.bf16.msra.mxu0 0
  %596 = vmatprep.subr.bf16.mxu0 0
  %597 = vmatpush1.bf16.msra.mxu0 0
  %598 = vmatprep.subr.bf16.mxu0 0
  %599 = vmatpush1.bf16.msra.mxu0 0
  %600 = vmatprep.subr.bf16.mxu0 0
  %601 = vmatpush1.bf16.msra.mxu0 0
  %602 = vmatprep.subr.bf16.mxu0 0
  %603 = vmatpush1.bf16.msra.mxu0 0
  %604 = vmatprep.mubr.bf16.mxu0 0
  %605 = vmatmul.mubr.bf16.gmra.mrb[0].mxu0 %v570
  %v606 = vpop.f32.mrb[0].mxu0
  %v607 = vadd.f32 0.0, %v606
  %v608 = vpop.f32.mrb[0].mxu0
  %v609 = vpop.f32.mrb[0].mxu0
  %v610 = vadd.f32 0.0, %v609
  %v611 = vpop.f32.mrb[0].mxu0
  %612 = vdwg.mxu0
  %s613 = scalar_lea.vmem [#allocation4], 8
  %v614 = vld [vmem:[%s613] sm:$0xff]
  %v615 = vunpack.c.l.bf16 %v614
  %v616 = vunpack.c.h.bf16 %v614
  %v617 = vmul.f32 %v607, %v615
  %v618 = vmul.f32 %v610, %v616
  %v619 = vadd.f32 %v556, %v617
  %v620 = vadd.f32 %v557, %v618
  %v621 = vrcp.pop %v566
  %v622 = vrcp.pop %v567
  %v624 = vsel %vm444, %v621, 0
  %v627 = vsel %vm444, %v622, 0
  %vm629 = vcmask 1043456
  %v631 = vsel %vm629, %v351, 0
  %633 = vmatprep.subr.mxu0 0.0
  %634 = vmatpush1.msra.mxu0 %v631
  %635 = vmatprep.subr.mxu0 0.0
  %636 = vmatpush1.msra.mxu0 0.0
  %637 = vmatprep.subr.mxu0 0.0
  %638 = vmatpush1.msra.mxu0 0.0
  %639 = vmatprep.subr.mxu0 0.0
  %640 = vmatpush1.msra.mxu0 0.0
  %641 = vmatprep.subr.mxu0 0.0
  %642 = vmatpush1.msra.mxu0 0.0
  %643 = vmatprep.subr.mxu0 0.0
  %644 = vmatpush1.msra.mxu0 0.0
  %645 = vmatprep.subr.mxu0 0.0
  %646 = vmatpush1.msra.mxu0 0.0
  %647 = vmatprep.subr.mxu0 0.0
  %648 = vmatpush1.msra.mxu0 0.0
  %649 = vmatprep.subr.mxu0 0.0
  %650 = vmatpush1.msra.mxu0 0.0
  %651 = vmatprep.subr.mxu0 0.0
  %652 = vmatpush1.msra.mxu0 0.0
  %653 = vmatprep.subr.mxu0 0.0
  %654 = vmatpush1.msra.mxu0 0.0
  %655 = vmatprep.subr.mxu0 0.0
  %656 = vmatpush1.msra.mxu0 0.0
  %657 = vmatprep.subr.mxu0 0.0
  %658 = vmatpush1.msra.mxu0 0.0
  %659 = vmatprep.subr.mxu0 0.0
  %660 = vmatpush1.msra.mxu0 0.0
  %661 = vmatprep.subr.mxu0 0.0
  %662 = vmatpush1.msra.mxu0 0.0
  %663 = vmatprep.subr.mxu0 0.0
  %664 = vmatpush1.msra.mxu0 0.0
  %665 = vmatprep.subr.mxu0 0.0
  %666 = vmatpush1.msra.mxu0 0.0
  %667 = vmatprep.subr.mxu0 0.0
  %668 = vmatpush1.msra.mxu0 0.0
  %669 = vmatprep.subr.mxu0 0.0
  %670 = vmatpush1.msra.mxu0 0.0
  %671 = vmatprep.subr.mxu0 0.0
  %672 = vmatpush1.msra.mxu0 0.0
  %673 = vmatprep.subr.mxu0 0.0
  %674 = vmatpush1.msra.mxu0 0.0
  %675 = vmatprep.subr.mxu0 0.0
  %676 = vmatpush1.msra.mxu0 0.0
  %677 = vmatprep.subr.mxu0 0.0
  %678 = vmatpush1.msra.mxu0 0.0
  %679 = vmatprep.subr.mxu0 0.0
  %680 = vmatpush1.msra.mxu0 0.0
  %681 = vmatprep.subr.mxu0 0.0
  %682 = vmatpush1.msra.mxu0 0.0
  %683 = vmatprep.subr.mxu0 0.0
  %684 = vmatpush1.msra.mxu0 0.0
  %685 = vmatprep.subr.mxu0 0.0
  %686 = vmatpush1.msra.mxu0 0.0
  %687 = vmatprep.subr.mxu0 0.0
  %688 = vmatpush1.msra.mxu0 0.0
  %689 = vmatprep.subr.mxu0 0.0
  %690 = vmatpush1.msra.mxu0 0.0
  %691 = vmatprep.subr.mxu0 0.0
  %692 = vmatpush1.msra.mxu0 0.0
  %693 = vmatprep.subr.mxu0 0.0
  %694 = vmatpush1.msra.mxu0 0.0
  %695 = vmatprep.subr.mxu0 0.0
  %696 = vmatpush1.msra.mxu0 0.0
  %697 = vmatprep.mubr.f32.mxu0 0.0
  %698 = vmatmul.mubr.f32.gmra.mrb[0].mxu0 %v624
  %v699 = vpop.f32.mrb[0].mxu0
  %v700 = vadd.f32 0.0, %v699
  %v701 = vpop.f32.mrb[0].mxu0
  %702 = vmatprep.mubr.f32.mxu0 0.0
  %703 = vmatmul.mubr.f32.gmra.mrb[0].mxu0 %v627
  %v704 = vpop.f32.mrb[0].mxu0
  %v705 = vadd.f32 0.0, %v704
  %v706 = vpop.f32.mrb[0].mxu0
  %707 = vdwg.mxu0
  %v708 = vmul.f32 %v619, %v700
  %v709 = vmul.f32 %v620, %v705
  %710 = vst [vmem:[#allocation5] sm:$0xff] %v708
  %711 = vst [vmem:[#allocation5 + $0x8] sm:$0xff] %v709
  %s712 = scalar_lea.vmem [#allocation2], 8
  %v713 = vld [vmem:[%s712] sm:$0xff]
  %v714 = vld [vmem:[#allocation3] sm:$0xff]
  %v715 = vmul.bf16 %v713, %v714
  %716 = vmatprep.subr.bf16.mxu0 0
  %717 = vmatpush1.bf16.msra.mxu0 %v387
  %718 = vmatprep.subr.bf16.mxu0 0
  %719 = vmatpush1.bf16.msra.mxu0 %v388
  %720 = vmatprep.subr.bf16.mxu0 0
  %721 = vmatpush1.bf16.msra.mxu0 %v389
  %722 = vmatprep.subr.bf16.mxu0 0
  %723 = vmatpush1.bf16.msra.mxu0 %v390
  %724 = vmatprep.subr.bf16.mxu0 0
  %725 = vmatpush1.bf16.msra.mxu0 %v391
  %726 = vmatprep.subr.bf16.mxu0 0
  %727 = vmatpush1.bf16.msra.mxu0 %v392
  %728 = vmatprep.subr.bf16.mxu0 0
  %729 = vmatpush1.bf16.msra.mxu0 %v393
  %730 = vmatprep.subr.bf16.mxu0 0
  %731 = vmatpush1.bf16.msra.mxu0 %v394
  %732 = vmatprep.subr.bf16.mxu0 0
  %733 = vmatpush1.bf16.msra.mxu0 0
  %734 = vmatprep.subr.bf16.mxu0 0
  %735 = vmatpush1.bf16.msra.mxu0 0
  %736 = vmatprep.subr.bf16.mxu0 0
  %737 = vmatpush1.bf16.msra.mxu0 0
  %738 = vmatprep.subr.bf16.mxu0 0
  %739 = vmatpush1.bf16.msra.mxu0 0
  %740 = vmatprep.subr.bf16.mxu0 0
  %741 = vmatpush1.bf16.msra.mxu0 0
  %742 = vmatprep.subr.bf16.mxu0 0
  %743 = vmatpush1.bf16.msra.mxu0 0
  %744 = vmatprep.subr.bf16.mxu0 0
  %745 = vmatpush1.bf16.msra.mxu0 0
  %746 = vmatprep.subr.bf16.mxu0 0
  %747 = vmatpush1.bf16.msra.mxu0 0
  %748 = vmatprep.mubr.bf16.mxu0 0
  %749 = vmatmul.mubr.bf16.gmra.mrb[0].mxu0 %v715
  %v750 = vpop.f32.mrb[0].mxu0
  %v751 = vadd.f32 0.0, %v750
  %v752 = vpop.f32.mrb[0].mxu0
  %v753 = vpop.f32.mrb[0].mxu0
  %v754 = vadd.f32 0.0, %v753
  %v755 = vpop.f32.mrb[0].mxu0
  %756 = vdwg.mxu0
  %757 = vst.msk [vmem:[#allocation6] sm:$0xff] %vm444, %v751
  %758 = vst.msk [vmem:[#allocation6 + $0x8] sm:$0xff] %vm444, %v754
  %v759 = vld [vmem:[%s447] sm:$0xff]
  %v760 = vmul.bf16 %v713, %v759
  %761 = vmatprep.subr.bf16.mxu0 0
  %762 = vmatpush1.bf16.msra.mxu0 %v387
  %763 = vmatprep.subr.bf16.mxu0 0
  %764 = vmatpush1.bf16.msra.mxu0 %v388
  %765 = vmatprep.subr.bf16.mxu0 0
  %766 = vmatpush1.bf16.msra.mxu0 %v389
  %767 = vmatprep.subr.bf16.mxu0 0
  %768 = vmatpush1.bf16.msra.mxu0 %v390
  %769 = vmatprep.subr.bf16.mxu0 0
  %770 = vmatpush1.bf16.msra.mxu0 %v391
  %771 = vmatprep.subr.bf16.mxu0 0
  %772 = vmatpush1.bf16.msra.mxu0 %v392
  %773 = vmatprep.subr.bf16.mxu0 0
  %774 = vmatpush1.bf16.msra.mxu0 %v393
  %775 = vmatprep.subr.bf16.mxu0 0
  %776 = vmatpush1.bf16.msra.mxu0 %v394
  %777 = vmatprep.subr.bf16.mxu0 0
  %778 = vmatpush1.bf16.msra.mxu0 0
  %779 = vmatprep.subr.bf16.mxu0 0
  %780 = vmatpush1.bf16.msra.mxu0 0
  %781 = vmatprep.subr.bf16.mxu0 0
  %782 = vmatpush1.bf16.msra.mxu0 0
  %783 = vmatprep.subr.bf16.mxu0 0
  %784 = vmatpush1.bf16.msra.mxu0 0
  %785 = vmatprep.subr.bf16.mxu0 0
  %786 = vmatpush1.bf16.msra.mxu0 0
  %787 = vmatprep.subr.bf16.mxu0 0
  %788 = vmatpush1.bf16.msra.mxu0 0
  %789 = vmatprep.subr.bf16.mxu0 0
  %790 = vmatpush1.bf16.msra.mxu0 0
  %791 = vmatprep.subr.bf16.mxu0 0
  %792 = vmatpush1.bf16.msra.mxu0 0
  %793 = vmatprep.mubr.bf16.mxu0 0
  %794 = vmatmul.mubr.bf16.gmra.mrb[0].mxu0 %v760
  %v795 = vpop.f32.mrb[0].mxu0
  %v796 = vadd.f32 0.0, %v795
  %v797 = vpop.f32.mrb[0].mxu0
  %v798 = vpop.f32.mrb[0].mxu0
  %v799 = vadd.f32 0.0, %v798
  %v800 = vpop.f32.mrb[0].mxu0
  %801 = vdwg.mxu0
  %802 = vst.msk [vmem:[%s491] sm:$0xff] %vm444, %v796
  %803 = vst.msk [vmem:[%s491 + $0x8] sm:$0xff] %vm444, %v799
  %v804 = vmax.f32 %v751, %v796
  %v805 = vmax.f32 %v754, %v799
  %v806 = vld [vmem:[#allocation6] sm:$0xff]
  %v807 = vld [vmem:[#allocation6 + $0x8] sm:$0xff]
  %v808 = vsub.f32 %v806, %v804
  %v809 = vsub.f32 %v807, %v805
  %v810 = vmul.f32 %v808, 1.442695
  %v811 = vpow.pop %v810
  %v812 = vmul.f32 %v809, 1.442695
  %v813 = vpow.pop %v812
  %v814 = vpack.c.bf16 %v813, %v811
  %v816 = vsel %vm444, %v814, 0
  %818 = vmatprep.subr.bf16.mxu0 0
  %819 = vmatpush1.bf16.msra.mxu0 %v510
  %820 = vmatprep.subr.bf16.mxu0 0
  %821 = vmatpush1.bf16.msra.mxu0 0
  %822 = vmatprep.subr.bf16.mxu0 0
  %823 = vmatpush1.bf16.msra.mxu0 0
  %824 = vmatprep.subr.bf16.mxu0 0
  %825 = vmatpush1.bf16.msra.mxu0 0
  %826 = vmatprep.subr.bf16.mxu0 0
  %827 = vmatpush1.bf16.msra.mxu0 0
  %828 = vmatprep.subr.bf16.mxu0 0
  %829 = vmatpush1.bf16.msra.mxu0 0
  %830 = vmatprep.subr.bf16.mxu0 0
  %831 = vmatpush1.bf16.msra.mxu0 0
  %832 = vmatprep.subr.bf16.mxu0 0
  %833 = vmatpush1.bf16.msra.mxu0 0
  %834 = vmatprep.subr.bf16.mxu0 0
  %835 = vmatpush1.bf16.msra.mxu0 0
  %836 = vmatprep.subr.bf16.mxu0 0
  %837 = vmatpush1.bf16.msra.mxu0 0
  %838 = vmatprep.subr.bf16.mxu0 0
  %839 = vmatpush1.bf16.msra.mxu0 0
  %840 = vmatprep.subr.bf16.mxu0 0
  %841 = vmatpush1.bf16.msra.mxu0 0
  %842 = vmatprep.subr.bf16.mxu0 0
  %843 = vmatpush1.bf16.msra.mxu0 0
  %844 = vmatprep.subr.bf16.mxu0 0
  %845 = vmatpush1.bf16.msra.mxu0 0
  %846 = vmatprep.subr.bf16.mxu0 0
  %847 = vmatpush1.bf16.msra.mxu0 0
  %848 = vmatprep.subr.bf16.mxu0 0
  %849 = vmatpush1.bf16.msra.mxu0 0
  %850 = vmatprep.mubr.bf16.mxu0 0
  %851 = vmatmul.mubr.bf16.gmra.mrb[0].mxu0 %v816
  %v852 = vpop.f32.mrb[0].mxu0
  %v853 = vadd.f32 0.0, %v852
  %v854 = vpop.f32.mrb[0].mxu0
  %v855 = vpop.f32.mrb[0].mxu0
  %v856 = vadd.f32 0.0, %v855
  %v857 = vpop.f32.mrb[0].mxu0
  %858 = vdwg.mxu0
  %v859 = vld [vmem:[#allocation4] sm:$0xff]
  %v860 = vunpack.c.l.bf16 %v859
  %v861 = vunpack.c.h.bf16 %v859
  %v862 = vmul.f32 %v853, %v860
  %v863 = vmul.f32 %v856, %v861
  %v864 = vld [vmem:[%s491] sm:$0xff]
  %v865 = vld [vmem:[%s491 + $0x8] sm:$0xff]
  %v866 = vsub.f32 %v864, %v804
  %v867 = vsub.f32 %v865, %v805
  %v868 = vmul.f32 %v866, 1.442695
  %v869 = vpow.pop %v868
  %v870 = vmul.f32 %v867, 1.442695
  %v871 = vpow.pop %v870
  %v872 = vadd.f32 %v811, %v869
  %v873 = vadd.f32 %v813, %v871
  %v874 = vpack.c.bf16 %v871, %v869
  %v876 = vsel %vm444, %v874, 0
  %878 = vmatprep.subr.bf16.mxu0 0
  %879 = vmatpush1.bf16.msra.mxu0 %v510
  %880 = vmatprep.subr.bf16.mxu0 0
  %881 = vmatpush1.bf16.msra.mxu0 0
  %882 = vmatprep.subr.bf16.mxu0 0
  %883 = vmatpush1.bf16.msra.mxu0 0
  %884 = vmatprep.subr.bf16.mxu0 0
  %885 = vmatpush1.bf16.msra.mxu0 0
  %886 = vmatprep.subr.bf16.mxu0 0
  %887 = vmatpush1.bf16.msra.mxu0 0
  %888 = vmatprep.subr.bf16.mxu0 0
  %889 = vmatpush1.bf16.msra.mxu0 0
  %890 = vmatprep.subr.bf16.mxu0 0
  %891 = vmatpush1.bf16.msra.mxu0 0
  %892 = vmatprep.subr.bf16.mxu0 0
  %893 = vmatpush1.bf16.msra.mxu0 0
  %894 = vmatprep.subr.bf16.mxu0 0
  %895 = vmatpush1.bf16.msra.mxu0 0
  %896 = vmatprep.subr.bf16.mxu0 0
  %897 = vmatpush1.bf16.msra.mxu0 0
  %898 = vmatprep.subr.bf16.mxu0 0
  %899 = vmatpush1.bf16.msra.mxu0 0
  %900 = vmatprep.subr.bf16.mxu0 0
  %901 = vmatpush1.bf16.msra.mxu0 0
  %902 = vmatprep.subr.bf16.mxu0 0
  %903 = vmatpush1.bf16.msra.mxu0 0
  %904 = vmatprep.subr.bf16.mxu0 0
  %905 = vmatpush1.bf16.msra.mxu0 0
  %906 = vmatprep.subr.bf16.mxu0 0
  %907 = vmatpush1.bf16.msra.mxu0 0
  %908 = vmatprep.subr.bf16.mxu0 0
  %909 = vmatpush1.bf16.msra.mxu0 0
  %910 = vmatprep.mubr.bf16.mxu0 0
  %911 = vmatmul.mubr.bf16.gmra.mrb[0].mxu0 %v876
  %v912 = vpop.f32.mrb[0].mxu0
  %v913 = vadd.f32 0.0, %v912
  %v914 = vpop.f32.mrb[0].mxu0
  %v915 = vpop.f32.mrb[0].mxu0
  %v916 = vadd.f32 0.0, %v915
  %v917 = vpop.f32.mrb[0].mxu0
  %918 = vdwg.mxu0
  %v919 = vld [vmem:[%s613] sm:$0xff]
  %v920 = vunpack.c.l.bf16 %v919
  %v921 = vunpack.c.h.bf16 %v919
  %v922 = vmul.f32 %v913, %v920
  %v923 = vmul.f32 %v916, %v921
  %v924 = vadd.f32 %v862, %v922
  %v925 = vadd.f32 %v863, %v923
  %v926 = vrcp.pop %v872
  %v927 = vrcp.pop %v873
  %v929 = vsel %vm444, %v926, 0
  %v932 = vsel %vm444, %v927, 0
  %934 = vmatprep.subr.mxu0 0.0
  %935 = vmatpush1.msra.mxu0 %v631
  %936 = vmatprep.subr.mxu0 0.0
  %937 = vmatpush1.msra.mxu0 0.0
  %938 = vmatprep.subr.mxu0 0.0
  %939 = vmatpush1.msra.mxu0 0.0
  %940 = vmatprep.subr.mxu0 0.0
  %941 = vmatpush1.msra.mxu0 0.0
  %942 = vmatprep.subr.mxu0 0.0
  %943 = vmatpush1.msra.mxu0 0.0
  %944 = vmatprep.subr.mxu0 0.0
  %945 = vmatpush1.msra.mxu0 0.0
  %946 = vmatprep.subr.mxu0 0.0
  %947 = vmatpush1.msra.mxu0 0.0
  %948 = vmatprep.subr.mxu0 0.0
  %949 = vmatpush1.msra.mxu0 0.0
  %950 = vmatprep.subr.mxu0 0.0
  %951 = vmatpush1.msra.mxu0 0.0
  %952 = vmatprep.subr.mxu0 0.0
  %953 = vmatpush1.msra.mxu0 0.0
  %954 = vmatprep.subr.mxu0 0.0
  %955 = vmatpush1.msra.mxu0 0.0
  %956 = vmatprep.subr.mxu0 0.0
  %957 = vmatpush1.msra.mxu0 0.0
  %958 = vmatprep.subr.mxu0 0.0
  %959 = vmatpush1.msra.mxu0 0.0
  %960 = vmatprep.subr.mxu0 0.0
  %961 = vmatpush1.msra.mxu0 0.0
  %962 = vmatprep.subr.mxu0 0.0
  %963 = vmatpush1.msra.mxu0 0.0
  %964 = vmatprep.subr.mxu0 0.0
  %965 = vmatpush1.msra.mxu0 0.0
  %966 = vmatprep.subr.mxu0 0.0
  %967 = vmatpush1.msra.mxu0 0.0
  %968 = vmatprep.subr.mxu0 0.0
  %969 = vmatpush1.msra.mxu0 0.0
  %970 = vmatprep.subr.mxu0 0.0
  %971 = vmatpush1.msra.mxu0 0.0
  %972 = vmatprep.subr.mxu0 0.0
  %973 = vmatpush1.msra.mxu0 0.0
  %974 = vmatprep.subr.mxu0 0.0
  %975 = vmatpush1.msra.mxu0 0.0
  %976 = vmatprep.subr.mxu0 0.0
  %977 = vmatpush1.msra.mxu0 0.0
  %978 = vmatprep.subr.mxu0 0.0
  %979 = vmatpush1.msra.mxu0 0.0
  %980 = vmatprep.subr.mxu0 0.0
  %981 = vmatpush1.msra.mxu0 0.0
  %982 = vmatprep.subr.mxu0 0.0
  %983 = vmatpush1.msra.mxu0 0.0
  %984 = vmatprep.subr.mxu0 0.0
  %985 = vmatpush1.msra.mxu0 0.0
  %986 = vmatprep.subr.mxu0 0.0
  %987 = vmatpush1.msra.mxu0 0.0
  %988 = vmatprep.subr.mxu0 0.0
  %989 = vmatpush1.msra.mxu0 0.0
  %990 = vmatprep.subr.mxu0 0.0
  %991 = vmatpush1.msra.mxu0 0.0
  %992 = vmatprep.subr.mxu0 0.0
  %993 = vmatpush1.msra.mxu0 0.0
  %994 = vmatprep.subr.mxu0 0.0
  %995 = vmatpush1.msra.mxu0 0.0
  %996 = vmatprep.subr.mxu0 0.0
  %997 = vmatpush1.msra.mxu0 0.0
  %998 = vmatprep.mubr.f32.mxu0 0.0
  %999 = vmatmul.mubr.f32.gmra.mrb[0].mxu0 %v929
  %v1000 = vpop.f32.mrb[0].mxu0
  %v1001 = vadd.f32 0.0, %v1000
  %v1002 = vpop.f32.mrb[0].mxu0
  %1003 = vmatprep.mubr.f32.mxu0 0.0
  %1004 = vmatmul.mubr.f32.gmra.mrb[0].mxu0 %v932
  %v1005 = vpop.f32.mrb[0].mxu0
  %v1006 = vadd.f32 0.0, %v1005
  %v1007 = vpop.f32.mrb[0].mxu0
  %1008 = vdwg.mxu0
  %v1009 = vmul.f32 %v924, %v1001
  %v1010 = vmul.f32 %v925, %v1006
  %s1011 = scalar_lea.vmem [#allocation5], 16
  %1012 = vst [vmem:[%s1011] sm:$0xff] %v1009
  %1013 = vst [vmem:[%s1011 + $0x8] sm:$0xff] %v1010
  %v1014 = vld [vmem:[#allocation5] sm:$0xff]
  %v1015 = vld [vmem:[#allocation5 + $0x8] sm:$0xff]
  %v1016 = vld [vmem:[#allocation5 + $0x10] sm:$0xff]
  %v1017 = vld [vmem:[#allocation5 + $0x18] sm:$0xff]
  %v1018 = vpack.c.bf16 %v1015, %v1014
  %v1019 = vpack.c.bf16 %v1017, %v1016
  %v1020 = vld [vmem:[%s3] sm:$0xf]
  %v1021 = vld [vmem:[%s3 + $0x4] sm:$0xf]
  %v1022 = vld [vmem:[%s3 + $0x8] sm:$0xf]
  %v1023 = vld [vmem:[%s3 + $0xc] sm:$0xf]
  %v1024 = vld [vmem:[%s3 + $0x10] sm:$0xf]
  %v1025 = vld [vmem:[%s3 + $0x14] sm:$0xf]
  %v1026 = vld [vmem:[%s3 + $0x18] sm:$0xf]
  %v1027 = vld [vmem:[%s3 + $0x1c] sm:$0xf]
  %v1028 = vld [vmem:[%s3 + $0x20] sm:$0xf]
  %v1029 = vld [vmem:[%s3 + $0x24] sm:$0xf]
  %v1030 = vld [vmem:[%s3 + $0x28] sm:$0xf]
  %v1031 = vld [vmem:[%s3 + $0x2c] sm:$0xf]
  %v1032 = vld [vmem:[%s3 + $0x30] sm:$0xf]
  %v1033 = vld [vmem:[%s3 + $0x34] sm:$0xf]
  %v1034 = vld [vmem:[%s3 + $0x38] sm:$0xf]
  %v1035 = vld [vmem:[%s3 + $0x3c] sm:$0xf]
  %v1036 = vld [vmem:[%s4] sm:$0x1]
  %v1038 = vlaneseq
  %v1039 = vshrl.u32 %v1038, 7
  %v1040 = vsub.s32 0, %v1039
  %v1041 = vrot.slane %v1036, %v1040
  %v1059 = vunpack.c.l.b16 %v1020
  %v1060 = vunpack.c.l.b16 %v1021
  %v1061 = vunpack.c.l.b16 %v1022
  %v1062 = vunpack.c.l.b16 %v1023
  %v1063 = vunpack.c.l.b16 %v1024
  %v1064 = vunpack.c.l.b16 %v1025
  %v1065 = vunpack.c.l.b16 %v1026
  %v1066 = vunpack.c.l.b16 %v1027
  %v1067 = vunpack.c.l.b16 %v1028
  %v1068 = vunpack.c.l.b16 %v1029
  %v1069 = vunpack.c.l.b16 %v1030
  %v1070 = vunpack.c.l.b16 %v1031
  %v1071 = vunpack.c.l.b16 %v1032
  %v1072 = vunpack.c.l.b16 %v1033
  %v1073 = vunpack.c.l.b16 %v1034
  %v1074 = vunpack.c.l.b16 %v1035
  %v1075 = vpack.c.b16 %v1060, %v1059
  %v1076 = vpack.c.b16 %v1062, %v1061
  %v1077 = vpack.c.b16 %v1064, %v1063
  %v1078 = vpack.c.b16 %v1066, %v1065
  %v1079 = vpack.c.b16 %v1068, %v1067
  %v1080 = vpack.c.b16 %v1070, %v1069
  %v1081 = vpack.c.b16 %v1072, %v1071
  %v1082 = vpack.c.b16 %v1074, %v1073
  %1091 = vmatprep.subr.bf16.mxu0 0
  %1092 = vmatpush1.bf16.msra.mxu0 %v1075
  %1093 = vmatprep.subr.bf16.mxu0 0
  %1094 = vmatpush1.bf16.msra.mxu0 %v1076
  %1095 = vmatprep.subr.bf16.mxu0 0
  %1096 = vmatpush1.bf16.msra.mxu0 %v1077
  %1097 = vmatprep.subr.bf16.mxu0 0
  %1098 = vmatpush1.bf16.msra.mxu0 %v1078
  %1099 = vmatprep.subr.bf16.mxu0 0
  %1100 = vmatpush1.bf16.msra.mxu0 %v1079
  %1101 = vmatprep.subr.bf16.mxu0 0
  %1102 = vmatpush1.bf16.msra.mxu0 %v1080
  %1103 = vmatprep.subr.bf16.mxu0 0
  %1104 = vmatpush1.bf16.msra.mxu0 %v1081
  %1105 = vmatprep.subr.bf16.mxu0 0
  %1106 = vmatpush1.bf16.msra.mxu0 %v1082
  %1107 = vmatprep.subr.bf16.mxu0 0
  %1108 = vmatpush1.bf16.msra.mxu0 0
  %1109 = vmatprep.subr.bf16.mxu0 0
  %1110 = vmatpush1.bf16.msra.mxu0 0
  %1111 = vmatprep.subr.bf16.mxu0 0
  %1112 = vmatpush1.bf16.msra.mxu0 0
  %1113 = vmatprep.subr.bf16.mxu0 0
  %1114 = vmatpush1.bf16.msra.mxu0 0
  %1115 = vmatprep.subr.bf16.mxu0 0
  %1116 = vmatpush1.bf16.msra.mxu0 0
  %1117 = vmatprep.subr.bf16.mxu0 0
  %1118 = vmatpush1.bf16.msra.mxu0 0
  %1119 = vmatprep.subr.bf16.mxu0 0
  %1120 = vmatpush1.bf16.msra.mxu0 0
  %1121 = vmatprep.subr.bf16.mxu0 0
  %1122 = vmatpush1.bf16.msra.mxu0 0
  %1123 = vmatprep.mubr.bf16.mxu0 0
  %1124 = vmatmul.mubr.bf16.gmra.mrb[0].mxu0 %v1018
  %v1125 = vpop.f32.mrb[0].mxu0
  %v1126 = vadd.f32 %v1041, %v1125
  %v1127 = vpop.f32.mrb[0].mxu0
  %v1128 = vpop.f32.mrb[0].mxu0
  %v1129 = vadd.f32 %v1041, %v1128
  %v1130 = vpop.f32.mrb[0].mxu0
  %1131 = vmatprep.mubr.bf16.mxu0 0
  %1132 = vmatmul.mubr.bf16.gmra.mrb[0].mxu0 %v1019
  %v1133 = vpop.f32.mrb[0].mxu0
  %v1134 = vadd.f32 %v1041, %v1133
  %v1135 = vpop.f32.mrb[0].mxu0
  %v1136 = vpop.f32.mrb[0].mxu0
  %v1137 = vadd.f32 %v1041, %v1136
  %v1138 = vpop.f32.mrb[0].mxu0
  %1139 = vdwg.mxu0
  %v1140 = vld [vmem:[%s0] sm:$0xf]
  %v1141 = vld [vmem:[%s0 + $0x4] sm:$0xf]
  %v1142 = vld [vmem:[%s0 + $0x8] sm:$0xf]
  %v1143 = vld [vmem:[%s0 + $0xc] sm:$0xf]
  %v1144 = vunpack.c.l.bf16 %v1140
  %v1145 = vunpack.c.l.bf16 %v1141
  %v1146 = vunpack.c.l.bf16 %v1142
  %v1147 = vunpack.c.l.bf16 %v1143
  %v1148 = vadd.f32 %v1126, %v1144
  %v1149 = vadd.f32 %v1129, %v1145
  %v1150 = vadd.f32 %v1134, %v1146
  %v1151 = vadd.f32 %v1137, %v1147
  %v1152 = vpack.c.bf16 %v1149, %v1148
  %v1153 = vpack.c.bf16 %v1151, %v1150
  %v1156 = vunpack.c.l.b16 %v1152
  %v1157 = vunpack.c.h.b16 %v1152
  %v1158 = vunpack.c.l.b16 %v1153
  %v1159 = vunpack.c.h.b16 %v1153
  %v1160 = vpack.c.b16 %v1156, %v1156
  %v1161 = vpack.c.b16 %v1157, %v1157
  %v1162 = vpack.c.b16 %v1158, %v1158
  %v1163 = vpack.c.b16 %v1159, %v1159
  %1168 = vst [vmem:[%s7] sm:$0xf] %v1160
  %1169 = vst [vmem:[%s7 + $0x4] sm:$0xf] %v1161
  %1170 = vst [vmem:[%s7 + $0x8] sm:$0xf] %v1162
  %1171 = vst [vmem:[%s7 + $0xc] sm:$0xf] %v1163
  // Predicated region
  $region30: #{attention_dgcnn_forward.15} parent=0 // pred_check
    _
  $region31: #{attention_dgcnn_forward.15} parent=0 // pred_check_branch
    %1173 = sbr.rel (0) target = $region33
  $region32: #{attention_dgcnn_forward.15} parent=0 // pred_region
    _
  $region33: #{attention_dgcnn_forward.15} parent=0 // pred_fallthru
    _
  // Predicated region
  $region34: #{attention_dgcnn_forward.15} parent=0 // pred_check
    _
  $region35: #{attention_dgcnn_forward.15} parent=0 // pred_check_branch
    %1175 = sbr.rel (0) target = $region37
  $region36: #{attention_dgcnn_forward.15} parent=0 // pred_region
    _
  $region37: #{attention_dgcnn_forward.15} parent=0 // pred_fallthru
    _

// kernel: attention_dgcnn_forward.19
$region0: #{attention_dgcnn_forward.19}
  #allocation0 [shape = 'u32[]', space=smem, size = 0x4, offset = 0x4, fixed_abs, tag = 'smem constant byte address 0x4 - core index']
  #allocation1 [shape = 'u32[144,128]{1,0:T(1,128)}', space=vmem, size = 0x12000, scoped, tag = 'internal scratch']
  %s0 = inlined_call_operand.vmem [shape: f32[2,64], index: 0, kind: input, shape index: {}]
  %s1 = inlined_call_operand.vmem [shape: f32[2,64], index: 1, kind: input, shape index: {}]
  %s2 = inlined_call_operand.vmem [shape: f32[64,512], index: 2, kind: input, shape index: {}]
  %s3 = inlined_call_operand.vmem [shape: f32[64,512], index: 3, kind: input, shape index: {}]
  %s4 = inlined_call_operand.vmem [shape: f32[1,512], index: 4, kind: input, shape index: {}]
  %s5 = inlined_call_operand.vmem [shape: f32[512,256], index: 5, kind: input, shape index: {}]
  %s6 = inlined_call_operand.vmem [shape: f32[1,256], index: 6, kind: input, shape index: {}]
  %s7 = inlined_call_operand.vmem [shape: f32[256,8], index: 7, kind: input, shape index: {}]
  %s8 = inlined_call_operand.vmem [shape: f32[1,8], index: 8, kind: input, shape index: {}]
  %s9 = inlined_call_operand.hbm [shape: f32[2,8], index: 9, kind: output, shape index: {}]
  %s10 = sld [smem:[#allocation0]]
  $region46: #{attention_dgcnn_forward.19} parent=0
    _
  %s12 = ssub.s32 1, %s10
  %s13 = scalar_select 0, %s12, %s10
  $region1: #{attention_dgcnn_forward.19} parent=0
    #allocation2 [shape = 'u8[1024]{0}', space=vmem, size = 0x400, scoped, tag = 'output window, operand 0, single buffered']
    #allocation3 [shape = 's32[1]{0}', space=sflag, size = 0x4, scoped, tag = 'scoped memory for attention_dgcnn_forward.19']
    %14 = vsyncpa [#allocation3], 0
    // Predicated region
    $region2: #{attention_dgcnn_forward.19} parent=1 // pred_check
      _
    $region3: #{attention_dgcnn_forward.19} parent=1 // pred_check_branch
      %16 = sbr.rel (0) target = $region5
    $region4: #{attention_dgcnn_forward.19} parent=1 // pred_region
      _
    $region5: #{attention_dgcnn_forward.19} parent=1 // pred_fallthru
      _
    // Predicated region
    $region6: #{attention_dgcnn_forward.19} parent=1 // pred_check
      _
    $region7: #{attention_dgcnn_forward.19} parent=1 // pred_check_branch
      %18 = sbr.rel (0) target = $region9
    $region8: #{attention_dgcnn_forward.19} parent=1 // pred_region
      _
    $region9: #{attention_dgcnn_forward.19} parent=1 // pred_fallthru
      _
    // Predicated region
    $region10: #{attention_dgcnn_forward.19} parent=1 // pred_check
      _
    $region11: #{attention_dgcnn_forward.19} parent=1 // pred_check_branch
      %20 = sbr.rel (0) target = $region13
    $region12: #{attention_dgcnn_forward.19} parent=1 // pred_region
      _
    $region13: #{attention_dgcnn_forward.19} parent=1 // pred_fallthru
      _
    // Predicated region
    $region14: #{attention_dgcnn_forward.19} parent=1 // pred_check
      _
    $region15: #{attention_dgcnn_forward.19} parent=1 // pred_check_branch
      %22 = sbr.rel (0) target = $region17
    $region16: #{attention_dgcnn_forward.19} parent=1 // pred_region
      _
    $region17: #{attention_dgcnn_forward.19} parent=1 // pred_fallthru
      _
    // Predicated region
    $region18: #{attention_dgcnn_forward.19} parent=1 // pred_check
      _
    $region19: #{attention_dgcnn_forward.19} parent=1 // pred_check_branch
      %24 = sbr.rel (0) target = $region21
    $region20: #{attention_dgcnn_forward.19} parent=1 // pred_region
      _
    $region21: #{attention_dgcnn_forward.19} parent=1 // pred_fallthru
      _
    // Predicated region
    $region22: #{attention_dgcnn_forward.19} parent=1 // pred_check
      _
    $region23: #{attention_dgcnn_forward.19} parent=1 // pred_check_branch
      %26 = sbr.rel (0) target = $region25
    $region24: #{attention_dgcnn_forward.19} parent=1 // pred_region
      _
    $region25: #{attention_dgcnn_forward.19} parent=1 // pred_fallthru
      _
    // Predicated region
    $region26: #{attention_dgcnn_forward.19} parent=1 // pred_check
      _
    $region27: #{attention_dgcnn_forward.19} parent=1 // pred_check_branch
      %28 = sbr.rel (0) target = $region29
    $region28: #{attention_dgcnn_forward.19} parent=1 // pred_region
      _
    $region29: #{attention_dgcnn_forward.19} parent=1 // pred_fallthru
      _
    // Predicated region
    $region30: #{attention_dgcnn_forward.19} parent=1 // pred_check
      _
    $region31: #{attention_dgcnn_forward.19} parent=1 // pred_check_branch
      %30 = sbr.rel (0) target = $region33
    $region32: #{attention_dgcnn_forward.19} parent=1 // pred_region
      _
    $region33: #{attention_dgcnn_forward.19} parent=1 // pred_fallthru
      _
    // Predicated region
    $region34: #{attention_dgcnn_forward.19} parent=1 // pred_check
      _
    $region35: #{attention_dgcnn_forward.19} parent=1 // pred_check_branch
      %32 = sbr.rel (0) target = $region37
    $region36: #{attention_dgcnn_forward.19} parent=1 // pred_region
      _
    $region37: #{attention_dgcnn_forward.19} parent=1 // pred_fallthru
      _
    %v33 = vld [vmem:[%s0] sm:$0x3]
    %v34 = vld [vmem:[%s2] sm:$0xff]
    %v35 = vld [vmem:[%s2 + $0x8] sm:$0xff]
    %v36 = vld [vmem:[%s2 + $0x10] sm:$0xff]
    %v37 = vld [vmem:[%s2 + $0x18] sm:$0xff]
    %v38 = vld [vmem:[%s2 + $0x20] sm:$0xff]
    %v39 = vld [vmem:[%s2 + $0x28] sm:$0xff]
    %v40 = vld [vmem:[%s2 + $0x30] sm:$0xff]
    %v41 = vld [vmem:[%s2 + $0x38] sm:$0xff]
    %v42 = vld [vmem:[%s2 + $0x40] sm:$0xff]
    %v43 = vld [vmem:[%s2 + $0x48] sm:$0xff]
    %v44 = vld [vmem:[%s2 + $0x50] sm:$0xff]
    %v45 = vld [vmem:[%s2 + $0x58] sm:$0xff]
    %v46 = vld [vmem:[%s2 + $0x60] sm:$0xff]
    %v47 = vld [vmem:[%s2 + $0x68] sm:$0xff]
    %v48 = vld [vmem:[%s2 + $0x70] sm:$0xff]
    %v49 = vld [vmem:[%s2 + $0x78] sm:$0xff]
    %v50 = vld [vmem:[%s2 + $0x80] sm:$0xff]
    %v51 = vld [vmem:[%s2 + $0x88] sm:$0xff]
    %v52 = vld [vmem:[%s2 + $0x90] sm:$0xff]
    %v53 = vld [vmem:[%s2 + $0x98] sm:$0xff]
    %v54 = vld [vmem:[%s2 + $0xa0] sm:$0xff]
    %v55 = vld [vmem:[%s2 + $0xa8] sm:$0xff]
    %v56 = vld [vmem:[%s2 + $0xb0] sm:$0xff]
    %v57 = vld [vmem:[%s2 + $0xb8] sm:$0xff]
    %v58 = vld [vmem:[%s2 + $0xc0] sm:$0xff]
    %v59 = vld [vmem:[%s2 + $0xc8] sm:$0xff]
    %v60 = vld [vmem:[%s2 + $0xd0] sm:$0xff]
    %v61 = vld [vmem:[%s2 + $0xd8] sm:$0xff]
    %v62 = vld [vmem:[%s2 + $0xe0] sm:$0xff]
    %v63 = vld [vmem:[%s2 + $0xe8] sm:$0xff]
    %v64 = vld [vmem:[%s2 + $0xf0] sm:$0xff]
    %v65 = vld [vmem:[%s2 + $0xf8] sm:$0xff]
    %v66 = vld [vmem:[%s1] sm:$0x3]
    %v67 = vld [vmem:[%s3] sm:$0xff]
    %v68 = vld [vmem:[%s3 + $0x8] sm:$0xff]
    %v69 = vld [vmem:[%s3 + $0x10] sm:$0xff]
    %v70 = vld [vmem:[%s3 + $0x18] sm:$0xff]
    %v71 = vld [vmem:[%s3 + $0x20] sm:$0xff]
    %v72 = vld [vmem:[%s3 + $0x28] sm:$0xff]
    %v73 = vld [vmem:[%s3 + $0x30] sm:$0xff]
    %v74 = vld [vmem:[%s3 + $0x38] sm:$0xff]
    %v75 = vld [vmem:[%s3 + $0x40] sm:$0xff]
    %v76 = vld [vmem:[%s3 + $0x48] sm:$0xff]
    %v77 = vld [vmem:[%s3 + $0x50] sm:$0xff]
    %v78 = vld [vmem:[%s3 + $0x58] sm:$0xff]
    %v79 = vld [vmem:[%s3 + $0x60] sm:$0xff]
    %v80 = vld [vmem:[%s3 + $0x68] sm:$0xff]
    %v81 = vld [vmem:[%s3 + $0x70] sm:$0xff]
    %v82 = vld [vmem:[%s3 + $0x78] sm:$0xff]
    %v83 = vld [vmem:[%s3 + $0x80] sm:$0xff]
    %v84 = vld [vmem:[%s3 + $0x88] sm:$0xff]
    %v85 = vld [vmem:[%s3 + $0x90] sm:$0xff]
    %v86 = vld [vmem:[%s3 + $0x98] sm:$0xff]
    %v87 = vld [vmem:[%s3 + $0xa0] sm:$0xff]
    %v88 = vld [vmem:[%s3 + $0xa8] sm:$0xff]
    %v89 = vld [vmem:[%s3 + $0xb0] sm:$0xff]
    %v90 = vld [vmem:[%s3 + $0xb8] sm:$0xff]
    %v91 = vld [vmem:[%s3 + $0xc0] sm:$0xff]
    %v92 = vld [vmem:[%s3 + $0xc8] sm:$0xff]
    %v93 = vld [vmem:[%s3 + $0xd0] sm:$0xff]
    %v94 = vld [vmem:[%s3 + $0xd8] sm:$0xff]
    %v95 = vld [vmem:[%s3 + $0xe0] sm:$0xff]
    %v96 = vld [vmem:[%s3 + $0xe8] sm:$0xff]
    %v97 = vld [vmem:[%s3 + $0xf0] sm:$0xff]
    %v98 = vld [vmem:[%s3 + $0xf8] sm:$0xff]
    %vm99 = vcmask 523264
    %v101 = vsel %vm99, %v66, 0
    %103 = vmatprep.subr.mxu0 %v68
    %104 = vmatpush1.msra.mxu0 %v67
    %105 = vmatprep.subr.mxu0 %v72
    %106 = vmatpush1.msra.mxu0 %v71
    %107 = vmatprep.subr.mxu0 %v76
    %108 = vmatpush1.msra.mxu0 %v75
    %109 = vmatprep.subr.mxu0 %v80
    %110 = vmatpush1.msra.mxu0 %v79
    %111 = vmatprep.subr.mxu0 %v84
    %112 = vmatpush1.msra.mxu0 %v83
    %113 = vmatprep.subr.mxu0 %v88
    %114 = vmatpush1.msra.mxu0 %v87
    %115 = vmatprep.subr.mxu0 %v92
    %116 = vmatpush1.msra.mxu0 %v91
    %117 = vmatprep.subr.mxu0 %v96
    %118 = vmatpush1.msra.mxu0 %v95
    %119 = vmatprep.subr.mxu0 0.0
    %120 = vmatpush1.msra.mxu0 0.0
    %121 = vmatprep.subr.mxu0 0.0
    %122 = vmatpush1.msra.mxu0 0.0
    %123 = vmatprep.subr.mxu0 0.0
    %124 = vmatpush1.msra.mxu0 0.0
    %125 = vmatprep.subr.mxu0 0.0
    %126 = vmatpush1.msra.mxu0 0.0
    %127 = vmatprep.subr.mxu0 0.0
    %128 = vmatpush1.msra.mxu0 0.0
    %129 = vmatprep.subr.mxu0 0.0
    %130 = vmatpush1.msra.mxu0 0.0
    %131 = vmatprep.subr.mxu0 0.0
    %132 = vmatpush1.msra.mxu0 0.0
    %133 = vmatprep.subr.mxu0 0.0
    %134 = vmatpush1.msra.mxu0 0.0
    %135 = vmatprep.subr.mxu0 0.0
    %136 = vmatpush1.msra.mxu0 0.0
    %137 = vmatprep.subr.mxu0 0.0
    %138 = vmatpush1.msra.mxu0 0.0
    %139 = vmatprep.subr.mxu0 0.0
    %140 = vmatpush1.msra.mxu0 0.0
    %141 = vmatprep.subr.mxu0 0.0
    %142 = vmatpush1.msra.mxu0 0.0
    %143 = vmatprep.subr.mxu0 0.0
    %144 = vmatpush1.msra.mxu0 0.0
    %145 = vmatprep.subr.mxu0 0.0
    %146 = vmatpush1.msra.mxu0 0.0
    %147 = vmatprep.subr.mxu0 0.0
    %148 = vmatpush1.msra.mxu0 0.0
    %149 = vmatprep.subr.mxu0 0.0
    %150 = vmatpush1.msra.mxu0 0.0
    %151 = vmatprep.subr.mxu0 0.0
    %152 = vmatpush1.msra.mxu0 0.0
    %153 = vmatprep.subr.mxu0 0.0
    %154 = vmatpush1.msra.mxu0 0.0
    %155 = vmatprep.subr.mxu0 0.0
    %156 = vmatpush1.msra.mxu0 0.0
    %157 = vmatprep.subr.mxu0 0.0
    %158 = vmatpush1.msra.mxu0 0.0
    %159 = vmatprep.subr.mxu0 0.0
    %160 = vmatpush1.msra.mxu0 0.0
    %161 = vmatprep.subr.mxu0 0.0
    %162 = vmatpush1.msra.mxu0 0.0
    %163 = vmatprep.subr.mxu0 0.0
    %164 = vmatpush1.msra.mxu0 0.0
    %165 = vmatprep.subr.mxu0 0.0
    %166 = vmatpush1.msra.mxu0 0.0
    %167 = vmatprep.mubr.f32.mxu0 0.0
    %168 = vmatmul.mubr.f32.gmra.mrb[0].mxu0 %v101
    %v169 = vpop.f32.mrb[0].mxu0
    %v170 = vadd.f32 0.0, %v169
    %v171 = vpop.f32.mrb[0].mxu0
    %v172 = vadd.f32 0.0, %v171
    %173 = vdwg.mxu0
    %174 = vmatprep.subr.mxu0 %v70
    %175 = vmatpush1.msra.mxu0 %v69
    %176 = vmatprep.subr.mxu0 %v74
    %177 = vmatpush1.msra.mxu0 %v73
    %178 = vmatprep.subr.mxu0 %v78
    %179 = vmatpush1.msra.mxu0 %v77
    %180 = vmatprep.subr.mxu0 %v82
    %181 = vmatpush1.msra.mxu0 %v81
    %182 = vmatprep.subr.mxu0 %v86
    %183 = vmatpush1.msra.mxu0 %v85
    %184 = vmatprep.subr.mxu0 %v90
    %185 = vmatpush1.msra.mxu0 %v89
    %186 = vmatprep.subr.mxu0 %v94
    %187 = vmatpush1.msra.mxu0 %v93
    %188 = vmatprep.subr.mxu0 %v98
    %189 = vmatpush1.msra.mxu0 %v97
    %190 = vmatprep.subr.mxu0 0.0
    %191 = vmatpush1.msra.mxu0 0.0
    %192 = vmatprep.subr.mxu0 0.0
    %193 = vmatpush1.msra.mxu0 0.0
    %194 = vmatprep.subr.mxu0 0.0
    %195 = vmatpush1.msra.mxu0 0.0
    %196 = vmatprep.subr.mxu0 0.0
    %197 = vmatpush1.msra.mxu0 0.0
    %198 = vmatprep.subr.mxu0 0.0
    %199 = vmatpush1.msra.mxu0 0.0
    %200 = vmatprep.subr.mxu0 0.0
    %201 = vmatpush1.msra.mxu0 0.0
    %202 = vmatprep.subr.mxu0 0.0
    %203 = vmatpush1.msra.mxu0 0.0
    %204 = vmatprep.subr.mxu0 0.0
    %205 = vmatpush1.msra.mxu0 0.0
    %206 = vmatprep.subr.mxu0 0.0
    %207 = vmatpush1.msra.mxu0 0.0
    %208 = vmatprep.subr.mxu0 0.0
    %209 = vmatpush1.msra.mxu0 0.0
    %210 = vmatprep.subr.mxu0 0.0
    %211 = vmatpush1.msra.mxu0 0.0
    %212 = vmatprep.subr.mxu0 0.0
    %213 = vmatpush1.msra.mxu0 0.0
    %214 = vmatprep.subr.mxu0 0.0
    %215 = vmatpush1.msra.mxu0 0.0
    %216 = vmatprep.subr.mxu0 0.0
    %217 = vmatpush1.msra.mxu0 0.0
    %218 = vmatprep.subr.mxu0 0.0
    %219 = vmatpush1.msra.mxu0 0.0
    %220 = vmatprep.subr.mxu0 0.0
    %221 = vmatpush1.msra.mxu0 0.0
    %222 = vmatprep.subr.mxu0 0.0
    %223 = vmatpush1.msra.mxu0 0.0
    %224 = vmatprep.subr.mxu0 0.0
    %225 = vmatpush1.msra.mxu0 0.0
    %226 = vmatprep.subr.mxu0 0.0
    %227 = vmatpush1.msra.mxu0 0.0
    %228 = vmatprep.subr.mxu0 0.0
    %229 = vmatpush1.msra.mxu0 0.0
    %230 = vmatprep.subr.mxu0 0.0
    %231 = vmatpush1.msra.mxu0 0.0
    %232 = vmatprep.subr.mxu0 0.0
    %233 = vmatpush1.msra.mxu0 0.0
    %234 = vmatprep.subr.mxu0 0.0
    %235 = vmatpush1.msra.mxu0 0.0
    %236 = vmatprep.subr.mxu0 0.0
    %237 = vmatpush1.msra.mxu0 0.0
    %238 = vmatprep.mubr.f32.mxu0 0.0
    %239 = vmatmul.mubr.f32.gmra.mrb[0].mxu0 %v101
    %v240 = vpop.f32.mrb[0].mxu0
    %v241 = vadd.f32 0.0, %v240
    %v242 = vpop.f32.mrb[0].mxu0
    %v243 = vadd.f32 0.0, %v242
    %244 = vdwg.mxu0
    %v246 = vsel %vm99, %v33, 0
    %248 = vmatprep.subr.mxu0 %v35
    %249 = vmatpush1.msra.mxu0 %v34
    %250 = vmatprep.subr.mxu0 %v39
    %251 = vmatpush1.msra.mxu0 %v38
    %252 = vmatprep.subr.mxu0 %v43
    %253 = vmatpush1.msra.mxu0 %v42
    %254 = vmatprep.subr.mxu0 %v47
    %255 = vmatpush1.msra.mxu0 %v46
    %256 = vmatprep.subr.mxu0 %v51
    %257 = vmatpush1.msra.mxu0 %v50
    %258 = vmatprep.subr.mxu0 %v55
    %259 = vmatpush1.msra.mxu0 %v54
    %260 = vmatprep.subr.mxu0 %v59
    %261 = vmatpush1.msra.mxu0 %v58
    %262 = vmatprep.subr.mxu0 %v63
    %263 = vmatpush1.msra.mxu0 %v62
    %264 = vmatprep.subr.mxu0 0.0
    %265 = vmatpush1.msra.mxu0 0.0
    %266 = vmatprep.subr.mxu0 0.0
    %267 = vmatpush1.msra.mxu0 0.0
    %268 = vmatprep.subr.mxu0 0.0
    %269 = vmatpush1.msra.mxu0 0.0
    %270 = vmatprep.subr.mxu0 0.0
    %271 = vmatpush1.msra.mxu0 0.0
    %272 = vmatprep.subr.mxu0 0.0
    %273 = vmatpush1.msra.mxu0 0.0
    %274 = vmatprep.subr.mxu0 0.0
    %275 = vmatpush1.msra.mxu0 0.0
    %276 = vmatprep.subr.mxu0 0.0
    %277 = vmatpush1.msra.mxu0 0.0
    %278 = vmatprep.subr.mxu0 0.0
    %279 = vmatpush1.msra.mxu0 0.0
    %280 = vmatprep.subr.mxu0 0.0
    %281 = vmatpush1.msra.mxu0 0.0
    %282 = vmatprep.subr.mxu0 0.0
    %283 = vmatpush1.msra.mxu0 0.0
    %284 = vmatprep.subr.mxu0 0.0
    %285 = vmatpush1.msra.mxu0 0.0
    %286 = vmatprep.subr.mxu0 0.0
    %287 = vmatpush1.msra.mxu0 0.0
    %288 = vmatprep.subr.mxu0 0.0
    %289 = vmatpush1.msra.mxu0 0.0
    %290 = vmatprep.subr.mxu0 0.0
    %291 = vmatpush1.msra.mxu0 0.0
    %292 = vmatprep.subr.mxu0 0.0
    %293 = vmatpush1.msra.mxu0 0.0
    %294 = vmatprep.subr.mxu0 0.0
    %295 = vmatpush1.msra.mxu0 0.0
    %296 = vmatprep.subr.mxu0 0.0
    %297 = vmatpush1.msra.mxu0 0.0
    %298 = vmatprep.subr.mxu0 0.0
    %299 = vmatpush1.msra.mxu0 0.0
    %300 = vmatprep.subr.mxu0 0.0
    %301 = vmatpush1.msra.mxu0 0.0
    %302 = vmatprep.subr.mxu0 0.0
    %303 = vmatpush1.msra.mxu0 0.0
    %304 = vmatprep.subr.mxu0 0.0
    %305 = vmatpush1.msra.mxu0 0.0
    %306 = vmatprep.subr.mxu0 0.0
    %307 = vmatpush1.msra.mxu0 0.0
    %308 = vmatprep.subr.mxu0 0.0
    %309 = vmatpush1.msra.mxu0 0.0
    %310 = vmatprep.subr.mxu0 0.0
    %311 = vmatpush1.msra.mxu0 0.0
    %312 = vmatprep.mubr.f32.mxu0 0.0
    %313 = vmatmul.mubr.f32.gmra.mrb[0].mxu0 %v246
    %v314 = vpop.f32.mrb[0].mxu0
    %v315 = vadd.f32 %v170, %v314
    %v316 = vpop.f32.mrb[0].mxu0
    %v317 = vadd.f32 %v172, %v316
    %318 = vdwg.mxu0
    %319 = vmatprep.subr.mxu0 %v37
    %320 = vmatpush1.msra.mxu0 %v36
    %321 = vmatprep.subr.mxu0 %v41
    %322 = vmatpush1.msra.mxu0 %v40
    %323 = vmatprep.subr.mxu0 %v45
    %324 = vmatpush1.msra.mxu0 %v44
    %325 = vmatprep.subr.mxu0 %v49
    %326 = vmatpush1.msra.mxu0 %v48
    %327 = vmatprep.subr.mxu0 %v53
    %328 = vmatpush1.msra.mxu0 %v52
    %329 = vmatprep.subr.mxu0 %v57
    %330 = vmatpush1.msra.mxu0 %v56
    %331 = vmatprep.subr.mxu0 %v61
    %332 = vmatpush1.msra.mxu0 %v60
    %333 = vmatprep.subr.mxu0 %v65
    %334 = vmatpush1.msra.mxu0 %v64
    %335 = vmatprep.subr.mxu0 0.0
    %336 = vmatpush1.msra.mxu0 0.0
    %337 = vmatprep.subr.mxu0 0.0
    %338 = vmatpush1.msra.mxu0 0.0
    %339 = vmatprep.subr.mxu0 0.0
    %340 = vmatpush1.msra.mxu0 0.0
    %341 = vmatprep.subr.mxu0 0.0
    %342 = vmatpush1.msra.mxu0 0.0
    %343 = vmatprep.subr.mxu0 0.0
    %344 = vmatpush1.msra.mxu0 0.0
    %345 = vmatprep.subr.mxu0 0.0
    %346 = vmatpush1.msra.mxu0 0.0
    %347 = vmatprep.subr.mxu0 0.0
    %348 = vmatpush1.msra.mxu0 0.0
    %349 = vmatprep.subr.mxu0 0.0
    %350 = vmatpush1.msra.mxu0 0.0
    %351 = vmatprep.subr.mxu0 0.0
    %352 = vmatpush1.msra.mxu0 0.0
    %353 = vmatprep.subr.mxu0 0.0
    %354 = vmatpush1.msra.mxu0 0.0
    %355 = vmatprep.subr.mxu0 0.0
    %356 = vmatpush1.msra.mxu0 0.0
    %357 = vmatprep.subr.mxu0 0.0
    %358 = vmatpush1.msra.mxu0 0.0
    %359 = vmatprep.subr.mxu0 0.0
    %360 = vmatpush1.msra.mxu0 0.0
    %361 = vmatprep.subr.mxu0 0.0
    %362 = vmatpush1.msra.mxu0 0.0
    %363 = vmatprep.subr.mxu0 0.0
    %364 = vmatpush1.msra.mxu0 0.0
    %365 = vmatprep.subr.mxu0 0.0
    %366 = vmatpush1.msra.mxu0 0.0
    %367 = vmatprep.subr.mxu0 0.0
    %368 = vmatpush1.msra.mxu0 0.0
    %369 = vmatprep.subr.mxu0 0.0
    %370 = vmatpush1.msra.mxu0 0.0
    %371 = vmatprep.subr.mxu0 0.0
    %372 = vmatpush1.msra.mxu0 0.0
    %373 = vmatprep.subr.mxu0 0.0
    %374 = vmatpush1.msra.mxu0 0.0
    %375 = vmatprep.subr.mxu0 0.0
    %376 = vmatpush1.msra.mxu0 0.0
    %377 = vmatprep.subr.mxu0 0.0
    %378 = vmatpush1.msra.mxu0 0.0
    %379 = vmatprep.subr.mxu0 0.0
    %380 = vmatpush1.msra.mxu0 0.0
    %381 = vmatprep.subr.mxu0 0.0
    %382 = vmatpush1.msra.mxu0 0.0
    %383 = vmatprep.mubr.f32.mxu0 0.0
    %384 = vmatmul.mubr.f32.gmra.mrb[0].mxu0 %v246
    %v385 = vpop.f32.mrb[0].mxu0
    %v386 = vadd.f32 %v241, %v385
    %v387 = vpop.f32.mrb[0].mxu0
    %v388 = vadd.f32 %v243, %v387
    %389 = vdwg.mxu0
    %v390 = vld [vmem:[%s4] sm:$0xf]
    %v392 = vlaneseq
    %v393 = vshrl.u32 %v392, 7
    %v394 = vsub.s32 0, %v393
    %v395 = vrot.slane %v390, %v394
    %v396 = vlaneseq
    %v397 = vshrl.u32 %v396, 7
    %v398 = vsub.s32 1, %v397
    %v399 = vrot.slane %v390, %v398
    %v400 = vlaneseq
    %v401 = vshrl.u32 %v400, 7
    %v402 = vsub.s32 2, %v401
    %v403 = vrot.slane %v390, %v402
    %v404 = vlaneseq
    %v405 = vshrl.u32 %v404, 7
    %v406 = vsub.s32 3, %v405
    %v407 = vrot.slane %v390, %v406
    %v412 = vadd.f32 %v315, %v395
    %v413 = vadd.f32 %v317, %v399
    %v414 = vadd.f32 %v386, %v403
    %v415 = vadd.f32 %v388, %v407
    %vm416 = vcmp.gt.f32.partialorder %v412, 0.0
    %vm417 = vcmp.gt.f32.partialorder %v413, 0.0
    %vm418 = vcmp.gt.f32.partialorder %v414, 0.0
    %vm419 = vcmp.gt.f32.partialorder %v415, 0.0
    %v420 = vmul.f32 %v412, 0.2
    %v421 = vmul.f32 %v413, 0.2
    %v422 = vmul.f32 %v414, 0.2
    %v423 = vmul.f32 %v415, 0.2
    %v424 = vsel %vm416, %v412, %v420
    %v425 = vsel %vm417, %v413, %v421
    %v426 = vsel %vm418, %v414, %v422
    %v427 = vsel %vm419, %v415, %v423
    %v428 = vld [vmem:[%s5] sm:$0xff]
    %v429 = vld [vmem:[%s5 + $0x8] sm:$0xff]
    %v430 = vld [vmem:[%s5 + $0x10] sm:$0xff]
    %v431 = vld [vmem:[%s5 + $0x18] sm:$0xff]
    %v432 = vld [vmem:[%s5 + $0x20] sm:$0xff]
    %v433 = vld [vmem:[%s5 + $0x28] sm:$0xff]
    %v434 = vld [vmem:[%s5 + $0x30] sm:$0xff]
    %v435 = vld [vmem:[%s5 + $0x38] sm:$0xff]
    %v436 = vld [vmem:[%s5 + $0x40] sm:$0xff]
    %v437 = vld [vmem:[%s5 + $0x48] sm:$0xff]
    %v438 = vld [vmem:[%s5 + $0x50] sm:$0xff]
    %v439 = vld [vmem:[%s5 + $0x58] sm:$0xff]
    %v440 = vld [vmem:[%s5 + $0x60] sm:$0xff]
    %v441 = vld [vmem:[%s5 + $0x68] sm:$0xff]
    %v442 = vld [vmem:[%s5 + $0x70] sm:$0xff]
    %v443 = vld [vmem:[%s5 + $0x78] sm:$0xff]
    %v444 = vld [vmem:[%s5 + $0x80] sm:$0xff]
    %v445 = vld [vmem:[%s5 + $0x88] sm:$0xff]
    %v446 = vld [vmem:[%s5 + $0x90] sm:$0xff]
    %v447 = vld [vmem:[%s5 + $0x98] sm:$0xff]
    %v448 = vld [vmem:[%s5 + $0xa0] sm:$0xff]
    %v449 = vld [vmem:[%s5 + $0xa8] sm:$0xff]
    %v450 = vld [vmem:[%s5 + $0xb0] sm:$0xff]
    %v451 = vld [vmem:[%s5 + $0xb8] sm:$0xff]
    %v452 = vld [vmem:[%s5 + $0xc0] sm:$0xff]
    %v453 = vld [vmem:[%s5 + $0xc8] sm:$0xff]
    %v454 = vld [vmem:[%s5 + $0xd0] sm:$0xff]
    %v455 = vld [vmem:[%s5 + $0xd8] sm:$0xff]
    %v456 = vld [vmem:[%s5 + $0xe0] sm:$0xff]
    %v457 = vld [vmem:[%s5 + $0xe8] sm:$0xff]
    %v458 = vld [vmem:[%s5 + $0xf0] sm:$0xff]
    %v459 = vld [vmem:[%s5 + $0xf8] sm:$0xff]
    %v460 = vld [vmem:[%s5 + $0x100] sm:$0xff]
    %v461 = vld [vmem:[%s5 + $0x108] sm:$0xff]
    %v462 = vld [vmem:[%s5 + $0x110] sm:$0xff]
    %v463 = vld [vmem:[%s5 + $0x118] sm:$0xff]
    %v464 = vld [vmem:[%s5 + $0x120] sm:$0xff]
    %v465 = vld [vmem:[%s5 + $0x128] sm:$0xff]
    %v466 = vld [vmem:[%s5 + $0x130] sm:$0xff]
    %v467 = vld [vmem:[%s5 + $0x138] sm:$0xff]
    %v468 = vld [vmem:[%s5 + $0x140] sm:$0xff]
    %v469 = vld [vmem:[%s5 + $0x148] sm:$0xff]
    %v470 = vld [vmem:[%s5 + $0x150] sm:$0xff]
    %v471 = vld [vmem:[%s5 + $0x158] sm:$0xff]
    %v472 = vld [vmem:[%s5 + $0x160] sm:$0xff]
    %v473 = vld [vmem:[%s5 + $0x168] sm:$0xff]
    %v474 = vld [vmem:[%s5 + $0x170] sm:$0xff]
    %v475 = vld [vmem:[%s5 + $0x178] sm:$0xff]
    %v476 = vld [vmem:[%s5 + $0x180] sm:$0xff]
    %v477 = vld [vmem:[%s5 + $0x188] sm:$0xff]
    %v478 = vld [vmem:[%s5 + $0x190] sm:$0xff]
    %v479 = vld [vmem:[%s5 + $0x198] sm:$0xff]
    %v480 = vld [vmem:[%s5 + $0x1a0] sm:$0xff]
    %v481 = vld [vmem:[%s5 + $0x1a8] sm:$0xff]
    %v482 = vld [vmem:[%s5 + $0x1b0] sm:$0xff]
    %v483 = vld [vmem:[%s5 + $0x1b8] sm:$0xff]
    %v484 = vld [vmem:[%s5 + $0x1c0] sm:$0xff]
    %v485 = vld [vmem:[%s5 + $0x1c8] sm:$0xff]
    %v486 = vld [vmem:[%s5 + $0x1d0] sm:$0xff]
    %v487 = vld [vmem:[%s5 + $0x1d8] sm:$0xff]
    %v488 = vld [vmem:[%s5 + $0x1e0] sm:$0xff]
    %v489 = vld [vmem:[%s5 + $0x1e8] sm:$0xff]
    %v490 = vld [vmem:[%s5 + $0x1f0] sm:$0xff]
    %v491 = vld [vmem:[%s5 + $0x1f8] sm:$0xff]
    %v492 = vld [vmem:[%s5 + $0x200] sm:$0xff]
    %v493 = vld [vmem:[%s5 + $0x208] sm:$0xff]
    %v494 = vld [vmem:[%s5 + $0x210] sm:$0xff]
    %v495 = vld [vmem:[%s5 + $0x218] sm:$0xff]
    %v496 = vld [vmem:[%s5 + $0x220] sm:$0xff]
    %v497 = vld [vmem:[%s5 + $0x228] sm:$0xff]
    %v498 = vld [vmem:[%s5 + $0x230] sm:$0xff]
    %v499 = vld [vmem:[%s5 + $0x238] sm:$0xff]
    %v500 = vld [vmem:[%s5 + $0x240] sm:$0xff]
    %v501 = vld [vmem:[%s5 + $0x248] sm:$0xff]
    %v502 = vld [vmem:[%s5 + $0x250] sm:$0xff]
    %v503 = vld [vmem:[%s5 + $0x258] sm:$0xff]
    %v504 = vld [vmem:[%s5 + $0x260] sm:$0xff]
    %v505 = vld [vmem:[%s5 + $0x268] sm:$0xff]
    %v506 = vld [vmem:[%s5 + $0x270] sm:$0xff]
    %v507 = vld [vmem:[%s5 + $0x278] sm:$0xff]
    %v508 = vld [vmem:[%s5 + $0x280] sm:$0xff]
    %v509 = vld [vmem:[%s5 + $0x288] sm:$0xff]
    %v510 = vld [vmem:[%s5 + $0x290] sm:$0xff]
    %v511 = vld [vmem:[%s5 + $0x298] sm:$0xff]
    %v512 = vld [vmem:[%s5 + $0x2a0] sm:$0xff]
    %v513 = vld [vmem:[%s5 + $0x2a8] sm:$0xff]
    %v514 = vld [vmem:[%s5 + $0x2b0] sm:$0xff]
    %v515 = vld [vmem:[%s5 + $0x2b8] sm:$0xff]
    %v516 = vld [vmem:[%s5 + $0x2c0] sm:$0xff]
    %v517 = vld [vmem:[%s5 + $0x2c8] sm:$0xff]
    %v518 = vld [vmem:[%s5 + $0x2d0] sm:$0xff]
    %v519 = vld [vmem:[%s5 + $0x2d8] sm:$0xff]
    %v520 = vld [vmem:[%s5 + $0x2e0] sm:$0xff]
    %v521 = vld [vmem:[%s5 + $0x2e8] sm:$0xff]
    %v522 = vld [vmem:[%s5 + $0x2f0] sm:$0xff]
    %v523 = vld [vmem:[%s5 + $0x2f8] sm:$0xff]
    %v524 = vld [vmem:[%s5 + $0x300] sm:$0xff]
    %v525 = vld [vmem:[%s5 + $0x308] sm:$0xff]
    %v526 = vld [vmem:[%s5 + $0x310] sm:$0xff]
    %v527 = vld [vmem:[%s5 + $0x318] sm:$0xff]
    %v528 = vld [vmem:[%s5 + $0x320] sm:$0xff]
    %v529 = vld [vmem:[%s5 + $0x328] sm:$0xff]
    %v530 = vld [vmem:[%s5 + $0x330] sm:$0xff]
    %v531 = vld [vmem:[%s5 + $0x338] sm:$0xff]
    %v532 = vld [vmem:[%s5 + $0x340] sm:$0xff]
    %v533 = vld [vmem:[%s5 + $0x348] sm:$0xff]
    %v534 = vld [vmem:[%s5 + $0x350] sm:$0xff]
    %v535 = vld [vmem:[%s5 + $0x358] sm:$0xff]
    %v536 = vld [vmem:[%s5 + $0x360] sm:$0xff]
    %v537 = vld [vmem:[%s5 + $0x368] sm:$0xff]
    %v538 = vld [vmem:[%s5 + $0x370] sm:$0xff]
    %v539 = vld [vmem:[%s5 + $0x378] sm:$0xff]
    %v540 = vld [vmem:[%s5 + $0x380] sm:$0xff]
    %v541 = vld [vmem:[%s5 + $0x388] sm:$0xff]
    %v542 = vld [vmem:[%s5 + $0x390] sm:$0xff]
    %v543 = vld [vmem:[%s5 + $0x398] sm:$0xff]
    %v544 = vld [vmem:[%s5 + $0x3a0] sm:$0xff]
    %v545 = vld [vmem:[%s5 + $0x3a8] sm:$0xff]
    %v546 = vld [vmem:[%s5 + $0x3b0] sm:$0xff]
    %v547 = vld [vmem:[%s5 + $0x3b8] sm:$0xff]
    %v548 = vld [vmem:[%s5 + $0x3c0] sm:$0xff]
    %v549 = vld [vmem:[%s5 + $0x3c8] sm:$0xff]
    %v550 = vld [vmem:[%s5 + $0x3d0] sm:$0xff]
    %v551 = vld [vmem:[%s5 + $0x3d8] sm:$0xff]
    %v552 = vld [vmem:[%s5 + $0x3e0] sm:$0xff]
    %v553 = vld [vmem:[%s5 + $0x3e8] sm:$0xff]
    %v554 = vld [vmem:[%s5 + $0x3f0] sm:$0xff]
    %v555 = vld [vmem:[%s5 + $0x3f8] sm:$0xff]
    %v556 = vld [vmem:[%s6] sm:$0x3]
    %v558 = vlaneseq
    %v559 = vshrl.u32 %v558, 7
    %v560 = vsub.s32 0, %v559
    %v561 = vrot.slane %v556, %v560
    %v562 = vlaneseq
    %v563 = vshrl.u32 %v562, 7
    %v564 = vsub.s32 1, %v563
    %v565 = vrot.slane %v556, %v564
    %568 = vmatprep.subr.mxu0 %v429
    %569 = vmatpush1.msra.mxu0 %v428
    %570 = vmatprep.subr.mxu0 %v431
    %571 = vmatpush1.msra.mxu0 %v430
    %572 = vmatprep.subr.mxu0 %v433
    %573 = vmatpush1.msra.mxu0 %v432
    %574 = vmatprep.subr.mxu0 %v435
    %575 = vmatpush1.msra.mxu0 %v434
    %576 = vmatprep.subr.mxu0 %v437
    %577 = vmatpush1.msra.mxu0 %v436
    %578 = vmatprep.subr.mxu0 %v439
    %579 = vmatpush1.msra.mxu0 %v438
    %580 = vmatprep.subr.mxu0 %v441
    %581 = vmatpush1.msra.mxu0 %v440
    %582 = vmatprep.subr.mxu0 %v443
    %583 = vmatpush1.msra.mxu0 %v442
    %584 = vmatprep.subr.mxu0 %v445
    %585 = vmatpush1.msra.mxu0 %v444
    %586 = vmatprep.subr.mxu0 %v447
    %587 = vmatpush1.msra.mxu0 %v446
    %588 = vmatprep.subr.mxu0 %v449
    %589 = vmatpush1.msra.mxu0 %v448
    %590 = vmatprep.subr.mxu0 %v451
    %591 = vmatpush1.msra.mxu0 %v450
    %592 = vmatprep.subr.mxu0 %v453
    %593 = vmatpush1.msra.mxu0 %v452
    %594 = vmatprep.subr.mxu0 %v455
    %595 = vmatpush1.msra.mxu0 %v454
    %596 = vmatprep.subr.mxu0 %v457
    %597 = vmatpush1.msra.mxu0 %v456
    %598 = vmatprep.subr.mxu0 %v459
    %599 = vmatpush1.msra.mxu0 %v458
    %600 = vmatprep.subr.mxu0 %v461
    %601 = vmatpush1.msra.mxu0 %v460
    %602 = vmatprep.subr.mxu0 %v463
    %603 = vmatpush1.msra.mxu0 %v462
    %604 = vmatprep.subr.mxu0 %v465
    %605 = vmatpush1.msra.mxu0 %v464
    %606 = vmatprep.subr.mxu0 %v467
    %607 = vmatpush1.msra.mxu0 %v466
    %608 = vmatprep.subr.mxu0 %v469
    %609 = vmatpush1.msra.mxu0 %v468
    %610 = vmatprep.subr.mxu0 %v471
    %611 = vmatpush1.msra.mxu0 %v470
    %612 = vmatprep.subr.mxu0 %v473
    %613 = vmatpush1.msra.mxu0 %v472
    %614 = vmatprep.subr.mxu0 %v475
    %615 = vmatpush1.msra.mxu0 %v474
    %616 = vmatprep.subr.mxu0 %v477
    %617 = vmatpush1.msra.mxu0 %v476
    %618 = vmatprep.subr.mxu0 %v479
    %619 = vmatpush1.msra.mxu0 %v478
    %620 = vmatprep.subr.mxu0 %v481
    %621 = vmatpush1.msra.mxu0 %v480
    %622 = vmatprep.subr.mxu0 %v483
    %623 = vmatpush1.msra.mxu0 %v482
    %624 = vmatprep.subr.mxu0 %v485
    %625 = vmatpush1.msra.mxu0 %v484
    %626 = vmatprep.subr.mxu0 %v487
    %627 = vmatpush1.msra.mxu0 %v486
    %628 = vmatprep.subr.mxu0 %v489
    %629 = vmatpush1.msra.mxu0 %v488
    %630 = vmatprep.subr.mxu0 %v491
    %631 = vmatpush1.msra.mxu0 %v490
    %632 = vmatprep.mubr.f32.mxu0 %v425
    %633 = vmatmul.mubr.f32.gmra.mrb[0].mxu0 %v424
    %v634 = vpop.f32.mrb[0].mxu0
    %v635 = vadd.f32 %v561, %v634
    %v636 = vpop.f32.mrb[0].mxu0
    %v637 = vadd.f32 %v565, %v636
    %638 = vdwg.mxu0
    %639 = vmatprep.subr.mxu0 %v493
    %640 = vmatpush1.msra.mxu0 %v492
    %641 = vmatprep.subr.mxu0 %v495
    %642 = vmatpush1.msra.mxu0 %v494
    %643 = vmatprep.subr.mxu0 %v497
    %644 = vmatpush1.msra.mxu0 %v496
    %645 = vmatprep.subr.mxu0 %v499
    %646 = vmatpush1.msra.mxu0 %v498
    %647 = vmatprep.subr.mxu0 %v501
    %648 = vmatpush1.msra.mxu0 %v500
    %649 = vmatprep.subr.mxu0 %v503
    %650 = vmatpush1.msra.mxu0 %v502
    %651 = vmatprep.subr.mxu0 %v505
    %652 = vmatpush1.msra.mxu0 %v504
    %653 = vmatprep.subr.mxu0 %v507
    %654 = vmatpush1.msra.mxu0 %v506
    %655 = vmatprep.subr.mxu0 %v509
    %656 = vmatpush1.msra.mxu0 %v508
    %657 = vmatprep.subr.mxu0 %v511
    %658 = vmatpush1.msra.mxu0 %v510
    %659 = vmatprep.subr.mxu0 %v513
    %660 = vmatpush1.msra.mxu0 %v512
    %661 = vmatprep.subr.mxu0 %v515
    %662 = vmatpush1.msra.mxu0 %v514
    %663 = vmatprep.subr.mxu0 %v517
    %664 = vmatpush1.msra.mxu0 %v516
    %665 = vmatprep.subr.mxu0 %v519
    %666 = vmatpush1.msra.mxu0 %v518
    %667 = vmatprep.subr.mxu0 %v521
    %668 = vmatpush1.msra.mxu0 %v520
    %669 = vmatprep.subr.mxu0 %v523
    %670 = vmatpush1.msra.mxu0 %v522
    %671 = vmatprep.subr.mxu0 %v525
    %672 = vmatpush1.msra.mxu0 %v524
    %673 = vmatprep.subr.mxu0 %v527
    %674 = vmatpush1.msra.mxu0 %v526
    %675 = vmatprep.subr.mxu0 %v529
    %676 = vmatpush1.msra.mxu0 %v528
    %677 = vmatprep.subr.mxu0 %v531
    %678 = vmatpush1.msra.mxu0 %v530
    %679 = vmatprep.subr.mxu0 %v533
    %680 = vmatpush1.msra.mxu0 %v532
    %681 = vmatprep.subr.mxu0 %v535
    %682 = vmatpush1.msra.mxu0 %v534
    %683 = vmatprep.subr.mxu0 %v537
    %684 = vmatpush1.msra.mxu0 %v536
    %685 = vmatprep.subr.mxu0 %v539
    %686 = vmatpush1.msra.mxu0 %v538
    %687 = vmatprep.subr.mxu0 %v541
    %688 = vmatpush1.msra.mxu0 %v540
    %689 = vmatprep.subr.mxu0 %v543
    %690 = vmatpush1.msra.mxu0 %v542
    %691 = vmatprep.subr.mxu0 %v545
    %692 = vmatpush1.msra.mxu0 %v544
    %693 = vmatprep.subr.mxu0 %v547
    %694 = vmatpush1.msra.mxu0 %v546
    %695 = vmatprep.subr.mxu0 %v549
    %696 = vmatpush1.msra.mxu0 %v548
    %697 = vmatprep.subr.mxu0 %v551
    %698 = vmatpush1.msra.mxu0 %v550
    %699 = vmatprep.subr.mxu0 %v553
    %700 = vmatpush1.msra.mxu0 %v552
    %701 = vmatprep.subr.mxu0 %v555
    %702 = vmatpush1.msra.mxu0 %v554
    %703 = vmatprep.mubr.f32.mxu0 %v427
    %704 = vmatmul.mubr.f32.gmra.mrb[0].mxu0 %v426
    %v705 = vpop.f32.mrb[0].mxu0
    %v706 = vadd.f32 %v635, %v705
    %v707 = vpop.f32.mrb[0].mxu0
    %v708 = vadd.f32 %v637, %v707
    %709 = vdwg.mxu0
    %vm710 = vcmp.gt.f32.partialorder %v706, 0.0
    %vm711 = vcmp.gt.f32.partialorder %v708, 0.0
    %v712 = vmul.f32 %v706, 0.2
    %v713 = vmul.f32 %v708, 0.2
    %v714 = vsel %vm710, %v706, %v712
    %v715 = vsel %vm711, %v708, %v713
    %v716 = vld [vmem:[%s7] sm:$0xff]
    %v717 = vld [vmem:[%s7 + $0x8] sm:$0xff]
    %v718 = vld [vmem:[%s7 + $0x10] sm:$0xff]
    %v719 = vld [vmem:[%s7 + $0x18] sm:$0xff]
    %v720 = vld [vmem:[%s7 + $0x20] sm:$0xff]
    %v721 = vld [vmem:[%s7 + $0x28] sm:$0xff]
    %v722 = vld [vmem:[%s7 + $0x30] sm:$0xff]
    %v723 = vld [vmem:[%s7 + $0x38] sm:$0xff]
    %v724 = vld [vmem:[%s7 + $0x40] sm:$0xff]
    %v725 = vld [vmem:[%s7 + $0x48] sm:$0xff]
    %v726 = vld [vmem:[%s7 + $0x50] sm:$0xff]
    %v727 = vld [vmem:[%s7 + $0x58] sm:$0xff]
    %v728 = vld [vmem:[%s7 + $0x60] sm:$0xff]
    %v729 = vld [vmem:[%s7 + $0x68] sm:$0xff]
    %v730 = vld [vmem:[%s7 + $0x70] sm:$0xff]
    %v731 = vld [vmem:[%s7 + $0x78] sm:$0xff]
    %v732 = vld [vmem:[%s7 + $0x80] sm:$0xff]
    %v733 = vld [vmem:[%s7 + $0x88] sm:$0xff]
    %v734 = vld [vmem:[%s7 + $0x90] sm:$0xff]
    %v735 = vld [vmem:[%s7 + $0x98] sm:$0xff]
    %v736 = vld [vmem:[%s7 + $0xa0] sm:$0xff]
    %v737 = vld [vmem:[%s7 + $0xa8] sm:$0xff]
    %v738 = vld [vmem:[%s7 + $0xb0] sm:$0xff]
    %v739 = vld [vmem:[%s7 + $0xb8] sm:$0xff]
    %v740 = vld [vmem:[%s7 + $0xc0] sm:$0xff]
    %v741 = vld [vmem:[%s7 + $0xc8] sm:$0xff]
    %v742 = vld [vmem:[%s7 + $0xd0] sm:$0xff]
    %v743 = vld [vmem:[%s7 + $0xd8] sm:$0xff]
    %v744 = vld [vmem:[%s7 + $0xe0] sm:$0xff]
    %v745 = vld [vmem:[%s7 + $0xe8] sm:$0xff]
    %v746 = vld [vmem:[%s7 + $0xf0] sm:$0xff]
    %v747 = vld [vmem:[%s7 + $0xf8] sm:$0xff]
    %v748 = vld [vmem:[%s8] sm:$0x1]
    %v750 = vlaneseq
    %v751 = vshrl.u32 %v750, 7
    %v752 = vsub.s32 0, %v751
    %v753 = vrot.slane %v748, %v752
    %755 = vmatprep.subr.mxu0 0.0
    %756 = vmatpush1.msra.mxu0 %v716
    %757 = vmatprep.subr.mxu0 0.0
    %758 = vmatpush1.msra.mxu0 %v717
    %759 = vmatprep.subr.mxu0 0.0
    %760 = vmatpush1.msra.mxu0 %v718
    %761 = vmatprep.subr.mxu0 0.0
    %762 = vmatpush1.msra.mxu0 %v719
    %763 = vmatprep.subr.mxu0 0.0
    %764 = vmatpush1.msra.mxu0 %v720
    %765 = vmatprep.subr.mxu0 0.0
    %766 = vmatpush1.msra.mxu0 %v721
    %767 = vmatprep.subr.mxu0 0.0
    %768 = vmatpush1.msra.mxu0 %v722
    %769 = vmatprep.subr.mxu0 0.0
    %770 = vmatpush1.msra.mxu0 %v723
    %771 = vmatprep.subr.mxu0 0.0
    %772 = vmatpush1.msra.mxu0 %v724
    %773 = vmatprep.subr.mxu0 0.0
    %774 = vmatpush1.msra.mxu0 %v725
    %775 = vmatprep.subr.mxu0 0.0
    %776 = vmatpush1.msra.mxu0 %v726
    %777 = vmatprep.subr.mxu0 0.0
    %778 = vmatpush1.msra.mxu0 %v727
    %779 = vmatprep.subr.mxu0 0.0
    %780 = vmatpush1.msra.mxu0 %v728
    %781 = vmatprep.subr.mxu0 0.0
    %782 = vmatpush1.msra.mxu0 %v729
    %783 = vmatprep.subr.mxu0 0.0
    %784 = vmatpush1.msra.mxu0 %v730
    %785 = vmatprep.subr.mxu0 0.0
    %786 = vmatpush1.msra.mxu0 %v731
    %787 = vmatprep.subr.mxu0 0.0
    %788 = vmatpush1.msra.mxu0 %v732
    %789 = vmatprep.subr.mxu0 0.0
    %790 = vmatpush1.msra.mxu0 %v733
    %791 = vmatprep.subr.mxu0 0.0
    %792 = vmatpush1.msra.mxu0 %v734
    %793 = vmatprep.subr.mxu0 0.0
    %794 = vmatpush1.msra.mxu0 %v735
    %795 = vmatprep.subr.mxu0 0.0
    %796 = vmatpush1.msra.mxu0 %v736
    %797 = vmatprep.subr.mxu0 0.0
    %798 = vmatpush1.msra.mxu0 %v737
    %799 = vmatprep.subr.mxu0 0.0
    %800 = vmatpush1.msra.mxu0 %v738
    %801 = vmatprep.subr.mxu0 0.0
    %802 = vmatpush1.msra.mxu0 %v739
    %803 = vmatprep.subr.mxu0 0.0
    %804 = vmatpush1.msra.mxu0 %v740
    %805 = vmatprep.subr.mxu0 0.0
    %806 = vmatpush1.msra.mxu0 %v741
    %807 = vmatprep.subr.mxu0 0.0
    %808 = vmatpush1.msra.mxu0 %v742
    %809 = vmatprep.subr.mxu0 0.0
    %810 = vmatpush1.msra.mxu0 %v743
    %811 = vmatprep.subr.mxu0 0.0
    %812 = vmatpush1.msra.mxu0 %v744
    %813 = vmatprep.subr.mxu0 0.0
    %814 = vmatpush1.msra.mxu0 %v745
    %815 = vmatprep.subr.mxu0 0.0
    %816 = vmatpush1.msra.mxu0 %v746
    %817 = vmatprep.subr.mxu0 0.0
    %818 = vmatpush1.msra.mxu0 %v747
    %819 = vmatprep.mubr.f32.mxu0 %v715
    %820 = vmatmul.mubr.f32.gmra.mrb[0].mxu0 %v714
    %v821 = vpop.f32.mrb[0].mxu0
    %v822 = vadd.f32 %v753, %v821
    %v823 = vpop.f32.mrb[0].mxu0
    %824 = vdwg.mxu0
    %vm825 = vcmask 58368
    %826 = vst.msk [vmem:[#allocation2] sm:$0x3] %vm825, %v822
    // Predicated region
    $region38: #{attention_dgcnn_forward.19} parent=1 // pred_check
      _
    $region39: #{attention_dgcnn_forward.19} parent=1 // pred_check_branch
      %828 = sbr.rel (0) target = $region41
    $region40: #{attention_dgcnn_forward.19} parent=1 // pred_region
      %s830 = ssub.s32 32, 32
      %831 = vsyncadd [#allocation3], %s830
      %s833 = sshll.u32 [#allocation2], 4
      %s834 = int_to_ptr.vmem [resolvable:$true] %s833
      %836 = dma.vmem_to_hbm [thread:$0]  %s834, 32, %s9, [#allocation3]
    $region41: #{attention_dgcnn_forward.19} parent=1 // pred_fallthru
      _
    // Predicated region
    $region42: #{attention_dgcnn_forward.19} parent=1 // pred_check
      _
    $region43: #{attention_dgcnn_forward.19} parent=1 // pred_check_branch
      %838 = sbr.rel (0) target = $region45
    $region44: #{attention_dgcnn_forward.19} parent=1 // pred_region
      %839 = dma.done [#allocation3], 32
    $region45: #{attention_dgcnn_forward.19} parent=1 // pred_fallthru
      _
    %840 = vsyncpa [#allocation3], 1

// kernel: attention_dgcnn_forward.18
$region0: #{attention_dgcnn_forward.18}
  #allocation0 [shape = 'u32[]', space=smem, size = 0x4, offset = 0x4, fixed_abs, tag = 'smem constant byte address 0x4 - core index']
  #allocation1 [shape = 'u32[144,128]{1,0:T(1,128)}', space=vmem, size = 0x12000, scoped, tag = 'internal scratch']
  %s0 = inlined_call_operand.vmem [shape: bf16[2,16,64], index: 0, kind: input, shape index: {}]
  %s1 = inlined_call_operand.vmem [shape: bf16[2,16,64], index: 1, kind: input, shape index: {}]
  %s2 = inlined_call_operand.vmem [shape: bf16[2,16,128], index: 2, kind: input, shape index: {}]
  %s3 = inlined_call_operand.vmem [shape: bf16[2,16,256], index: 3, kind: input, shape index: {}]
  %s4 = inlined_call_operand.vmem [shape: bf16[64,64], index: 4, kind: input, shape index: {}]
  %s5 = inlined_call_operand.vmem [shape: bf16[64,64], index: 5, kind: input, shape index: {}]
  %s6 = inlined_call_operand.vmem [shape: bf16[128,64], index: 6, kind: input, shape index: {}]
  %s7 = inlined_call_operand.vmem [shape: bf16[256,64], index: 7, kind: input, shape index: {}]
  %s8 = inlined_call_operand.vmem [shape: f32[1,64], index: 8, kind: input, shape index: {}]
  %s9 = inlined_call_operand.vmem [shape: f32[2,1,64], index: 9, kind: output, shape index: {0}]
  %s10 = inlined_call_operand.vmem [shape: f32[2,1,64], index: 10, kind: output, shape index: {1}]
  %11 = xla_tuple %s9, %s10
  %s12 = sld [smem:[#allocation0]]
  $region89: #{attention_dgcnn_forward.18} parent=0
    _
  %s14 = ssub.s32 1, %s12
  %s15 = scalar_select 0, %s14, %s12
  loop: start=0, step=1, limit=4
  $region2: #{attention_dgcnn_forward.18} parent=0 // loop_pre_header
    _
  $region3: #{attention_dgcnn_forward.18} parent=0 // loop_header
    %s17 = sphi 0, %s21
    %p18 = scmp.ge.s32.totalorder %s17, 4
    %s24 = sphi 0, %s36
    %s25 = sphi 0, %s32
    %s26 = sphi 0, %s24
    %s27 = sphi 0, %s25
    %s28 = sphi 0, %s26
    %s29 = sphi 0, %s27
    %s41 = sphi 0, %s43
    %s44 = sphi 0, %s41
    %s45 = sphi 0, %s44
    %s61 = sphi 0, %s45
    %s69 = sphi 0, %s71
    %s72 = sphi 0, %s69
    %s73 = sphi 0, %s72
    %s89 = sphi 0, %s73
    %s97 = sphi 0, %s99
    %s100 = sphi 0, %s97
    %s101 = sphi 0, %s100
    %s117 = sphi 0, %s101
    %s125 = sphi 0, %s127
    %s128 = sphi 0, %s125
    %s129 = sphi 0, %s128
    %s145 = sphi 0, %s129
    %s149 = sphi 0, %s149
    %s151 = sphi 0, %s149
    %s152 = sphi 0, %s151
    %s166 = sphi 0, %s152
    %s170 = sphi 0, %s170
    %s172 = sphi 0, %s170
    %s173 = sphi 0, %s172
    %s187 = sphi 0, %s173
    %s191 = sphi 0, %s191
    %s193 = sphi 0, %s191
    %s194 = sphi 0, %s193
    %s208 = sphi 0, %s194
    %s212 = sphi 0, %s212
    %s214 = sphi 0, %s212
    %s215 = sphi 0, %s214
    %s229 = sphi 0, %s215
    %s233 = sphi 0, %s233
    %s235 = sphi 0, %s233
    %s236 = sphi 0, %s235
    %s250 = sphi 0, %s236
    %s256 = sphi 0, %s258
    %s259 = sphi 0, %s256
    %s260 = sphi 0, %s259
    %s276 = sphi 0, %s260
    %s282 = sphi 0, %s284
    %s285 = sphi 0, %s282
    %s286 = sphi 0, %s285
    %s302 = sphi 0, %s286
  $region4: #{attention_dgcnn_forward.18} parent=0 // loop_header_branch
    %20 = sbr.rel (%p18) target = $region8
  $region5: #{attention_dgcnn_forward.18} parent=0 // loop_body
    %s22 = ssub.s32 %s17, 1
    %s23 = ssub.s32 %s17, 2
    %s30 = sadd.s32 1, %s25
    %p31 = scmp.ge.s32.totalorder %s30, 1
    %s32 = scalar_select %p31, 0, %s30
    %s33 = sadd.s32 1, %s24
    %s34 = scalar_select %p31, %s33, %s24
    %p35 = scmp.ge.s32.totalorder %s34, 2
    %s36 = scalar_select %p35, 0, %s34
    %s37 = ssub.s32 %s24, %s36
    %s38 = ssub.s32 %s25, %s32
    %s39 = sor.u32 %s37, %s38
    %p40 = scmp.eq.s32.totalorder %s39, 0
    %s42 = sadd.s32 %s41, 1
    %s43 = scalar_select %p40, %s41, %s42
    %p46 = pneg %p40
    %p47 = scmp.eq.s32.totalorder %s17, 1
    %p48 = por %p46, %p47
    %p49 = scmp.ne.s32.totalorder %s41, %s44
    %p50 = scmp.eq.s32.totalorder %s17, 0
    %p51 = por %p49, %p50
    %p52 = scmp.ne.s32.totalorder %s41, %s44
    %p53 = scmp.eq.s32.totalorder %s22, 1
    %p54 = por %p52, %p53
    %p55 = scmp.ne.s32.totalorder %s44, %s45
    %p56 = scmp.eq.s32.totalorder %s22, 0
    %p57 = por %p55, %p56
    %p58 = scmp.ne.s32.totalorder %s44, %s45
    %p59 = scmp.eq.s32.totalorder %s23, 1
    %p60 = por %p58, %p59
    %p62 = scmp.ne.s32.totalorder %s45, %s61
    %p63 = scmp.eq.s32.totalorder %s23, 0
    %p64 = por %p62, %p63
    %s65 = ssub.s32 %s24, %s36
    %s66 = ssub.s32 %s25, %s32
    %s67 = sor.u32 %s65, %s66
    %p68 = scmp.eq.s32.totalorder %s67, 0
    %s70 = sadd.s32 %s69, 1
    %s71 = scalar_select %p68, %s69, %s70
    %p74 = pneg %p68
    %p75 = scmp.eq.s32.totalorder %s17, 1
    %p76 = por %p74, %p75
    %p77 = scmp.ne.s32.totalorder %s69, %s72
    %p78 = scmp.eq.s32.totalorder %s17, 0
    %p79 = por %p77, %p78
    %p80 = scmp.ne.s32.totalorder %s69, %s72
    %p81 = scmp.eq.s32.totalorder %s22, 1
    %p82 = por %p80, %p81
    %p83 = scmp.ne.s32.totalorder %s72, %s73
    %p84 = scmp.eq.s32.totalorder %s22, 0
    %p85 = por %p83, %p84
    %p86 = scmp.ne.s32.totalorder %s72, %s73
    %p87 = scmp.eq.s32.totalorder %s23, 1
    %p88 = por %p86, %p87
    %p90 = scmp.ne.s32.totalorder %s73, %s89
    %p91 = scmp.eq.s32.totalorder %s23, 0
    %p92 = por %p90, %p91
    %s93 = ssub.s32 %s24, %s36
    %s94 = ssub.s32 %s25, %s32
    %s95 = sor.u32 %s93, %s94
    %p96 = scmp.eq.s32.totalorder %s95, 0
    %s98 = sadd.s32 %s97, 1
    %s99 = scalar_select %p96, %s97, %s98
    %p102 = pneg %p96
    %p103 = scmp.eq.s32.totalorder %s17, 1
    %p104 = por %p102, %p103
    %p105 = scmp.ne.s32.totalorder %s97, %s100
    %p106 = scmp.eq.s32.totalorder %s17, 0
    %p107 = por %p105, %p106
    %p108 = scmp.ne.s32.totalorder %s97, %s100
    %p109 = scmp.eq.s32.totalorder %s22, 1
    %p110 = por %p108, %p109
    %p111 = scmp.ne.s32.totalorder %s100, %s101
    %p112 = scmp.eq.s32.totalorder %s22, 0
    %p113 = por %p111, %p112
    %p114 = scmp.ne.s32.totalorder %s100, %s101
    %p115 = scmp.eq.s32.totalorder %s23, 1
    %p116 = por %p114, %p115
    %p118 = scmp.ne.s32.totalorder %s101, %s117
    %p119 = scmp.eq.s32.totalorder %s23, 0
    %p120 = por %p118, %p119
    %s121 = ssub.s32 %s24, %s36
    %s122 = ssub.s32 %s25, %s32
    %s123 = sor.u32 %s121, %s122
    %p124 = scmp.eq.s32.totalorder %s123, 0
    %s126 = sadd.s32 %s125, 1
    %s127 = scalar_select %p124, %s125, %s126
    %p130 = pneg %p124
    %p131 = scmp.eq.s32.totalorder %s17, 1
    %p132 = por %p130, %p131
    %p133 = scmp.ne.s32.totalorder %s125, %s128
    %p134 = scmp.eq.s32.totalorder %s17, 0
    %p135 = por %p133, %p134
    %p136 = scmp.ne.s32.totalorder %s125, %s128
    %p137 = scmp.eq.s32.totalorder %s22, 1
    %p138 = por %p136, %p137
    %p139 = scmp.ne.s32.totalorder %s128, %s129
    %p140 = scmp.eq.s32.totalorder %s22, 0
    %p141 = por %p139, %p140
    %p142 = scmp.ne.s32.totalorder %s128, %s129
    %p143 = scmp.eq.s32.totalorder %s23, 1
    %p144 = por %p142, %p143
    %p146 = scmp.ne.s32.totalorder %s129, %s145
    %p147 = scmp.eq.s32.totalorder %s23, 0
    %p148 = por %p146, %p147
    %s150 = sadd.s32 %s149, 1
    %p153 = scmp.eq.s32.totalorder %s17, 1
    %p154 = scmp.ne.s32.totalorder %s149, %s151
    %p155 = scmp.eq.s32.totalorder %s17, 0
    %p156 = por %p154, %p155
    %p157 = scmp.ne.s32.totalorder %s149, %s151
    %p158 = scmp.eq.s32.totalorder %s22, 1
    %p159 = por %p157, %p158
    %p160 = scmp.ne.s32.totalorder %s151, %s152
    %p161 = scmp.eq.s32.totalorder %s22, 0
    %p162 = por %p160, %p161
    %p163 = scmp.ne.s32.totalorder %s151, %s152
    %p164 = scmp.eq.s32.totalorder %s23, 1
    %p165 = por %p163, %p164
    %p167 = scmp.ne.s32.totalorder %s152, %s166
    %p168 = scmp.eq.s32.totalorder %s23, 0
    %p169 = por %p167, %p168
    %s171 = sadd.s32 %s170, 1
    %p174 = scmp.eq.s32.totalorder %s17, 1
    %p175 = scmp.ne.s32.totalorder %s170, %s172
    %p176 = scmp.eq.s32.totalorder %s17, 0
    %p177 = por %p175, %p176
    %p178 = scmp.ne.s32.totalorder %s170, %s172
    %p179 = scmp.eq.s32.totalorder %s22, 1
    %p180 = por %p178, %p179
    %p181 = scmp.ne.s32.totalorder %s172, %s173
    %p182 = scmp.eq.s32.totalorder %s22, 0
    %p183 = por %p181, %p182
    %p184 = scmp.ne.s32.totalorder %s172, %s173
    %p185 = scmp.eq.s32.totalorder %s23, 1
    %p186 = por %p184, %p185
    %p188 = scmp.ne.s32.totalorder %s173, %s187
    %p189 = scmp.eq.s32.totalorder %s23, 0
    %p190 = por %p188, %p189
    %s192 = sadd.s32 %s191, 1
    %p195 = scmp.eq.s32.totalorder %s17, 1
    %p196 = scmp.ne.s32.totalorder %s191, %s193
    %p197 = scmp.eq.s32.totalorder %s17, 0
    %p198 = por %p196, %p197
    %p199 = scmp.ne.s32.totalorder %s191, %s193
    %p200 = scmp.eq.s32.totalorder %s22, 1
    %p201 = por %p199, %p200
    %p202 = scmp.ne.s32.totalorder %s193, %s194
    %p203 = scmp.eq.s32.totalorder %s22, 0
    %p204 = por %p202, %p203
    %p205 = scmp.ne.s32.totalorder %s193, %s194
    %p206 = scmp.eq.s32.totalorder %s23, 1
    %p207 = por %p205, %p206
    %p209 = scmp.ne.s32.totalorder %s194, %s208
    %p210 = scmp.eq.s32.totalorder %s23, 0
    %p211 = por %p209, %p210
    %s213 = sadd.s32 %s212, 1
    %p216 = scmp.eq.s32.totalorder %s17, 1
    %p217 = scmp.ne.s32.totalorder %s212, %s214
    %p218 = scmp.eq.s32.totalorder %s17, 0
    %p219 = por %p217, %p218
    %p220 = scmp.ne.s32.totalorder %s212, %s214
    %p221 = scmp.eq.s32.totalorder %s22, 1
    %p222 = por %p220, %p221
    %p223 = scmp.ne.s32.totalorder %s214, %s215
    %p224 = scmp.eq.s32.totalorder %s22, 0
    %p225 = por %p223, %p224
    %p226 = scmp.ne.s32.totalorder %s214, %s215
    %p227 = scmp.eq.s32.totalorder %s23, 1
    %p228 = por %p226, %p227
    %p230 = scmp.ne.s32.totalorder %s215, %s229
    %p231 = scmp.eq.s32.totalorder %s23, 0
    %p232 = por %p230, %p231
    %s234 = sadd.s32 %s233, 1
    %p237 = scmp.eq.s32.totalorder %s17, 1
    %p238 = scmp.ne.s32.totalorder %s233, %s235
    %p239 = scmp.eq.s32.totalorder %s17, 0
    %p240 = por %p238, %p239
    %p241 = scmp.ne.s32.totalorder %s233, %s235
    %p242 = scmp.eq.s32.totalorder %s22, 1
    %p243 = por %p241, %p242
    %p244 = scmp.ne.s32.totalorder %s235, %s236
    %p245 = scmp.eq.s32.totalorder %s22, 0
    %p246 = por %p244, %p245
    %p247 = scmp.ne.s32.totalorder %s235, %s236
    %p248 = scmp.eq.s32.totalorder %s23, 1
    %p249 = por %p247, %p248
    %p251 = scmp.ne.s32.totalorder %s236, %s250
    %p252 = scmp.eq.s32.totalorder %s23, 0
    %p253 = por %p251, %p252
    %s254 = ssub.s32 %s24, %s36
    %p255 = scmp.eq.s32.totalorder %s254, 0
    %s257 = sadd.s32 %s256, 1
    %s258 = scalar_select %p255, %s256, %s257
    %p261 = pneg %p255
    %p262 = scmp.eq.s32.totalorder %s17, 1
    %p263 = por %p261, %p262
    %p264 = scmp.ne.s32.totalorder %s256, %s259
    %p265 = scmp.eq.s32.totalorder %s17, 0
    %p266 = por %p264, %p265
    %p267 = scmp.ne.s32.totalorder %s256, %s259
    %p268 = scmp.eq.s32.totalorder %s22, 1
    %p269 = por %p267, %p268
    %p270 = scmp.ne.s32.totalorder %s259, %s260
    %p271 = scmp.eq.s32.totalorder %s22, 0
    %p272 = por %p270, %p271
    %p273 = scmp.ne.s32.totalorder %s259, %s260
    %p274 = scmp.eq.s32.totalorder %s23, 1
    %p275 = por %p273, %p274
    %p277 = scmp.ne.s32.totalorder %s260, %s276
    %p278 = scmp.eq.s32.totalorder %s23, 0
    %p279 = por %p277, %p278
    %s280 = ssub.s32 %s24, %s36
    %p281 = scmp.eq.s32.totalorder %s280, 0
    %s283 = sadd.s32 %s282, 1
    %s284 = scalar_select %p281, %s282, %s283
    %p287 = pneg %p281
    %p288 = scmp.eq.s32.totalorder %s17, 1
    %p289 = por %p287, %p288
    %p290 = scmp.ne.s32.totalorder %s282, %s285
    %p291 = scmp.eq.s32.totalorder %s17, 0
    %p292 = por %p290, %p291
    %p293 = scmp.ne.s32.totalorder %s282, %s285
    %p294 = scmp.eq.s32.totalorder %s22, 1
    %p295 = por %p293, %p294
    %p296 = scmp.ne.s32.totalorder %s285, %s286
    %p297 = scmp.eq.s32.totalorder %s22, 0
    %p298 = por %p296, %p297
    %p299 = scmp.ne.s32.totalorder %s285, %s286
    %p300 = scmp.eq.s32.totalorder %s23, 1
    %p301 = por %p299, %p300
    %p303 = scmp.ne.s32.totalorder %s286, %s302
    %p304 = scmp.eq.s32.totalorder %s23, 0
    %p305 = por %p303, %p304
    %p306 = scmp.le.s32.totalorder 1, %s17
    %p307 = scmp.lt.s32.totalorder %s17, 3
    %p308 = pnand %p306, %p307
    %p309 = pneg %p308
    // Predicated region
    $region9: #{attention_dgcnn_forward.18} parent=5 // pred_check
      _
    $region10: #{attention_dgcnn_forward.18} parent=5 // pred_check_branch
      %311 = sbr.rel (%p308) target = $region12
    $region11: #{attention_dgcnn_forward.18} parent=5 // pred_region
      %s312 = ssub.s32 %s17, 1
      // Predicated region
      $region13: #{attention_dgcnn_forward.18} parent=11 // pred_check
        %p313 = pneg %p162
      $region14: #{attention_dgcnn_forward.18} parent=11 // pred_check_branch
        %315 = sbr.rel (%p313) target = $region16
      $region15: #{attention_dgcnn_forward.18} parent=11 // pred_region
        _
      $region16: #{attention_dgcnn_forward.18} parent=11 // pred_fallthru
        _
      // Predicated region
      $region17: #{attention_dgcnn_forward.18} parent=11 // pred_check
        %p316 = pneg %p183
      $region18: #{attention_dgcnn_forward.18} parent=11 // pred_check_branch
        %318 = sbr.rel (%p316) target = $region20
      $region19: #{attention_dgcnn_forward.18} parent=11 // pred_region
        _
      $region20: #{attention_dgcnn_forward.18} parent=11 // pred_fallthru
        _
      // Predicated region
      $region21: #{attention_dgcnn_forward.18} parent=11 // pred_check
        %p319 = pneg %p204
      $region22: #{attention_dgcnn_forward.18} parent=11 // pred_check_branch
        %321 = sbr.rel (%p319) target = $region24
      $region23: #{attention_dgcnn_forward.18} parent=11 // pred_region
        _
      $region24: #{attention_dgcnn_forward.18} parent=11 // pred_fallthru
        _
      // Predicated region
      $region25: #{attention_dgcnn_forward.18} parent=11 // pred_check
        %p322 = pneg %p225
      $region26: #{attention_dgcnn_forward.18} parent=11 // pred_check_branch
        %324 = sbr.rel (%p322) target = $region28
      $region27: #{attention_dgcnn_forward.18} parent=11 // pred_region
        _
      $region28: #{attention_dgcnn_forward.18} parent=11 // pred_fallthru
        _
      // Predicated region
      $region29: #{attention_dgcnn_forward.18} parent=11 // pred_check
        %p325 = pneg %p246
      $region30: #{attention_dgcnn_forward.18} parent=11 // pred_check_branch
        %327 = sbr.rel (%p325) target = $region32
      $region31: #{attention_dgcnn_forward.18} parent=11 // pred_region
        _
      $region32: #{attention_dgcnn_forward.18} parent=11 // pred_fallthru
        _
    $region12: #{attention_dgcnn_forward.18} parent=5 // pred_fallthru
      _
    %p328 = scmp.lt.s32.totalorder %s17, 2
    // Predicated region
    $region33: #{attention_dgcnn_forward.18} parent=5 // pred_check
      %p329 = pneg %p328
    $region34: #{attention_dgcnn_forward.18} parent=5 // pred_check_branch
      %331 = sbr.rel (%p329) target = $region36
    $region35: #{attention_dgcnn_forward.18} parent=5 // pred_region
      // Predicated region
      $region37: #{attention_dgcnn_forward.18} parent=35 // pred_check
        %p332 = pneg %p51
      $region38: #{attention_dgcnn_forward.18} parent=35 // pred_check_branch
        %334 = sbr.rel (%p332) target = $region40
      $region39: #{attention_dgcnn_forward.18} parent=35 // pred_region
        %s335 = smul.u32 2, %s25
        %p336 = scmp.lt.s32.totalorder %s24, 1
        %s337 = scalar_select %p336, %s24, 1
        %p338 = scmp.lt.s32.totalorder %s335, 1
        %s339 = scalar_select %p338, %s335, 1
        %s340 = smul.addr %s337, 2
        %s341 = sadd.s32 %s339, %s340
        %s342 = smul.addr %s341, 4
        %s343 = scalar_lea.vmem %s0, %s342
        %s344 = smul.u32 2, %s25
      $region40: #{attention_dgcnn_forward.18} parent=35 // pred_fallthru
        _
      // Predicated region
      $region41: #{attention_dgcnn_forward.18} parent=35 // pred_check
        %p345 = pneg %p79
      $region42: #{attention_dgcnn_forward.18} parent=35 // pred_check_branch
        %347 = sbr.rel (%p345) target = $region44
      $region43: #{attention_dgcnn_forward.18} parent=35 // pred_region
        %s348 = smul.u32 2, %s25
        %p349 = scmp.lt.s32.totalorder %s24, 1
        %s350 = scalar_select %p349, %s24, 1
        %p351 = scmp.lt.s32.totalorder %s348, 1
        %s352 = scalar_select %p351, %s348, 1
        %s353 = smul.addr %s350, 2
        %s354 = sadd.s32 %s352, %s353
        %s355 = smul.addr %s354, 4
        %s356 = scalar_lea.vmem %s1, %s355
        %s357 = smul.u32 2, %s25
      $region44: #{attention_dgcnn_forward.18} parent=35 // pred_fallthru
        _
      // Predicated region
      $region45: #{attention_dgcnn_forward.18} parent=35 // pred_check
        %p358 = pneg %p107
      $region46: #{attention_dgcnn_forward.18} parent=35 // pred_check_branch
        %360 = sbr.rel (%p358) target = $region48
      $region47: #{attention_dgcnn_forward.18} parent=35 // pred_region
        %s361 = smul.u32 2, %s25
        %p362 = scmp.lt.s32.totalorder %s24, 1
        %s363 = scalar_select %p362, %s24, 1
        %p364 = scmp.lt.s32.totalorder %s361, 1
        %s365 = scalar_select %p364, %s361, 1
        %s366 = smul.addr %s363, 2
        %s367 = sadd.s32 %s365, %s366
        %s368 = smul.addr %s367, 4
        %s369 = scalar_lea.vmem %s2, %s368
        %s370 = smul.u32 2, %s25
      $region48: #{attention_dgcnn_forward.18} parent=35 // pred_fallthru
        _
      // Predicated region
      $region49: #{attention_dgcnn_forward.18} parent=35 // pred_check
        %p371 = pneg %p135
      $region50: #{attention_dgcnn_forward.18} parent=35 // pred_check_branch
        %373 = sbr.rel (%p371) target = $region52
      $region51: #{attention_dgcnn_forward.18} parent=35 // pred_region
        %s374 = smul.u32 2, %s25
        %p375 = scmp.lt.s32.totalorder %s24, 1
        %s376 = scalar_select %p375, %s24, 1
        %p377 = scmp.lt.s32.totalorder %s374, 1
        %s378 = scalar_select %p377, %s374, 1
        %s379 = smul.addr %s378, 2
        %s380 = smul.addr %s376, 4
        %s381 = sadd.s32 %s379, %s380
        %s382 = smul.addr %s381, 4
        %s383 = scalar_lea.vmem %s3, %s382
        %s384 = smul.u32 2, %s25
      $region52: #{attention_dgcnn_forward.18} parent=35 // pred_fallthru
        _
    $region36: #{attention_dgcnn_forward.18} parent=5 // pred_fallthru
      _
    %p385 = scmp.le.s32.totalorder 1, %s17
    %p386 = scmp.lt.s32.totalorder %s17, 3
    %p387 = pnand %p385, %p386
    %p388 = pneg %p387
    // Predicated region
    $region53: #{attention_dgcnn_forward.18} parent=5 // pred_check
      _
    $region54: #{attention_dgcnn_forward.18} parent=5 // pred_check_branch
      %390 = sbr.rel (%p387) target = $region56
    $region55: #{attention_dgcnn_forward.18} parent=5 // pred_region
      %s391 = ssub.s32 %s17, 1
      %s392 = smul.u32 2, %s27
      %p393 = scmp.lt.s32.totalorder %s26, 1
      %s394 = scalar_select %p393, %s26, 1
      %p395 = scmp.lt.s32.totalorder %s392, 1
      %s396 = scalar_select %p395, %s392, 1
      %s397 = smul.addr %s394, 2
      %s398 = sadd.s32 %s396, %s397
      %s399 = smul.addr %s398, 4
      %s400 = scalar_lea.vmem %s0, %s399
      %p401 = pneg %p57
      %p402 = pneg %p54
      %s403 = smul.u32 2, %s27
      %p404 = scmp.lt.s32.totalorder %s26, 1
      %s405 = scalar_select %p404, %s26, 1
      %p406 = scmp.lt.s32.totalorder %s403, 1
      %s407 = scalar_select %p406, %s403, 1
      %s408 = smul.addr %s405, 2
      %s409 = sadd.s32 %s407, %s408
      %s410 = smul.addr %s409, 4
      %s411 = scalar_lea.vmem %s1, %s410
      %p412 = pneg %p85
      %p413 = pneg %p82
      %s414 = smul.u32 2, %s27
      %p415 = scmp.lt.s32.totalorder %s26, 1
      %s416 = scalar_select %p415, %s26, 1
      %p417 = scmp.lt.s32.totalorder %s414, 1
      %s418 = scalar_select %p417, %s414, 1
      %s419 = smul.addr %s416, 2
      %s420 = sadd.s32 %s418, %s419
      %s421 = smul.addr %s420, 4
      %s422 = scalar_lea.vmem %s2, %s421
      %p423 = pneg %p113
      %p424 = pneg %p110
      %s425 = smul.u32 2, %s27
      %p426 = scmp.lt.s32.totalorder %s26, 1
      %s427 = scalar_select %p426, %s26, 1
      %p428 = scmp.lt.s32.totalorder %s425, 1
      %s429 = scalar_select %p428, %s425, 1
      %s430 = smul.addr %s429, 2
      %s431 = smul.addr %s427, 4
      %s432 = sadd.s32 %s430, %s431
      %s433 = smul.addr %s432, 4
      %s434 = scalar_lea.vmem %s3, %s433
      %p435 = pneg %p141
      %p436 = pneg %p138
      %p437 = pneg %p162
      %p438 = pneg %p159
      %p439 = pneg %p183
      %p440 = pneg %p180
      %p441 = pneg %p204
      %p442 = pneg %p201
      %p443 = pneg %p225
      %p444 = pneg %p222
      %p445 = pneg %p246
      %p446 = pneg %p243
      %p447 = pneg %p272
      %p448 = pneg %p269
      %p449 = scmp.lt.s32.totalorder %s26, 1
      %s450 = scalar_select %p449, %s26, 1
      %s451 = scalar_lea.vmem %s9, %s450
      %p452 = pneg %p298
      %p453 = pneg %p295
      %p454 = scmp.lt.s32.totalorder %s26, 1
      %s455 = scalar_select %p454, %s26, 1
      %s456 = scalar_lea.vmem %s10, %s455
      %s457 = smul.u32 2, %s27
      %p458 = scmp.lt.s32.totalorder %s26, 1
      %s459 = scalar_select %p458, %s26, 1
      %p460 = scmp.lt.s32.totalorder %s457, 1
      %s461 = scalar_select %p460, %s457, 1
      %s462 = smul.addr %s459, 2
      %s463 = sadd.s32 %s461, %s462
      %s464 = smul.addr %s463, 4
      %s465 = scalar_lea.vmem %s0, %s464
      %s466 = smul.u32 2, %s27
      %s467 = smul.u32 2, %s27
      %p468 = scmp.lt.s32.totalorder %s26, 1
      %s469 = scalar_select %p468, %s26, 1
      %p470 = scmp.lt.s32.totalorder %s467, 1
      %s471 = scalar_select %p470, %s467, 1
      %s472 = smul.addr %s469, 2
      %s473 = sadd.s32 %s471, %s472
      %s474 = smul.addr %s473, 4
      %s475 = scalar_lea.vmem %s1, %s474
      %s476 = smul.u32 2, %s27
      %s477 = smul.u32 2, %s27
      %p478 = scmp.lt.s32.totalorder %s26, 1
      %s479 = scalar_select %p478, %s26, 1
      %p480 = scmp.lt.s32.totalorder %s477, 1
      %s481 = scalar_select %p480, %s477, 1
      %s482 = smul.addr %s479, 2
      %s483 = sadd.s32 %s481, %s482
      %s484 = smul.addr %s483, 4
      %s485 = scalar_lea.vmem %s2, %s484
      %s486 = smul.u32 2, %s27
      %s487 = smul.u32 2, %s27
      %p488 = scmp.lt.s32.totalorder %s26, 1
      %s489 = scalar_select %p488, %s26, 1
      %p490 = scmp.lt.s32.totalorder %s487, 1
      %s491 = scalar_select %p490, %s487, 1
      %s492 = smul.addr %s491, 2
      %s493 = smul.addr %s489, 4
      %s494 = sadd.s32 %s492, %s493
      %s495 = smul.addr %s494, 4
      %s496 = scalar_lea.vmem %s3, %s495
      %s497 = smul.u32 2, %s27
      %p498 = scmp.lt.s32.totalorder %s26, 1
      %s499 = scalar_select %p498, %s26, 1
      %s500 = scalar_lea.vmem %s9, %s499
      %p501 = scmp.lt.s32.totalorder %s26, 1
      %s502 = scalar_select %p501, %s26, 1
      %s503 = scalar_lea.vmem %s10, %s502
      %v505 = vld [vmem:[%s465] sm:$0xf]
      %v506 = vld [vmem:[%s465 + $0x4] sm:$0xf]
      %v507 = vld [vmem:[%s4] sm:$0xf]
      %v508 = vld [vmem:[%s4 + $0x4] sm:$0xf]
      %v509 = vld [vmem:[%s4 + $0x8] sm:$0xf]
      %v510 = vld [vmem:[%s4 + $0xc] sm:$0xf]
      %v511 = vld [vmem:[%s4 + $0x10] sm:$0xf]
      %v512 = vld [vmem:[%s4 + $0x14] sm:$0xf]
      %v513 = vld [vmem:[%s4 + $0x18] sm:$0xf]
      %v514 = vld [vmem:[%s4 + $0x1c] sm:$0xf]
      %v515 = vld [vmem:[%s475] sm:$0xf]
      %v516 = vld [vmem:[%s475 + $0x4] sm:$0xf]
      %v517 = vld [vmem:[%s5] sm:$0xf]
      %v518 = vld [vmem:[%s5 + $0x4] sm:$0xf]
      %v519 = vld [vmem:[%s5 + $0x8] sm:$0xf]
      %v520 = vld [vmem:[%s5 + $0xc] sm:$0xf]
      %v521 = vld [vmem:[%s5 + $0x10] sm:$0xf]
      %v522 = vld [vmem:[%s5 + $0x14] sm:$0xf]
      %v523 = vld [vmem:[%s5 + $0x18] sm:$0xf]
      %v524 = vld [vmem:[%s5 + $0x1c] sm:$0xf]
      %v527 = vunpack.c.l.b16 %v515
      %v528 = vunpack.c.l.b16 %v516
      %v529 = vpack.c.b16 %v528, %v527
      %v538 = vunpack.c.l.b16 %v517
      %v539 = vunpack.c.l.b16 %v518
      %v540 = vunpack.c.l.b16 %v519
      %v541 = vunpack.c.l.b16 %v520
      %v542 = vunpack.c.l.b16 %v521
      %v543 = vunpack.c.l.b16 %v522
      %v544 = vunpack.c.l.b16 %v523
      %v545 = vunpack.c.l.b16 %v524
      %v546 = vpack.c.b16 %v539, %v538
      %v547 = vpack.c.b16 %v541, %v540
      %v548 = vpack.c.b16 %v543, %v542
      %v549 = vpack.c.b16 %v545, %v544
      %vm554 = vcmask 523264
      %v556 = vsel %vm554, %v529, 0
      %558 = vmatprep.subr.bf16.mxu0 0
      %559 = vmatpush1.bf16.msra.mxu0 %v546
      %560 = vmatprep.subr.bf16.mxu0 0
      %561 = vmatpush1.bf16.msra.mxu0 %v547
      %562 = vmatprep.subr.bf16.mxu0 0
      %563 = vmatpush1.bf16.msra.mxu0 %v548
      %564 = vmatprep.subr.bf16.mxu0 0
      %565 = vmatpush1.bf16.msra.mxu0 %v549
      %566 = vmatprep.subr.bf16.mxu0 0
      %567 = vmatpush1.bf16.msra.mxu0 0
      %568 = vmatprep.subr.bf16.mxu0 0
      %569 = vmatpush1.bf16.msra.mxu0 0
      %570 = vmatprep.subr.bf16.mxu0 0
      %571 = vmatpush1.bf16.msra.mxu0 0
      %572 = vmatprep.subr.bf16.mxu0 0
      %573 = vmatpush1.bf16.msra.mxu0 0
      %574 = vmatprep.subr.bf16.mxu0 0
      %575 = vmatpush1.bf16.msra.mxu0 0
      %576 = vmatprep.subr.bf16.mxu0 0
      %577 = vmatpush1.bf16.msra.mxu0 0
      %578 = vmatprep.subr.bf16.mxu0 0
      %579 = vmatpush1.bf16.msra.mxu0 0
      %580 = vmatprep.subr.bf16.mxu0 0
      %581 = vmatpush1.bf16.msra.mxu0 0
      %582 = vmatprep.subr.bf16.mxu0 0
      %583 = vmatpush1.bf16.msra.mxu0 0
      %584 = vmatprep.subr.bf16.mxu0 0
      %585 = vmatpush1.bf16.msra.mxu0 0
      %586 = vmatprep.subr.bf16.mxu0 0
      %587 = vmatpush1.bf16.msra.mxu0 0
      %588 = vmatprep.subr.bf16.mxu0 0
      %589 = vmatpush1.bf16.msra.mxu0 0
      %590 = vmatprep.mubr.bf16.mxu0 0
      %591 = vmatmul.mubr.bf16.gmra.mrb[0].mxu0 %v556
      %v592 = vpop.f32.mrb[0].mxu0
      %v593 = vadd.f32 0.0, %v592
      %v594 = vpop.f32.mrb[0].mxu0
      %v595 = vpop.f32.mrb[0].mxu0
      %v596 = vadd.f32 0.0, %v595
      %v597 = vpop.f32.mrb[0].mxu0
      %598 = vdwg.mxu0
      %v601 = vunpack.c.l.b16 %v505
      %v602 = vunpack.c.l.b16 %v506
      %v603 = vpack.c.b16 %v602, %v601
      %v612 = vunpack.c.l.b16 %v507
      %v613 = vunpack.c.l.b16 %v508
      %v614 = vunpack.c.l.b16 %v509
      %v615 = vunpack.c.l.b16 %v510
      %v616 = vunpack.c.l.b16 %v511
      %v617 = vunpack.c.l.b16 %v512
      %v618 = vunpack.c.l.b16 %v513
      %v619 = vunpack.c.l.b16 %v514
      %v620 = vpack.c.b16 %v613, %v612
      %v621 = vpack.c.b16 %v615, %v614
      %v622 = vpack.c.b16 %v617, %v616
      %v623 = vpack.c.b16 %v619, %v618
      %v629 = vsel %vm554, %v603, 0
      %631 = vmatprep.subr.bf16.mxu0 0
      %632 = vmatpush1.bf16.msra.mxu0 %v620
      %633 = vmatprep.subr.bf16.mxu0 0
      %634 = vmatpush1.bf16.msra.mxu0 %v621
      %635 = vmatprep.subr.bf16.mxu0 0
      %636 = vmatpush1.bf16.msra.mxu0 %v622
      %637 = vmatprep.subr.bf16.mxu0 0
      %638 = vmatpush1.bf16.msra.mxu0 %v623
      %639 = vmatprep.subr.bf16.mxu0 0
      %640 = vmatpush1.bf16.msra.mxu0 0
      %641 = vmatprep.subr.bf16.mxu0 0
      %642 = vmatpush1.bf16.msra.mxu0 0
      %643 = vmatprep.subr.bf16.mxu0 0
      %644 = vmatpush1.bf16.msra.mxu0 0
      %645 = vmatprep.subr.bf16.mxu0 0
      %646 = vmatpush1.bf16.msra.mxu0 0
      %647 = vmatprep.subr.bf16.mxu0 0
      %648 = vmatpush1.bf16.msra.mxu0 0
      %649 = vmatprep.subr.bf16.mxu0 0
      %650 = vmatpush1.bf16.msra.mxu0 0
      %651 = vmatprep.subr.bf16.mxu0 0
      %652 = vmatpush1.bf16.msra.mxu0 0
      %653 = vmatprep.subr.bf16.mxu0 0
      %654 = vmatpush1.bf16.msra.mxu0 0
      %655 = vmatprep.subr.bf16.mxu0 0
      %656 = vmatpush1.bf16.msra.mxu0 0
      %657 = vmatprep.subr.bf16.mxu0 0
      %658 = vmatpush1.bf16.msra.mxu0 0
      %659 = vmatprep.subr.bf16.mxu0 0
      %660 = vmatpush1.bf16.msra.mxu0 0
      %661 = vmatprep.subr.bf16.mxu0 0
      %662 = vmatpush1.bf16.msra.mxu0 0
      %663 = vmatprep.mubr.bf16.mxu0 0
      %664 = vmatmul.mubr.bf16.gmra.mrb[0].mxu0 %v629
      %v665 = vpop.f32.mrb[0].mxu0
      %v666 = vadd.f32 %v593, %v665
      %v667 = vpop.f32.mrb[0].mxu0
      %v668 = vpop.f32.mrb[0].mxu0
      %v669 = vadd.f32 %v596, %v668
      %v670 = vpop.f32.mrb[0].mxu0
      %671 = vdwg.mxu0
      %v672 = vld [vmem:[%s485] sm:$0xf]
      %v673 = vld [vmem:[%s485 + $0x4] sm:$0xf]
      %v674 = vld [vmem:[%s6] sm:$0xf]
      %v675 = vld [vmem:[%s6 + $0x4] sm:$0xf]
      %v676 = vld [vmem:[%s6 + $0x8] sm:$0xf]
      %v677 = vld [vmem:[%s6 + $0xc] sm:$0xf]
      %v678 = vld [vmem:[%s6 + $0x10] sm:$0xf]
      %v679 = vld [vmem:[%s6 + $0x14] sm:$0xf]
      %v680 = vld [vmem:[%s6 + $0x18] sm:$0xf]
      %v681 = vld [vmem:[%s6 + $0x1c] sm:$0xf]
      %v682 = vld [vmem:[%s6 + $0x20] sm:$0xf]
      %v683 = vld [vmem:[%s6 + $0x24] sm:$0xf]
      %v684 = vld [vmem:[%s6 + $0x28] sm:$0xf]
      %v685 = vld [vmem:[%s6 + $0x2c] sm:$0xf]
      %v686 = vld [vmem:[%s6 + $0x30] sm:$0xf]
      %v687 = vld [vmem:[%s6 + $0x34] sm:$0xf]
      %v688 = vld [vmem:[%s6 + $0x38] sm:$0xf]
      %v689 = vld [vmem:[%s6 + $0x3c] sm:$0xf]
      %v692 = vunpack.c.l.b16 %v672
      %v693 = vunpack.c.l.b16 %v673
      %v694 = vpack.c.b16 %v693, %v692
      %v712 = vunpack.c.l.b16 %v674
      %v713 = vunpack.c.l.b16 %v675
      %v714 = vunpack.c.l.b16 %v676
      %v715 = vunpack.c.l.b16 %v677
      %v716 = vunpack.c.l.b16 %v678
      %v717 = vunpack.c.l.b16 %v679
      %v718 = vunpack.c.l.b16 %v680
      %v719 = vunpack.c.l.b16 %v681
      %v720 = vunpack.c.l.b16 %v682
      %v721 = vunpack.c.l.b16 %v683
      %v722 = vunpack.c.l.b16 %v684
      %v723 = vunpack.c.l.b16 %v685
      %v724 = vunpack.c.l.b16 %v686
      %v725 = vunpack.c.l.b16 %v687
      %v726 = vunpack.c.l.b16 %v688
      %v727 = vunpack.c.l.b16 %v689
      %v728 = vpack.c.b16 %v713, %v712
      %v729 = vpack.c.b16 %v715, %v714
      %v730 = vpack.c.b16 %v717, %v716
      %v731 = vpack.c.b16 %v719, %v718
      %v732 = vpack.c.b16 %v721, %v720
      %v733 = vpack.c.b16 %v723, %v722
      %v734 = vpack.c.b16 %v725, %v724
      %v735 = vpack.c.b16 %v727, %v726
      %744 = vmatprep.subr.bf16.mxu0 0
      %745 = vmatpush1.bf16.msra.mxu0 %v728
      %746 = vmatprep.subr.bf16.mxu0 0
      %747 = vmatpush1.bf16.msra.mxu0 %v729
      %748 = vmatprep.subr.bf16.mxu0 0
      %749 = vmatpush1.bf16.msra.mxu0 %v730
      %750 = vmatprep.subr.bf16.mxu0 0
      %751 = vmatpush1.bf16.msra.mxu0 %v731
      %752 = vmatprep.subr.bf16.mxu0 0
      %753 = vmatpush1.bf16.msra.mxu0 %v732
      %754 = vmatprep.subr.bf16.mxu0 0
      %755 = vmatpush1.bf16.msra.mxu0 %v733
      %756 = vmatprep.subr.bf16.mxu0 0
      %757 = vmatpush1.bf16.msra.mxu0 %v734
      %758 = vmatprep.subr.bf16.mxu0 0
      %759 = vmatpush1.bf16.msra.mxu0 %v735
      %760 = vmatprep.subr.bf16.mxu0 0
      %761 = vmatpush1.bf16.msra.mxu0 0
      %762 = vmatprep.subr.bf16.mxu0 0
      %763 = vmatpush1.bf16.msra.mxu0 0
      %764 = vmatprep.subr.bf16.mxu0 0
      %765 = vmatpush1.bf16.msra.mxu0 0
      %766 = vmatprep.subr.bf16.mxu0 0
      %767 = vmatpush1.bf16.msra.mxu0 0
      %768 = vmatprep.subr.bf16.mxu0 0
      %769 = vmatpush1.bf16.msra.mxu0 0
      %770 = vmatprep.subr.bf16.mxu0 0
      %771 = vmatpush1.bf16.msra.mxu0 0
      %772 = vmatprep.subr.bf16.mxu0 0
      %773 = vmatpush1.bf16.msra.mxu0 0
      %774 = vmatprep.subr.bf16.mxu0 0
      %775 = vmatpush1.bf16.msra.mxu0 0
      %776 = vmatprep.mubr.bf16.mxu0 0
      %777 = vmatmul.mubr.bf16.gmra.mrb[0].mxu0 %v694
      %v778 = vpop.f32.mrb[0].mxu0
      %v779 = vadd.f32 0.0, %v778
      %v780 = vpop.f32.mrb[0].mxu0
      %v781 = vpop.f32.mrb[0].mxu0
      %v782 = vadd.f32 0.0, %v781
      %v783 = vpop.f32.mrb[0].mxu0
      %784 = vdwg.mxu0
      %v785 = vadd.f32 %v666, %v779
      %v786 = vadd.f32 %v669, %v782
      %v787 = vld [vmem:[%s496] sm:$0xff]
      %v788 = vld [vmem:[%s496 + $0x8] sm:$0xff]
      %v789 = vld [vmem:[%s7] sm:$0xf]
      %v790 = vld [vmem:[%s7 + $0x4] sm:$0xf]
      %v791 = vld [vmem:[%s7 + $0x8] sm:$0xf]
      %v792 = vld [vmem:[%s7 + $0xc] sm:$0xf]
      %v793 = vld [vmem:[%s7 + $0x10] sm:$0xf]
      %v794 = vld [vmem:[%s7 + $0x14] sm:$0xf]
      %v795 = vld [vmem:[%s7 + $0x18] sm:$0xf]
      %v796 = vld [vmem:[%s7 + $0x1c] sm:$0xf]
      %v797 = vld [vmem:[%s7 + $0x20] sm:$0xf]
      %v798 = vld [vmem:[%s7 + $0x24] sm:$0xf]
      %v799 = vld [vmem:[%s7 + $0x28] sm:$0xf]
      %v800 = vld [vmem:[%s7 + $0x2c] sm:$0xf]
      %v801 = vld [vmem:[%s7 + $0x30] sm:$0xf]
      %v802 = vld [vmem:[%s7 + $0x34] sm:$0xf]
      %v803 = vld [vmem:[%s7 + $0x38] sm:$0xf]
      %v804 = vld [vmem:[%s7 + $0x3c] sm:$0xf]
      %v805 = vld [vmem:[%s7 + $0x40] sm:$0xf]
      %v806 = vld [vmem:[%s7 + $0x44] sm:$0xf]
      %v807 = vld [vmem:[%s7 + $0x48] sm:$0xf]
      %v808 = vld [vmem:[%s7 + $0x4c] sm:$0xf]
      %v809 = vld [vmem:[%s7 + $0x50] sm:$0xf]
      %v810 = vld [vmem:[%s7 + $0x54] sm:$0xf]
      %v811 = vld [vmem:[%s7 + $0x58] sm:$0xf]
      %v812 = vld [vmem:[%s7 + $0x5c] sm:$0xf]
      %v813 = vld [vmem:[%s7 + $0x60] sm:$0xf]
      %v814 = vld [vmem:[%s7 + $0x64] sm:$0xf]
      %v815 = vld [vmem:[%s7 + $0x68] sm:$0xf]
      %v816 = vld [vmem:[%s7 + $0x6c] sm:$0xf]
      %v817 = vld [vmem:[%s7 + $0x70] sm:$0xf]
      %v818 = vld [vmem:[%s7 + $0x74] sm:$0xf]
      %v819 = vld [vmem:[%s7 + $0x78] sm:$0xf]
      %v820 = vld [vmem:[%s7 + $0x7c] sm:$0xf]
      %v823 = vunpack.c.l.b16 %v787
      %v824 = vunpack.c.h.b16 %v787
      %v825 = vunpack.c.l.b16 %v788
      %v826 = vunpack.c.h.b16 %v788
      %v827 = vpack.c.b16 %v825, %v823
      %v828 = vpack.c.b16 %v826, %v824
      %v863 = vunpack.c.l.b16 %v789
      %v864 = vunpack.c.l.b16 %v790
      %v865 = vunpack.c.l.b16 %v791
      %v866 = vunpack.c.l.b16 %v792
      %v867 = vunpack.c.l.b16 %v793
      %v868 = vunpack.c.l.b16 %v794
      %v869 = vunpack.c.l.b16 %v795
      %v870 = vunpack.c.l.b16 %v796
      %v871 = vunpack.c.l.b16 %v797
      %v872 = vunpack.c.l.b16 %v798
      %v873 = vunpack.c.l.b16 %v799
      %v874 = vunpack.c.l.b16 %v800
      %v875 = vunpack.c.l.b16 %v801
      %v876 = vunpack.c.l.b16 %v802
      %v877 = vunpack.c.l.b16 %v803
      %v878 = vunpack.c.l.b16 %v804
      %v879 = vunpack.c.l.b16 %v805
      %v880 = vunpack.c.l.b16 %v806
      %v881 = vunpack.c.l.b16 %v807
      %v882 = vunpack.c.l.b16 %v808
      %v883 = vunpack.c.l.b16 %v809
      %v884 = vunpack.c.l.b16 %v810
      %v885 = vunpack.c.l.b16 %v811
      %v886 = vunpack.c.l.b16 %v812
      %v887 = vunpack.c.l.b16 %v813
      %v888 = vunpack.c.l.b16 %v814
      %v889 = vunpack.c.l.b16 %v815
      %v890 = vunpack.c.l.b16 %v816
      %v891 = vunpack.c.l.b16 %v817
      %v892 = vunpack.c.l.b16 %v818
      %v893 = vunpack.c.l.b16 %v819
      %v894 = vunpack.c.l.b16 %v820
      %v895 = vpack.c.b16 %v864, %v863
      %v896 = vpack.c.b16 %v866, %v865
      %v897 = vpack.c.b16 %v868, %v867
      %v898 = vpack.c.b16 %v870, %v869
      %v899 = vpack.c.b16 %v872, %v871
      %v900 = vpack.c.b16 %v874, %v873
      %v901 = vpack.c.b16 %v876, %v875
      %v902 = vpack.c.b16 %v878, %v877
      %v903 = vpack.c.b16 %v880, %v879
      %v904 = vpack.c.b16 %v882, %v881
      %v905 = vpack.c.b16 %v884, %v883
      %v906 = vpack.c.b16 %v886, %v885
      %v907 = vpack.c.b16 %v888, %v887
      %v908 = vpack.c.b16 %v890, %v889
      %v909 = vpack.c.b16 %v892, %v891
      %v910 = vpack.c.b16 %v894, %v893
      %927 = vmatprep.subr.bf16.mxu0 0
      %928 = vmatpush1.bf16.msra.mxu0 %v895
      %929 = vmatprep.subr.bf16.mxu0 0
      %930 = vmatpush1.bf16.msra.mxu0 %v896
      %931 = vmatprep.subr.bf16.mxu0 0
      %932 = vmatpush1.bf16.msra.mxu0 %v897
      %933 = vmatprep.subr.bf16.mxu0 0
      %934 = vmatpush1.bf16.msra.mxu0 %v898
      %935 = vmatprep.subr.bf16.mxu0 0
      %936 = vmatpush1.bf16.msra.mxu0 %v899
      %937 = vmatprep.subr.bf16.mxu0 0
      %938 = vmatpush1.bf16.msra.mxu0 %v900
      %939 = vmatprep.subr.bf16.mxu0 0
      %940 = vmatpush1.bf16.msra.mxu0 %v901
      %941 = vmatprep.subr.bf16.mxu0 0
      %942 = vmatpush1.bf16.msra.mxu0 %v902
      %943 = vmatprep.subr.bf16.mxu0 0
      %944 = vmatpush1.bf16.msra.mxu0 %v903
      %945 = vmatprep.subr.bf16.mxu0 0
      %946 = vmatpush1.bf16.msra.mxu0 %v904
      %947 = vmatprep.subr.bf16.mxu0 0
      %948 = vmatpush1.bf16.msra.mxu0 %v905
      %949 = vmatprep.subr.bf16.mxu0 0
      %950 = vmatpush1.bf16.msra.mxu0 %v906
      %951 = vmatprep.subr.bf16.mxu0 0
      %952 = vmatpush1.bf16.msra.mxu0 %v907
      %953 = vmatprep.subr.bf16.mxu0 0
      %954 = vmatpush1.bf16.msra.mxu0 %v908
      %955 = vmatprep.subr.bf16.mxu0 0
      %956 = vmatpush1.bf16.msra.mxu0 %v909
      %957 = vmatprep.subr.bf16.mxu0 0
      %958 = vmatpush1.bf16.msra.mxu0 %v910
      %959 = vmatprep.mubr.bf16.mxu0 %v828
      %960 = vmatmul.mubr.bf16.gmra.mrb[0].mxu0 %v827
      %v961 = vpop.f32.mrb[0].mxu0
      %v962 = vadd.f32 0.0, %v961
      %v963 = vpop.f32.mrb[0].mxu0
      %v964 = vpop.f32.mrb[0].mxu0
      %v965 = vadd.f32 0.0, %v964
      %v966 = vpop.f32.mrb[0].mxu0
      %967 = vdwg.mxu0
      %v968 = vadd.f32 %v785, %v962
      %v969 = vadd.f32 %v786, %v965
      %v970 = vld [vmem:[%s8] sm:$0x1]
      %v972 = vlaneseq
      %v973 = vshrl.u32 %v972, 7
      %v974 = vsub.s32 0, %v973
      %v975 = vrot.slane %v970, %v974
      %v977 = vadd.f32 %v968, %v975
      %v978 = vadd.f32 %v969, %v975
      %vm979 = vcmp.gt.f32.partialorder %v977, 0.0
      %vm980 = vcmp.gt.f32.partialorder %v978, 0.0
      %v981 = vmul.f32 %v977, 0.2
      %v982 = vmul.f32 %v978, 0.2
      %v983 = vsel %vm979, %v977, %v981
      %v984 = vsel %vm980, %v978, %v982
      %v985 = vsel %vm554, %v983, -inf
      %v986 = vsel %vm554, %v984, -inf
      %v987 = vmax.f32 %v985, %v986
      %v988 = vrot.slane %v987, 4
      %v989 = vmax.f32 %v987, %v988
      %v990 = vrot.slane %v989, 2
      %v991 = vmax.f32 %v989, %v990
      %v992 = vrot.slane %v991, 1
      %v993 = vmax.f32 %v991, %v992
      %v994 = vsel %vm554, %v983, 0.0
      %v995 = vsel %vm554, %v984, 0.0
      %v996 = vadd.f32 %v994, %v995
      %v997 = vrot.slane %v996, 4
      %v998 = vadd.f32 %v996, %v997
      %v999 = vrot.slane %v998, 2
      %v1000 = vadd.f32 %v998, %v999
      %v1001 = vrot.slane %v1000, 1
      %v1002 = vadd.f32 %v1000, %v1001
      %p1003 = scmp.eq.s32.totalorder %s27, 0
      // Predicated region
      $region57: #{attention_dgcnn_forward.18} parent=55 // pred_check
        %p1004 = pneg %p1003
      $region58: #{attention_dgcnn_forward.18} parent=55 // pred_check_branch
        %1006 = sbr.rel (%p1004) target = $region60
      $region59: #{attention_dgcnn_forward.18} parent=55 // pred_region
        %vm1007 = vcmask 516096
        %1008 = vst.msk [vmem:[%s500] sm:$0x1] %vm1007, %v993
        %1009 = vst.msk [vmem:[%s503] sm:$0x1] %vm1007, %v1002
      $region60: #{attention_dgcnn_forward.18} parent=55 // pred_fallthru
        _
      %p1010 = scmp.gt.s32.totalorder %s27, 0
      // Predicated region
      $region61: #{attention_dgcnn_forward.18} parent=55 // pred_check
        %p1011 = pneg %p1010
      $region62: #{attention_dgcnn_forward.18} parent=55 // pred_check_branch
        %1013 = sbr.rel (%p1011) target = $region64
      $region63: #{attention_dgcnn_forward.18} parent=55 // pred_region
        %v1014 = vld [vmem:[%s500] sm:$0x1]
        %v1015 = vmax.f32 %v1014, %v993
        %vm1016 = vcmask 516096
        %1017 = vst.msk [vmem:[%s500] sm:$0x1] %vm1016, %v1015
        %v1018 = vld [vmem:[%s503] sm:$0x1]
        %v1019 = vadd.f32 %v1018, %v1002
        %1020 = vst.msk [vmem:[%s503] sm:$0x1] %vm1016, %v1019
      $region64: #{attention_dgcnn_forward.18} parent=55 // pred_fallthru
        _
      // Predicated region
      $region65: #{attention_dgcnn_forward.18} parent=55 // pred_check
        %p1021 = pneg %p1003
      $region66: #{attention_dgcnn_forward.18} parent=55 // pred_check_branch
        %1023 = sbr.rel (%p1021) target = $region68
      $region67: #{attention_dgcnn_forward.18} parent=55 // pred_region
        %v1024 = vld [vmem:[%s503] sm:$0x1]
        %v1025 = vmul.f32 %v1024, 0.0625
        %vm1026 = vcmask 516096
        %1027 = vst.msk [vmem:[%s503] sm:$0x1] %vm1026, %v1025
      $region68: #{attention_dgcnn_forward.18} parent=55 // pred_fallthru
        _
      %p1028 = scmp.lt.s32.totalorder %s26, 1
      %s1029 = scalar_select %p1028, %s26, 1
      %s1030 = scalar_lea.vmem %s9, %s1029
      %p1031 = scmp.lt.s32.totalorder %s26, 1
      %s1032 = scalar_select %p1031, %s26, 1
      %s1033 = scalar_lea.vmem %s10, %s1032
      // Predicated region
      $region69: #{attention_dgcnn_forward.18} parent=55 // pred_check
        %p1034 = pneg %p269
      $region70: #{attention_dgcnn_forward.18} parent=55 // pred_check_branch
        %1036 = sbr.rel (%p1034) target = $region72
      $region71: #{attention_dgcnn_forward.18} parent=55 // pred_region
        _
      $region72: #{attention_dgcnn_forward.18} parent=55 // pred_fallthru
        _
      // Predicated region
      $region73: #{attention_dgcnn_forward.18} parent=55 // pred_check
        %p1037 = pneg %p295
      $region74: #{attention_dgcnn_forward.18} parent=55 // pred_check_branch
        %1039 = sbr.rel (%p1037) target = $region76
      $region75: #{attention_dgcnn_forward.18} parent=55 // pred_region
        _
      $region76: #{attention_dgcnn_forward.18} parent=55 // pred_fallthru
        _
    $region56: #{attention_dgcnn_forward.18} parent=5 // pred_fallthru
      _
    %p1040 = scmp.le.s32.totalorder 2, %s17
    // Predicated region
    $region77: #{attention_dgcnn_forward.18} parent=5 // pred_check
      %p1041 = pneg %p1040
    $region78: #{attention_dgcnn_forward.18} parent=5 // pred_check_branch
      %1043 = sbr.rel (%p1041) target = $region80
    $region79: #{attention_dgcnn_forward.18} parent=5 // pred_region
      %s1044 = ssub.s32 %s17, 2
      // Predicated region
      $region81: #{attention_dgcnn_forward.18} parent=79 // pred_check
        %p1045 = pneg %p275
      $region82: #{attention_dgcnn_forward.18} parent=79 // pred_check_branch
        %1047 = sbr.rel (%p1045) target = $region84
      $region83: #{attention_dgcnn_forward.18} parent=79 // pred_region
        %p1048 = scmp.lt.s32.totalorder %s28, 1
        %s1049 = scalar_select %p1048, %s28, 1
        %s1050 = scalar_lea.vmem %s9, %s1049
      $region84: #{attention_dgcnn_forward.18} parent=79 // pred_fallthru
        _
      // Predicated region
      $region85: #{attention_dgcnn_forward.18} parent=79 // pred_check
        %p1051 = pneg %p301
      $region86: #{attention_dgcnn_forward.18} parent=79 // pred_check_branch
        %1053 = sbr.rel (%p1051) target = $region88
      $region87: #{attention_dgcnn_forward.18} parent=79 // pred_region
        %p1054 = scmp.lt.s32.totalorder %s28, 1
        %s1055 = scalar_select %p1054, %s28, 1
        %s1056 = scalar_lea.vmem %s10, %s1055
      $region88: #{attention_dgcnn_forward.18} parent=79 // pred_fallthru
        _
    $region80: #{attention_dgcnn_forward.18} parent=5 // pred_fallthru
      _
  $region6: #{attention_dgcnn_forward.18} parent=0 // loop_footer
    %s21 = sadd.s32 1, %s17
  $region7: #{attention_dgcnn_forward.18} parent=0 // loop_footer_branch
    %16 = sbr.rel target = $region3
  $region8: #{attention_dgcnn_forward.18} parent=0 // loop_exit
    _

// kernel: attention_dgcnn_forward.17
$region0: #{attention_dgcnn_forward.17}
  #allocation0 [shape = 'u32[]', space=smem, size = 0x4, offset = 0x4, fixed_abs, tag = 'smem constant byte address 0x4 - core index']
  #allocation1 [shape = 'u32[144,128]{1,0:T(1,128)}', space=vmem, size = 0x12000, scoped, tag = 'internal scratch']
  #allocation2 [shape = 'bf16[2,16,256]{2,1,0:T(16,128)(2,1)}', space=vmem, size = 0x4000, scoped, tag = 'scratch operand']
  #allocation3 [shape = 'bf16[2,16,256]{2,1,0:T(16,128)(2,1)}', space=vmem, size = 0x4000, scoped, tag = 'scratch operand']
  #allocation4 [shape = 'bf16[2,16,256]{2,1,0:T(16,128)(2,1)}', space=vmem, size = 0x4000, scoped, tag = 'scratch operand']
  #allocation5 [shape = 'f32[2,16,256]{2,1,0:T(8,128)}', space=vmem, size = 0x8000, scoped, tag = 'scratch operand']
  #allocation6 [shape = 'f32[2,16,4]{2,1,0:T(8,128)}', space=vmem, size = 0x4000, scoped, tag = 'scratch operand']
  %s0 = inlined_call_operand.vmem [shape: bf16[2,16,256], index: 0, kind: input, shape index: {}]
  %s1 = inlined_call_operand.vmem [shape: bf16[256,768], index: 1, kind: input, shape index: {}]
  %s2 = inlined_call_operand.vmem [shape: f32[1,768], index: 2, kind: input, shape index: {}]
  %s3 = inlined_call_operand.vmem [shape: bf16[256,256], index: 3, kind: input, shape index: {}]
  %s4 = inlined_call_operand.vmem [shape: f32[1,256], index: 4, kind: input, shape index: {}]
  %s5 = inlined_call_operand.vmem [shape: bf16[256,4], index: 5, kind: input, shape index: {}]
  %s6 = inlined_call_operand.vmem [shape: bf16[4,256], index: 6, kind: input, shape index: {}]
  %s7 = inlined_call_operand.vmem [shape: bf16[2,16,256], index: 7, kind: output, shape index: {}]
  %s8 = sld [smem:[#allocation0]]
  $region38: #{attention_dgcnn_forward.17} parent=0
    _
  %s10 = ssub.s32 1, %s8
  %s11 = scalar_select 0, %s10, %s8
  // Predicated region
  $region2: #{attention_dgcnn_forward.17} parent=0 // pred_check
    _
  $region3: #{attention_dgcnn_forward.17} parent=0 // pred_check_branch
    %13 = sbr.rel (0) target = $region5
  $region4: #{attention_dgcnn_forward.17} parent=0 // pred_region
    _
  $region5: #{attention_dgcnn_forward.17} parent=0 // pred_fallthru
    _
  // Predicated region
  $region6: #{attention_dgcnn_forward.17} parent=0 // pred_check
    _
  $region7: #{attention_dgcnn_forward.17} parent=0 // pred_check_branch
    %15 = sbr.rel (0) target = $region9
  $region8: #{attention_dgcnn_forward.17} parent=0 // pred_region
    _
  $region9: #{attention_dgcnn_forward.17} parent=0 // pred_fallthru
    _
  // Predicated region
  $region10: #{attention_dgcnn_forward.17} parent=0 // pred_check
    _
  $region11: #{attention_dgcnn_forward.17} parent=0 // pred_check_branch
    %17 = sbr.rel (0) target = $region13
  $region12: #{attention_dgcnn_forward.17} parent=0 // pred_region
    _
  $region13: #{attention_dgcnn_forward.17} parent=0 // pred_fallthru
    _
  // Predicated region
  $region14: #{attention_dgcnn_forward.17} parent=0 // pred_check
    _
  $region15: #{attention_dgcnn_forward.17} parent=0 // pred_check_branch
    %19 = sbr.rel (0) target = $region17
  $region16: #{attention_dgcnn_forward.17} parent=0 // pred_region
    _
  $region17: #{attention_dgcnn_forward.17} parent=0 // pred_fallthru
    _
  // Predicated region
  $region18: #{attention_dgcnn_forward.17} parent=0 // pred_check
    _
  $region19: #{attention_dgcnn_forward.17} parent=0 // pred_check_branch
    %21 = sbr.rel (0) target = $region21
  $region20: #{attention_dgcnn_forward.17} parent=0 // pred_region
    _
  $region21: #{attention_dgcnn_forward.17} parent=0 // pred_fallthru
    _
  // Predicated region
  $region22: #{attention_dgcnn_forward.17} parent=0 // pred_check
    _
  $region23: #{attention_dgcnn_forward.17} parent=0 // pred_check_branch
    %23 = sbr.rel (0) target = $region25
  $region24: #{attention_dgcnn_forward.17} parent=0 // pred_region
    _
  $region25: #{attention_dgcnn_forward.17} parent=0 // pred_fallthru
    _
  // Predicated region
  $region26: #{attention_dgcnn_forward.17} parent=0 // pred_check
    _
  $region27: #{attention_dgcnn_forward.17} parent=0 // pred_check_branch
    %25 = sbr.rel (0) target = $region29
  $region28: #{attention_dgcnn_forward.17} parent=0 // pred_region
    _
  $region29: #{attention_dgcnn_forward.17} parent=0 // pred_fallthru
    _
  %v27 = vld [vmem:[%s0] sm:$0xff]
  %v28 = vld [vmem:[%s0 + $0x8] sm:$0xff]
  %v29 = vld [vmem:[%s0 + $0x10] sm:$0xff]
  %v30 = vld [vmem:[%s0 + $0x18] sm:$0xff]
  %v31 = vld [vmem:[%s1] sm:$0xff]
  %v32 = vld [vmem:[%s1 + $0x8] sm:$0xff]
  %v33 = vld [vmem:[%s1 + $0x10] sm:$0xff]
  %v34 = vld [vmem:[%s1 + $0x18] sm:$0xff]
  %v35 = vld [vmem:[%s1 + $0x20] sm:$0xff]
  %v36 = vld [vmem:[%s1 + $0x28] sm:$0xff]
  %v37 = vld [vmem:[%s1 + $0x30] sm:$0xff]
  %v38 = vld [vmem:[%s1 + $0x38] sm:$0xff]
  %v39 = vld [vmem:[%s1 + $0x40] sm:$0xff]
  %v40 = vld [vmem:[%s1 + $0x48] sm:$0xff]
  %v41 = vld [vmem:[%s1 + $0x50] sm:$0xff]
  %v42 = vld [vmem:[%s1 + $0x58] sm:$0xff]
  %v43 = vld [vmem:[%s1 + $0x60] sm:$0xff]
  %v44 = vld [vmem:[%s1 + $0x68] sm:$0xff]
  %v45 = vld [vmem:[%s1 + $0x70] sm:$0xff]
  %v46 = vld [vmem:[%s1 + $0x78] sm:$0xff]
  %v47 = vld [vmem:[%s1 + $0x80] sm:$0xff]
  %v48 = vld [vmem:[%s1 + $0x88] sm:$0xff]
  %v49 = vld [vmem:[%s1 + $0x90] sm:$0xff]
  %v50 = vld [vmem:[%s1 + $0x98] sm:$0xff]
  %v51 = vld [vmem:[%s1 + $0xa0] sm:$0xff]
  %v52 = vld [vmem:[%s1 + $0xa8] sm:$0xff]
  %v53 = vld [vmem:[%s1 + $0xb0] sm:$0xff]
  %v54 = vld [vmem:[%s1 + $0xb8] sm:$0xff]
  %v55 = vld [vmem:[%s1 + $0xc0] sm:$0xff]
  %v56 = vld [vmem:[%s1 + $0xc8] sm:$0xff]
  %v57 = vld [vmem:[%s1 + $0xd0] sm:$0xff]
  %v58 = vld [vmem:[%s1 + $0xd8] sm:$0xff]
  %v59 = vld [vmem:[%s1 + $0xe0] sm:$0xff]
  %v60 = vld [vmem:[%s1 + $0xe8] sm:$0xff]
  %v61 = vld [vmem:[%s1 + $0xf0] sm:$0xff]
  %v62 = vld [vmem:[%s1 + $0xf8] sm:$0xff]
  %v63 = vld [vmem:[%s1 + $0x100] sm:$0xff]
  %v64 = vld [vmem:[%s1 + $0x108] sm:$0xff]
  %v65 = vld [vmem:[%s1 + $0x110] sm:$0xff]
  %v66 = vld [vmem:[%s1 + $0x118] sm:$0xff]
  %v67 = vld [vmem:[%s1 + $0x120] sm:$0xff]
  %v68 = vld [vmem:[%s1 + $0x128] sm:$0xff]
  %v69 = vld [vmem:[%s1 + $0x130] sm:$0xff]
  %v70 = vld [vmem:[%s1 + $0x138] sm:$0xff]
  %v71 = vld [vmem:[%s1 + $0x140] sm:$0xff]
  %v72 = vld [vmem:[%s1 + $0x148] sm:$0xff]
  %v73 = vld [vmem:[%s1 + $0x150] sm:$0xff]
  %v74 = vld [vmem:[%s1 + $0x158] sm:$0xff]
  %v75 = vld [vmem:[%s1 + $0x160] sm:$0xff]
  %v76 = vld [vmem:[%s1 + $0x168] sm:$0xff]
  %v77 = vld [vmem:[%s1 + $0x170] sm:$0xff]
  %v78 = vld [vmem:[%s1 + $0x178] sm:$0xff]
  %v79 = vld [vmem:[%s1 + $0x180] sm:$0xff]
  %v80 = vld [vmem:[%s1 + $0x188] sm:$0xff]
  %v81 = vld [vmem:[%s1 + $0x190] sm:$0xff]
  %v82 = vld [vmem:[%s1 + $0x198] sm:$0xff]
  %v83 = vld [vmem:[%s1 + $0x1a0] sm:$0xff]
  %v84 = vld [vmem:[%s1 + $0x1a8] sm:$0xff]
  %v85 = vld [vmem:[%s1 + $0x1b0] sm:$0xff]
  %v86 = vld [vmem:[%s1 + $0x1b8] sm:$0xff]
  %v87 = vld [vmem:[%s1 + $0x1c0] sm:$0xff]
  %v88 = vld [vmem:[%s1 + $0x1c8] sm:$0xff]
  %v89 = vld [vmem:[%s1 + $0x1d0] sm:$0xff]
  %v90 = vld [vmem:[%s1 + $0x1d8] sm:$0xff]
  %v91 = vld [vmem:[%s1 + $0x1e0] sm:$0xff]
  %v92 = vld [vmem:[%s1 + $0x1e8] sm:$0xff]
  %v93 = vld [vmem:[%s1 + $0x1f0] sm:$0xff]
  %v94 = vld [vmem:[%s1 + $0x1f8] sm:$0xff]
  %v95 = vld [vmem:[%s1 + $0x200] sm:$0xff]
  %v96 = vld [vmem:[%s1 + $0x208] sm:$0xff]
  %v97 = vld [vmem:[%s1 + $0x210] sm:$0xff]
  %v98 = vld [vmem:[%s1 + $0x218] sm:$0xff]
  %v99 = vld [vmem:[%s1 + $0x220] sm:$0xff]
  %v100 = vld [vmem:[%s1 + $0x228] sm:$0xff]
  %v101 = vld [vmem:[%s1 + $0x230] sm:$0xff]
  %v102 = vld [vmem:[%s1 + $0x238] sm:$0xff]
  %v103 = vld [vmem:[%s1 + $0x240] sm:$0xff]
  %v104 = vld [vmem:[%s1 + $0x248] sm:$0xff]
  %v105 = vld [vmem:[%s1 + $0x250] sm:$0xff]
  %v106 = vld [vmem:[%s1 + $0x258] sm:$0xff]
  %v107 = vld [vmem:[%s1 + $0x260] sm:$0xff]
  %v108 = vld [vmem:[%s1 + $0x268] sm:$0xff]
  %v109 = vld [vmem:[%s1 + $0x270] sm:$0xff]
  %v110 = vld [vmem:[%s1 + $0x278] sm:$0xff]
  %v111 = vld [vmem:[%s1 + $0x280] sm:$0xff]
  %v112 = vld [vmem:[%s1 + $0x288] sm:$0xff]
  %v113 = vld [vmem:[%s1 + $0x290] sm:$0xff]
  %v114 = vld [vmem:[%s1 + $0x298] sm:$0xff]
  %v115 = vld [vmem:[%s1 + $0x2a0] sm:$0xff]
  %v116 = vld [vmem:[%s1 + $0x2a8] sm:$0xff]
  %v117 = vld [vmem:[%s1 + $0x2b0] sm:$0xff]
  %v118 = vld [vmem:[%s1 + $0x2b8] sm:$0xff]
  %v119 = vld [vmem:[%s1 + $0x2c0] sm:$0xff]
  %v120 = vld [vmem:[%s1 + $0x2c8] sm:$0xff]
  %v121 = vld [vmem:[%s1 + $0x2d0] sm:$0xff]
  %v122 = vld [vmem:[%s1 + $0x2d8] sm:$0xff]
  %v123 = vld [vmem:[%s1 + $0x2e0] sm:$0xff]
  %v124 = vld [vmem:[%s1 + $0x2e8] sm:$0xff]
  %v125 = vld [vmem:[%s1 + $0x2f0] sm:$0xff]
  %v126 = vld [vmem:[%s1 + $0x2f8] sm:$0xff]
  %v127 = vld [vmem:[%s2] sm:$0x3f]
  %v129 = vlaneseq
  %v130 = vshrl.u32 %v129, 7
  %v131 = vsub.s32 0, %v130
  %v132 = vrot.slane %v127, %v131
  %v133 = vlaneseq
  %v134 = vshrl.u32 %v133, 7
  %v135 = vsub.s32 1, %v134
  %v136 = vrot.slane %v127, %v135
  %v137 = vlaneseq
  %v138 = vshrl.u32 %v137, 7
  %v139 = vsub.s32 2, %v138
  %v140 = vrot.slane %v127, %v139
  %v141 = vlaneseq
  %v142 = vshrl.u32 %v141, 7
  %v143 = vsub.s32 3, %v142
  %v144 = vrot.slane %v127, %v143
  %v145 = vlaneseq
  %v146 = vshrl.u32 %v145, 7
  %v147 = vsub.s32 4, %v146
  %v148 = vrot.slane %v127, %v147
  %v149 = vlaneseq
  %v150 = vshrl.u32 %v149, 7
  %v151 = vsub.s32 5, %v150
  %v152 = vrot.slane %v127, %v151
  %v163 = vunpack.c.l.b16 %v27
  %v164 = vunpack.c.h.b16 %v27
  %v165 = vunpack.c.l.b16 %v28
  %v166 = vunpack.c.h.b16 %v28
  %v167 = vunpack.c.l.b16 %v29
  %v168 = vunpack.c.h.b16 %v29
  %v169 = vunpack.c.l.b16 %v30
  %v170 = vunpack.c.h.b16 %v30
  %v171 = vpack.c.b16 %v165, %v163
  %v172 = vpack.c.b16 %v166, %v164
  %v173 = vpack.c.b16 %v169, %v167
  %v174 = vpack.c.b16 %v170, %v168
  %v275 = vunpack.c.l.b16 %v31
  %v276 = vunpack.c.h.b16 %v31
  %v277 = vunpack.c.l.b16 %v32
  %v278 = vunpack.c.h.b16 %v32
  %v279 = vunpack.c.l.b16 %v33
  %v280 = vunpack.c.h.b16 %v33
  %v281 = vunpack.c.l.b16 %v34
  %v282 = vunpack.c.h.b16 %v34
  %v283 = vunpack.c.l.b16 %v35
  %v284 = vunpack.c.h.b16 %v35
  %v285 = vunpack.c.l.b16 %v36
  %v286 = vunpack.c.h.b16 %v36
  %v287 = vunpack.c.l.b16 %v37
  %v288 = vunpack.c.h.b16 %v37
  %v289 = vunpack.c.l.b16 %v38
  %v290 = vunpack.c.h.b16 %v38
  %v291 = vunpack.c.l.b16 %v39
  %v292 = vunpack.c.h.b16 %v39
  %v293 = vunpack.c.l.b16 %v40
  %v294 = vunpack.c.h.b16 %v40
  %v295 = vunpack.c.l.b16 %v41
  %v296 = vunpack.c.h.b16 %v41
  %v297 = vunpack.c.l.b16 %v42
  %v298 = vunpack.c.h.b16 %v42
  %v299 = vunpack.c.l.b16 %v43
  %v300 = vunpack.c.h.b16 %v43
  %v301 = vunpack.c.l.b16 %v44
  %v302 = vunpack.c.h.b16 %v44
  %v303 = vunpack.c.l.b16 %v45
  %v304 = vunpack.c.h.b16 %v45
  %v305 = vunpack.c.l.b16 %v46
  %v306 = vunpack.c.h.b16 %v46
  %v307 = vunpack.c.l.b16 %v47
  %v308 = vunpack.c.h.b16 %v47
  %v309 = vunpack.c.l.b16 %v48
  %v310 = vunpack.c.h.b16 %v48
  %v311 = vunpack.c.l.b16 %v49
  %v312 = vunpack.c.h.b16 %v49
  %v313 = vunpack.c.l.b16 %v50
  %v314 = vunpack.c.h.b16 %v50
  %v315 = vunpack.c.l.b16 %v51
  %v316 = vunpack.c.h.b16 %v51
  %v317 = vunpack.c.l.b16 %v52
  %v318 = vunpack.c.h.b16 %v52
  %v319 = vunpack.c.l.b16 %v53
  %v320 = vunpack.c.h.b16 %v53
  %v321 = vunpack.c.l.b16 %v54
  %v322 = vunpack.c.h.b16 %v54
  %v323 = vunpack.c.l.b16 %v55
  %v324 = vunpack.c.h.b16 %v55
  %v325 = vunpack.c.l.b16 %v56
  %v326 = vunpack.c.h.b16 %v56
  %v327 = vunpack.c.l.b16 %v57
  %v328 = vunpack.c.h.b16 %v57
  %v329 = vunpack.c.l.b16 %v58
  %v330 = vunpack.c.h.b16 %v58
  %v331 = vunpack.c.l.b16 %v59
  %v332 = vunpack.c.h.b16 %v59
  %v333 = vunpack.c.l.b16 %v60
  %v334 = vunpack.c.h.b16 %v60
  %v335 = vunpack.c.l.b16 %v61
  %v336 = vunpack.c.h.b16 %v61
  %v337 = vunpack.c.l.b16 %v62
  %v338 = vunpack.c.h.b16 %v62
  %v339 = vunpack.c.l.b16 %v63
  %v340 = vunpack.c.h.b16 %v63
  %v341 = vunpack.c.l.b16 %v64
  %v342 = vunpack.c.h.b16 %v64
  %v343 = vunpack.c.l.b16 %v65
  %v344 = vunpack.c.h.b16 %v65
  %v345 = vunpack.c.l.b16 %v66
  %v346 = vunpack.c.h.b16 %v66
  %v347 = vunpack.c.l.b16 %v67
  %v348 = vunpack.c.h.b16 %v67
  %v349 = vunpack.c.l.b16 %v68
  %v350 = vunpack.c.h.b16 %v68
  %v351 = vunpack.c.l.b16 %v69
  %v352 = vunpack.c.h.b16 %v69
  %v353 = vunpack.c.l.b16 %v70
  %v354 = vunpack.c.h.b16 %v70
  %v355 = vunpack.c.l.b16 %v71
  %v356 = vunpack.c.h.b16 %v71
  %v357 = vunpack.c.l.b16 %v72
  %v358 = vunpack.c.h.b16 %v72
  %v359 = vunpack.c.l.b16 %v73
  %v360 = vunpack.c.h.b16 %v73
  %v361 = vunpack.c.l.b16 %v74
  %v362 = vunpack.c.h.b16 %v74
  %v363 = vunpack.c.l.b16 %v75
  %v364 = vunpack.c.h.b16 %v75
  %v365 = vunpack.c.l.b16 %v76
  %v366 = vunpack.c.h.b16 %v76
  %v367 = vunpack.c.l.b16 %v77
  %v368 = vunpack.c.h.b16 %v77
  %v369 = vunpack.c.l.b16 %v78
  %v370 = vunpack.c.h.b16 %v78
  %v371 = vunpack.c.l.b16 %v79
  %v372 = vunpack.c.h.b16 %v79
  %v373 = vunpack.c.l.b16 %v80
  %v374 = vunpack.c.h.b16 %v80
  %v375 = vunpack.c.l.b16 %v81
  %v376 = vunpack.c.h.b16 %v81
  %v377 = vunpack.c.l.b16 %v82
  %v378 = vunpack.c.h.b16 %v82
  %v379 = vunpack.c.l.b16 %v83
  %v380 = vunpack.c.h.b16 %v83
  %v381 = vunpack.c.l.b16 %v84
  %v382 = vunpack.c.h.b16 %v84
  %v383 = vunpack.c.l.b16 %v85
  %v384 = vunpack.c.h.b16 %v85
  %v385 = vunpack.c.l.b16 %v86
  %v386 = vunpack.c.h.b16 %v86
  %v387 = vunpack.c.l.b16 %v87
  %v388 = vunpack.c.h.b16 %v87
  %v389 = vunpack.c.l.b16 %v88
  %v390 = vunpack.c.h.b16 %v88
  %v391 = vunpack.c.l.b16 %v89
  %v392 = vunpack.c.h.b16 %v89
  %v393 = vunpack.c.l.b16 %v90
  %v394 = vunpack.c.h.b16 %v90
  %v395 = vunpack.c.l.b16 %v91
  %v396 = vunpack.c.h.b16 %v91
  %v397 = vunpack.c.l.b16 %v92
  %v398 = vunpack.c.h.b16 %v92
  %v399 = vunpack.c.l.b16 %v93
  %v400 = vunpack.c.h.b16 %v93
  %v401 = vunpack.c.l.b16 %v94
  %v402 = vunpack.c.h.b16 %v94
  %v403 = vunpack.c.l.b16 %v95
  %v404 = vunpack.c.h.b16 %v95
  %v405 = vunpack.c.l.b16 %v96
  %v406 = vunpack.c.h.b16 %v96
  %v407 = vunpack.c.l.b16 %v97
  %v408 = vunpack.c.h.b16 %v97
  %v409 = vunpack.c.l.b16 %v98
  %v410 = vunpack.c.h.b16 %v98
  %v411 = vunpack.c.l.b16 %v99
  %v412 = vunpack.c.h.b16 %v99
  %v413 = vunpack.c.l.b16 %v100
  %v414 = vunpack.c.h.b16 %v100
  %v415 = vunpack.c.l.b16 %v101
  %v416 = vunpack.c.h.b16 %v101
  %v417 = vunpack.c.l.b16 %v102
  %v418 = vunpack.c.h.b16 %v102
  %v419 = vunpack.c.l.b16 %v103
  %v420 = vunpack.c.h.b16 %v103
  %v421 = vunpack.c.l.b16 %v104
  %v422 = vunpack.c.h.b16 %v104
  %v423 = vunpack.c.l.b16 %v105
  %v424 = vunpack.c.h.b16 %v105
  %v425 = vunpack.c.l.b16 %v106
  %v426 = vunpack.c.h.b16 %v106
  %v427 = vunpack.c.l.b16 %v107
  %v428 = vunpack.c.h.b16 %v107
  %v429 = vunpack.c.l.b16 %v108
  %v430 = vunpack.c.h.b16 %v108
  %v431 = vunpack.c.l.b16 %v109
  %v432 = vunpack.c.h.b16 %v109
  %v433 = vunpack.c.l.b16 %v110
  %v434 = vunpack.c.h.b16 %v110
  %v435 = vunpack.c.l.b16 %v111
  %v436 = vunpack.c.h.b16 %v111
  %v437 = vunpack.c.l.b16 %v112
  %v438 = vunpack.c.h.b16 %v112
  %v439 = vunpack.c.l.b16 %v113
  %v440 = vunpack.c.h.b16 %v113
  %v441 = vunpack.c.l.b16 %v114
  %v442 = vunpack.c.h.b16 %v114
  %v443 = vunpack.c.l.b16 %v115
  %v444 = vunpack.c.h.b16 %v115
  %v445 = vunpack.c.l.b16 %v116
  %v446 = vunpack.c.h.b16 %v116
  %v447 = vunpack.c.l.b16 %v117
  %v448 = vunpack.c.h.b16 %v117
  %v449 = vunpack.c.l.b16 %v118
  %v450 = vunpack.c.h.b16 %v118
  %v451 = vunpack.c.l.b16 %v119
  %v452 = vunpack.c.h.b16 %v119
  %v453 = vunpack.c.l.b16 %v120
  %v454 = vunpack.c.h.b16 %v120
  %v455 = vunpack.c.l.b16 %v121
  %v456 = vunpack.c.h.b16 %v121
  %v457 = vunpack.c.l.b16 %v122
  %v458 = vunpack.c.h.b16 %v122
  %v459 = vunpack.c.l.b16 %v123
  %v460 = vunpack.c.h.b16 %v123
  %v461 = vunpack.c.l.b16 %v124
  %v462 = vunpack.c.h.b16 %v124
  %v463 = vunpack.c.l.b16 %v125
  %v464 = vunpack.c.h.b16 %v125
  %v465 = vunpack.c.l.b16 %v126
  %v466 = vunpack.c.h.b16 %v126
  %v467 = vpack.c.b16 %v281, %v275
  %v468 = vpack.c.b16 %v282, %v276
  %v469 = vpack.c.b16 %v283, %v277
  %v470 = vpack.c.b16 %v284, %v278
  %v471 = vpack.c.b16 %v285, %v279
  %v472 = vpack.c.b16 %v286, %v280
  %v473 = vpack.c.b16 %v293, %v287
  %v474 = vpack.c.b16 %v294, %v288
  %v475 = vpack.c.b16 %v295, %v289
  %v476 = vpack.c.b16 %v296, %v290
  %v477 = vpack.c.b16 %v297, %v291
  %v478 = vpack.c.b16 %v298, %v292
  %v479 = vpack.c.b16 %v305, %v299
  %v480 = vpack.c.b16 %v306, %v300
  %v481 = vpack.c.b16 %v307, %v301
  %v482 = vpack.c.b16 %v308, %v302
  %v483 = vpack.c.b16 %v309, %v303
  %v484 = vpack.c.b16 %v310, %v304
  %v485 = vpack.c.b16 %v317, %v311
  %v486 = vpack.c.b16 %v318, %v312
  %v487 = vpack.c.b16 %v319, %v313
  %v488 = vpack.c.b16 %v320, %v314
  %v489 = vpack.c.b16 %v321, %v315
  %v490 = vpack.c.b16 %v322, %v316
  %v491 = vpack.c.b16 %v329, %v323
  %v492 = vpack.c.b16 %v330, %v324
  %v493 = vpack.c.b16 %v331, %v325
  %v494 = vpack.c.b16 %v332, %v326
  %v495 = vpack.c.b16 %v333, %v327
  %v496 = vpack.c.b16 %v334, %v328
  %v497 = vpack.c.b16 %v341, %v335
  %v498 = vpack.c.b16 %v342, %v336
  %v499 = vpack.c.b16 %v343, %v337
  %v500 = vpack.c.b16 %v344, %v338
  %v501 = vpack.c.b16 %v345, %v339
  %v502 = vpack.c.b16 %v346, %v340
  %v503 = vpack.c.b16 %v353, %v347
  %v504 = vpack.c.b16 %v354, %v348
  %v505 = vpack.c.b16 %v355, %v349
  %v506 = vpack.c.b16 %v356, %v350
  %v507 = vpack.c.b16 %v357, %v351
  %v508 = vpack.c.b16 %v358, %v352
  %v509 = vpack.c.b16 %v365, %v359
  %v510 = vpack.c.b16 %v366, %v360
  %v511 = vpack.c.b16 %v367, %v361
  %v512 = vpack.c.b16 %v368, %v362
  %v513 = vpack.c.b16 %v369, %v363
  %v514 = vpack.c.b16 %v370, %v364
  %v515 = vpack.c.b16 %v377, %v371
  %v516 = vpack.c.b16 %v378, %v372
  %v517 = vpack.c.b16 %v379, %v373
  %v518 = vpack.c.b16 %v380, %v374
  %v519 = vpack.c.b16 %v381, %v375
  %v520 = vpack.c.b16 %v382, %v376
  %v521 = vpack.c.b16 %v389, %v383
  %v522 = vpack.c.b16 %v390, %v384
  %v523 = vpack.c.b16 %v391, %v385
  %v524 = vpack.c.b16 %v392, %v386
  %v525 = vpack.c.b16 %v393, %v387
  %v526 = vpack.c.b16 %v394, %v388
  %v527 = vpack.c.b16 %v401, %v395
  %v528 = vpack.c.b16 %v402, %v396
  %v529 = vpack.c.b16 %v403, %v397
  %v530 = vpack.c.b16 %v404, %v398
  %v531 = vpack.c.b16 %v405, %v399
  %v532 = vpack.c.b16 %v406, %v400
  %v533 = vpack.c.b16 %v413, %v407
  %v534 = vpack.c.b16 %v414, %v408
  %v535 = vpack.c.b16 %v415, %v409
  %v536 = vpack.c.b16 %v416, %v410
  %v537 = vpack.c.b16 %v417, %v411
  %v538 = vpack.c.b16 %v418, %v412
  %v539 = vpack.c.b16 %v425, %v419
  %v540 = vpack.c.b16 %v426, %v420
  %v541 = vpack.c.b16 %v427, %v421
  %v542 = vpack.c.b16 %v428, %v422
  %v543 = vpack.c.b16 %v429, %v423
  %v544 = vpack.c.b16 %v430, %v424
  %v545 = vpack.c.b16 %v437, %v431
  %v546 = vpack.c.b16 %v438, %v432
  %v547 = vpack.c.b16 %v439, %v433
  %v548 = vpack.c.b16 %v440, %v434
  %v549 = vpack.c.b16 %v441, %v435
  %v550 = vpack.c.b16 %v442, %v436
  %v551 = vpack.c.b16 %v449, %v443
  %v552 = vpack.c.b16 %v450, %v444
  %v553 = vpack.c.b16 %v451, %v445
  %v554 = vpack.c.b16 %v452, %v446
  %v555 = vpack.c.b16 %v453, %v447
  %v556 = vpack.c.b16 %v454, %v448
  %v557 = vpack.c.b16 %v461, %v455
  %v558 = vpack.c.b16 %v462, %v456
  %v559 = vpack.c.b16 %v463, %v457
  %v560 = vpack.c.b16 %v464, %v458
  %v561 = vpack.c.b16 %v465, %v459
  %v562 = vpack.c.b16 %v466, %v460
  %659 = vmatprep.subr.bf16.mxu0 %v468
  %660 = vmatpush1.bf16.msra.mxu0 %v467
  %661 = vmatprep.subr.bf16.mxu0 %v474
  %662 = vmatpush1.bf16.msra.mxu0 %v473
  %663 = vmatprep.subr.bf16.mxu0 %v480
  %664 = vmatpush1.bf16.msra.mxu0 %v479
  %665 = vmatprep.subr.bf16.mxu0 %v486
  %666 = vmatpush1.bf16.msra.mxu0 %v485
  %667 = vmatprep.subr.bf16.mxu0 %v492
  %668 = vmatpush1.bf16.msra.mxu0 %v491
  %669 = vmatprep.subr.bf16.mxu0 %v498
  %670 = vmatpush1.bf16.msra.mxu0 %v497
  %671 = vmatprep.subr.bf16.mxu0 %v504
  %672 = vmatpush1.bf16.msra.mxu0 %v503
  %673 = vmatprep.subr.bf16.mxu0 %v510
  %674 = vmatpush1.bf16.msra.mxu0 %v509
  %675 = vmatprep.subr.bf16.mxu0 %v516
  %676 = vmatpush1.bf16.msra.mxu0 %v515
  %677 = vmatprep.subr.bf16.mxu0 %v522
  %678 = vmatpush1.bf16.msra.mxu0 %v521
  %679 = vmatprep.subr.bf16.mxu0 %v528
  %680 = vmatpush1.bf16.msra.mxu0 %v527
  %681 = vmatprep.subr.bf16.mxu0 %v534
  %682 = vmatpush1.bf16.msra.mxu0 %v533
  %683 = vmatprep.subr.bf16.mxu0 %v540
  %684 = vmatpush1.bf16.msra.mxu0 %v539
  %685 = vmatprep.subr.bf16.mxu0 %v546
  %686 = vmatpush1.bf16.msra.mxu0 %v545
  %687 = vmatprep.subr.bf16.mxu0 %v552
  %688 = vmatpush1.bf16.msra.mxu0 %v551
  %689 = vmatprep.subr.bf16.mxu0 %v558
  %690 = vmatpush1.bf16.msra.mxu0 %v557
  %691 = vmatprep.mubr.bf16.mxu0 %v172
  %692 = vmatmul.mubr.bf16.gmra.mrb[0].mxu0 %v171
  %v693 = vpop.f32.mrb[0].mxu0
  %v694 = vadd.f32 %v132, %v693
  %v695 = vpop.f32.mrb[0].mxu0
  %v696 = vadd.f32 %v136, %v695
  %v697 = vpop.f32.mrb[0].mxu0
  %v698 = vadd.f32 %v132, %v697
  %v699 = vpop.f32.mrb[0].mxu0
  %v700 = vadd.f32 %v136, %v699
  %701 = vmatprep.mubr.bf16.mxu0 %v174
  %702 = vmatmul.mubr.bf16.gmra.mrb[0].mxu0 %v173
  %v703 = vpop.f32.mrb[0].mxu0
  %v704 = vadd.f32 %v132, %v703
  %v705 = vpop.f32.mrb[0].mxu0
  %v706 = vadd.f32 %v136, %v705
  %v707 = vpop.f32.mrb[0].mxu0
  %v708 = vadd.f32 %v132, %v707
  %v709 = vpop.f32.mrb[0].mxu0
  %v710 = vadd.f32 %v136, %v709
  %711 = vdwg.mxu0
  %712 = vmatprep.subr.bf16.mxu0 %v470
  %713 = vmatpush1.bf16.msra.mxu0 %v469
  %714 = vmatprep.subr.bf16.mxu0 %v476
  %715 = vmatpush1.bf16.msra.mxu0 %v475
  %716 = vmatprep.subr.bf16.mxu0 %v482
  %717 = vmatpush1.bf16.msra.mxu0 %v481
  %718 = vmatprep.subr.bf16.mxu0 %v488
  %719 = vmatpush1.bf16.msra.mxu0 %v487
  %720 = vmatprep.subr.bf16.mxu0 %v494
  %721 = vmatpush1.bf16.msra.mxu0 %v493
  %722 = vmatprep.subr.bf16.mxu0 %v500
  %723 = vmatpush1.bf16.msra.mxu0 %v499
  %724 = vmatprep.subr.bf16.mxu0 %v506
  %725 = vmatpush1.bf16.msra.mxu0 %v505
  %726 = vmatprep.subr.bf16.mxu0 %v512
  %727 = vmatpush1.bf16.msra.mxu0 %v511
  %728 = vmatprep.subr.bf16.mxu0 %v518
  %729 = vmatpush1.bf16.msra.mxu0 %v517
  %730 = vmatprep.subr.bf16.mxu0 %v524
  %731 = vmatpush1.bf16.msra.mxu0 %v523
  %732 = vmatprep.subr.bf16.mxu0 %v530
  %733 = vmatpush1.bf16.msra.mxu0 %v529
  %734 = vmatprep.subr.bf16.mxu0 %v536
  %735 = vmatpush1.bf16.msra.mxu0 %v535
  %736 = vmatprep.subr.bf16.mxu0 %v542
  %737 = vmatpush1.bf16.msra.mxu0 %v541
  %738 = vmatprep.subr.bf16.mxu0 %v548
  %739 = vmatpush1.bf16.msra.mxu0 %v547
  %740 = vmatprep.subr.bf16.mxu0 %v554
  %741 = vmatpush1.bf16.msra.mxu0 %v553
  %742 = vmatprep.subr.bf16.mxu0 %v560
  %743 = vmatpush1.bf16.msra.mxu0 %v559
  %744 = vmatprep.mubr.bf16.mxu0 %v172
  %745 = vmatmul.mubr.bf16.gmra.mrb[0].mxu0 %v171
  %v746 = vpop.f32.mrb[0].mxu0
  %v747 = vadd.f32 %v140, %v746
  %v748 = vpop.f32.mrb[0].mxu0
  %v749 = vadd.f32 %v144, %v748
  %v750 = vpop.f32.mrb[0].mxu0
  %v751 = vadd.f32 %v140, %v750
  %v752 = vpop.f32.mrb[0].mxu0
  %v753 = vadd.f32 %v144, %v752
  %754 = vmatprep.mubr.bf16.mxu0 %v174
  %755 = vmatmul.mubr.bf16.gmra.mrb[0].mxu0 %v173
  %v756 = vpop.f32.mrb[0].mxu0
  %v757 = vadd.f32 %v140, %v756
  %v758 = vpop.f32.mrb[0].mxu0
  %v759 = vadd.f32 %v144, %v758
  %v760 = vpop.f32.mrb[0].mxu0
  %v761 = vadd.f32 %v140, %v760
  %v762 = vpop.f32.mrb[0].mxu0
  %v763 = vadd.f32 %v144, %v762
  %764 = vdwg.mxu0
  %765 = vmatprep.subr.bf16.mxu0 %v472
  %766 = vmatpush1.bf16.msra.mxu0 %v471
  %767 = vmatprep.subr.bf16.mxu0 %v478
  %768 = vmatpush1.bf16.msra.mxu0 %v477
  %769 = vmatprep.subr.bf16.mxu0 %v484
  %770 = vmatpush1.bf16.msra.mxu0 %v483
  %771 = vmatprep.subr.bf16.mxu0 %v490
  %772 = vmatpush1.bf16.msra.mxu0 %v489
  %773 = vmatprep.subr.bf16.mxu0 %v496
  %774 = vmatpush1.bf16.msra.mxu0 %v495
  %775 = vmatprep.subr.bf16.mxu0 %v502
  %776 = vmatpush1.bf16.msra.mxu0 %v501
  %777 = vmatprep.subr.bf16.mxu0 %v508
  %778 = vmatpush1.bf16.msra.mxu0 %v507
  %779 = vmatprep.subr.bf16.mxu0 %v514
  %780 = vmatpush1.bf16.msra.mxu0 %v513
  %781 = vmatprep.subr.bf16.mxu0 %v520
  %782 = vmatpush1.bf16.msra.mxu0 %v519
  %783 = vmatprep.subr.bf16.mxu0 %v526
  %784 = vmatpush1.bf16.msra.mxu0 %v525
  %785 = vmatprep.subr.bf16.mxu0 %v532
  %786 = vmatpush1.bf16.msra.mxu0 %v531
  %787 = vmatprep.subr.bf16.mxu0 %v538
  %788 = vmatpush1.bf16.msra.mxu0 %v537
  %789 = vmatprep.subr.bf16.mxu0 %v544
  %790 = vmatpush1.bf16.msra.mxu0 %v543
  %791 = vmatprep.subr.bf16.mxu0 %v550
  %792 = vmatpush1.bf16.msra.mxu0 %v549
  %793 = vmatprep.subr.bf16.mxu0 %v556
  %794 = vmatpush1.bf16.msra.mxu0 %v555
  %795 = vmatprep.subr.bf16.mxu0 %v562
  %796 = vmatpush1.bf16.msra.mxu0 %v561
  %797 = vmatprep.mubr.bf16.mxu0 %v172
  %798 = vmatmul.mubr.bf16.gmra.mrb[0].mxu0 %v171
  %v799 = vpop.f32.mrb[0].mxu0
  %v800 = vadd.f32 %v148, %v799
  %v801 = vpop.f32.mrb[0].mxu0
  %v802 = vadd.f32 %v152, %v801
  %v803 = vpop.f32.mrb[0].mxu0
  %v804 = vadd.f32 %v148, %v803
  %v805 = vpop.f32.mrb[0].mxu0
  %v806 = vadd.f32 %v152, %v805
  %807 = vmatprep.mubr.bf16.mxu0 %v174
  %808 = vmatmul.mubr.bf16.gmra.mrb[0].mxu0 %v173
  %v809 = vpop.f32.mrb[0].mxu0
  %v810 = vadd.f32 %v148, %v809
  %v811 = vpop.f32.mrb[0].mxu0
  %v812 = vadd.f32 %v152, %v811
  %v813 = vpop.f32.mrb[0].mxu0
  %v814 = vadd.f32 %v148, %v813
  %v815 = vpop.f32.mrb[0].mxu0
  %v816 = vadd.f32 %v152, %v815
  %817 = vdwg.mxu0
  %v818 = vpack.c.bf16 %v698, %v694
  %v819 = vpack.c.bf16 %v700, %v696
  %v820 = vpack.c.bf16 %v708, %v704
  %v821 = vpack.c.bf16 %v710, %v706
  %822 = vst [vmem:[#allocation2] sm:$0xff] %v818
  %823 = vst [vmem:[#allocation2 + $0x8] sm:$0xff] %v819
  %824 = vst [vmem:[#allocation2 + $0x10] sm:$0xff] %v820
  %825 = vst [vmem:[#allocation2 + $0x18] sm:$0xff] %v821
  %v826 = vpack.c.bf16 %v751, %v747
  %v827 = vpack.c.bf16 %v753, %v749
  %v828 = vpack.c.bf16 %v761, %v757
  %v829 = vpack.c.bf16 %v763, %v759
  %830 = vst [vmem:[#allocation3] sm:$0xff] %v826
  %831 = vst [vmem:[#allocation3 + $0x8] sm:$0xff] %v827
  %832 = vst [vmem:[#allocation3 + $0x10] sm:$0xff] %v828
  %833 = vst [vmem:[#allocation3 + $0x18] sm:$0xff] %v829
  %v834 = vpack.c.bf16 %v804, %v800
  %v835 = vpack.c.bf16 %v806, %v802
  %v836 = vpack.c.bf16 %v814, %v810
  %v837 = vpack.c.bf16 %v816, %v812
  %838 = vst [vmem:[#allocation4] sm:$0xff] %v834
  %839 = vst [vmem:[#allocation4 + $0x8] sm:$0xff] %v835
  %840 = vst [vmem:[#allocation4 + $0x10] sm:$0xff] %v836
  %841 = vst [vmem:[#allocation4 + $0x18] sm:$0xff] %v837
  %v842 = vld [vmem:[%s5] sm:$0xf]
  %v843 = vld [vmem:[%s5 + $0x4] sm:$0xf]
  %v844 = vld [vmem:[%s5 + $0x8] sm:$0xf]
  %v845 = vld [vmem:[%s5 + $0xc] sm:$0xf]
  %v846 = vld [vmem:[%s5 + $0x10] sm:$0xf]
  %v847 = vld [vmem:[%s5 + $0x14] sm:$0xf]
  %v848 = vld [vmem:[%s5 + $0x18] sm:$0xf]
  %v849 = vld [vmem:[%s5 + $0x1c] sm:$0xf]
  %v850 = vld [vmem:[%s5 + $0x20] sm:$0xf]
  %v851 = vld [vmem:[%s5 + $0x24] sm:$0xf]
  %v852 = vld [vmem:[%s5 + $0x28] sm:$0xf]
  %v853 = vld [vmem:[%s5 + $0x2c] sm:$0xf]
  %v854 = vld [vmem:[%s5 + $0x30] sm:$0xf]
  %v855 = vld [vmem:[%s5 + $0x34] sm:$0xf]
  %v856 = vld [vmem:[%s5 + $0x38] sm:$0xf]
  %v857 = vld [vmem:[%s5 + $0x3c] sm:$0xf]
  %v858 = vld [vmem:[%s5 + $0x40] sm:$0xf]
  %v859 = vld [vmem:[%s5 + $0x44] sm:$0xf]
  %v860 = vld [vmem:[%s5 + $0x48] sm:$0xf]
  %v861 = vld [vmem:[%s5 + $0x4c] sm:$0xf]
  %v862 = vld [vmem:[%s5 + $0x50] sm:$0xf]
  %v863 = vld [vmem:[%s5 + $0x54] sm:$0xf]
  %v864 = vld [vmem:[%s5 + $0x58] sm:$0xf]
  %v865 = vld [vmem:[%s5 + $0x5c] sm:$0xf]
  %v866 = vld [vmem:[%s5 + $0x60] sm:$0xf]
  %v867 = vld [vmem:[%s5 + $0x64] sm:$0xf]
  %v868 = vld [vmem:[%s5 + $0x68] sm:$0xf]
  %v869 = vld [vmem:[%s5 + $0x6c] sm:$0xf]
  %v870 = vld [vmem:[%s5 + $0x70] sm:$0xf]
  %v871 = vld [vmem:[%s5 + $0x74] sm:$0xf]
  %v872 = vld [vmem:[%s5 + $0x78] sm:$0xf]
  %v873 = vld [vmem:[%s5 + $0x7c] sm:$0xf]
  %v874 = vld [vmem:[%s6] sm:$0xf]
  %v875 = vunpack.c.l.bf16 %v874
  %v876 = vld [vmem:[#allocation2] sm:$0xff]
  %v877 = vld [vmem:[#allocation2 + $0x8] sm:$0xff]
  %v878 = vld [vmem:[#allocation3] sm:$0xff]
  %v879 = vld [vmem:[#allocation3 + $0x8] sm:$0xff]
  %v880 = vmul.bf16 %v876, %v878
  %v881 = vmul.bf16 %v877, %v879
  %v914 = vunpack.c.l.b16 %v842
  %v915 = vunpack.c.l.b16 %v843
  %v916 = vunpack.c.l.b16 %v844
  %v917 = vunpack.c.l.b16 %v845
  %v918 = vunpack.c.l.b16 %v846
  %v919 = vunpack.c.l.b16 %v847
  %v920 = vunpack.c.l.b16 %v848
  %v921 = vunpack.c.l.b16 %v849
  %v922 = vunpack.c.l.b16 %v850
  %v923 = vunpack.c.l.b16 %v851
  %v924 = vunpack.c.l.b16 %v852
  %v925 = vunpack.c.l.b16 %v853
  %v926 = vunpack.c.l.b16 %v854
  %v927 = vunpack.c.l.b16 %v855
  %v928 = vunpack.c.l.b16 %v856
  %v929 = vunpack.c.l.b16 %v857
  %v930 = vunpack.c.l.b16 %v858
  %v931 = vunpack.c.l.b16 %v859
  %v932 = vunpack.c.l.b16 %v860
  %v933 = vunpack.c.l.b16 %v861
  %v934 = vunpack.c.l.b16 %v862
  %v935 = vunpack.c.l.b16 %v863
  %v936 = vunpack.c.l.b16 %v864
  %v937 = vunpack.c.l.b16 %v865
  %v938 = vunpack.c.l.b16 %v866
  %v939 = vunpack.c.l.b16 %v867
  %v940 = vunpack.c.l.b16 %v868
  %v941 = vunpack.c.l.b16 %v869
  %v942 = vunpack.c.l.b16 %v870
  %v943 = vunpack.c.l.b16 %v871
  %v944 = vunpack.c.l.b16 %v872
  %v945 = vunpack.c.l.b16 %v873
  %v946 = vpack.c.b16 %v915, %v914
  %v947 = vpack.c.b16 %v917, %v916
  %v948 = vpack.c.b16 %v919, %v918
  %v949 = vpack.c.b16 %v921, %v920
  %v950 = vpack.c.b16 %v923, %v922
  %v951 = vpack.c.b16 %v925, %v924
  %v952 = vpack.c.b16 %v927, %v926
  %v953 = vpack.c.b16 %v929, %v928
  %v954 = vpack.c.b16 %v931, %v930
  %v955 = vpack.c.b16 %v933, %v932
  %v956 = vpack.c.b16 %v935, %v934
  %v957 = vpack.c.b16 %v937, %v936
  %v958 = vpack.c.b16 %v939, %v938
  %v959 = vpack.c.b16 %v941, %v940
  %v960 = vpack.c.b16 %v943, %v942
  %v961 = vpack.c.b16 %v945, %v944
  %978 = vmatprep.subr.bf16.mxu0 0
  %979 = vmatpush1.bf16.msra.mxu0 %v946
  %980 = vmatprep.subr.bf16.mxu0 0
  %981 = vmatpush1.bf16.msra.mxu0 %v947
  %982 = vmatprep.subr.bf16.mxu0 0
  %983 = vmatpush1.bf16.msra.mxu0 %v948
  %984 = vmatprep.subr.bf16.mxu0 0
  %985 = vmatpush1.bf16.msra.mxu0 %v949
  %986 = vmatprep.subr.bf16.mxu0 0
  %987 = vmatpush1.bf16.msra.mxu0 %v950
  %988 = vmatprep.subr.bf16.mxu0 0
  %989 = vmatpush1.bf16.msra.mxu0 %v951
  %990 = vmatprep.subr.bf16.mxu0 0
  %991 = vmatpush1.bf16.msra.mxu0 %v952
  %992 = vmatprep.subr.bf16.mxu0 0
  %993 = vmatpush1.bf16.msra.mxu0 %v953
  %994 = vmatprep.subr.bf16.mxu0 0
  %995 = vmatpush1.bf16.msra.mxu0 %v954
  %996 = vmatprep.subr.bf16.mxu0 0
  %997 = vmatpush1.bf16.msra.mxu0 %v955
  %998 = vmatprep.subr.bf16.mxu0 0
  %999 = vmatpush1.bf16.msra.mxu0 %v956
  %1000 = vmatprep.subr.bf16.mxu0 0
  %1001 = vmatpush1.bf16.msra.mxu0 %v957
  %1002 = vmatprep.subr.bf16.mxu0 0
  %1003 = vmatpush1.bf16.msra.mxu0 %v958
  %1004 = vmatprep.subr.bf16.mxu0 0
  %1005 = vmatpush1.bf16.msra.mxu0 %v959
  %1006 = vmatprep.subr.bf16.mxu0 0
  %1007 = vmatpush1.bf16.msra.mxu0 %v960
  %1008 = vmatprep.subr.bf16.mxu0 0
  %1009 = vmatpush1.bf16.msra.mxu0 %v961
  %1010 = vmatprep.mubr.bf16.mxu0 %v881
  %1011 = vmatmul.mubr.bf16.gmra.mrb[0].mxu0 %v880
  %v1012 = vpop.f32.mrb[0].mxu0
  %v1013 = vadd.f32 0.0, %v1012
  %v1014 = vpop.f32.mrb[0].mxu0
  %v1015 = vpop.f32.mrb[0].mxu0
  %v1016 = vadd.f32 0.0, %v1015
  %v1017 = vpop.f32.mrb[0].mxu0
  %1018 = vdwg.mxu0
  %vm1019 = vcmask 31744
  %1020 = vst.msk [vmem:[#allocation6] sm:$0xff] %vm1019, %v1013
  %1021 = vst.msk [vmem:[#allocation6 + $0x8] sm:$0xff] %vm1019, %v1016
  %s1022 = scalar_lea.vmem [#allocation3], 16
  %v1023 = vld [vmem:[%s1022] sm:$0xff]
  %v1024 = vld [vmem:[%s1022 + $0x8] sm:$0xff]
  %v1025 = vmul.bf16 %v876, %v1023
  %v1026 = vmul.bf16 %v877, %v1024
  %1027 = vmatprep.subr.bf16.mxu0 0
  %1028 = vmatpush1.bf16.msra.mxu0 %v946
  %1029 = vmatprep.subr.bf16.mxu0 0
  %1030 = vmatpush1.bf16.msra.mxu0 %v947
  %1031 = vmatprep.subr.bf16.mxu0 0
  %1032 = vmatpush1.bf16.msra.mxu0 %v948
  %1033 = vmatprep.subr.bf16.mxu0 0
  %1034 = vmatpush1.bf16.msra.mxu0 %v949
  %1035 = vmatprep.subr.bf16.mxu0 0
  %1036 = vmatpush1.bf16.msra.mxu0 %v950
  %1037 = vmatprep.subr.bf16.mxu0 0
  %1038 = vmatpush1.bf16.msra.mxu0 %v951
  %1039 = vmatprep.subr.bf16.mxu0 0
  %1040 = vmatpush1.bf16.msra.mxu0 %v952
  %1041 = vmatprep.subr.bf16.mxu0 0
  %1042 = vmatpush1.bf16.msra.mxu0 %v953
  %1043 = vmatprep.subr.bf16.mxu0 0
  %1044 = vmatpush1.bf16.msra.mxu0 %v954
  %1045 = vmatprep.subr.bf16.mxu0 0
  %1046 = vmatpush1.bf16.msra.mxu0 %v955
  %1047 = vmatprep.subr.bf16.mxu0 0
  %1048 = vmatpush1.bf16.msra.mxu0 %v956
  %1049 = vmatprep.subr.bf16.mxu0 0
  %1050 = vmatpush1.bf16.msra.mxu0 %v957
  %1051 = vmatprep.subr.bf16.mxu0 0
  %1052 = vmatpush1.bf16.msra.mxu0 %v958
  %1053 = vmatprep.subr.bf16.mxu0 0
  %1054 = vmatpush1.bf16.msra.mxu0 %v959
  %1055 = vmatprep.subr.bf16.mxu0 0
  %1056 = vmatpush1.bf16.msra.mxu0 %v960
  %1057 = vmatprep.subr.bf16.mxu0 0
  %1058 = vmatpush1.bf16.msra.mxu0 %v961
  %1059 = vmatprep.mubr.bf16.mxu0 %v1026
  %1060 = vmatmul.mubr.bf16.gmra.mrb[0].mxu0 %v1025
  %v1061 = vpop.f32.mrb[0].mxu0
  %v1062 = vadd.f32 0.0, %v1061
  %v1063 = vpop.f32.mrb[0].mxu0
  %v1064 = vpop.f32.mrb[0].mxu0
  %v1065 = vadd.f32 0.0, %v1064
  %v1066 = vpop.f32.mrb[0].mxu0
  %1067 = vdwg.mxu0
  %s1068 = scalar_lea.vmem [#allocation6], 16
  %1069 = vst.msk [vmem:[%s1068] sm:$0xff] %vm1019, %v1062
  %1070 = vst.msk [vmem:[%s1068 + $0x8] sm:$0xff] %vm1019, %v1065
  %v1071 = vmax.f32 %v1013, %v1062
  %v1072 = vmax.f32 %v1016, %v1065
  %v1073 = vld [vmem:[#allocation6] sm:$0xff]
  %v1074 = vld [vmem:[#allocation6 + $0x8] sm:$0xff]
  %v1075 = vsub.f32 %v1073, %v1071
  %v1076 = vsub.f32 %v1074, %v1072
  %v1077 = vmul.f32 %v1075, 1.442695
  %v1078 = vpow.pop %v1077
  %v1079 = vmul.f32 %v1076, 1.442695
  %v1080 = vpow.pop %v1079
  %v1081 = vpack.c.bf16 %v1080, %v1078
  %v1084 = vunpack.c.l.s4 1983009808
  %v1085 = vunpack.c.0.s8 %v1084
  %v1086 = vlaneseq
  %v1087 = vshrl.u32 %v1086, 7
  %v1088 = vsub.s32 %v1085, %v1087
  %v1089 = vrot.slane %v874, %v1088
  %v1090 = vcombine.high %v1089, %v1089
  %v1092 = vsel %vm1019, %v1081, 0
  %vm1094 = vcmask 1041408
  %v1096 = vsel %vm1094, %v1089, 0
  %v1099 = vsel %vm1094, %v1090, 0
  %1101 = vmatprep.subr.bf16.mxu0 %v1099
  %1102 = vmatpush1.bf16.msra.mxu0 %v1096
  %1103 = vmatprep.subr.bf16.mxu0 0
  %1104 = vmatpush1.bf16.msra.mxu0 0
  %1105 = vmatprep.subr.bf16.mxu0 0
  %1106 = vmatpush1.bf16.msra.mxu0 0
  %1107 = vmatprep.subr.bf16.mxu0 0
  %1108 = vmatpush1.bf16.msra.mxu0 0
  %1109 = vmatprep.subr.bf16.mxu0 0
  %1110 = vmatpush1.bf16.msra.mxu0 0
  %1111 = vmatprep.subr.bf16.mxu0 0
  %1112 = vmatpush1.bf16.msra.mxu0 0
  %1113 = vmatprep.subr.bf16.mxu0 0
  %1114 = vmatpush1.bf16.msra.mxu0 0
  %1115 = vmatprep.subr.bf16.mxu0 0
  %1116 = vmatpush1.bf16.msra.mxu0 0
  %1117 = vmatprep.subr.bf16.mxu0 0
  %1118 = vmatpush1.bf16.msra.mxu0 0
  %1119 = vmatprep.subr.bf16.mxu0 0
  %1120 = vmatpush1.bf16.msra.mxu0 0
  %1121 = vmatprep.subr.bf16.mxu0 0
  %1122 = vmatpush1.bf16.msra.mxu0 0
  %1123 = vmatprep.subr.bf16.mxu0 0
  %1124 = vmatpush1.bf16.msra.mxu0 0
  %1125 = vmatprep.subr.bf16.mxu0 0
  %1126 = vmatpush1.bf16.msra.mxu0 0
  %1127 = vmatprep.subr.bf16.mxu0 0
  %1128 = vmatpush1.bf16.msra.mxu0 0
  %1129 = vmatprep.subr.bf16.mxu0 0
  %1130 = vmatpush1.bf16.msra.mxu0 0
  %1131 = vmatprep.subr.bf16.mxu0 0
  %1132 = vmatpush1.bf16.msra.mxu0 0
  %1133 = vmatprep.mubr.bf16.mxu0 0
  %1134 = vmatmul.mubr.bf16.gmra.mrb[0].mxu0 %v1092
  %v1135 = vpop.f32.mrb[0].mxu0
  %v1136 = vadd.f32 0.0, %v1135
  %v1137 = vpop.f32.mrb[0].mxu0
  %v1138 = vadd.f32 0.0, %v1137
  %v1139 = vpop.f32.mrb[0].mxu0
  %v1140 = vadd.f32 0.0, %v1139
  %v1141 = vpop.f32.mrb[0].mxu0
  %v1142 = vadd.f32 0.0, %v1141
  %1143 = vdwg.mxu0
  %v1144 = vld [vmem:[#allocation4] sm:$0xff]
  %v1145 = vld [vmem:[#allocation4 + $0x8] sm:$0xff]
  %v1146 = vunpack.c.l.bf16 %v1144
  %v1147 = vunpack.c.l.bf16 %v1145
  %v1148 = vunpack.c.h.bf16 %v1144
  %v1149 = vunpack.c.h.bf16 %v1145
  %v1150 = vmul.f32 %v1136, %v1146
  %v1151 = vmul.f32 %v1138, %v1147
  %v1152 = vmul.f32 %v1140, %v1148
  %v1153 = vmul.f32 %v1142, %v1149
  %v1154 = vld [vmem:[%s1068] sm:$0xff]
  %v1155 = vld [vmem:[%s1068 + $0x8] sm:$0xff]
  %v1156 = vsub.f32 %v1154, %v1071
  %v1157 = vsub.f32 %v1155, %v1072
  %v1158 = vmul.f32 %v1156, 1.442695
  %v1159 = vpow.pop %v1158
  %v1160 = vmul.f32 %v1157, 1.442695
  %v1161 = vpow.pop %v1160
  %v1162 = vadd.f32 %v1078, %v1159
  %v1163 = vadd.f32 %v1080, %v1161
  %v1164 = vpack.c.bf16 %v1161, %v1159
  %v1166 = vsel %vm1019, %v1164, 0
  %1168 = vmatprep.subr.bf16.mxu0 %v1099
  %1169 = vmatpush1.bf16.msra.mxu0 %v1096
  %1170 = vmatprep.subr.bf16.mxu0 0
  %1171 = vmatpush1.bf16.msra.mxu0 0
  %1172 = vmatprep.subr.bf16.mxu0 0
  %1173 = vmatpush1.bf16.msra.mxu0 0
  %1174 = vmatprep.subr.bf16.mxu0 0
  %1175 = vmatpush1.bf16.msra.mxu0 0
  %1176 = vmatprep.subr.bf16.mxu0 0
  %1177 = vmatpush1.bf16.msra.mxu0 0
  %1178 = vmatprep.subr.bf16.mxu0 0
  %1179 = vmatpush1.bf16.msra.mxu0 0
  %1180 = vmatprep.subr.bf16.mxu0 0
  %1181 = vmatpush1.bf16.msra.mxu0 0
  %1182 = vmatprep.subr.bf16.mxu0 0
  %1183 = vmatpush1.bf16.msra.mxu0 0
  %1184 = vmatprep.subr.bf16.mxu0 0
  %1185 = vmatpush1.bf16.msra.mxu0 0
  %1186 = vmatprep.subr.bf16.mxu0 0
  %1187 = vmatpush1.bf16.msra.mxu0 0
  %1188 = vmatprep.subr.bf16.mxu0 0
  %1189 = vmatpush1.bf16.msra.mxu0 0
  %1190 = vmatprep.subr.bf16.mxu0 0
  %1191 = vmatpush1.bf16.msra.mxu0 0
  %1192 = vmatprep.subr.bf16.mxu0 0
  %1193 = vmatpush1.bf16.msra.mxu0 0
  %1194 = vmatprep.subr.bf16.mxu0 0
  %1195 = vmatpush1.bf16.msra.mxu0 0
  %1196 = vmatprep.subr.bf16.mxu0 0
  %1197 = vmatpush1.bf16.msra.mxu0 0
  %1198 = vmatprep.subr.bf16.mxu0 0
  %1199 = vmatpush1.bf16.msra.mxu0 0
  %1200 = vmatprep.mubr.bf16.mxu0 0
  %1201 = vmatmul.mubr.bf16.gmra.mrb[0].mxu0 %v1166
  %v1202 = vpop.f32.mrb[0].mxu0
  %v1203 = vadd.f32 0.0, %v1202
  %v1204 = vpop.f32.mrb[0].mxu0
  %v1205 = vadd.f32 0.0, %v1204
  %v1206 = vpop.f32.mrb[0].mxu0
  %v1207 = vadd.f32 0.0, %v1206
  %v1208 = vpop.f32.mrb[0].mxu0
  %v1209 = vadd.f32 0.0, %v1208
  %1210 = vdwg.mxu0
  %s1211 = scalar_lea.vmem [#allocation4], 16
  %v1212 = vld [vmem:[%s1211] sm:$0xff]
  %v1213 = vld [vmem:[%s1211 + $0x8] sm:$0xff]
  %v1214 = vunpack.c.l.bf16 %v1212
  %v1215 = vunpack.c.l.bf16 %v1213
  %v1216 = vunpack.c.h.bf16 %v1212
  %v1217 = vunpack.c.h.bf16 %v1213
  %v1218 = vmul.f32 %v1203, %v1214
  %v1219 = vmul.f32 %v1205, %v1215
  %v1220 = vmul.f32 %v1207, %v1216
  %v1221 = vmul.f32 %v1209, %v1217
  %v1222 = vadd.f32 %v1150, %v1218
  %v1223 = vadd.f32 %v1151, %v1219
  %v1224 = vadd.f32 %v1152, %v1220
  %v1225 = vadd.f32 %v1153, %v1221
  %v1226 = vrcp.pop %v1162
  %v1227 = vrcp.pop %v1163
  %v1229 = vcombine.high %v875, %v875
  %v1231 = vsel %vm1019, %v1226, 0
  %v1234 = vsel %vm1019, %v1227, 0
  %vm1236 = vcmask 1043456
  %v1237 = vsel %vm1236, %v875, 0
  %v1239 = vsel %vm1236, %v1229, 0
  %1241 = vmatprep.subr.mxu0 %v1239
  %1242 = vmatpush1.msra.mxu0 %v1237
  %1243 = vmatprep.subr.mxu0 0.0
  %1244 = vmatpush1.msra.mxu0 0.0
  %1245 = vmatprep.subr.mxu0 0.0
  %1246 = vmatpush1.msra.mxu0 0.0
  %1247 = vmatprep.subr.mxu0 0.0
  %1248 = vmatpush1.msra.mxu0 0.0
  %1249 = vmatprep.subr.mxu0 0.0
  %1250 = vmatpush1.msra.mxu0 0.0
  %1251 = vmatprep.subr.mxu0 0.0
  %1252 = vmatpush1.msra.mxu0 0.0
  %1253 = vmatprep.subr.mxu0 0.0
  %1254 = vmatpush1.msra.mxu0 0.0
  %1255 = vmatprep.subr.mxu0 0.0
  %1256 = vmatpush1.msra.mxu0 0.0
  %1257 = vmatprep.subr.mxu0 0.0
  %1258 = vmatpush1.msra.mxu0 0.0
  %1259 = vmatprep.subr.mxu0 0.0
  %1260 = vmatpush1.msra.mxu0 0.0
  %1261 = vmatprep.subr.mxu0 0.0
  %1262 = vmatpush1.msra.mxu0 0.0
  %1263 = vmatprep.subr.mxu0 0.0
  %1264 = vmatpush1.msra.mxu0 0.0
  %1265 = vmatprep.subr.mxu0 0.0
  %1266 = vmatpush1.msra.mxu0 0.0
  %1267 = vmatprep.subr.mxu0 0.0
  %1268 = vmatpush1.msra.mxu0 0.0
  %1269 = vmatprep.subr.mxu0 0.0
  %1270 = vmatpush1.msra.mxu0 0.0
  %1271 = vmatprep.subr.mxu0 0.0
  %1272 = vmatpush1.msra.mxu0 0.0
  %1273 = vmatprep.subr.mxu0 0.0
  %1274 = vmatpush1.msra.mxu0 0.0
  %1275 = vmatprep.subr.mxu0 0.0
  %1276 = vmatpush1.msra.mxu0 0.0
  %1277 = vmatprep.subr.mxu0 0.0
  %1278 = vmatpush1.msra.mxu0 0.0
  %1279 = vmatprep.subr.mxu0 0.0
  %1280 = vmatpush1.msra.mxu0 0.0
  %1281 = vmatprep.subr.mxu0 0.0
  %1282 = vmatpush1.msra.mxu0 0.0
  %1283 = vmatprep.subr.mxu0 0.0
  %1284 = vmatpush1.msra.mxu0 0.0
  %1285 = vmatprep.subr.mxu0 0.0
  %1286 = vmatpush1.msra.mxu0 0.0
  %1287 = vmatprep.subr.mxu0 0.0
  %1288 = vmatpush1.msra.mxu0 0.0
  %1289 = vmatprep.subr.mxu0 0.0
  %1290 = vmatpush1.msra.mxu0 0.0
  %1291 = vmatprep.subr.mxu0 0.0
  %1292 = vmatpush1.msra.mxu0 0.0
  %1293 = vmatprep.subr.mxu0 0.0
  %1294 = vmatpush1.msra.mxu0 0.0
  %1295 = vmatprep.subr.mxu0 0.0
  %1296 = vmatpush1.msra.mxu0 0.0
  %1297 = vmatprep.subr.mxu0 0.0
  %1298 = vmatpush1.msra.mxu0 0.0
  %1299 = vmatprep.subr.mxu0 0.0
  %1300 = vmatpush1.msra.mxu0 0.0
  %1301 = vmatprep.subr.mxu0 0.0
  %1302 = vmatpush1.msra.mxu0 0.0
  %1303 = vmatprep.subr.mxu0 0.0
  %1304 = vmatpush1.msra.mxu0 0.0
  %1305 = vmatprep.mubr.f32.mxu0 0.0
  %1306 = vmatmul.mubr.f32.gmra.mrb[0].mxu0 %v1231
  %v1307 = vpop.f32.mrb[0].mxu0
  %v1308 = vadd.f32 0.0, %v1307
  %v1309 = vpop.f32.mrb[0].mxu0
  %v1310 = vadd.f32 0.0, %v1309
  %1311 = vmatprep.mubr.f32.mxu0 0.0
  %1312 = vmatmul.mubr.f32.gmra.mrb[0].mxu0 %v1234
  %v1313 = vpop.f32.mrb[0].mxu0
  %v1314 = vadd.f32 0.0, %v1313
  %v1315 = vpop.f32.mrb[0].mxu0
  %v1316 = vadd.f32 0.0, %v1315
  %1317 = vdwg.mxu0
  %v1318 = vmul.f32 %v1222, %v1308
  %v1319 = vmul.f32 %v1223, %v1310
  %v1320 = vmul.f32 %v1224, %v1314
  %v1321 = vmul.f32 %v1225, %v1316
  %1322 = vst [vmem:[#allocation5] sm:$0xff] %v1318
  %1323 = vst [vmem:[#allocation5 + $0x8] sm:$0xff] %v1319
  %1324 = vst [vmem:[#allocation5 + $0x10] sm:$0xff] %v1320
  %1325 = vst [vmem:[#allocation5 + $0x18] sm:$0xff] %v1321
  %s1326 = scalar_lea.vmem [#allocation2], 16
  %v1327 = vld [vmem:[%s1326] sm:$0xff]
  %v1328 = vld [vmem:[%s1326 + $0x8] sm:$0xff]
  %v1329 = vld [vmem:[#allocation3] sm:$0xff]
  %v1330 = vld [vmem:[#allocation3 + $0x8] sm:$0xff]
  %v1331 = vmul.bf16 %v1327, %v1329
  %v1332 = vmul.bf16 %v1328, %v1330
  %1333 = vmatprep.subr.bf16.mxu0 0
  %1334 = vmatpush1.bf16.msra.mxu0 %v946
  %1335 = vmatprep.subr.bf16.mxu0 0
  %1336 = vmatpush1.bf16.msra.mxu0 %v947
  %1337 = vmatprep.subr.bf16.mxu0 0
  %1338 = vmatpush1.bf16.msra.mxu0 %v948
  %1339 = vmatprep.subr.bf16.mxu0 0
  %1340 = vmatpush1.bf16.msra.mxu0 %v949
  %1341 = vmatprep.subr.bf16.mxu0 0
  %1342 = vmatpush1.bf16.msra.mxu0 %v950
  %1343 = vmatprep.subr.bf16.mxu0 0
  %1344 = vmatpush1.bf16.msra.mxu0 %v951
  %1345 = vmatprep.subr.bf16.mxu0 0
  %1346 = vmatpush1.bf16.msra.mxu0 %v952
  %1347 = vmatprep.subr.bf16.mxu0 0
  %1348 = vmatpush1.bf16.msra.mxu0 %v953
  %1349 = vmatprep.subr.bf16.mxu0 0
  %1350 = vmatpush1.bf16.msra.mxu0 %v954
  %1351 = vmatprep.subr.bf16.mxu0 0
  %1352 = vmatpush1.bf16.msra.mxu0 %v955
  %1353 = vmatprep.subr.bf16.mxu0 0
  %1354 = vmatpush1.bf16.msra.mxu0 %v956
  %1355 = vmatprep.subr.bf16.mxu0 0
  %1356 = vmatpush1.bf16.msra.mxu0 %v957
  %1357 = vmatprep.subr.bf16.mxu0 0
  %1358 = vmatpush1.bf16.msra.mxu0 %v958
  %1359 = vmatprep.subr.bf16.mxu0 0
  %1360 = vmatpush1.bf16.msra.mxu0 %v959
  %1361 = vmatprep.subr.bf16.mxu0 0
  %1362 = vmatpush1.bf16.msra.mxu0 %v960
  %1363 = vmatprep.subr.bf16.mxu0 0
  %1364 = vmatpush1.bf16.msra.mxu0 %v961
  %1365 = vmatprep.mubr.bf16.mxu0 %v1332
  %1366 = vmatmul.mubr.bf16.gmra.mrb[0].mxu0 %v1331
  %v1367 = vpop.f32.mrb[0].mxu0
  %v1368 = vadd.f32 0.0, %v1367
  %v1369 = vpop.f32.mrb[0].mxu0
  %v1370 = vpop.f32.mrb[0].mxu0
  %v1371 = vadd.f32 0.0, %v1370
  %v1372 = vpop.f32.mrb[0].mxu0
  %1373 = vdwg.mxu0
  %1374 = vst.msk [vmem:[#allocation6] sm:$0xff] %vm1019, %v1368
  %1375 = vst.msk [vmem:[#allocation6 + $0x8] sm:$0xff] %vm1019, %v1371
  %v1376 = vld [vmem:[%s1022] sm:$0xff]
  %v1377 = vld [vmem:[%s1022 + $0x8] sm:$0xff]
  %v1378 = vmul.bf16 %v1327, %v1376
  %v1379 = vmul.bf16 %v1328, %v1377
  %1380 = vmatprep.subr.bf16.mxu0 0
  %1381 = vmatpush1.bf16.msra.mxu0 %v946
  %1382 = vmatprep.subr.bf16.mxu0 0
  %1383 = vmatpush1.bf16.msra.mxu0 %v947
  %1384 = vmatprep.subr.bf16.mxu0 0
  %1385 = vmatpush1.bf16.msra.mxu0 %v948
  %1386 = vmatprep.subr.bf16.mxu0 0
  %1387 = vmatpush1.bf16.msra.mxu0 %v949
  %1388 = vmatprep.subr.bf16.mxu0 0
  %1389 = vmatpush1.bf16.msra.mxu0 %v950
  %1390 = vmatprep.subr.bf16.mxu0 0
  %1391 = vmatpush1.bf16.msra.mxu0 %v951
  %1392 = vmatprep.subr.bf16.mxu0 0
  %1393 = vmatpush1.bf16.msra.mxu0 %v952
  %1394 = vmatprep.subr.bf16.mxu0 0
  %1395 = vmatpush1.bf16.msra.mxu0 %v953
  %1396 = vmatprep.subr.bf16.mxu0 0
  %1397 = vmatpush1.bf16.msra.mxu0 %v954
  %1398 = vmatprep.subr.bf16.mxu0 0
  %1399 = vmatpush1.bf16.msra.mxu0 %v955
  %1400 = vmatprep.subr.bf16.mxu0 0
  %1401 = vmatpush1.bf16.msra.mxu0 %v956
  %1402 = vmatprep.subr.bf16.mxu0 0
  %1403 = vmatpush1.bf16.msra.mxu0 %v957
  %1404 = vmatprep.subr.bf16.mxu0 0
  %1405 = vmatpush1.bf16.msra.mxu0 %v958
  %1406 = vmatprep.subr.bf16.mxu0 0
  %1407 = vmatpush1.bf16.msra.mxu0 %v959
  %1408 = vmatprep.subr.bf16.mxu0 0
  %1409 = vmatpush1.bf16.msra.mxu0 %v960
  %1410 = vmatprep.subr.bf16.mxu0 0
  %1411 = vmatpush1.bf16.msra.mxu0 %v961
  %1412 = vmatprep.mubr.bf16.mxu0 %v1379
  %1413 = vmatmul.mubr.bf16.gmra.mrb[0].mxu0 %v1378
  %v1414 = vpop.f32.mrb[0].mxu0
  %v1415 = vadd.f32 0.0, %v1414
  %v1416 = vpop.f32.mrb[0].mxu0
  %v1417 = vpop.f32.mrb[0].mxu0
  %v1418 = vadd.f32 0.0, %v1417
  %v1419 = vpop.f32.mrb[0].mxu0
  %1420 = vdwg.mxu0
  %1421 = vst.msk [vmem:[%s1068] sm:$0xff] %vm1019, %v1415
  %1422 = vst.msk [vmem:[%s1068 + $0x8] sm:$0xff] %vm1019, %v1418
  %v1423 = vmax.f32 %v1368, %v1415
  %v1424 = vmax.f32 %v1371, %v1418
  %v1425 = vld [vmem:[#allocation6] sm:$0xff]
  %v1426 = vld [vmem:[#allocation6 + $0x8] sm:$0xff]
  %v1427 = vsub.f32 %v1425, %v1423
  %v1428 = vsub.f32 %v1426, %v1424
  %v1429 = vmul.f32 %v1427, 1.442695
  %v1430 = vpow.pop %v1429
  %v1431 = vmul.f32 %v1428, 1.442695
  %v1432 = vpow.pop %v1431
  %v1433 = vpack.c.bf16 %v1432, %v1430
  %v1435 = vsel %vm1019, %v1433, 0
  %1437 = vmatprep.subr.bf16.mxu0 %v1099
  %1438 = vmatpush1.bf16.msra.mxu0 %v1096
  %1439 = vmatprep.subr.bf16.mxu0 0
  %1440 = vmatpush1.bf16.msra.mxu0 0
  %1441 = vmatprep.subr.bf16.mxu0 0
  %1442 = vmatpush1.bf16.msra.mxu0 0
  %1443 = vmatprep.subr.bf16.mxu0 0
  %1444 = vmatpush1.bf16.msra.mxu0 0
  %1445 = vmatprep.subr.bf16.mxu0 0
  %1446 = vmatpush1.bf16.msra.mxu0 0
  %1447 = vmatprep.subr.bf16.mxu0 0
  %1448 = vmatpush1.bf16.msra.mxu0 0
  %1449 = vmatprep.subr.bf16.mxu0 0
  %1450 = vmatpush1.bf16.msra.mxu0 0
  %1451 = vmatprep.subr.bf16.mxu0 0
  %1452 = vmatpush1.bf16.msra.mxu0 0
  %1453 = vmatprep.subr.bf16.mxu0 0
  %1454 = vmatpush1.bf16.msra.mxu0 0
  %1455 = vmatprep.subr.bf16.mxu0 0
  %1456 = vmatpush1.bf16.msra.mxu0 0
  %1457 = vmatprep.subr.bf16.mxu0 0
  %1458 = vmatpush1.bf16.msra.mxu0 0
  %1459 = vmatprep.subr.bf16.mxu0 0
  %1460 = vmatpush1.bf16.msra.mxu0 0
  %1461 = vmatprep.subr.bf16.mxu0 0
  %1462 = vmatpush1.bf16.msra.mxu0 0
  %1463 = vmatprep.subr.bf16.mxu0 0
  %1464 = vmatpush1.bf16.msra.mxu0 0
  %1465 = vmatprep.subr.bf16.mxu0 0
  %1466 = vmatpush1.bf16.msra.mxu0 0
  %1467 = vmatprep.subr.bf16.mxu0 0
  %1468 = vmatpush1.bf16.msra.mxu0 0
  %1469 = vmatprep.mubr.bf16.mxu0 0
  %1470 = vmatmul.mubr.bf16.gmra.mrb[0].mxu0 %v1435
  %v1471 = vpop.f32.mrb[0].mxu0
  %v1472 = vadd.f32 0.0, %v1471
  %v1473 = vpop.f32.mrb[0].mxu0
  %v1474 = vadd.f32 0.0, %v1473
  %v1475 = vpop.f32.mrb[0].mxu0
  %v1476 = vadd.f32 0.0, %v1475
  %v1477 = vpop.f32.mrb[0].mxu0
  %v1478 = vadd.f32 0.0, %v1477
  %1479 = vdwg.mxu0
  %v1480 = vld [vmem:[#allocation4] sm:$0xff]
  %v1481 = vld [vmem:[#allocation4 + $0x8] sm:$0xff]
  %v1482 = vunpack.c.l.bf16 %v1480
  %v1483 = vunpack.c.l.bf16 %v1481
  %v1484 = vunpack.c.h.bf16 %v1480
  %v1485 = vunpack.c.h.bf16 %v1481
  %v1486 = vmul.f32 %v1472, %v1482
  %v1487 = vmul.f32 %v1474, %v1483
  %v1488 = vmul.f32 %v1476, %v1484
  %v1489 = vmul.f32 %v1478, %v1485
  %v1490 = vld [vmem:[%s1068] sm:$0xff]
  %v1491 = vld [vmem:[%s1068 + $0x8] sm:$0xff]
  %v1492 = vsub.f32 %v1490, %v1423
  %v1493 = vsub.f32 %v1491, %v1424
  %v1494 = vmul.f32 %v1492, 1.442695
  %v1495 = vpow.pop %v1494
  %v1496 = vmul.f32 %v1493, 1.442695
  %v1497 = vpow.pop %v1496
  %v1498 = vadd.f32 %v1430, %v1495
  %v1499 = vadd.f32 %v1432, %v1497
  %v1500 = vpack.c.bf16 %v1497, %v1495
  %v1502 = vsel %vm1019, %v1500, 0
  %1504 = vmatprep.subr.bf16.mxu0 %v1099
  %1505 = vmatpush1.bf16.msra.mxu0 %v1096
  %1506 = vmatprep.subr.bf16.mxu0 0
  %1507 = vmatpush1.bf16.msra.mxu0 0
  %1508 = vmatprep.subr.bf16.mxu0 0
  %1509 = vmatpush1.bf16.msra.mxu0 0
  %1510 = vmatprep.subr.bf16.mxu0 0
  %1511 = vmatpush1.bf16.msra.mxu0 0
  %1512 = vmatprep.subr.bf16.mxu0 0
  %1513 = vmatpush1.bf16.msra.mxu0 0
  %1514 = vmatprep.subr.bf16.mxu0 0
  %1515 = vmatpush1.bf16.msra.mxu0 0
  %1516 = vmatprep.subr.bf16.mxu0 0
  %1517 = vmatpush1.bf16.msra.mxu0 0
  %1518 = vmatprep.subr.bf16.mxu0 0
  %1519 = vmatpush1.bf16.msra.mxu0 0
  %1520 = vmatprep.subr.bf16.mxu0 0
  %1521 = vmatpush1.bf16.msra.mxu0 0
  %1522 = vmatprep.subr.bf16.mxu0 0
  %1523 = vmatpush1.bf16.msra.mxu0 0
  %1524 = vmatprep.subr.bf16.mxu0 0
  %1525 = vmatpush1.bf16.msra.mxu0 0
  %1526 = vmatprep.subr.bf16.mxu0 0
  %1527 = vmatpush1.bf16.msra.mxu0 0
  %1528 = vmatprep.subr.bf16.mxu0 0
  %1529 = vmatpush1.bf16.msra.mxu0 0
  %1530 = vmatprep.subr.bf16.mxu0 0
  %1531 = vmatpush1.bf16.msra.mxu0 0
  %1532 = vmatprep.subr.bf16.mxu0 0
  %1533 = vmatpush1.bf16.msra.mxu0 0
  %1534 = vmatprep.subr.bf16.mxu0 0
  %1535 = vmatpush1.bf16.msra.mxu0 0
  %1536 = vmatprep.mubr.bf16.mxu0 0
  %1537 = vmatmul.mubr.bf16.gmra.mrb[0].mxu0 %v1502
  %v1538 = vpop.f32.mrb[0].mxu0
  %v1539 = vadd.f32 0.0, %v1538
  %v1540 = vpop.f32.mrb[0].mxu0
  %v1541 = vadd.f32 0.0, %v1540
  %v1542 = vpop.f32.mrb[0].mxu0
  %v1543 = vadd.f32 0.0, %v1542
  %v1544 = vpop.f32.mrb[0].mxu0
  %v1545 = vadd.f32 0.0, %v1544
  %1546 = vdwg.mxu0
  %v1547 = vld [vmem:[%s1211] sm:$0xff]
  %v1548 = vld [vmem:[%s1211 + $0x8] sm:$0xff]
  %v1549 = vunpack.c.l.bf16 %v1547
  %v1550 = vunpack.c.l.bf16 %v1548
  %v1551 = vunpack.c.h.bf16 %v1547
  %v1552 = vunpack.c.h.bf16 %v1548
  %v1553 = vmul.f32 %v1539, %v1549
  %v1554 = vmul.f32 %v1541, %v1550
  %v1555 = vmul.f32 %v1543, %v1551
  %v1556 = vmul.f32 %v1545, %v1552
  %v1557 = vadd.f32 %v1486, %v1553
  %v1558 = vadd.f32 %v1487, %v1554
  %v1559 = vadd.f32 %v1488, %v1555
  %v1560 = vadd.f32 %v1489, %v1556
  %v1561 = vrcp.pop %v1498
  %v1562 = vrcp.pop %v1499
  %v1564 = vsel %vm1019, %v1561, 0
  %v1567 = vsel %vm1019, %v1562, 0
  %1569 = vmatprep.subr.mxu0 %v1239
  %1570 = vmatpush1.msra.mxu0 %v1237
  %1571 = vmatprep.subr.mxu0 0.0
  %1572 = vmatpush1.msra.mxu0 0.0
  %1573 = vmatprep.subr.mxu0 0.0
  %1574 = vmatpush1.msra.mxu0 0.0
  %1575 = vmatprep.subr.mxu0 0.0
  %1576 = vmatpush1.msra.mxu0 0.0
  %1577 = vmatprep.subr.mxu0 0.0
  %1578 = vmatpush1.msra.mxu0 0.0
  %1579 = vmatprep.subr.mxu0 0.0
  %1580 = vmatpush1.msra.mxu0 0.0
  %1581 = vmatprep.subr.mxu0 0.0
  %1582 = vmatpush1.msra.mxu0 0.0
  %1583 = vmatprep.subr.mxu0 0.0
  %1584 = vmatpush1.msra.mxu0 0.0
  %1585 = vmatprep.subr.mxu0 0.0
  %1586 = vmatpush1.msra.mxu0 0.0
  %1587 = vmatprep.subr.mxu0 0.0
  %1588 = vmatpush1.msra.mxu0 0.0
  %1589 = vmatprep.subr.mxu0 0.0
  %1590 = vmatpush1.msra.mxu0 0.0
  %1591 = vmatprep.subr.mxu0 0.0
  %1592 = vmatpush1.msra.mxu0 0.0
  %1593 = vmatprep.subr.mxu0 0.0
  %1594 = vmatpush1.msra.mxu0 0.0
  %1595 = vmatprep.subr.mxu0 0.0
  %1596 = vmatpush1.msra.mxu0 0.0
  %1597 = vmatprep.subr.mxu0 0.0
  %1598 = vmatpush1.msra.mxu0 0.0
  %1599 = vmatprep.subr.mxu0 0.0
  %1600 = vmatpush1.msra.mxu0 0.0
  %1601 = vmatprep.subr.mxu0 0.0
  %1602 = vmatpush1.msra.mxu0 0.0
  %1603 = vmatprep.subr.mxu0 0.0
  %1604 = vmatpush1.msra.mxu0 0.0
  %1605 = vmatprep.subr.mxu0 0.0
  %1606 = vmatpush1.msra.mxu0 0.0
  %1607 = vmatprep.subr.mxu0 0.0
  %1608 = vmatpush1.msra.mxu0 0.0
  %1609 = vmatprep.subr.mxu0 0.0
  %1610 = vmatpush1.msra.mxu0 0.0
  %1611 = vmatprep.subr.mxu0 0.0
  %1612 = vmatpush1.msra.mxu0 0.0
  %1613 = vmatprep.subr.mxu0 0.0
  %1614 = vmatpush1.msra.mxu0 0.0
  %1615 = vmatprep.subr.mxu0 0.0
  %1616 = vmatpush1.msra.mxu0 0.0
  %1617 = vmatprep.subr.mxu0 0.0
  %1618 = vmatpush1.msra.mxu0 0.0
  %1619 = vmatprep.subr.mxu0 0.0
  %1620 = vmatpush1.msra.mxu0 0.0
  %1621 = vmatprep.subr.mxu0 0.0
  %1622 = vmatpush1.msra.mxu0 0.0
  %1623 = vmatprep.subr.mxu0 0.0
  %1624 = vmatpush1.msra.mxu0 0.0
  %1625 = vmatprep.subr.mxu0 0.0
  %1626 = vmatpush1.msra.mxu0 0.0
  %1627 = vmatprep.subr.mxu0 0.0
  %1628 = vmatpush1.msra.mxu0 0.0
  %1629 = vmatprep.subr.mxu0 0.0
  %1630 = vmatpush1.msra.mxu0 0.0
  %1631 = vmatprep.subr.mxu0 0.0
  %1632 = vmatpush1.msra.mxu0 0.0
  %1633 = vmatprep.mubr.f32.mxu0 0.0
  %1634 = vmatmul.mubr.f32.gmra.mrb[0].mxu0 %v1564
  %v1635 = vpop.f32.mrb[0].mxu0
  %v1636 = vadd.f32 0.0, %v1635
  %v1637 = vpop.f32.mrb[0].mxu0
  %v1638 = vadd.f32 0.0, %v1637
  %1639 = vmatprep.mubr.f32.mxu0 0.0
  %1640 = vmatmul.mubr.f32.gmra.mrb[0].mxu0 %v1567
  %v1641 = vpop.f32.mrb[0].mxu0
  %v1642 = vadd.f32 0.0, %v1641
  %v1643 = vpop.f32.mrb[0].mxu0
  %v1644 = vadd.f32 0.0, %v1643
  %1645 = vdwg.mxu0
  %v1646 = vmul.f32 %v1557, %v1636
  %v1647 = vmul.f32 %v1558, %v1638
  %v1648 = vmul.f32 %v1559, %v1642
  %v1649 = vmul.f32 %v1560, %v1644
  %s1650 = scalar_lea.vmem [#allocation5], 32
  %1651 = vst [vmem:[%s1650] sm:$0xff] %v1646
  %1652 = vst [vmem:[%s1650 + $0x8] sm:$0xff] %v1647
  %1653 = vst [vmem:[%s1650 + $0x10] sm:$0xff] %v1648
  %1654 = vst [vmem:[%s1650 + $0x18] sm:$0xff] %v1649
  %v1655 = vld [vmem:[#allocation5] sm:$0xff]
  %v1656 = vld [vmem:[#allocation5 + $0x8] sm:$0xff]
  %v1657 = vld [vmem:[#allocation5 + $0x10] sm:$0xff]
  %v1658 = vld [vmem:[#allocation5 + $0x18] sm:$0xff]
  %v1659 = vld [vmem:[#allocation5 + $0x20] sm:$0xff]
  %v1660 = vld [vmem:[#allocation5 + $0x28] sm:$0xff]
  %v1661 = vld [vmem:[#allocation5 + $0x30] sm:$0xff]
  %v1662 = vld [vmem:[#allocation5 + $0x38] sm:$0xff]
  %v1663 = vpack.c.bf16 %v1657, %v1655
  %v1664 = vpack.c.bf16 %v1658, %v1656
  %v1665 = vpack.c.bf16 %v1661, %v1659
  %v1666 = vpack.c.bf16 %v1662, %v1660
  %v1667 = vld [vmem:[%s3] sm:$0xff]
  %v1668 = vld [vmem:[%s3 + $0x8] sm:$0xff]
  %v1669 = vld [vmem:[%s3 + $0x10] sm:$0xff]
  %v1670 = vld [vmem:[%s3 + $0x18] sm:$0xff]
  %v1671 = vld [vmem:[%s3 + $0x20] sm:$0xff]
  %v1672 = vld [vmem:[%s3 + $0x28] sm:$0xff]
  %v1673 = vld [vmem:[%s3 + $0x30] sm:$0xff]
  %v1674 = vld [vmem:[%s3 + $0x38] sm:$0xff]
  %v1675 = vld [vmem:[%s3 + $0x40] sm:$0xff]
  %v1676 = vld [vmem:[%s3 + $0x48] sm:$0xff]
  %v1677 = vld [vmem:[%s3 + $0x50] sm:$0xff]
  %v1678 = vld [vmem:[%s3 + $0x58] sm:$0xff]
  %v1679 = vld [vmem:[%s3 + $0x60] sm:$0xff]
  %v1680 = vld [vmem:[%s3 + $0x68] sm:$0xff]
  %v1681 = vld [vmem:[%s3 + $0x70] sm:$0xff]
  %v1682 = vld [vmem:[%s3 + $0x78] sm:$0xff]
  %v1683 = vld [vmem:[%s3 + $0x80] sm:$0xff]
  %v1684 = vld [vmem:[%s3 + $0x88] sm:$0xff]
  %v1685 = vld [vmem:[%s3 + $0x90] sm:$0xff]
  %v1686 = vld [vmem:[%s3 + $0x98] sm:$0xff]
  %v1687 = vld [vmem:[%s3 + $0xa0] sm:$0xff]
  %v1688 = vld [vmem:[%s3 + $0xa8] sm:$0xff]
  %v1689 = vld [vmem:[%s3 + $0xb0] sm:$0xff]
  %v1690 = vld [vmem:[%s3 + $0xb8] sm:$0xff]
  %v1691 = vld [vmem:[%s3 + $0xc0] sm:$0xff]
  %v1692 = vld [vmem:[%s3 + $0xc8] sm:$0xff]
  %v1693 = vld [vmem:[%s3 + $0xd0] sm:$0xff]
  %v1694 = vld [vmem:[%s3 + $0xd8] sm:$0xff]
  %v1695 = vld [vmem:[%s3 + $0xe0] sm:$0xff]
  %v1696 = vld [vmem:[%s3 + $0xe8] sm:$0xff]
  %v1697 = vld [vmem:[%s3 + $0xf0] sm:$0xff]
  %v1698 = vld [vmem:[%s3 + $0xf8] sm:$0xff]
  %v1699 = vld [vmem:[%s4] sm:$0x3]
  %v1701 = vlaneseq
  %v1702 = vshrl.u32 %v1701, 7
  %v1703 = vsub.s32 0, %v1702
  %v1704 = vrot.slane %v1699, %v1703
  %v1705 = vlaneseq
  %v1706 = vshrl.u32 %v1705, 7
  %v1707 = vsub.s32 1, %v1706
  %v1708 = vrot.slane %v1699, %v1707
  %v1743 = vunpack.c.l.b16 %v1667
  %v1744 = vunpack.c.h.b16 %v1667
  %v1745 = vunpack.c.l.b16 %v1668
  %v1746 = vunpack.c.h.b16 %v1668
  %v1747 = vunpack.c.l.b16 %v1669
  %v1748 = vunpack.c.h.b16 %v1669
  %v1749 = vunpack.c.l.b16 %v1670
  %v1750 = vunpack.c.h.b16 %v1670
  %v1751 = vunpack.c.l.b16 %v1671
  %v1752 = vunpack.c.h.b16 %v1671
  %v1753 = vunpack.c.l.b16 %v1672
  %v1754 = vunpack.c.h.b16 %v1672
  %v1755 = vunpack.c.l.b16 %v1673
  %v1756 = vunpack.c.h.b16 %v1673
  %v1757 = vunpack.c.l.b16 %v1674
  %v1758 = vunpack.c.h.b16 %v1674
  %v1759 = vunpack.c.l.b16 %v1675
  %v1760 = vunpack.c.h.b16 %v1675
  %v1761 = vunpack.c.l.b16 %v1676
  %v1762 = vunpack.c.h.b16 %v1676
  %v1763 = vunpack.c.l.b16 %v1677
  %v1764 = vunpack.c.h.b16 %v1677
  %v1765 = vunpack.c.l.b16 %v1678
  %v1766 = vunpack.c.h.b16 %v1678
  %v1767 = vunpack.c.l.b16 %v1679
  %v1768 = vunpack.c.h.b16 %v1679
  %v1769 = vunpack.c.l.b16 %v1680
  %v1770 = vunpack.c.h.b16 %v1680
  %v1771 = vunpack.c.l.b16 %v1681
  %v1772 = vunpack.c.h.b16 %v1681
  %v1773 = vunpack.c.l.b16 %v1682
  %v1774 = vunpack.c.h.b16 %v1682
  %v1775 = vunpack.c.l.b16 %v1683
  %v1776 = vunpack.c.h.b16 %v1683
  %v1777 = vunpack.c.l.b16 %v1684
  %v1778 = vunpack.c.h.b16 %v1684
  %v1779 = vunpack.c.l.b16 %v1685
  %v1780 = vunpack.c.h.b16 %v1685
  %v1781 = vunpack.c.l.b16 %v1686
  %v1782 = vunpack.c.h.b16 %v1686
  %v1783 = vunpack.c.l.b16 %v1687
  %v1784 = vunpack.c.h.b16 %v1687
  %v1785 = vunpack.c.l.b16 %v1688
  %v1786 = vunpack.c.h.b16 %v1688
  %v1787 = vunpack.c.l.b16 %v1689
  %v1788 = vunpack.c.h.b16 %v1689
  %v1789 = vunpack.c.l.b16 %v1690
  %v1790 = vunpack.c.h.b16 %v1690
  %v1791 = vunpack.c.l.b16 %v1691
  %v1792 = vunpack.c.h.b16 %v1691
  %v1793 = vunpack.c.l.b16 %v1692
  %v1794 = vunpack.c.h.b16 %v1692
  %v1795 = vunpack.c.l.b16 %v1693
  %v1796 = vunpack.c.h.b16 %v1693
  %v1797 = vunpack.c.l.b16 %v1694
  %v1798 = vunpack.c.h.b16 %v1694
  %v1799 = vunpack.c.l.b16 %v1695
  %v1800 = vunpack.c.h.b16 %v1695
  %v1801 = vunpack.c.l.b16 %v1696
  %v1802 = vunpack.c.h.b16 %v1696
  %v1803 = vunpack.c.l.b16 %v1697
  %v1804 = vunpack.c.h.b16 %v1697
  %v1805 = vunpack.c.l.b16 %v1698
  %v1806 = vunpack.c.h.b16 %v1698
  %v1807 = vpack.c.b16 %v1745, %v1743
  %v1808 = vpack.c.b16 %v1746, %v1744
  %v1809 = vpack.c.b16 %v1749, %v1747
  %v1810 = vpack.c.b16 %v1750, %v1748
  %v1811 = vpack.c.b16 %v1753, %v1751
  %v1812 = vpack.c.b16 %v1754, %v1752
  %v1813 = vpack.c.b16 %v1757, %v1755
  %v1814 = vpack.c.b16 %v1758, %v1756
  %v1815 = vpack.c.b16 %v1761, %v1759
  %v1816 = vpack.c.b16 %v1762, %v1760
  %v1817 = vpack.c.b16 %v1765, %v1763
  %v1818 = vpack.c.b16 %v1766, %v1764
  %v1819 = vpack.c.b16 %v1769, %v1767
  %v1820 = vpack.c.b16 %v1770, %v1768
  %v1821 = vpack.c.b16 %v1773, %v1771
  %v1822 = vpack.c.b16 %v1774, %v1772
  %v1823 = vpack.c.b16 %v1777, %v1775
  %v1824 = vpack.c.b16 %v1778, %v1776
  %v1825 = vpack.c.b16 %v1781, %v1779
  %v1826 = vpack.c.b16 %v1782, %v1780
  %v1827 = vpack.c.b16 %v1785, %v1783
  %v1828 = vpack.c.b16 %v1786, %v1784
  %v1829 = vpack.c.b16 %v1789, %v1787
  %v1830 = vpack.c.b16 %v1790, %v1788
  %v1831 = vpack.c.b16 %v1793, %v1791
  %v1832 = vpack.c.b16 %v1794, %v1792
  %v1833 = vpack.c.b16 %v1797, %v1795
  %v1834 = vpack.c.b16 %v1798, %v1796
  %v1835 = vpack.c.b16 %v1801, %v1799
  %v1836 = vpack.c.b16 %v1802, %v1800
  %v1837 = vpack.c.b16 %v1805, %v1803
  %v1838 = vpack.c.b16 %v1806, %v1804
  %1871 = vmatprep.subr.bf16.mxu0 %v1808
  %1872 = vmatpush1.bf16.msra.mxu0 %v1807
  %1873 = vmatprep.subr.bf16.mxu0 %v1810
  %1874 = vmatpush1.bf16.msra.mxu0 %v1809
  %1875 = vmatprep.subr.bf16.mxu0 %v1812
  %1876 = vmatpush1.bf16.msra.mxu0 %v1811
  %1877 = vmatprep.subr.bf16.mxu0 %v1814
  %1878 = vmatpush1.bf16.msra.mxu0 %v1813
  %1879 = vmatprep.subr.bf16.mxu0 %v1816
  %1880 = vmatpush1.bf16.msra.mxu0 %v1815
  %1881 = vmatprep.subr.bf16.mxu0 %v1818
  %1882 = vmatpush1.bf16.msra.mxu0 %v1817
  %1883 = vmatprep.subr.bf16.mxu0 %v1820
  %1884 = vmatpush1.bf16.msra.mxu0 %v1819
  %1885 = vmatprep.subr.bf16.mxu0 %v1822
  %1886 = vmatpush1.bf16.msra.mxu0 %v1821
  %1887 = vmatprep.subr.bf16.mxu0 %v1824
  %1888 = vmatpush1.bf16.msra.mxu0 %v1823
  %1889 = vmatprep.subr.bf16.mxu0 %v1826
  %1890 = vmatpush1.bf16.msra.mxu0 %v1825
  %1891 = vmatprep.subr.bf16.mxu0 %v1828
  %1892 = vmatpush1.bf16.msra.mxu0 %v1827
  %1893 = vmatprep.subr.bf16.mxu0 %v1830
  %1894 = vmatpush1.bf16.msra.mxu0 %v1829
  %1895 = vmatprep.subr.bf16.mxu0 %v1832
  %1896 = vmatpush1.bf16.msra.mxu0 %v1831
  %1897 = vmatprep.subr.bf16.mxu0 %v1834
  %1898 = vmatpush1.bf16.msra.mxu0 %v1833
  %1899 = vmatprep.subr.bf16.mxu0 %v1836
  %1900 = vmatpush1.bf16.msra.mxu0 %v1835
  %1901 = vmatprep.subr.bf16.mxu0 %v1838
  %1902 = vmatpush1.bf16.msra.mxu0 %v1837
  %1903 = vmatprep.mubr.bf16.mxu0 %v1664
  %1904 = vmatmul.mubr.bf16.gmra.mrb[0].mxu0 %v1663
  %v1905 = vpop.f32.mrb[0].mxu0
  %v1906 = vadd.f32 %v1704, %v1905
  %v1907 = vpop.f32.mrb[0].mxu0
  %v1908 = vadd.f32 %v1708, %v1907
  %v1909 = vpop.f32.mrb[0].mxu0
  %v1910 = vadd.f32 %v1704, %v1909
  %v1911 = vpop.f32.mrb[0].mxu0
  %v1912 = vadd.f32 %v1708, %v1911
  %1913 = vmatprep.mubr.bf16.mxu0 %v1666
  %1914 = vmatmul.mubr.bf16.gmra.mrb[0].mxu0 %v1665
  %v1915 = vpop.f32.mrb[0].mxu0
  %v1916 = vadd.f32 %v1704, %v1915
  %v1917 = vpop.f32.mrb[0].mxu0
  %v1918 = vadd.f32 %v1708, %v1917
  %v1919 = vpop.f32.mrb[0].mxu0
  %v1920 = vadd.f32 %v1704, %v1919
  %v1921 = vpop.f32.mrb[0].mxu0
  %v1922 = vadd.f32 %v1708, %v1921
  %1923 = vdwg.mxu0
  %v1924 = vld [vmem:[%s0] sm:$0xff]
  %v1925 = vld [vmem:[%s0 + $0x8] sm:$0xff]
  %v1926 = vld [vmem:[%s0 + $0x10] sm:$0xff]
  %v1927 = vld [vmem:[%s0 + $0x18] sm:$0xff]
  %v1928 = vunpack.c.l.bf16 %v1924
  %v1929 = vunpack.c.h.bf16 %v1924
  %v1930 = vunpack.c.l.bf16 %v1925
  %v1931 = vunpack.c.h.bf16 %v1925
  %v1932 = vunpack.c.l.bf16 %v1926
  %v1933 = vunpack.c.h.bf16 %v1926
  %v1934 = vunpack.c.l.bf16 %v1927
  %v1935 = vunpack.c.h.bf16 %v1927
  %v1936 = vadd.f32 %v1906, %v1928
  %v1937 = vadd.f32 %v1908, %v1929
  %v1938 = vadd.f32 %v1910, %v1930
  %v1939 = vadd.f32 %v1912, %v1931
  %v1940 = vadd.f32 %v1916, %v1932
  %v1941 = vadd.f32 %v1918, %v1933
  %v1942 = vadd.f32 %v1920, %v1934
  %v1943 = vadd.f32 %v1922, %v1935
  %v1944 = vpack.c.bf16 %v1938, %v1936
  %v1945 = vpack.c.bf16 %v1939, %v1937
  %v1946 = vpack.c.bf16 %v1942, %v1940
  %v1947 = vpack.c.bf16 %v1943, %v1941
  %v1952 = vunpack.c.l.b16 %v1944
  %v1953 = vunpack.c.l.b16 %v1945
  %v1954 = vunpack.c.h.b16 %v1944
  %v1955 = vunpack.c.h.b16 %v1945
  %v1956 = vunpack.c.l.b16 %v1946
  %v1957 = vunpack.c.l.b16 %v1947
  %v1958 = vunpack.c.h.b16 %v1946
  %v1959 = vunpack.c.h.b16 %v1947
  %v1960 = vpack.c.b16 %v1953, %v1952
  %v1961 = vpack.c.b16 %v1955, %v1954
  %v1962 = vpack.c.b16 %v1957, %v1956
  %v1963 = vpack.c.b16 %v1959, %v1958
  %1968 = vst [vmem:[%s7] sm:$0xff] %v1960
  %1969 = vst [vmem:[%s7 + $0x8] sm:$0xff] %v1961
  %1970 = vst [vmem:[%s7 + $0x10] sm:$0xff] %v1962
  %1971 = vst [vmem:[%s7 + $0x18] sm:$0xff] %v1963
  // Predicated region
  $region30: #{attention_dgcnn_forward.17} parent=0 // pred_check
    _
  $region31: #{attention_dgcnn_forward.17} parent=0 // pred_check_branch
    %1973 = sbr.rel (0) target = $region33
  $region32: #{attention_dgcnn_forward.17} parent=0 // pred_region
    _
  $region33: #{attention_dgcnn_forward.17} parent=0 // pred_fallthru
    _
  // Predicated region
  $region34: #{attention_dgcnn_forward.17} parent=0 // pred_check
    _
  $region35: #{attention_dgcnn_forward.17} parent=0 // pred_check_branch
    %1975 = sbr.rel (0) target = $region37
  $region36: #{attention_dgcnn_forward.17} parent=0 // pred_region
    _
  $region37: #{attention_dgcnn_forward.17} parent=0 // pred_fallthru
    _

</llo_original>
